<compile_context>
chip_gen: v6e
topology: v6e:2x2x1
jax: 0.10.0
libtpu: 0.0.40
codegen_flags: <defaults>
</compile_context>

<pallas_src>
import functools

import jax
import jax.numpy as jnp
import numpy as np
from jax.experimental import pallas as pl
from jax.experimental.pallas import tpu as pltpu

_VMEM_LIMIT = 32 * 1024 * 1024
_BN_EPS = 1e-5


# ----------------------------- Pallas kernels ------------------------------ #

def _conv_band_kernel(x_ref, w_ref, b_ref, o_ref, *, KH, H_out, apply_relu):
    """One image: stride-1 'same' conv as KH banded matmuls + bias(+BN) + ReLU.

    x_ref: (Hp, Wp*Cin)          bf16  padded activation rows (row-flattened)
    w_ref: (KH, Wp*Cin, W*Cout)  bf16  banded weights (BN scale pre-folded)
    b_ref: (1, W*Cout)           f32   bias (BN shift pre-folded), tiled over W
    o_ref: (H_out, W*Cout)       bf16  lane-dense output rows
    """
    acc = jnp.zeros(o_ref.shape, jnp.float32)
    for ki in range(KH):                          # static unroll over vertical taps
        acc = acc + jnp.dot(x_ref[ki:ki + H_out, :], w_ref[ki],
                            preferred_element_type=jnp.float32)
    acc = acc + b_ref[...]
    if apply_relu:
        acc = jnp.maximum(acc, 0.0)
    o_ref[...] = acc.astype(o_ref.dtype)


def _conv_pool_bn_kernel(x_ref, w_ref, b_ref, s_ref, t_ref, o_ref, *,
                         KH, H_out, half):
    """One image: conv3 + bias + 2x2 max-pool + BN + ReLU, fully fused.

    x_ref: (2, Hp//2, Wp*Cin)      bf16  padded rows split by row parity
    w_ref: (KH, Wp*Cin, 2*half)    bf16  banded weights, [even cols | odd cols]
    b/s/t: (1, half)               f32   conv bias / BN scale / BN shift (tiled)
    o_ref: (H_out, half)           bf16  pooled output rows (half = Wo*Cout)
    """
    def row_acc(row_par):
        acc = jnp.zeros((H_out, 2 * half), jnp.float32)
        for ki in range(KH):
            r = row_par + ki                      # offset within the 2x pooled row
            lhs = x_ref[r % 2, r // 2:r // 2 + H_out, :]
            acc = acc + jnp.dot(lhs, w_ref[ki],
                                preferred_element_type=jnp.float32)
        return acc

    m = jnp.maximum(row_acc(0), row_acc(1))       # max over the two conv rows
    m = jnp.maximum(m[:, :half], m[:, half:])     # max over even/odd conv cols
    m = m + b_ref[...]                            # max(a_i) + b == max(a_i + b)
    o_ref[...] = jnp.maximum(m * s_ref[...] + t_ref[...], 0.0).astype(o_ref.dtype)


# ------------------------------ call wrappers ------------------------------ #

def conv_band(x_nhwc, band_w, bias_t, *, pad, apply_relu):
    N, H, W, Cin = x_nhwc.shape
    KH, WpCin, WCout = band_w.shape
    Hp, Wp = H + 2 * pad, W + 2 * pad
    assert WpCin == Wp * Cin and WCout % W == 0
    xp = jnp.pad(x_nhwc.astype(jnp.bfloat16),
                 ((0, 0), (pad, pad), (pad, pad), (0, 0)))
    xp = xp.reshape(N, Hp, Wp * Cin)              # lane-dense row slabs
    kernel = functools.partial(_conv_band_kernel, KH=KH, H_out=H,
                               apply_relu=apply_relu)
    y = pl.pallas_call(
        kernel,
        out_shape=jax.ShapeDtypeStruct((N, H, WCout), jnp.bfloat16),
        grid_spec=pltpu.PrefetchScalarGridSpec(
            num_scalar_prefetch=0,
            grid=(N,),
            in_specs=[
                pl.BlockSpec((None, Hp, Wp * Cin), lambda n: (n, 0, 0)),
                pl.BlockSpec((KH, Wp * Cin, WCout), lambda n: (0, 0, 0)),
                pl.BlockSpec((1, WCout), lambda n: (0, 0)),
            ],
            out_specs=pl.BlockSpec((None, H, WCout), lambda n: (n, 0, 0)),
        ),
        compiler_params=pltpu.CompilerParams(
            dimension_semantics=("parallel",),
            vmem_limit_bytes=_VMEM_LIMIT),
    )(xp, band_w, bias_t)
    return y.reshape(N, H, W, WCout // W)


def conv_pool_bn(x_nhwc, band_eo, bias_t, scale_t, shift_t, *, pad):
    N, H, W, Cin = x_nhwc.shape
    KH, WpCin, two_half = band_eo.shape
    half = two_half // 2
    Hp, Wp = H + 2 * pad, W + 2 * pad
    Ho, Wo = H // 2, W // 2
    assert WpCin == Wp * Cin and Hp % 2 == 0 and half % Wo == 0
    xp = jnp.pad(x_nhwc.astype(jnp.bfloat16),
                 ((0, 0), (pad, pad), (pad, pad), (0, 0)))
    xp = xp.reshape(N, Hp, Wp * Cin)
    # Split padded rows by parity so the fused 2x2 pool only needs contiguous
    # static slices inside the kernel (no strided reads, no separate pool pass).
    xp = xp.reshape(N, Hp // 2, 2, Wp * Cin).transpose(0, 2, 1, 3)
    kernel = functools.partial(_conv_pool_bn_kernel, KH=KH, H_out=Ho, half=half)
    y = pl.pallas_call(
        kernel,
        out_shape=jax.ShapeDtypeStruct((N, Ho, half), jnp.bfloat16),
        grid_spec=pltpu.PrefetchScalarGridSpec(
            num_scalar_prefetch=0,
            grid=(N,),
            in_specs=[
                pl.BlockSpec((None, 2, Hp // 2, Wp * Cin), lambda n: (n, 0, 0, 0)),
                pl.BlockSpec((KH, Wp * Cin, two_half), lambda n: (0, 0, 0)),
                pl.BlockSpec((1, half), lambda n: (0, 0)),
                pl.BlockSpec((1, half), lambda n: (0, 0)),
                pl.BlockSpec((1, half), lambda n: (0, 0)),
            ],
            out_specs=pl.BlockSpec((None, Ho, half), lambda n: (n, 0, 0)),
        ),
        compiler_params=pltpu.CompilerParams(
            dimension_semantics=("parallel",),
            vmem_limit_bytes=_VMEM_LIMIT),
    )(xp, band_eo, bias_t, scale_t, shift_t)
    return y.reshape(N, Ho, Wo, half // Wo)


@jax.jit
def cpm_stage_x_forward(x_nchw, kp):
    x = jnp.transpose(x_nchw, (0, 2, 3, 1))            # NHWC
    x = conv_band(x, kp['w1'], kp['b1'], pad=4, apply_relu=True)
    x = conv_band(x, kp['w2'], kp['b2'], pad=4, apply_relu=True)
    x = conv_pool_bn(x, kp['w3eo'], kp['b3'], kp['s3'], kp['t3'], pad=4)
    x = conv_band(x, kp['w4'], kp['b4'], pad=4, apply_relu=True)
    x = conv_band(x, kp['w5'], kp['b5'], pad=2, apply_relu=True)
    return jnp.transpose(x, (0, 3, 1, 2)).astype(jnp.float32)   # NCHW like PyTorch


# ----------------------- parameter construction (host) --------------------- #

def _band(w_hwio, Wp, out_cols, col_of):
    """band[ki, j*Cin + c, oc*Cout + co] = w[ki, j - col_of(oc), c, co] (0 outside)."""
    KH, KW, Cin, Cout = w_hwio.shape
    out = np.zeros((KH, Wp * Cin, out_cols * Cout), np.float32)
    flat = w_hwio.reshape(KH, KW * Cin, Cout)
    for oc in range(out_cols):
        c0 = col_of(oc)
        out[:, c0 * Cin:(c0 + KW) * Cin, oc * Cout:(oc + 1) * Cout] = flat
    return out


def make_params(key, in_channels, out_channels, H, W):
    """Random PyTorch-like params -> (kernel params, matching reference params)."""
    cfg = [  # (name, K, pad, Cin, Cout, spatial width seen by the layer)
        ('1', 9, 4, in_channels,      out_channels,     W),
        ('2', 9, 4, out_channels,     out_channels,     W),
        ('3', 9, 4, out_channels,     out_channels,     W),
        ('4', 9, 4, out_channels,     2 * out_channels, W // 2),
        ('5', 5, 2, 2 * out_channels, out_channels,     W // 2),
    ]
    ks = jax.random.split(key, 4 * len(cfg))
    kern, ref = {}, {}
    for idx, (name, K, pad, ci, co, w_sp) in enumerate(cfg):
        kw_, kb_, kg_, ke_ = ks[4 * idx:4 * idx + 4]
        w = (np.asarray(jax.random.normal(kw_, (K, K, ci, co), jnp.float32))
             / np.sqrt(K * K * ci)).astype(np.float32)
        b = 0.05 * np.asarray(jax.random.normal(kb_, (co,), jnp.float32))
        gamma = 1.0 + 0.1 * np.asarray(jax.random.normal(kg_, (co,), jnp.float32))
        beta = 0.1 * np.asarray(jax.random.normal(ke_, (co,), jnp.float32))
        mean = np.zeros((co,), np.float32)          # inference-mode running stats
        var = np.ones((co,), np.float32)
        scale = gamma / np.sqrt(var + _BN_EPS)
        shift = beta - mean * scale
        Wp = w_sp + 2 * pad
        if name == '3':
            # BN3/ReLU3 act after the pool -> keep weights unfolded; the pool,
            # BN and ReLU are fused into the conv3 kernel epilogue instead.
            be = _band(w, Wp, w_sp // 2, lambda c: 2 * c)
            bo = _band(w, Wp, w_sp // 2, lambda c: 2 * c + 1)
            kern['w3eo'] = jnp.asarray(np.concatenate([be, bo], axis=-1),
                                       jnp.bfloat16)
            kern['b3'] = jnp.asarray(np.tile(b, w_sp // 2)[None, :], jnp.float32)
            kern['s3'] = jnp.asarray(np.tile(scale, w_sp // 2)[None, :], jnp.float32)
            kern['t3'] = jnp.asarray(np.tile(shift, w_sp // 2)[None, :], jnp.float32)
            ref['w3'] = jnp.asarray(w, jnp.bfloat16)
            ref['b3'] = jnp.asarray(b, jnp.float32)
            ref['s3'] = jnp.asarray(scale, jnp.float32)
            ref['t3'] = jnp.asarray(shift, jnp.float32)
        else:
            wf = (w * scale).astype(np.float32)     # fold BN scale into weights
            bf = (b * scale + shift).astype(np.float32)
            kern['w' + name] = jnp.asarray(_band(wf, Wp, w_sp, lambda c: c),
                                           jnp.bfloat16)
            kern['b' + name] = jnp.asarray(np.tile(bf, w_sp)[None, :], jnp.float32)
            ref['w' + name] = jnp.asarray(wf, jnp.bfloat16)
            ref['b' + name] = jnp.asarray(bf, jnp.float32)
    return kern, ref


# ------------------------- pure-JAX reference check ------------------------ #

@jax.jit
def ref_forward(x_nchw, rp):
    x = jnp.transpose(x_nchw, (0, 2, 3, 1)).astype(jnp.bfloat16)

    def conv(x, w, pad):
        return jax.lax.conv_general_dilated(
            x, w, (1, 1), [(pad, pad), (pad, pad)],
            dimension_numbers=('NHWC', 'HWIO', 'NHWC'),
            preferred_element_type=jnp.float32)

    def layer(x, w, b, pad):
        y = conv(x, w, pad) + b[None, None, None, :]
        return jnp.maximum(y, 0.0).astype(jnp.bfloat16)

    x = layer(x, rp['w1'], rp['b1'], 4)
    x = layer(x, rp['w2'], rp['b2'], 4)
    y = conv(x, rp['w3'], 4) + rp['b3'][None, None, None, :]
    N_, H_, W_, C_ = y.shape
    y = y.reshape(N_, H_ // 2, 2, W_ // 2, 2, C_).max(axis=(2, 4))
    y = y * rp['s3'][None, None, None, :] + rp['t3'][None, None, None, :]
    x = jnp.maximum(y, 0.0).astype(jnp.bfloat16)
    x = layer(x, rp['w4'], rp['b4'], 4)
    x = layer(x, rp['w5'], rp['b5'], 2)
    return jnp.transpose(x, (0, 3, 1, 2)).astype(jnp.float32)


# ----------------------------------- main ----------------------------------- #

if __name__ == "__main__":
    in_channels, out_channels = 4, 8
    N, H, W = 2, 16, 16

    key = jax.random.PRNGKey(0)
    k_x, k_p = jax.random.split(key)
    x = jax.random.normal(k_x, (N, in_channels, H, W), jnp.float32)   # NCHW input
    kparams, rparams = make_params(k_p, in_channels, out_channels, H, W)

    out = jax.block_until_ready(cpm_stage_x_forward(x, kparams))
    assert out.shape == (N, out_channels, H // 2, W // 2), out.shape

    ref = jax.block_until_ready(ref_forward(x, rparams))
    np.testing.assert_allclose(np.asarray(out), np.asarray(ref),
                               rtol=3e-2, atol=3e-2)

    print("KERNEL_OK")
</pallas_src>

<mosaic_0001>
module attributes {stable_mosaic.version = 11 : i64} {
  func.func @_conv_band_kernel(%arg0: i32, %arg1: memref<1x24x96xbf16, #tpu.memory_space<vmem>>, %arg2: memref<9x96x128xbf16, #tpu.memory_space<vmem>>, %arg3: memref<1x128xf32, #tpu.memory_space<vmem>>, %arg4: memref<1x16x128xbf16, #tpu.memory_space<vmem>>) attributes {dimension_semantics = [#tpu.dimension_semantics<parallel>], iteration_bounds = array<i64: 2>, scalar_prefetch = 0 : i64, scratch_operands = 0 : i64, tpu.core_type = #tpu.core_type<tc>, window_params = [{transform_indices = @transform_0, window_bounds = array<i64: 1, 24, 96>}, {pipeline_mode = #tpu.pipeline_mode<synchronous>, transform_indices = @transform_1, window_bounds = array<i64: 9, 96, 128>}, {pipeline_mode = #tpu.pipeline_mode<synchronous>, transform_indices = @transform_2, window_bounds = array<i64: 1, 128>}, {transform_indices = @transform_3, window_bounds = array<i64: 1, 16, 128>}]} {
    %cst = arith.constant 0.000000e+00 : f32
    %0 = vector.broadcast %cst : f32 to vector<16x128xf32>
    %c0 = arith.constant 0 : index
    %c0_0 = arith.constant 0 : index
    %c0_1 = arith.constant 0 : index
    %1 = vector.load %arg1[%c0, %c0_0, %c0_1] : memref<1x24x96xbf16, #tpu.memory_space<vmem>>, vector<1x16x96xbf16>
    %2 = vector.shape_cast %1 : vector<1x16x96xbf16> to vector<16x96xbf16>
    %c0_2 = arith.constant 0 : index
    %c0_3 = arith.constant 0 : index
    %c0_4 = arith.constant 0 : index
    %3 = vector.load %arg2[%c0_2, %c0_3, %c0_4] : memref<9x96x128xbf16, #tpu.memory_space<vmem>>, vector<1x96x128xbf16>
    %4 = vector.shape_cast %3 : vector<1x96x128xbf16> to vector<96x128xbf16>
    %cst_5 = arith.constant dense<0.000000e+00> : vector<16x128xf32>
    %5 = tpu.matmul %2, %4, %cst_5 {dimension_numbers = #tpu.dot_dimension_numbers<[1], [0], [0], [1], [0, 0, 1, 1], [], []>} : vector<16x96xbf16>, vector<96x128xbf16>, vector<16x128xf32> -> vector<16x128xf32>
    %6 = arith.addf %0, %5 : vector<16x128xf32>
    %c0_6 = arith.constant 0 : index
    %c1 = arith.constant 1 : index
    %c0_7 = arith.constant 0 : index
    %7 = vector.load %arg1[%c0_6, %c1, %c0_7] : memref<1x24x96xbf16, #tpu.memory_space<vmem>>, vector<1x16x96xbf16>
    %8 = vector.shape_cast %7 : vector<1x16x96xbf16> to vector<16x96xbf16>
    %c1_8 = arith.constant 1 : index
    %c0_9 = arith.constant 0 : index
    %c0_10 = arith.constant 0 : index
    %9 = vector.load %arg2[%c1_8, %c0_9, %c0_10] : memref<9x96x128xbf16, #tpu.memory_space<vmem>>, vector<1x96x128xbf16>
    %10 = vector.shape_cast %9 : vector<1x96x128xbf16> to vector<96x128xbf16>
    %cst_11 = arith.constant dense<0.000000e+00> : vector<16x128xf32>
    %11 = tpu.matmul %8, %10, %cst_11 {dimension_numbers = #tpu.dot_dimension_numbers<[1], [0], [0], [1], [0, 0, 1, 1], [], []>} : vector<16x96xbf16>, vector<96x128xbf16>, vector<16x128xf32> -> vector<16x128xf32>
    %12 = arith.addf %6, %11 : vector<16x128xf32>
    %c0_12 = arith.constant 0 : index
    %c2 = arith.constant 2 : index
    %c0_13 = arith.constant 0 : index
    %13 = vector.load %arg1[%c0_12, %c2, %c0_13] : memref<1x24x96xbf16, #tpu.memory_space<vmem>>, vector<1x16x96xbf16>
    %14 = vector.shape_cast %13 : vector<1x16x96xbf16> to vector<16x96xbf16>
    %c2_14 = arith.constant 2 : index
    %c0_15 = arith.constant 0 : index
    %c0_16 = arith.constant 0 : index
    %15 = vector.load %arg2[%c2_14, %c0_15, %c0_16] : memref<9x96x128xbf16, #tpu.memory_space<vmem>>, vector<1x96x128xbf16>
    %16 = vector.shape_cast %15 : vector<1x96x128xbf16> to vector<96x128xbf16>
    %cst_17 = arith.constant dense<0.000000e+00> : vector<16x128xf32>
    %17 = tpu.matmul %14, %16, %cst_17 {dimension_numbers = #tpu.dot_dimension_numbers<[1], [0], [0], [1], [0, 0, 1, 1], [], []>} : vector<16x96xbf16>, vector<96x128xbf16>, vector<16x128xf32> -> vector<16x128xf32>
    %18 = arith.addf %12, %17 : vector<16x128xf32>
    %c0_18 = arith.constant 0 : index
    %c3 = arith.constant 3 : index
    %c0_19 = arith.constant 0 : index
    %19 = vector.load %arg1[%c0_18, %c3, %c0_19] : memref<1x24x96xbf16, #tpu.memory_space<vmem>>, vector<1x16x96xbf16>
    %20 = vector.shape_cast %19 : vector<1x16x96xbf16> to vector<16x96xbf16>
    %c3_20 = arith.constant 3 : index
    %c0_21 = arith.constant 0 : index
    %c0_22 = arith.constant 0 : index
    %21 = vector.load %arg2[%c3_20, %c0_21, %c0_22] : memref<9x96x128xbf16, #tpu.memory_space<vmem>>, vector<1x96x128xbf16>
    %22 = vector.shape_cast %21 : vector<1x96x128xbf16> to vector<96x128xbf16>
    %cst_23 = arith.constant dense<0.000000e+00> : vector<16x128xf32>
    %23 = tpu.matmul %20, %22, %cst_23 {dimension_numbers = #tpu.dot_dimension_numbers<[1], [0], [0], [1], [0, 0, 1, 1], [], []>} : vector<16x96xbf16>, vector<96x128xbf16>, vector<16x128xf32> -> vector<16x128xf32>
    %24 = arith.addf %18, %23 : vector<16x128xf32>
    %c0_24 = arith.constant 0 : index
    %c4 = arith.constant 4 : index
    %c0_25 = arith.constant 0 : index
    %25 = vector.load %arg1[%c0_24, %c4, %c0_25] : memref<1x24x96xbf16, #tpu.memory_space<vmem>>, vector<1x16x96xbf16>
    %26 = vector.shape_cast %25 : vector<1x16x96xbf16> to vector<16x96xbf16>
    %c4_26 = arith.constant 4 : index
    %c0_27 = arith.constant 0 : index
    %c0_28 = arith.constant 0 : index
    %27 = vector.load %arg2[%c4_26, %c0_27, %c0_28] : memref<9x96x128xbf16, #tpu.memory_space<vmem>>, vector<1x96x128xbf16>
    %28 = vector.shape_cast %27 : vector<1x96x128xbf16> to vector<96x128xbf16>
    %cst_29 = arith.constant dense<0.000000e+00> : vector<16x128xf32>
    %29 = tpu.matmul %26, %28, %cst_29 {dimension_numbers = #tpu.dot_dimension_numbers<[1], [0], [0], [1], [0, 0, 1, 1], [], []>} : vector<16x96xbf16>, vector<96x128xbf16>, vector<16x128xf32> -> vector<16x128xf32>
    %30 = arith.addf %24, %29 : vector<16x128xf32>
    %c0_30 = arith.constant 0 : index
    %c5 = arith.constant 5 : index
    %c0_31 = arith.constant 0 : index
    %31 = vector.load %arg1[%c0_30, %c5, %c0_31] : memref<1x24x96xbf16, #tpu.memory_space<vmem>>, vector<1x16x96xbf16>
    %32 = vector.shape_cast %31 : vector<1x16x96xbf16> to vector<16x96xbf16>
    %c5_32 = arith.constant 5 : index
    %c0_33 = arith.constant 0 : index
    %c0_34 = arith.constant 0 : index
    %33 = vector.load %arg2[%c5_32, %c0_33, %c0_34] : memref<9x96x128xbf16, #tpu.memory_space<vmem>>, vector<1x96x128xbf16>
    %34 = vector.shape_cast %33 : vector<1x96x128xbf16> to vector<96x128xbf16>
    %cst_35 = arith.constant dense<0.000000e+00> : vector<16x128xf32>
    %35 = tpu.matmul %32, %34, %cst_35 {dimension_numbers = #tpu.dot_dimension_numbers<[1], [0], [0], [1], [0, 0, 1, 1], [], []>} : vector<16x96xbf16>, vector<96x128xbf16>, vector<16x128xf32> -> vector<16x128xf32>
    %36 = arith.addf %30, %35 : vector<16x128xf32>
    %c0_36 = arith.constant 0 : index
    %c6 = arith.constant 6 : index
    %c0_37 = arith.constant 0 : index
    %37 = vector.load %arg1[%c0_36, %c6, %c0_37] : memref<1x24x96xbf16, #tpu.memory_space<vmem>>, vector<1x16x96xbf16>
    %38 = vector.shape_cast %37 : vector<1x16x96xbf16> to vector<16x96xbf16>
    %c6_38 = arith.constant 6 : index
    %c0_39 = arith.constant 0 : index
    %c0_40 = arith.constant 0 : index
    %39 = vector.load %arg2[%c6_38, %c0_39, %c0_40] : memref<9x96x128xbf16, #tpu.memory_space<vmem>>, vector<1x96x128xbf16>
    %40 = vector.shape_cast %39 : vector<1x96x128xbf16> to vector<96x128xbf16>
    %cst_41 = arith.constant dense<0.000000e+00> : vector<16x128xf32>
    %41 = tpu.matmul %38, %40, %cst_41 {dimension_numbers = #tpu.dot_dimension_numbers<[1], [0], [0], [1], [0, 0, 1, 1], [], []>} : vector<16x96xbf16>, vector<96x128xbf16>, vector<16x128xf32> -> vector<16x128xf32>
    %42 = arith.addf %36, %41 : vector<16x128xf32>
    %c0_42 = arith.constant 0 : index
    %c7 = arith.constant 7 : index
    %c0_43 = arith.constant 0 : index
    %43 = vector.load %arg1[%c0_42, %c7, %c0_43] : memref<1x24x96xbf16, #tpu.memory_space<vmem>>, vector<1x16x96xbf16>
    %44 = vector.shape_cast %43 : vector<1x16x96xbf16> to vector<16x96xbf16>
    %c7_44 = arith.constant 7 : index
    %c0_45 = arith.constant 0 : index
    %c0_46 = arith.constant 0 : index
    %45 = vector.load %arg2[%c7_44, %c0_45, %c0_46] : memref<9x96x128xbf16, #tpu.memory_space<vmem>>, vector<1x96x128xbf16>
    %46 = vector.shape_cast %45 : vector<1x96x128xbf16> to vector<96x128xbf16>
    %cst_47 = arith.constant dense<0.000000e+00> : vector<16x128xf32>
    %47 = tpu.matmul %44, %46, %cst_47 {dimension_numbers = #tpu.dot_dimension_numbers<[1], [0], [0], [1], [0, 0, 1, 1], [], []>} : vector<16x96xbf16>, vector<96x128xbf16>, vector<16x128xf32> -> vector<16x128xf32>
    %48 = arith.addf %42, %47 : vector<16x128xf32>
    %c0_48 = arith.constant 0 : index
    %c8 = arith.constant 8 : index
    %c0_49 = arith.constant 0 : index
    %49 = vector.load %arg1[%c0_48, %c8, %c0_49] : memref<1x24x96xbf16, #tpu.memory_space<vmem>>, vector<1x16x96xbf16>
    %50 = vector.shape_cast %49 : vector<1x16x96xbf16> to vector<16x96xbf16>
    %c8_50 = arith.constant 8 : index
    %c0_51 = arith.constant 0 : index
    %c0_52 = arith.constant 0 : index
    %51 = vector.load %arg2[%c8_50, %c0_51, %c0_52] : memref<9x96x128xbf16, #tpu.memory_space<vmem>>, vector<1x96x128xbf16>
    %52 = vector.shape_cast %51 : vector<1x96x128xbf16> to vector<96x128xbf16>
    %cst_53 = arith.constant dense<0.000000e+00> : vector<16x128xf32>
    %53 = tpu.matmul %50, %52, %cst_53 {dimension_numbers = #tpu.dot_dimension_numbers<[1], [0], [0], [1], [0, 0, 1, 1], [], []>} : vector<16x96xbf16>, vector<96x128xbf16>, vector<16x128xf32> -> vector<16x128xf32>
    %54 = arith.addf %48, %53 : vector<16x128xf32>
    %c0_54 = arith.constant 0 : index
    %c0_55 = arith.constant 0 : index
    %55 = vector.load %arg3[%c0_54, %c0_55] : memref<1x128xf32, #tpu.memory_space<vmem>>, vector<1x128xf32>
    %56 = vector.broadcast %55 : vector<1x128xf32> to vector<16x128xf32>
    %57 = arith.addf %54, %56 : vector<16x128xf32>
    %cst_56 = arith.constant 0.000000e+00 : f32
    %58 = vector.broadcast %cst_56 : f32 to vector<16x128xf32>
    %59 = arith.maximumf %57, %58 : vector<16x128xf32>
    %60 = arith.truncf %59 : vector<16x128xf32> to vector<16x128xbf16>
    %c0_57 = arith.constant 0 : index
    %c0_58 = arith.constant 0 : index
    %c0_59 = arith.constant 0 : index
    %61 = vector.load %arg4[%c0_57, %c0_58, %c0_59] : memref<1x16x128xbf16, #tpu.memory_space<vmem>>, vector<1x16x128xbf16>
    %62 = vector.shape_cast %61 : vector<1x16x128xbf16> to vector<16x128xbf16>
    %63 = vector.shape_cast %60 : vector<16x128xbf16> to vector<1x16x128xbf16>
    tpu.vector_store %arg4[%c0_57, %c0_58, %c0_59], %63 {strides = array<i32>} : memref<1x16x128xbf16, #tpu.memory_space<vmem>>, vector<1x16x128xbf16>,
    return
  }
  func.func @transform_0(%arg0: i32) -> (i32, i32, i32) {
    %c0_i32 = arith.constant 0 : i32
    %c0_i32_0 = arith.constant 0 : i32
    %c0_i32_1 = arith.constant 0 : i32
    return %arg0, %c0_i32, %c0_i32_0 : i32, i32, i32
  }
  func.func @transform_1(%arg0: i32) -> (i32, i32, i32) {
    %c0_i32 = arith.constant 0 : i32
    %c0_i32_0 = arith.constant 0 : i32
    %c0_i32_1 = arith.constant 0 : i32
    %c0_i32_2 = arith.constant 0 : i32
    return %c0_i32, %c0_i32_0, %c0_i32_1 : i32, i32, i32
  }
  func.func @transform_2(%arg0: i32) -> (i32, i32) {
    %c0_i32 = arith.constant 0 : i32
    %c0_i32_0 = arith.constant 0 : i32
    %c0_i32_1 = arith.constant 0 : i32
    return %c0_i32, %c0_i32_0 : i32, i32
  }
  func.func @transform_3(%arg0: i32) -> (i32, i32, i32) {
    %c0_i32 = arith.constant 0 : i32
    %c0_i32_0 = arith.constant 0 : i32
    %c0_i32_1 = arith.constant 0 : i32
    return %arg0, %c0_i32, %c0_i32_0 : i32, i32, i32
  }
}

module attributes {stable_mosaic.version = 11 : i64} {
  func.func @_conv_band_kernel(%arg0: i32, %arg1: memref<1x24x192xbf16, #tpu.memory_space<vmem>>, %arg2: memref<9x192x128xbf16, #tpu.memory_space<vmem>>, %arg3: memref<1x128xf32, #tpu.memory_space<vmem>>, %arg4: memref<1x16x128xbf16, #tpu.memory_space<vmem>>) attributes {dimension_semantics = [#tpu.dimension_semantics<parallel>], iteration_bounds = array<i64: 2>, scalar_prefetch = 0 : i64, scratch_operands = 0 : i64, tpu.core_type = #tpu.core_type<tc>, window_params = [{transform_indices = @transform_0, window_bounds = array<i64: 1, 24, 192>}, {pipeline_mode = #tpu.pipeline_mode<synchronous>, transform_indices = @transform_1, window_bounds = array<i64: 9, 192, 128>}, {pipeline_mode = #tpu.pipeline_mode<synchronous>, transform_indices = @transform_2, window_bounds = array<i64: 1, 128>}, {transform_indices = @transform_3, window_bounds = array<i64: 1, 16, 128>}]} {
    %cst = arith.constant 0.000000e+00 : f32
    %0 = vector.broadcast %cst : f32 to vector<16x128xf32>
    %c0 = arith.constant 0 : index
    %c0_0 = arith.constant 0 : index
    %c0_1 = arith.constant 0 : index
    %1 = vector.load %arg1[%c0, %c0_0, %c0_1] : memref<1x24x192xbf16, #tpu.memory_space<vmem>>, vector<1x16x192xbf16>
    %2 = vector.shape_cast %1 : vector<1x16x192xbf16> to vector<16x192xbf16>
    %c0_2 = arith.constant 0 : index
    %c0_3 = arith.constant 0 : index
    %c0_4 = arith.constant 0 : index
    %3 = vector.load %arg2[%c0_2, %c0_3, %c0_4] : memref<9x192x128xbf16, #tpu.memory_space<vmem>>, vector<1x192x128xbf16>
    %4 = vector.shape_cast %3 : vector<1x192x128xbf16> to vector<192x128xbf16>
    %cst_5 = arith.constant dense<0.000000e+00> : vector<16x128xf32>
    %5 = tpu.matmul %2, %4, %cst_5 {dimension_numbers = #tpu.dot_dimension_numbers<[1], [0], [0], [1], [0, 0, 1, 1], [], []>} : vector<16x192xbf16>, vector<192x128xbf16>, vector<16x128xf32> -> vector<16x128xf32>
    %6 = arith.addf %0, %5 : vector<16x128xf32>
    %c0_6 = arith.constant 0 : index
    %c1 = arith.constant 1 : index
    %c0_7 = arith.constant 0 : index
    %7 = vector.load %arg1[%c0_6, %c1, %c0_7] : memref<1x24x192xbf16, #tpu.memory_space<vmem>>, vector<1x16x192xbf16>
    %8 = vector.shape_cast %7 : vector<1x16x192xbf16> to vector<16x192xbf16>
    %c1_8 = arith.constant 1 : index
    %c0_9 = arith.constant 0 : index
    %c0_10 = arith.constant 0 : index
    %9 = vector.load %arg2[%c1_8, %c0_9, %c0_10] : memref<9x192x128xbf16, #tpu.memory_space<vmem>>, vector<1x192x128xbf16>
    %10 = vector.shape_cast %9 : vector<1x192x128xbf16> to vector<192x128xbf16>
    %cst_11 = arith.constant dense<0.000000e+00> : vector<16x128xf32>
    %11 = tpu.matmul %8, %10, %cst_11 {dimension_numbers = #tpu.dot_dimension_numbers<[1], [0], [0], [1], [0, 0, 1, 1], [], []>} : vector<16x192xbf16>, vector<192x128xbf16>, vector<16x128xf32> -> vector<16x128xf32>
    %12 = arith.addf %6, %11 : vector<16x128xf32>
    %c0_12 = arith.constant 0 : index
    %c2 = arith.constant 2 : index
    %c0_13 = arith.constant 0 : index
    %13 = vector.load %arg1[%c0_12, %c2, %c0_13] : memref<1x24x192xbf16, #tpu.memory_space<vmem>>, vector<1x16x192xbf16>
    %14 = vector.shape_cast %13 : vector<1x16x192xbf16> to vector<16x192xbf16>
    %c2_14 = arith.constant 2 : index
    %c0_15 = arith.constant 0 : index
    %c0_16 = arith.constant 0 : index
    %15 = vector.load %arg2[%c2_14, %c0_15, %c0_16] : memref<9x192x128xbf16, #tpu.memory_space<vmem>>, vector<1x192x128xbf16>
    %16 = vector.shape_cast %15 : vector<1x192x128xbf16> to vector<192x128xbf16>
    %cst_17 = arith.constant dense<0.000000e+00> : vector<16x128xf32>
    %17 = tpu.matmul %14, %16, %cst_17 {dimension_numbers = #tpu.dot_dimension_numbers<[1], [0], [0], [1], [0, 0, 1, 1], [], []>} : vector<16x192xbf16>, vector<192x128xbf16>, vector<16x128xf32> -> vector<16x128xf32>
    %18 = arith.addf %12, %17 : vector<16x128xf32>
    %c0_18 = arith.constant 0 : index
    %c3 = arith.constant 3 : index
    %c0_19 = arith.constant 0 : index
    %19 = vector.load %arg1[%c0_18, %c3, %c0_19] : memref<1x24x192xbf16, #tpu.memory_space<vmem>>, vector<1x16x192xbf16>
    %20 = vector.shape_cast %19 : vector<1x16x192xbf16> to vector<16x192xbf16>
    %c3_20 = arith.constant 3 : index
    %c0_21 = arith.constant 0 : index
    %c0_22 = arith.constant 0 : index
    %21 = vector.load %arg2[%c3_20, %c0_21, %c0_22] : memref<9x192x128xbf16, #tpu.memory_space<vmem>>, vector<1x192x128xbf16>
    %22 = vector.shape_cast %21 : vector<1x192x128xbf16> to vector<192x128xbf16>
    %cst_23 = arith.constant dense<0.000000e+00> : vector<16x128xf32>
    %23 = tpu.matmul %20, %22, %cst_23 {dimension_numbers = #tpu.dot_dimension_numbers<[1], [0], [0], [1], [0, 0, 1, 1], [], []>} : vector<16x192xbf16>, vector<192x128xbf16>, vector<16x128xf32> -> vector<16x128xf32>
    %24 = arith.addf %18, %23 : vector<16x128xf32>
    %c0_24 = arith.constant 0 : index
    %c4 = arith.constant 4 : index
    %c0_25 = arith.constant 0 : index
    %25 = vector.load %arg1[%c0_24, %c4, %c0_25] : memref<1x24x192xbf16, #tpu.memory_space<vmem>>, vector<1x16x192xbf16>
    %26 = vector.shape_cast %25 : vector<1x16x192xbf16> to vector<16x192xbf16>
    %c4_26 = arith.constant 4 : index
    %c0_27 = arith.constant 0 : index
    %c0_28 = arith.constant 0 : index
    %27 = vector.load %arg2[%c4_26, %c0_27, %c0_28] : memref<9x192x128xbf16, #tpu.memory_space<vmem>>, vector<1x192x128xbf16>
    %28 = vector.shape_cast %27 : vector<1x192x128xbf16> to vector<192x128xbf16>
    %cst_29 = arith.constant dense<0.000000e+00> : vector<16x128xf32>
    %29 = tpu.matmul %26, %28, %cst_29 {dimension_numbers = #tpu.dot_dimension_numbers<[1], [0], [0], [1], [0, 0, 1, 1], [], []>} : vector<16x192xbf16>, vector<192x128xbf16>, vector<16x128xf32> -> vector<16x128xf32>
    %30 = arith.addf %24, %29 : vector<16x128xf32>
    %c0_30 = arith.constant 0 : index
    %c5 = arith.constant 5 : index
    %c0_31 = arith.constant 0 : index
    %31 = vector.load %arg1[%c0_30, %c5, %c0_31] : memref<1x24x192xbf16, #tpu.memory_space<vmem>>, vector<1x16x192xbf16>
    %32 = vector.shape_cast %31 : vector<1x16x192xbf16> to vector<16x192xbf16>
    %c5_32 = arith.constant 5 : index
    %c0_33 = arith.constant 0 : index
    %c0_34 = arith.constant 0 : index
    %33 = vector.load %arg2[%c5_32, %c0_33, %c0_34] : memref<9x192x128xbf16, #tpu.memory_space<vmem>>, vector<1x192x128xbf16>
    %34 = vector.shape_cast %33 : vector<1x192x128xbf16> to vector<192x128xbf16>
    %cst_35 = arith.constant dense<0.000000e+00> : vector<16x128xf32>
    %35 = tpu.matmul %32, %34, %cst_35 {dimension_numbers = #tpu.dot_dimension_numbers<[1], [0], [0], [1], [0, 0, 1, 1], [], []>} : vector<16x192xbf16>, vector<192x128xbf16>, vector<16x128xf32> -> vector<16x128xf32>
    %36 = arith.addf %30, %35 : vector<16x128xf32>
    %c0_36 = arith.constant 0 : index
    %c6 = arith.constant 6 : index
    %c0_37 = arith.constant 0 : index
    %37 = vector.load %arg1[%c0_36, %c6, %c0_37] : memref<1x24x192xbf16, #tpu.memory_space<vmem>>, vector<1x16x192xbf16>
    %38 = vector.shape_cast %37 : vector<1x16x192xbf16> to vector<16x192xbf16>
    %c6_38 = arith.constant 6 : index
    %c0_39 = arith.constant 0 : index
    %c0_40 = arith.constant 0 : index
    %39 = vector.load %arg2[%c6_38, %c0_39, %c0_40] : memref<9x192x128xbf16, #tpu.memory_space<vmem>>, vector<1x192x128xbf16>
    %40 = vector.shape_cast %39 : vector<1x192x128xbf16> to vector<192x128xbf16>
    %cst_41 = arith.constant dense<0.000000e+00> : vector<16x128xf32>
    %41 = tpu.matmul %38, %40, %cst_41 {dimension_numbers = #tpu.dot_dimension_numbers<[1], [0], [0], [1], [0, 0, 1, 1], [], []>} : vector<16x192xbf16>, vector<192x128xbf16>, vector<16x128xf32> -> vector<16x128xf32>
    %42 = arith.addf %36, %41 : vector<16x128xf32>
    %c0_42 = arith.constant 0 : index
    %c7 = arith.constant 7 : index
    %c0_43 = arith.constant 0 : index
    %43 = vector.load %arg1[%c0_42, %c7, %c0_43] : memref<1x24x192xbf16, #tpu.memory_space<vmem>>, vector<1x16x192xbf16>
    %44 = vector.shape_cast %43 : vector<1x16x192xbf16> to vector<16x192xbf16>
    %c7_44 = arith.constant 7 : index
    %c0_45 = arith.constant 0 : index
    %c0_46 = arith.constant 0 : index
    %45 = vector.load %arg2[%c7_44, %c0_45, %c0_46] : memref<9x192x128xbf16, #tpu.memory_space<vmem>>, vector<1x192x128xbf16>
    %46 = vector.shape_cast %45 : vector<1x192x128xbf16> to vector<192x128xbf16>
    %cst_47 = arith.constant dense<0.000000e+00> : vector<16x128xf32>
    %47 = tpu.matmul %44, %46, %cst_47 {dimension_numbers = #tpu.dot_dimension_numbers<[1], [0], [0], [1], [0, 0, 1, 1], [], []>} : vector<16x192xbf16>, vector<192x128xbf16>, vector<16x128xf32> -> vector<16x128xf32>
    %48 = arith.addf %42, %47 : vector<16x128xf32>
    %c0_48 = arith.constant 0 : index
    %c8 = arith.constant 8 : index
    %c0_49 = arith.constant 0 : index
    %49 = vector.load %arg1[%c0_48, %c8, %c0_49] : memref<1x24x192xbf16, #tpu.memory_space<vmem>>, vector<1x16x192xbf16>
    %50 = vector.shape_cast %49 : vector<1x16x192xbf16> to vector<16x192xbf16>
    %c8_50 = arith.constant 8 : index
    %c0_51 = arith.constant 0 : index
    %c0_52 = arith.constant 0 : index
    %51 = vector.load %arg2[%c8_50, %c0_51, %c0_52] : memref<9x192x128xbf16, #tpu.memory_space<vmem>>, vector<1x192x128xbf16>
    %52 = vector.shape_cast %51 : vector<1x192x128xbf16> to vector<192x128xbf16>
    %cst_53 = arith.constant dense<0.000000e+00> : vector<16x128xf32>
    %53 = tpu.matmul %50, %52, %cst_53 {dimension_numbers = #tpu.dot_dimension_numbers<[1], [0], [0], [1], [0, 0, 1, 1], [], []>} : vector<16x192xbf16>, vector<192x128xbf16>, vector<16x128xf32> -> vector<16x128xf32>
    %54 = arith.addf %48, %53 : vector<16x128xf32>
    %c0_54 = arith.constant 0 : index
    %c0_55 = arith.constant 0 : index
    %55 = vector.load %arg3[%c0_54, %c0_55] : memref<1x128xf32, #tpu.memory_space<vmem>>, vector<1x128xf32>
    %56 = vector.broadcast %55 : vector<1x128xf32> to vector<16x128xf32>
    %57 = arith.addf %54, %56 : vector<16x128xf32>
    %cst_56 = arith.constant 0.000000e+00 : f32
    %58 = vector.broadcast %cst_56 : f32 to vector<16x128xf32>
    %59 = arith.maximumf %57, %58 : vector<16x128xf32>
    %60 = arith.truncf %59 : vector<16x128xf32> to vector<16x128xbf16>
    %c0_57 = arith.constant 0 : index
    %c0_58 = arith.constant 0 : index
    %c0_59 = arith.constant 0 : index
    %61 = vector.load %arg4[%c0_57, %c0_58, %c0_59] : memref<1x16x128xbf16, #tpu.memory_space<vmem>>, vector<1x16x128xbf16>
    %62 = vector.shape_cast %61 : vector<1x16x128xbf16> to vector<16x128xbf16>
    %63 = vector.shape_cast %60 : vector<16x128xbf16> to vector<1x16x128xbf16>
    tpu.vector_store %arg4[%c0_57, %c0_58, %c0_59], %63 {strides = array<i32>} : memref<1x16x128xbf16, #tpu.memory_space<vmem>>, vector<1x16x128xbf16>,
    return
  }
  func.func @transform_0(%arg0: i32) -> (i32, i32, i32) {
    %c0_i32 = arith.constant 0 : i32
    %c0_i32_0 = arith.constant 0 : i32
    %c0_i32_1 = arith.constant 0 : i32
    return %arg0, %c0_i32, %c0_i32_0 : i32, i32, i32
  }
  func.func @transform_1(%arg0: i32) -> (i32, i32, i32) {
    %c0_i32 = arith.constant 0 : i32
    %c0_i32_0 = arith.constant 0 : i32
    %c0_i32_1 = arith.constant 0 : i32
    %c0_i32_2 = arith.constant 0 : i32
    return %c0_i32, %c0_i32_0, %c0_i32_1 : i32, i32, i32
  }
  func.func @transform_2(%arg0: i32) -> (i32, i32) {
    %c0_i32 = arith.constant 0 : i32
    %c0_i32_0 = arith.constant 0 : i32
    %c0_i32_1 = arith.constant 0 : i32
    return %c0_i32, %c0_i32_0 : i32, i32
  }
  func.func @transform_3(%arg0: i32) -> (i32, i32, i32) {
    %c0_i32 = arith.constant 0 : i32
    %c0_i32_0 = arith.constant 0 : i32
    %c0_i32_1 = arith.constant 0 : i32
    return %arg0, %c0_i32, %c0_i32_0 : i32, i32, i32
  }
}

module attributes {stable_mosaic.version = 11 : i64} {
  func.func @_conv_pool_bn_kernel(%arg0: i32, %arg1: memref<1x2x12x192xbf16, #tpu.memory_space<vmem>>, %arg2: memref<9x192x128xbf16, #tpu.memory_space<vmem>>, %arg3: memref<1x64xf32, #tpu.memory_space<vmem>>, %arg4: memref<1x64xf32, #tpu.memory_space<vmem>>, %arg5: memref<1x64xf32, #tpu.memory_space<vmem>>, %arg6: memref<1x8x64xbf16, #tpu.memory_space<vmem>>) attributes {dimension_semantics = [#tpu.dimension_semantics<parallel>], iteration_bounds = array<i64: 2>, scalar_prefetch = 0 : i64, scratch_operands = 0 : i64, tpu.core_type = #tpu.core_type<tc>, window_params = [{transform_indices = @transform_0, window_bounds = array<i64: 1, 2, 12, 192>}, {pipeline_mode = #tpu.pipeline_mode<synchronous>, transform_indices = @transform_1, window_bounds = array<i64: 9, 192, 128>}, {pipeline_mode = #tpu.pipeline_mode<synchronous>, transform_indices = @transform_2, window_bounds = array<i64: 1, 64>}, {pipeline_mode = #tpu.pipeline_mode<synchronous>, transform_indices = @transform_3, window_bounds = array<i64: 1, 64>}, {pipeline_mode = #tpu.pipeline_mode<synchronous>, transform_indices = @transform_4, window_bounds = array<i64: 1, 64>}, {transform_indices = @transform_5, window_bounds = array<i64: 1, 8, 64>}]} {
    %cst = arith.constant 0.000000e+00 : f32
    %0 = vector.broadcast %cst : f32 to vector<8x128xf32>
    %c0 = arith.constant 0 : index
    %c0_0 = arith.constant 0 : index
    %c0_1 = arith.constant 0 : index
    %c0_2 = arith.constant 0 : index
    %1 = vector.load %arg1[%c0, %c0_0, %c0_1, %c0_2] : memref<1x2x12x192xbf16, #tpu.memory_space<vmem>>, vector<1x1x8x192xbf16>
    %2 = vector.shape_cast %1 : vector<1x1x8x192xbf16> to vector<8x192xbf16>
    %c0_3 = arith.constant 0 : index
    %c0_4 = arith.constant 0 : index
    %c0_5 = arith.constant 0 : index
    %3 = vector.load %arg2[%c0_3, %c0_4, %c0_5] : memref<9x192x128xbf16, #tpu.memory_space<vmem>>, vector<1x192x128xbf16>
    %4 = vector.shape_cast %3 : vector<1x192x128xbf16> to vector<192x128xbf16>
    %cst_6 = arith.constant dense<0.000000e+00> : vector<8x128xf32>
    %5 = tpu.matmul %2, %4, %cst_6 {dimension_numbers = #tpu.dot_dimension_numbers<[1], [0], [0], [1], [0, 0, 1, 1], [], []>} : vector<8x192xbf16>, vector<192x128xbf16>, vector<8x128xf32> -> vector<8x128xf32>
    %6 = arith.addf %0, %5 : vector<8x128xf32>
    %c0_7 = arith.constant 0 : index
    %c1 = arith.constant 1 : index
    %c0_8 = arith.constant 0 : index
    %c0_9 = arith.constant 0 : index
    %7 = vector.load %arg1[%c0_7, %c1, %c0_8, %c0_9] : memref<1x2x12x192xbf16, #tpu.memory_space<vmem>>, vector<1x1x8x192xbf16>
    %8 = vector.shape_cast %7 : vector<1x1x8x192xbf16> to vector<8x192xbf16>
    %c1_10 = arith.constant 1 : index
    %c0_11 = arith.constant 0 : index
    %c0_12 = arith.constant 0 : index
    %9 = vector.load %arg2[%c1_10, %c0_11, %c0_12] : memref<9x192x128xbf16, #tpu.memory_space<vmem>>, vector<1x192x128xbf16>
    %10 = vector.shape_cast %9 : vector<1x192x128xbf16> to vector<192x128xbf16>
    %cst_13 = arith.constant dense<0.000000e+00> : vector<8x128xf32>
    %11 = tpu.matmul %8, %10, %cst_13 {dimension_numbers = #tpu.dot_dimension_numbers<[1], [0], [0], [1], [0, 0, 1, 1], [], []>} : vector<8x192xbf16>, vector<192x128xbf16>, vector<8x128xf32> -> vector<8x128xf32>
    %12 = arith.addf %6, %11 : vector<8x128xf32>
    %c0_14 = arith.constant 0 : index
    %c0_15 = arith.constant 0 : index
    %c1_16 = arith.constant 1 : index
    %c0_17 = arith.constant 0 : index
    %13 = vector.load %arg1[%c0_14, %c0_15, %c1_16, %c0_17] : memref<1x2x12x192xbf16, #tpu.memory_space<vmem>>, vector<1x1x8x192xbf16>
    %14 = vector.shape_cast %13 : vector<1x1x8x192xbf16> to vector<8x192xbf16>
    %c2 = arith.constant 2 : index
    %c0_18 = arith.constant 0 : index
    %c0_19 = arith.constant 0 : index
    %15 = vector.load %arg2[%c2, %c0_18, %c0_19] : memref<9x192x128xbf16, #tpu.memory_space<vmem>>, vector<1x192x128xbf16>
    %16 = vector.shape_cast %15 : vector<1x192x128xbf16> to vector<192x128xbf16>
    %cst_20 = arith.constant dense<0.000000e+00> : vector<8x128xf32>
    %17 = tpu.matmul %14, %16, %cst_20 {dimension_numbers = #tpu.dot_dimension_numbers<[1], [0], [0], [1], [0, 0, 1, 1], [], []>} : vector<8x192xbf16>, vector<192x128xbf16>, vector<8x128xf32> -> vector<8x128xf32>
    %18 = arith.addf %12, %17 : vector<8x128xf32>
    %c0_21 = arith.constant 0 : index
    %c1_22 = arith.constant 1 : index
    %c1_23 = arith.constant 1 : index
    %c0_24 = arith.constant 0 : index
    %19 = vector.load %arg1[%c0_21, %c1_22, %c1_23, %c0_24] : memref<1x2x12x192xbf16, #tpu.memory_space<vmem>>, vector<1x1x8x192xbf16>
    %20 = vector.shape_cast %19 : vector<1x1x8x192xbf16> to vector<8x192xbf16>
    %c3 = arith.constant 3 : index
    %c0_25 = arith.constant 0 : index
    %c0_26 = arith.constant 0 : index
    %21 = vector.load %arg2[%c3, %c0_25, %c0_26] : memref<9x192x128xbf16, #tpu.memory_space<vmem>>, vector<1x192x128xbf16>
    %22 = vector.shape_cast %21 : vector<1x192x128xbf16> to vector<192x128xbf16>
    %cst_27 = arith.constant dense<0.000000e+00> : vector<8x128xf32>
    %23 = tpu.matmul %20, %22, %cst_27 {dimension_numbers = #tpu.dot_dimension_numbers<[1], [0], [0], [1], [0, 0, 1, 1], [], []>} : vector<8x192xbf16>, vector<192x128xbf16>, vector<8x128xf32> -> vector<8x128xf32>
    %24 = arith.addf %18, %23 : vector<8x128xf32>
    %c0_28 = arith.constant 0 : index
    %c0_29 = arith.constant 0 : index
    %c2_30 = arith.constant 2 : index
    %c0_31 = arith.constant 0 : index
    %25 = vector.load %arg1[%c0_28, %c0_29, %c2_30, %c0_31] : memref<1x2x12x192xbf16, #tpu.memory_space<vmem>>, vector<1x1x8x192xbf16>
    %26 = vector.shape_cast %25 : vector<1x1x8x192xbf16> to vector<8x192xbf16>
    %c4 = arith.constant 4 : index
    %c0_32 = arith.constant 0 : index
    %c0_33 = arith.constant 0 : index
    %27 = vector.load %arg2[%c4, %c0_32, %c0_33] : memref<9x192x128xbf16, #tpu.memory_space<vmem>>, vector<1x192x128xbf16>
    %28 = vector.shape_cast %27 : vector<1x192x128xbf16> to vector<192x128xbf16>
    %cst_34 = arith.constant dense<0.000000e+00> : vector<8x128xf32>
    %29 = tpu.matmul %26, %28, %cst_34 {dimension_numbers = #tpu.dot_dimension_numbers<[1], [0], [0], [1], [0, 0, 1, 1], [], []>} : vector<8x192xbf16>, vector<192x128xbf16>, vector<8x128xf32> -> vector<8x128xf32>
    %30 = arith.addf %24, %29 : vector<8x128xf32>
    %c0_35 = arith.constant 0 : index
    %c1_36 = arith.constant 1 : index
    %c2_37 = arith.constant 2 : index
    %c0_38 = arith.constant 0 : index
    %31 = vector.load %arg1[%c0_35, %c1_36, %c2_37, %c0_38] : memref<1x2x12x192xbf16, #tpu.memory_space<vmem>>, vector<1x1x8x192xbf16>
    %32 = vector.shape_cast %31 : vector<1x1x8x192xbf16> to vector<8x192xbf16>
    %c5 = arith.constant 5 : index
    %c0_39 = arith.constant 0 : index
    %c0_40 = arith.constant 0 : index
    %33 = vector.load %arg2[%c5, %c0_39, %c0_40] : memref<9x192x128xbf16, #tpu.memory_space<vmem>>, vector<1x192x128xbf16>
    %34 = vector.shape_cast %33 : vector<1x192x128xbf16> to vector<192x128xbf16>
    %cst_41 = arith.constant dense<0.000000e+00> : vector<8x128xf32>
    %35 = tpu.matmul %32, %34, %cst_41 {dimension_numbers = #tpu.dot_dimension_numbers<[1], [0], [0], [1], [0, 0, 1, 1], [], []>} : vector<8x192xbf16>, vector<192x128xbf16>, vector<8x128xf32> -> vector<8x128xf32>
    %36 = arith.addf %30, %35 : vector<8x128xf32>
    %c0_42 = arith.constant 0 : index
    %c0_43 = arith.constant 0 : index
    %c3_44 = arith.constant 3 : index
    %c0_45 = arith.constant 0 : index
    %37 = vector.load %arg1[%c0_42, %c0_43, %c3_44, %c0_45] : memref<1x2x12x192xbf16, #tpu.memory_space<vmem>>, vector<1x1x8x192xbf16>
    %38 = vector.shape_cast %37 : vector<1x1x8x192xbf16> to vector<8x192xbf16>
    %c6 = arith.constant 6 : index
    %c0_46 = arith.constant 0 : index
    %c0_47 = arith.constant 0 : index
    %39 = vector.load %arg2[%c6, %c0_46, %c0_47] : memref<9x192x128xbf16, #tpu.memory_space<vmem>>, vector<1x192x128xbf16>
    %40 = vector.shape_cast %39 : vector<1x192x128xbf16> to vector<192x128xbf16>
    %cst_48 = arith.constant dense<0.000000e+00> : vector<8x128xf32>
    %41 = tpu.matmul %38, %40, %cst_48 {dimension_numbers = #tpu.dot_dimension_numbers<[1], [0], [0], [1], [0, 0, 1, 1], [], []>} : vector<8x192xbf16>, vector<192x128xbf16>, vector<8x128xf32> -> vector<8x128xf32>
    %42 = arith.addf %36, %41 : vector<8x128xf32>
    %c0_49 = arith.constant 0 : index
    %c1_50 = arith.constant 1 : index
    %c3_51 = arith.constant 3 : index
    %c0_52 = arith.constant 0 : index
    %43 = vector.load %arg1[%c0_49, %c1_50, %c3_51, %c0_52] : memref<1x2x12x192xbf16, #tpu.memory_space<vmem>>, vector<1x1x8x192xbf16>
    %44 = vector.shape_cast %43 : vector<1x1x8x192xbf16> to vector<8x192xbf16>
    %c7 = arith.constant 7 : index
    %c0_53 = arith.constant 0 : index
    %c0_54 = arith.constant 0 : index
    %45 = vector.load %arg2[%c7, %c0_53, %c0_54] : memref<9x192x128xbf16, #tpu.memory_space<vmem>>, vector<1x192x128xbf16>
    %46 = vector.shape_cast %45 : vector<1x192x128xbf16> to vector<192x128xbf16>
    %cst_55 = arith.constant dense<0.000000e+00> : vector<8x128xf32>
    %47 = tpu.matmul %44, %46, %cst_55 {dimension_numbers = #tpu.dot_dimension_numbers<[1], [0], [0], [1], [0, 0, 1, 1], [], []>} : vector<8x192xbf16>, vector<192x128xbf16>, vector<8x128xf32> -> vector<8x128xf32>
    %48 = arith.addf %42, %47 : vector<8x128xf32>
    %c0_56 = arith.constant 0 : index
    %c0_57 = arith.constant 0 : index
    %c4_58 = arith.constant 4 : index
    %c0_59 = arith.constant 0 : index
    %49 = vector.load %arg1[%c0_56, %c0_57, %c4_58, %c0_59] : memref<1x2x12x192xbf16, #tpu.memory_space<vmem>>, vector<1x1x8x192xbf16>
    %50 = vector.shape_cast %49 : vector<1x1x8x192xbf16> to vector<8x192xbf16>
    %c8 = arith.constant 8 : index
    %c0_60 = arith.constant 0 : index
    %c0_61 = arith.constant 0 : index
    %51 = vector.load %arg2[%c8, %c0_60, %c0_61] : memref<9x192x128xbf16, #tpu.memory_space<vmem>>, vector<1x192x128xbf16>
    %52 = vector.shape_cast %51 : vector<1x192x128xbf16> to vector<192x128xbf16>
    %cst_62 = arith.constant dense<0.000000e+00> : vector<8x128xf32>
    %53 = tpu.matmul %50, %52, %cst_62 {dimension_numbers = #tpu.dot_dimension_numbers<[1], [0], [0], [1], [0, 0, 1, 1], [], []>} : vector<8x192xbf16>, vector<192x128xbf16>, vector<8x128xf32> -> vector<8x128xf32>
    %54 = arith.addf %48, %53 : vector<8x128xf32>
    %cst_63 = arith.constant 0.000000e+00 : f32
    %55 = vector.broadcast %cst_63 : f32 to vector<8x128xf32>
    %c0_64 = arith.constant 0 : index
    %c1_65 = arith.constant 1 : index
    %c0_66 = arith.constant 0 : index
    %c0_67 = arith.constant 0 : index
    %56 = vector.load %arg1[%c0_64, %c1_65, %c0_66, %c0_67] : memref<1x2x12x192xbf16, #tpu.memory_space<vmem>>, vector<1x1x8x192xbf16>
    %57 = vector.shape_cast %56 : vector<1x1x8x192xbf16> to vector<8x192xbf16>
    %c0_68 = arith.constant 0 : index
    %c0_69 = arith.constant 0 : index
    %c0_70 = arith.constant 0 : index
    %58 = vector.load %arg2[%c0_68, %c0_69, %c0_70] : memref<9x192x128xbf16, #tpu.memory_space<vmem>>, vector<1x192x128xbf16>
    %59 = vector.shape_cast %58 : vector<1x192x128xbf16> to vector<192x128xbf16>
    %cst_71 = arith.constant dense<0.000000e+00> : vector<8x128xf32>
    %60 = tpu.matmul %57, %59, %cst_71 {dimension_numbers = #tpu.dot_dimension_numbers<[1], [0], [0], [1], [0, 0, 1, 1], [], []>} : vector<8x192xbf16>, vector<192x128xbf16>, vector<8x128xf32> -> vector<8x128xf32>
    %61 = arith.addf %55, %60 : vector<8x128xf32>
    %c0_72 = arith.constant 0 : index
    %c0_73 = arith.constant 0 : index
    %c1_74 = arith.constant 1 : index
    %c0_75 = arith.constant 0 : index
    %62 = vector.load %arg1[%c0_72, %c0_73, %c1_74, %c0_75] : memref<1x2x12x192xbf16, #tpu.memory_space<vmem>>, vector<1x1x8x192xbf16>
    %63 = vector.shape_cast %62 : vector<1x1x8x192xbf16> to vector<8x192xbf16>
    %c1_76 = arith.constant 1 : index
    %c0_77 = arith.constant 0 : index
    %c0_78 = arith.constant 0 : index
    %64 = vector.load %arg2[%c1_76, %c0_77, %c0_78] : memref<9x192x128xbf16, #tpu.memory_space<vmem>>, vector<1x192x128xbf16>
    %65 = vector.shape_cast %64 : vector<1x192x128xbf16> to vector<192x128xbf16>
    %cst_79 = arith.constant dense<0.000000e+00> : vector<8x128xf32>
    %66 = tpu.matmul %63, %65, %cst_79 {dimension_numbers = #tpu.dot_dimension_numbers<[1], [0], [0], [1], [0, 0, 1, 1], [], []>} : vector<8x192xbf16>, vector<192x128xbf16>, vector<8x128xf32> -> vector<8x128xf32>
    %67 = arith.addf %61, %66 : vector<8x128xf32>
    %c0_80 = arith.constant 0 : index
    %c1_81 = arith.constant 1 : index
    %c1_82 = arith.constant 1 : index
    %c0_83 = arith.constant 0 : index
    %68 = vector.load %arg1[%c0_80, %c1_81, %c1_82, %c0_83] : memref<1x2x12x192xbf16, #tpu.memory_space<vmem>>, vector<1x1x8x192xbf16>
    %69 = vector.shape_cast %68 : vector<1x1x8x192xbf16> to vector<8x192xbf16>
    %c2_84 = arith.constant 2 : index
    %c0_85 = arith.constant 0 : index
    %c0_86 = arith.constant 0 : index
    %70 = vector.load %arg2[%c2_84, %c0_85, %c0_86] : memref<9x192x128xbf16, #tpu.memory_space<vmem>>, vector<1x192x128xbf16>
    %71 = vector.shape_cast %70 : vector<1x192x128xbf16> to vector<192x128xbf16>
    %cst_87 = arith.constant dense<0.000000e+00> : vector<8x128xf32>
    %72 = tpu.matmul %69, %71, %cst_87 {dimension_numbers = #tpu.dot_dimension_numbers<[1], [0], [0], [1], [0, 0, 1, 1], [], []>} : vector<8x192xbf16>, vector<192x128xbf16>, vector<8x128xf32> -> vector<8x128xf32>
    %73 = arith.addf %67, %72 : vector<8x128xf32>
    %c0_88 = arith.constant 0 : index
    %c0_89 = arith.constant 0 : index
    %c2_90 = arith.constant 2 : index
    %c0_91 = arith.constant 0 : index
    %74 = vector.load %arg1[%c0_88, %c0_89, %c2_90, %c0_91] : memref<1x2x12x192xbf16, #tpu.memory_space<vmem>>, vector<1x1x8x192xbf16>
    %75 = vector.shape_cast %74 : vector<1x1x8x192xbf16> to vector<8x192xbf16>
    %c3_92 = arith.constant 3 : index
    %c0_93 = arith.constant 0 : index
    %c0_94 = arith.constant 0 : index
    %76 = vector.load %arg2[%c3_92, %c0_93, %c0_94] : memref<9x192x128xbf16, #tpu.memory_space<vmem>>, vector<1x192x128xbf16>
    %77 = vector.shape_cast %76 : vector<1x192x128xbf16> to vector<192x128xbf16>
    %cst_95 = arith.constant dense<0.000000e+00> : vector<8x128xf32>
    %78 = tpu.matmul %75, %77, %cst_95 {dimension_numbers = #tpu.dot_dimension_numbers<[1], [0], [0], [1], [0, 0, 1, 1], [], []>} : vector<8x192xbf16>, vector<192x128xbf16>, vector<8x128xf32> -> vector<8x128xf32>
    %79 = arith.addf %73, %78 : vector<8x128xf32>
    %c0_96 = arith.constant 0 : index
    %c1_97 = arith.constant 1 : index
    %c2_98 = arith.constant 2 : index
    %c0_99 = arith.constant 0 : index
    %80 = vector.load %arg1[%c0_96, %c1_97, %c2_98, %c0_99] : memref<1x2x12x192xbf16, #tpu.memory_space<vmem>>, vector<1x1x8x192xbf16>
    %81 = vector.shape_cast %80 : vector<1x1x8x192xbf16> to vector<8x192xbf16>
    %c4_100 = arith.constant 4 : index
    %c0_101 = arith.constant 0 : index
    %c0_102 = arith.constant 0 : index
    %82 = vector.load %arg2[%c4_100, %c0_101, %c0_102] : memref<9x192x128xbf16, #tpu.memory_space<vmem>>, vector<1x192x128xbf16>
    %83 = vector.shape_cast %82 : vector<1x192x128xbf16> to vector<192x128xbf16>
    %cst_103 = arith.constant dense<0.000000e+00> : vector<8x128xf32>
    %84 = tpu.matmul %81, %83, %cst_103 {dimension_numbers = #tpu.dot_dimension_numbers<[1], [0], [0], [1], [0, 0, 1, 1], [], []>} : vector<8x192xbf16>, vector<192x128xbf16>, vector<8x128xf32> -> vector<8x128xf32>
    %85 = arith.addf %79, %84 : vector<8x128xf32>
    %c0_104 = arith.constant 0 : index
    %c0_105 = arith.constant 0 : index
    %c3_106 = arith.constant 3 : index
    %c0_107 = arith.constant 0 : index
    %86 = vector.load %arg1[%c0_104, %c0_105, %c3_106, %c0_107] : memref<1x2x12x192xbf16, #tpu.memory_space<vmem>>, vector<1x1x8x192xbf16>
    %87 = vector.shape_cast %86 : vector<1x1x8x192xbf16> to vector<8x192xbf16>
    %c5_108 = arith.constant 5 : index
    %c0_109 = arith.constant 0 : index
    %c0_110 = arith.constant 0 : index
    %88 = vector.load %arg2[%c5_108, %c0_109, %c0_110] : memref<9x192x128xbf16, #tpu.memory_space<vmem>>, vector<1x192x128xbf16>
    %89 = vector.shape_cast %88 : vector<1x192x128xbf16> to vector<192x128xbf16>
    %cst_111 = arith.constant dense<0.000000e+00> : vector<8x128xf32>
    %90 = tpu.matmul %87, %89, %cst_111 {dimension_numbers = #tpu.dot_dimension_numbers<[1], [0], [0], [1], [0, 0, 1, 1], [], []>} : vector<8x192xbf16>, vector<192x128xbf16>, vector<8x128xf32> -> vector<8x128xf32>
    %91 = arith.addf %85, %90 : vector<8x128xf32>
    %c0_112 = arith.constant 0 : index
    %c1_113 = arith.constant 1 : index
    %c3_114 = arith.constant 3 : index
    %c0_115 = arith.constant 0 : index
    %92 = vector.load %arg1[%c0_112, %c1_113, %c3_114, %c0_115] : memref<1x2x12x192xbf16, #tpu.memory_space<vmem>>, vector<1x1x8x192xbf16>
    %93 = vector.shape_cast %92 : vector<1x1x8x192xbf16> to vector<8x192xbf16>
    %c6_116 = arith.constant 6 : index
    %c0_117 = arith.constant 0 : index
    %c0_118 = arith.constant 0 : index
    %94 = vector.load %arg2[%c6_116, %c0_117, %c0_118] : memref<9x192x128xbf16, #tpu.memory_space<vmem>>, vector<1x192x128xbf16>
    %95 = vector.shape_cast %94 : vector<1x192x128xbf16> to vector<192x128xbf16>
    %cst_119 = arith.constant dense<0.000000e+00> : vector<8x128xf32>
    %96 = tpu.matmul %93, %95, %cst_119 {dimension_numbers = #tpu.dot_dimension_numbers<[1], [0], [0], [1], [0, 0, 1, 1], [], []>} : vector<8x192xbf16>, vector<192x128xbf16>, vector<8x128xf32> -> vector<8x128xf32>
    %97 = arith.addf %91, %96 : vector<8x128xf32>
    %c0_120 = arith.constant 0 : index
    %c0_121 = arith.constant 0 : index
    %c4_122 = arith.constant 4 : index
    %c0_123 = arith.constant 0 : index
    %98 = vector.load %arg1[%c0_120, %c0_121, %c4_122, %c0_123] : memref<1x2x12x192xbf16, #tpu.memory_space<vmem>>, vector<1x1x8x192xbf16>
    %99 = vector.shape_cast %98 : vector<1x1x8x192xbf16> to vector<8x192xbf16>
    %c7_124 = arith.constant 7 : index
    %c0_125 = arith.constant 0 : index
    %c0_126 = arith.constant 0 : index
    %100 = vector.load %arg2[%c7_124, %c0_125, %c0_126] : memref<9x192x128xbf16, #tpu.memory_space<vmem>>, vector<1x192x128xbf16>
    %101 = vector.shape_cast %100 : vector<1x192x128xbf16> to vector<192x128xbf16>
    %cst_127 = arith.constant dense<0.000000e+00> : vector<8x128xf32>
    %102 = tpu.matmul %99, %101, %cst_127 {dimension_numbers = #tpu.dot_dimension_numbers<[1], [0], [0], [1], [0, 0, 1, 1], [], []>} : vector<8x192xbf16>, vector<192x128xbf16>, vector<8x128xf32> -> vector<8x128xf32>
    %103 = arith.addf %97, %102 : vector<8x128xf32>
    %c0_128 = arith.constant 0 : index
    %c1_129 = arith.constant 1 : index
    %c4_130 = arith.constant 4 : index
    %c0_131 = arith.constant 0 : index
    %104 = vector.load %arg1[%c0_128, %c1_129, %c4_130, %c0_131] : memref<1x2x12x192xbf16, #tpu.memory_space<vmem>>, vector<1x1x8x192xbf16>
    %105 = vector.shape_cast %104 : vector<1x1x8x192xbf16> to vector<8x192xbf16>
    %c8_132 = arith.constant 8 : index
    %c0_133 = arith.constant 0 : index
    %c0_134 = arith.constant 0 : index
    %106 = vector.load %arg2[%c8_132, %c0_133, %c0_134] : memref<9x192x128xbf16, #tpu.memory_space<vmem>>, vector<1x192x128xbf16>
    %107 = vector.shape_cast %106 : vector<1x192x128xbf16> to vector<192x128xbf16>
    %cst_135 = arith.constant dense<0.000000e+00> : vector<8x128xf32>
    %108 = tpu.matmul %105, %107, %cst_135 {dimension_numbers = #tpu.dot_dimension_numbers<[1], [0], [0], [1], [0, 0, 1, 1], [], []>} : vector<8x192xbf16>, vector<192x128xbf16>, vector<8x128xf32> -> vector<8x128xf32>
    %109 = arith.addf %103, %108 : vector<8x128xf32>
    %110 = arith.maximumf %54, %109 : vector<8x128xf32>
    %111 = vector.extract_strided_slice %110 {offsets = [0, 0], sizes = [8, 64], strides = [1, 1]} : vector<8x128xf32> to vector<8x64xf32>
    %112 = vector.extract_strided_slice %110 {offsets = [0, 64], sizes = [8, 64], strides = [1, 1]} : vector<8x128xf32> to vector<8x64xf32>
    %113 = arith.maximumf %111, %112 : vector<8x64xf32>
    %c0_136 = arith.constant 0 : index
    %c0_137 = arith.constant 0 : index
    %114 = vector.load %arg3[%c0_136, %c0_137] : memref<1x64xf32, #tpu.memory_space<vmem>>, vector<1x64xf32>
    %115 = vector.broadcast %114 : vector<1x64xf32> to vector<8x64xf32>
    %116 = arith.addf %113, %115 : vector<8x64xf32>
    %c0_138 = arith.constant 0 : index
    %c0_139 = arith.constant 0 : index
    %117 = vector.load %arg4[%c0_138, %c0_139] : memref<1x64xf32, #tpu.memory_space<vmem>>, vector<1x64xf32>
    %118 = vector.broadcast %117 : vector<1x64xf32> to vector<8x64xf32>
    %119 = arith.mulf %116, %118 : vector<8x64xf32>
    %c0_140 = arith.constant 0 : index
    %c0_141 = arith.constant 0 : index
    %120 = vector.load %arg5[%c0_140, %c0_141] : memref<1x64xf32, #tpu.memory_space<vmem>>, vector<1x64xf32>
    %121 = vector.broadcast %120 : vector<1x64xf32> to vector<8x64xf32>
    %122 = arith.addf %119, %121 : vector<8x64xf32>
    %cst_142 = arith.constant 0.000000e+00 : f32
    %123 = vector.broadcast %cst_142 : f32 to vector<8x64xf32>
    %124 = arith.maximumf %122, %123 : vector<8x64xf32>
    %125 = arith.truncf %124 : vector<8x64xf32> to vector<8x64xbf16>
    %c0_143 = arith.constant 0 : index
    %c0_144 = arith.constant 0 : index
    %c0_145 = arith.constant 0 : index
    %126 = vector.load %arg6[%c0_143, %c0_144, %c0_145] : memref<1x8x64xbf16, #tpu.memory_space<vmem>>, vector<1x8x64xbf16>
    %127 = vector.shape_cast %126 : vector<1x8x64xbf16> to vector<8x64xbf16>
    %128 = vector.shape_cast %125 : vector<8x64xbf16> to vector<1x8x64xbf16>
    tpu.vector_store %arg6[%c0_143, %c0_144, %c0_145], %128 {strides = array<i32>} : memref<1x8x64xbf16, #tpu.memory_space<vmem>>, vector<1x8x64xbf16>,
    return
  }
  func.func @transform_0(%arg0: i32) -> (i32, i32, i32, i32) {
    %c0_i32 = arith.constant 0 : i32
    %c0_i32_0 = arith.constant 0 : i32
    %c0_i32_1 = arith.constant 0 : i32
    %c0_i32_2 = arith.constant 0 : i32
    return %arg0, %c0_i32, %c0_i32_0, %c0_i32_1 : i32, i32, i32, i32
  }
  func.func @transform_1(%arg0: i32) -> (i32, i32, i32) {
    %c0_i32 = arith.constant 0 : i32
    %c0_i32_0 = arith.constant 0 : i32
    %c0_i32_1 = arith.constant 0 : i32
    %c0_i32_2 = arith.constant 0 : i32
    return %c0_i32, %c0_i32_0, %c0_i32_1 : i32, i32, i32
  }
  func.func @transform_2(%arg0: i32) -> (i32, i32) {
    %c0_i32 = arith.constant 0 : i32
    %c0_i32_0 = arith.constant 0 : i32
    %c0_i32_1 = arith.constant 0 : i32
    return %c0_i32, %c0_i32_0 : i32, i32
  }
  func.func @transform_3(%arg0: i32) -> (i32, i32) {
    %c0_i32 = arith.constant 0 : i32
    %c0_i32_0 = arith.constant 0 : i32
    %c0_i32_1 = arith.constant 0 : i32
    return %c0_i32, %c0_i32_0 : i32, i32
  }
  func.func @transform_4(%arg0: i32) -> (i32, i32) {
    %c0_i32 = arith.constant 0 : i32
    %c0_i32_0 = arith.constant 0 : i32
    %c0_i32_1 = arith.constant 0 : i32
    return %c0_i32, %c0_i32_0 : i32, i32
  }
  func.func @transform_5(%arg0: i32) -> (i32, i32, i32) {
    %c0_i32 = arith.constant 0 : i32
    %c0_i32_0 = arith.constant 0 : i32
    %c0_i32_1 = arith.constant 0 : i32
    return %arg0, %c0_i32, %c0_i32_0 : i32, i32, i32
  }
}

module attributes {stable_mosaic.version = 11 : i64} {
  func.func @_conv_band_kernel(%arg0: i32, %arg1: memref<1x16x128xbf16, #tpu.memory_space<vmem>>, %arg2: memref<9x128x128xbf16, #tpu.memory_space<vmem>>, %arg3: memref<1x128xf32, #tpu.memory_space<vmem>>, %arg4: memref<1x8x128xbf16, #tpu.memory_space<vmem>>) attributes {dimension_semantics = [#tpu.dimension_semantics<parallel>], iteration_bounds = array<i64: 2>, scalar_prefetch = 0 : i64, scratch_operands = 0 : i64, tpu.core_type = #tpu.core_type<tc>, window_params = [{transform_indices = @transform_0, window_bounds = array<i64: 1, 16, 128>}, {pipeline_mode = #tpu.pipeline_mode<synchronous>, transform_indices = @transform_1, window_bounds = array<i64: 9, 128, 128>}, {pipeline_mode = #tpu.pipeline_mode<synchronous>, transform_indices = @transform_2, window_bounds = array<i64: 1, 128>}, {transform_indices = @transform_3, window_bounds = array<i64: 1, 8, 128>}]} {
    %cst = arith.constant 0.000000e+00 : f32
    %0 = vector.broadcast %cst : f32 to vector<8x128xf32>
    %c0 = arith.constant 0 : index
    %c0_0 = arith.constant 0 : index
    %c0_1 = arith.constant 0 : index
    %1 = vector.load %arg1[%c0, %c0_0, %c0_1] : memref<1x16x128xbf16, #tpu.memory_space<vmem>>, vector<1x8x128xbf16>
    %2 = vector.shape_cast %1 : vector<1x8x128xbf16> to vector<8x128xbf16>
    %c0_2 = arith.constant 0 : index
    %c0_3 = arith.constant 0 : index
    %c0_4 = arith.constant 0 : index
    %3 = vector.load %arg2[%c0_2, %c0_3, %c0_4] : memref<9x128x128xbf16, #tpu.memory_space<vmem>>, vector<1x128x128xbf16>
    %4 = vector.shape_cast %3 : vector<1x128x128xbf16> to vector<128x128xbf16>
    %cst_5 = arith.constant dense<0.000000e+00> : vector<8x128xf32>
    %5 = tpu.matmul %2, %4, %cst_5 {dimension_numbers = #tpu.dot_dimension_numbers<[1], [0], [0], [1], [0, 0, 1, 1], [], []>} : vector<8x128xbf16>, vector<128x128xbf16>, vector<8x128xf32> -> vector<8x128xf32>
    %6 = arith.addf %0, %5 : vector<8x128xf32>
    %c0_6 = arith.constant 0 : index
    %c1 = arith.constant 1 : index
    %c0_7 = arith.constant 0 : index
    %7 = vector.load %arg1[%c0_6, %c1, %c0_7] : memref<1x16x128xbf16, #tpu.memory_space<vmem>>, vector<1x8x128xbf16>
    %8 = vector.shape_cast %7 : vector<1x8x128xbf16> to vector<8x128xbf16>
    %c1_8 = arith.constant 1 : index
    %c0_9 = arith.constant 0 : index
    %c0_10 = arith.constant 0 : index
    %9 = vector.load %arg2[%c1_8, %c0_9, %c0_10] : memref<9x128x128xbf16, #tpu.memory_space<vmem>>, vector<1x128x128xbf16>
    %10 = vector.shape_cast %9 : vector<1x128x128xbf16> to vector<128x128xbf16>
    %cst_11 = arith.constant dense<0.000000e+00> : vector<8x128xf32>
    %11 = tpu.matmul %8, %10, %cst_11 {dimension_numbers = #tpu.dot_dimension_numbers<[1], [0], [0], [1], [0, 0, 1, 1], [], []>} : vector<8x128xbf16>, vector<128x128xbf16>, vector<8x128xf32> -> vector<8x128xf32>
    %12 = arith.addf %6, %11 : vector<8x128xf32>
    %c0_12 = arith.constant 0 : index
    %c2 = arith.constant 2 : index
    %c0_13 = arith.constant 0 : index
    %13 = vector.load %arg1[%c0_12, %c2, %c0_13] : memref<1x16x128xbf16, #tpu.memory_space<vmem>>, vector<1x8x128xbf16>
    %14 = vector.shape_cast %13 : vector<1x8x128xbf16> to vector<8x128xbf16>
    %c2_14 = arith.constant 2 : index
    %c0_15 = arith.constant 0 : index
    %c0_16 = arith.constant 0 : index
    %15 = vector.load %arg2[%c2_14, %c0_15, %c0_16] : memref<9x128x128xbf16, #tpu.memory_space<vmem>>, vector<1x128x128xbf16>
    %16 = vector.shape_cast %15 : vector<1x128x128xbf16> to vector<128x128xbf16>
    %cst_17 = arith.constant dense<0.000000e+00> : vector<8x128xf32>
    %17 = tpu.matmul %14, %16, %cst_17 {dimension_numbers = #tpu.dot_dimension_numbers<[1], [0], [0], [1], [0, 0, 1, 1], [], []>} : vector<8x128xbf16>, vector<128x128xbf16>, vector<8x128xf32> -> vector<8x128xf32>
    %18 = arith.addf %12, %17 : vector<8x128xf32>
    %c0_18 = arith.constant 0 : index
    %c3 = arith.constant 3 : index
    %c0_19 = arith.constant 0 : index
    %19 = vector.load %arg1[%c0_18, %c3, %c0_19] : memref<1x16x128xbf16, #tpu.memory_space<vmem>>, vector<1x8x128xbf16>
    %20 = vector.shape_cast %19 : vector<1x8x128xbf16> to vector<8x128xbf16>
    %c3_20 = arith.constant 3 : index
    %c0_21 = arith.constant 0 : index
    %c0_22 = arith.constant 0 : index
    %21 = vector.load %arg2[%c3_20, %c0_21, %c0_22] : memref<9x128x128xbf16, #tpu.memory_space<vmem>>, vector<1x128x128xbf16>
    %22 = vector.shape_cast %21 : vector<1x128x128xbf16> to vector<128x128xbf16>
    %cst_23 = arith.constant dense<0.000000e+00> : vector<8x128xf32>
    %23 = tpu.matmul %20, %22, %cst_23 {dimension_numbers = #tpu.dot_dimension_numbers<[1], [0], [0], [1], [0, 0, 1, 1], [], []>} : vector<8x128xbf16>, vector<128x128xbf16>, vector<8x128xf32> -> vector<8x128xf32>
    %24 = arith.addf %18, %23 : vector<8x128xf32>
    %c0_24 = arith.constant 0 : index
    %c4 = arith.constant 4 : index
    %c0_25 = arith.constant 0 : index
    %25 = vector.load %arg1[%c0_24, %c4, %c0_25] : memref<1x16x128xbf16, #tpu.memory_space<vmem>>, vector<1x8x128xbf16>
    %26 = vector.shape_cast %25 : vector<1x8x128xbf16> to vector<8x128xbf16>
    %c4_26 = arith.constant 4 : index
    %c0_27 = arith.constant 0 : index
    %c0_28 = arith.constant 0 : index
    %27 = vector.load %arg2[%c4_26, %c0_27, %c0_28] : memref<9x128x128xbf16, #tpu.memory_space<vmem>>, vector<1x128x128xbf16>
    %28 = vector.shape_cast %27 : vector<1x128x128xbf16> to vector<128x128xbf16>
    %cst_29 = arith.constant dense<0.000000e+00> : vector<8x128xf32>
    %29 = tpu.matmul %26, %28, %cst_29 {dimension_numbers = #tpu.dot_dimension_numbers<[1], [0], [0], [1], [0, 0, 1, 1], [], []>} : vector<8x128xbf16>, vector<128x128xbf16>, vector<8x128xf32> -> vector<8x128xf32>
    %30 = arith.addf %24, %29 : vector<8x128xf32>
    %c0_30 = arith.constant 0 : index
    %c5 = arith.constant 5 : index
    %c0_31 = arith.constant 0 : index
    %31 = vector.load %arg1[%c0_30, %c5, %c0_31] : memref<1x16x128xbf16, #tpu.memory_space<vmem>>, vector<1x8x128xbf16>
    %32 = vector.shape_cast %31 : vector<1x8x128xbf16> to vector<8x128xbf16>
    %c5_32 = arith.constant 5 : index
    %c0_33 = arith.constant 0 : index
    %c0_34 = arith.constant 0 : index
    %33 = vector.load %arg2[%c5_32, %c0_33, %c0_34] : memref<9x128x128xbf16, #tpu.memory_space<vmem>>, vector<1x128x128xbf16>
    %34 = vector.shape_cast %33 : vector<1x128x128xbf16> to vector<128x128xbf16>
    %cst_35 = arith.constant dense<0.000000e+00> : vector<8x128xf32>
    %35 = tpu.matmul %32, %34, %cst_35 {dimension_numbers = #tpu.dot_dimension_numbers<[1], [0], [0], [1], [0, 0, 1, 1], [], []>} : vector<8x128xbf16>, vector<128x128xbf16>, vector<8x128xf32> -> vector<8x128xf32>
    %36 = arith.addf %30, %35 : vector<8x128xf32>
    %c0_36 = arith.constant 0 : index
    %c6 = arith.constant 6 : index
    %c0_37 = arith.constant 0 : index
    %37 = vector.load %arg1[%c0_36, %c6, %c0_37] : memref<1x16x128xbf16, #tpu.memory_space<vmem>>, vector<1x8x128xbf16>
    %38 = vector.shape_cast %37 : vector<1x8x128xbf16> to vector<8x128xbf16>
    %c6_38 = arith.constant 6 : index
    %c0_39 = arith.constant 0 : index
    %c0_40 = arith.constant 0 : index
    %39 = vector.load %arg2[%c6_38, %c0_39, %c0_40] : memref<9x128x128xbf16, #tpu.memory_space<vmem>>, vector<1x128x128xbf16>
    %40 = vector.shape_cast %39 : vector<1x128x128xbf16> to vector<128x128xbf16>
    %cst_41 = arith.constant dense<0.000000e+00> : vector<8x128xf32>
    %41 = tpu.matmul %38, %40, %cst_41 {dimension_numbers = #tpu.dot_dimension_numbers<[1], [0], [0], [1], [0, 0, 1, 1], [], []>} : vector<8x128xbf16>, vector<128x128xbf16>, vector<8x128xf32> -> vector<8x128xf32>
    %42 = arith.addf %36, %41 : vector<8x128xf32>
    %c0_42 = arith.constant 0 : index
    %c7 = arith.constant 7 : index
    %c0_43 = arith.constant 0 : index
    %43 = vector.load %arg1[%c0_42, %c7, %c0_43] : memref<1x16x128xbf16, #tpu.memory_space<vmem>>, vector<1x8x128xbf16>
    %44 = vector.shape_cast %43 : vector<1x8x128xbf16> to vector<8x128xbf16>
    %c7_44 = arith.constant 7 : index
    %c0_45 = arith.constant 0 : index
    %c0_46 = arith.constant 0 : index
    %45 = vector.load %arg2[%c7_44, %c0_45, %c0_46] : memref<9x128x128xbf16, #tpu.memory_space<vmem>>, vector<1x128x128xbf16>
    %46 = vector.shape_cast %45 : vector<1x128x128xbf16> to vector<128x128xbf16>
    %cst_47 = arith.constant dense<0.000000e+00> : vector<8x128xf32>
    %47 = tpu.matmul %44, %46, %cst_47 {dimension_numbers = #tpu.dot_dimension_numbers<[1], [0], [0], [1], [0, 0, 1, 1], [], []>} : vector<8x128xbf16>, vector<128x128xbf16>, vector<8x128xf32> -> vector<8x128xf32>
    %48 = arith.addf %42, %47 : vector<8x128xf32>
    %c0_48 = arith.constant 0 : index
    %c8 = arith.constant 8 : index
    %c0_49 = arith.constant 0 : index
    %49 = vector.load %arg1[%c0_48, %c8, %c0_49] : memref<1x16x128xbf16, #tpu.memory_space<vmem>>, vector<1x8x128xbf16>
    %50 = vector.shape_cast %49 : vector<1x8x128xbf16> to vector<8x128xbf16>
    %c8_50 = arith.constant 8 : index
    %c0_51 = arith.constant 0 : index
    %c0_52 = arith.constant 0 : index
    %51 = vector.load %arg2[%c8_50, %c0_51, %c0_52] : memref<9x128x128xbf16, #tpu.memory_space<vmem>>, vector<1x128x128xbf16>
    %52 = vector.shape_cast %51 : vector<1x128x128xbf16> to vector<128x128xbf16>
    %cst_53 = arith.constant dense<0.000000e+00> : vector<8x128xf32>
    %53 = tpu.matmul %50, %52, %cst_53 {dimension_numbers = #tpu.dot_dimension_numbers<[1], [0], [0], [1], [0, 0, 1, 1], [], []>} : vector<8x128xbf16>, vector<128x128xbf16>, vector<8x128xf32> -> vector<8x128xf32>
    %54 = arith.addf %48, %53 : vector<8x128xf32>
    %c0_54 = arith.constant 0 : index
    %c0_55 = arith.constant 0 : index
    %55 = vector.load %arg3[%c0_54, %c0_55] : memref<1x128xf32, #tpu.memory_space<vmem>>, vector<1x128xf32>
    %56 = vector.broadcast %55 : vector<1x128xf32> to vector<8x128xf32>
    %57 = arith.addf %54, %56 : vector<8x128xf32>
    %cst_56 = arith.constant 0.000000e+00 : f32
    %58 = vector.broadcast %cst_56 : f32 to vector<8x128xf32>
    %59 = arith.maximumf %57, %58 : vector<8x128xf32>
    %60 = arith.truncf %59 : vector<8x128xf32> to vector<8x128xbf16>
    %c0_57 = arith.constant 0 : index
    %c0_58 = arith.constant 0 : index
    %c0_59 = arith.constant 0 : index
    %61 = vector.load %arg4[%c0_57, %c0_58, %c0_59] : memref<1x8x128xbf16, #tpu.memory_space<vmem>>, vector<1x8x128xbf16>
    %62 = vector.shape_cast %61 : vector<1x8x128xbf16> to vector<8x128xbf16>
    %63 = vector.shape_cast %60 : vector<8x128xbf16> to vector<1x8x128xbf16>
    tpu.vector_store %arg4[%c0_57, %c0_58, %c0_59], %63 {strides = array<i32>} : memref<1x8x128xbf16, #tpu.memory_space<vmem>>, vector<1x8x128xbf16>,
    return
  }
  func.func @transform_0(%arg0: i32) -> (i32, i32, i32) {
    %c0_i32 = arith.constant 0 : i32
    %c0_i32_0 = arith.constant 0 : i32
    %c0_i32_1 = arith.constant 0 : i32
    return %arg0, %c0_i32, %c0_i32_0 : i32, i32, i32
  }
  func.func @transform_1(%arg0: i32) -> (i32, i32, i32) {
    %c0_i32 = arith.constant 0 : i32
    %c0_i32_0 = arith.constant 0 : i32
    %c0_i32_1 = arith.constant 0 : i32
    %c0_i32_2 = arith.constant 0 : i32
    return %c0_i32, %c0_i32_0, %c0_i32_1 : i32, i32, i32
  }
  func.func @transform_2(%arg0: i32) -> (i32, i32) {
    %c0_i32 = arith.constant 0 : i32
    %c0_i32_0 = arith.constant 0 : i32
    %c0_i32_1 = arith.constant 0 : i32
    return %c0_i32, %c0_i32_0 : i32, i32
  }
  func.func @transform_3(%arg0: i32) -> (i32, i32, i32) {
    %c0_i32 = arith.constant 0 : i32
    %c0_i32_0 = arith.constant 0 : i32
    %c0_i32_1 = arith.constant 0 : i32
    return %arg0, %c0_i32, %c0_i32_0 : i32, i32, i32
  }
}

module attributes {stable_mosaic.version = 11 : i64} {
  func.func @_conv_band_kernel(%arg0: i32, %arg1: memref<1x12x192xbf16, #tpu.memory_space<vmem>>, %arg2: memref<5x192x64xbf16, #tpu.memory_space<vmem>>, %arg3: memref<1x64xf32, #tpu.memory_space<vmem>>, %arg4: memref<1x8x64xbf16, #tpu.memory_space<vmem>>) attributes {dimension_semantics = [#tpu.dimension_semantics<parallel>], iteration_bounds = array<i64: 2>, scalar_prefetch = 0 : i64, scratch_operands = 0 : i64, tpu.core_type = #tpu.core_type<tc>, window_params = [{transform_indices = @transform_0, window_bounds = array<i64: 1, 12, 192>}, {pipeline_mode = #tpu.pipeline_mode<synchronous>, transform_indices = @transform_1, window_bounds = array<i64: 5, 192, 64>}, {pipeline_mode = #tpu.pipeline_mode<synchronous>, transform_indices = @transform_2, window_bounds = array<i64: 1, 64>}, {transform_indices = @transform_3, window_bounds = array<i64: 1, 8, 64>}]} {
    %cst = arith.constant 0.000000e+00 : f32
    %0 = vector.broadcast %cst : f32 to vector<8x64xf32>
    %c0 = arith.constant 0 : index
    %c0_0 = arith.constant 0 : index
    %c0_1 = arith.constant 0 : index
    %1 = vector.load %arg1[%c0, %c0_0, %c0_1] : memref<1x12x192xbf16, #tpu.memory_space<vmem>>, vector<1x8x192xbf16>
    %2 = vector.shape_cast %1 : vector<1x8x192xbf16> to vector<8x192xbf16>
    %c0_2 = arith.constant 0 : index
    %c0_3 = arith.constant 0 : index
    %c0_4 = arith.constant 0 : index
    %3 = vector.load %arg2[%c0_2, %c0_3, %c0_4] : memref<5x192x64xbf16, #tpu.memory_space<vmem>>, vector<1x192x64xbf16>
    %4 = vector.shape_cast %3 : vector<1x192x64xbf16> to vector<192x64xbf16>
    %cst_5 = arith.constant dense<0.000000e+00> : vector<8x64xf32>
    %5 = tpu.matmul %2, %4, %cst_5 {dimension_numbers = #tpu.dot_dimension_numbers<[1], [0], [0], [1], [0, 0, 1, 1], [], []>} : vector<8x192xbf16>, vector<192x64xbf16>, vector<8x64xf32> -> vector<8x64xf32>
    %6 = arith.addf %0, %5 : vector<8x64xf32>
    %c0_6 = arith.constant 0 : index
    %c1 = arith.constant 1 : index
    %c0_7 = arith.constant 0 : index
    %7 = vector.load %arg1[%c0_6, %c1, %c0_7] : memref<1x12x192xbf16, #tpu.memory_space<vmem>>, vector<1x8x192xbf16>
    %8 = vector.shape_cast %7 : vector<1x8x192xbf16> to vector<8x192xbf16>
    %c1_8 = arith.constant 1 : index
    %c0_9 = arith.constant 0 : index
    %c0_10 = arith.constant 0 : index
    %9 = vector.load %arg2[%c1_8, %c0_9, %c0_10] : memref<5x192x64xbf16, #tpu.memory_space<vmem>>, vector<1x192x64xbf16>
    %10 = vector.shape_cast %9 : vector<1x192x64xbf16> to vector<192x64xbf16>
    %cst_11 = arith.constant dense<0.000000e+00> : vector<8x64xf32>
    %11 = tpu.matmul %8, %10, %cst_11 {dimension_numbers = #tpu.dot_dimension_numbers<[1], [0], [0], [1], [0, 0, 1, 1], [], []>} : vector<8x192xbf16>, vector<192x64xbf16>, vector<8x64xf32> -> vector<8x64xf32>
    %12 = arith.addf %6, %11 : vector<8x64xf32>
    %c0_12 = arith.constant 0 : index
    %c2 = arith.constant 2 : index
    %c0_13 = arith.constant 0 : index
    %13 = vector.load %arg1[%c0_12, %c2, %c0_13] : memref<1x12x192xbf16, #tpu.memory_space<vmem>>, vector<1x8x192xbf16>
    %14 = vector.shape_cast %13 : vector<1x8x192xbf16> to vector<8x192xbf16>
    %c2_14 = arith.constant 2 : index
    %c0_15 = arith.constant 0 : index
    %c0_16 = arith.constant 0 : index
    %15 = vector.load %arg2[%c2_14, %c0_15, %c0_16] : memref<5x192x64xbf16, #tpu.memory_space<vmem>>, vector<1x192x64xbf16>
    %16 = vector.shape_cast %15 : vector<1x192x64xbf16> to vector<192x64xbf16>
    %cst_17 = arith.constant dense<0.000000e+00> : vector<8x64xf32>
    %17 = tpu.matmul %14, %16, %cst_17 {dimension_numbers = #tpu.dot_dimension_numbers<[1], [0], [0], [1], [0, 0, 1, 1], [], []>} : vector<8x192xbf16>, vector<192x64xbf16>, vector<8x64xf32> -> vector<8x64xf32>
    %18 = arith.addf %12, %17 : vector<8x64xf32>
    %c0_18 = arith.constant 0 : index
    %c3 = arith.constant 3 : index
    %c0_19 = arith.constant 0 : index
    %19 = vector.load %arg1[%c0_18, %c3, %c0_19] : memref<1x12x192xbf16, #tpu.memory_space<vmem>>, vector<1x8x192xbf16>
    %20 = vector.shape_cast %19 : vector<1x8x192xbf16> to vector<8x192xbf16>
    %c3_20 = arith.constant 3 : index
    %c0_21 = arith.constant 0 : index
    %c0_22 = arith.constant 0 : index
    %21 = vector.load %arg2[%c3_20, %c0_21, %c0_22] : memref<5x192x64xbf16, #tpu.memory_space<vmem>>, vector<1x192x64xbf16>
    %22 = vector.shape_cast %21 : vector<1x192x64xbf16> to vector<192x64xbf16>
    %cst_23 = arith.constant dense<0.000000e+00> : vector<8x64xf32>
    %23 = tpu.matmul %20, %22, %cst_23 {dimension_numbers = #tpu.dot_dimension_numbers<[1], [0], [0], [1], [0, 0, 1, 1], [], []>} : vector<8x192xbf16>, vector<192x64xbf16>, vector<8x64xf32> -> vector<8x64xf32>
    %24 = arith.addf %18, %23 : vector<8x64xf32>
    %c0_24 = arith.constant 0 : index
    %c4 = arith.constant 4 : index
    %c0_25 = arith.constant 0 : index
    %25 = vector.load %arg1[%c0_24, %c4, %c0_25] : memref<1x12x192xbf16, #tpu.memory_space<vmem>>, vector<1x8x192xbf16>
    %26 = vector.shape_cast %25 : vector<1x8x192xbf16> to vector<8x192xbf16>
    %c4_26 = arith.constant 4 : index
    %c0_27 = arith.constant 0 : index
    %c0_28 = arith.constant 0 : index
    %27 = vector.load %arg2[%c4_26, %c0_27, %c0_28] : memref<5x192x64xbf16, #tpu.memory_space<vmem>>, vector<1x192x64xbf16>
    %28 = vector.shape_cast %27 : vector<1x192x64xbf16> to vector<192x64xbf16>
    %cst_29 = arith.constant dense<0.000000e+00> : vector<8x64xf32>
    %29 = tpu.matmul %26, %28, %cst_29 {dimension_numbers = #tpu.dot_dimension_numbers<[1], [0], [0], [1], [0, 0, 1, 1], [], []>} : vector<8x192xbf16>, vector<192x64xbf16>, vector<8x64xf32> -> vector<8x64xf32>
    %30 = arith.addf %24, %29 : vector<8x64xf32>
    %c0_30 = arith.constant 0 : index
    %c0_31 = arith.constant 0 : index
    %31 = vector.load %arg3[%c0_30, %c0_31] : memref<1x64xf32, #tpu.memory_space<vmem>>, vector<1x64xf32>
    %32 = vector.broadcast %31 : vector<1x64xf32> to vector<8x64xf32>
    %33 = arith.addf %30, %32 : vector<8x64xf32>
    %cst_32 = arith.constant 0.000000e+00 : f32
    %34 = vector.broadcast %cst_32 : f32 to vector<8x64xf32>
    %35 = arith.maximumf %33, %34 : vector<8x64xf32>
    %36 = arith.truncf %35 : vector<8x64xf32> to vector<8x64xbf16>
    %c0_33 = arith.constant 0 : index
    %c0_34 = arith.constant 0 : index
    %c0_35 = arith.constant 0 : index
    %37 = vector.load %arg4[%c0_33, %c0_34, %c0_35] : memref<1x8x64xbf16, #tpu.memory_space<vmem>>, vector<1x8x64xbf16>
    %38 = vector.shape_cast %37 : vector<1x8x64xbf16> to vector<8x64xbf16>
    %39 = vector.shape_cast %36 : vector<8x64xbf16> to vector<1x8x64xbf16>
    tpu.vector_store %arg4[%c0_33, %c0_34, %c0_35], %39 {strides = array<i32>} : memref<1x8x64xbf16, #tpu.memory_space<vmem>>, vector<1x8x64xbf16>,
    return
  }
  func.func @transform_0(%arg0: i32) -> (i32, i32, i32) {
    %c0_i32 = arith.constant 0 : i32
    %c0_i32_0 = arith.constant 0 : i32
    %c0_i32_1 = arith.constant 0 : i32
    return %arg0, %c0_i32, %c0_i32_0 : i32, i32, i32
  }
  func.func @transform_1(%arg0: i32) -> (i32, i32, i32) {
    %c0_i32 = arith.constant 0 : i32
    %c0_i32_0 = arith.constant 0 : i32
    %c0_i32_1 = arith.constant 0 : i32
    %c0_i32_2 = arith.constant 0 : i32
    return %c0_i32, %c0_i32_0, %c0_i32_1 : i32, i32, i32
  }
  func.func @transform_2(%arg0: i32) -> (i32, i32) {
    %c0_i32 = arith.constant 0 : i32
    %c0_i32_0 = arith.constant 0 : i32
    %c0_i32_1 = arith.constant 0 : i32
    return %c0_i32, %c0_i32_0 : i32, i32
  }
  func.func @transform_3(%arg0: i32) -> (i32, i32, i32) {
    %c0_i32 = arith.constant 0 : i32
    %c0_i32_0 = arith.constant 0 : i32
    %c0_i32_1 = arith.constant 0 : i32
    return %arg0, %c0_i32, %c0_i32_0 : i32, i32, i32
  }
}

</mosaic_0001>

<llo_original>
// kernel: cpm_stage_x_forward.5
$region0: #{cpm_stage_x_forward.5}
  #allocation0 [shape = 'u32[]', space=smem, size = 0x4, offset = 0x4, fixed_abs, tag = 'smem constant byte address 0x4 - core index']
  #allocation1 [shape = 'u32[144,128]{1,0:T(1,128)}', space=vmem, size = 0x12000, scoped, tag = 'internal scratch']
  %s0 = inlined_call_operand.vmem [shape: bf16[2,24,96], index: 0, kind: input, shape index: {}]
  %s1 = inlined_call_operand.vmem [shape: bf16[9,96,128], index: 1, kind: input, shape index: {}]
  %s2 = inlined_call_operand.hbm [shape: f32[1,128], index: 2, kind: input, shape index: {}]
  %s3 = inlined_call_operand.vmem [shape: bf16[2,16,128], index: 3, kind: output, shape index: {}]
  %s4 = sld [smem:[#allocation0]]
  $region49: #{cpm_stage_x_forward.5} parent=0
    _
  %s6 = ssub.s32 1, %s4
  %s7 = scalar_select 0, %s6, %s4
  $region1: #{cpm_stage_x_forward.5} parent=0
    #allocation2 [shape = 'u8[512]{0}', space=vmem, size = 0x400, scoped, tag = 'input window, operand 2, single buffered']
    #allocation3 [shape = 's32[2]{0}', space=sflag, size = 0x8, scoped, tag = 'scoped memory for cpm_stage_x_forward.5']
    %8 = vsyncpa [#allocation3], 0
    loop: start=0, step=1, limit=4
    $region2: #{cpm_stage_x_forward.5} parent=1 // loop_pre_header
      _
    $region3: #{cpm_stage_x_forward.5} parent=1 // loop_header
      %s10 = sphi 0, %s14
      %p11 = scmp.ge.s32.totalorder %s10, 4
      %s20 = sphi 0, %s22
      %s23 = sphi 0, %s20
      %s24 = sphi 0, %s23
      %s40 = sphi 0, %s24
      %s44 = sphi 0, %s44
      %s46 = sphi 0, %s44
      %s47 = sphi 0, %s46
      %s61 = sphi 0, %s47
      %s65 = sphi 0, %s65
      %s67 = sphi 0, %s65
      %s68 = sphi 0, %s67
      %s82 = sphi 0, %s68
      %s88 = sphi 0, %s90
      %s91 = sphi 0, %s88
      %s92 = sphi 0, %s91
      %s108 = sphi 0, %s92
    $region4: #{cpm_stage_x_forward.5} parent=1 // loop_header_branch
      %13 = sbr.rel (%p11) target = $region8
    $region5: #{cpm_stage_x_forward.5} parent=1 // loop_body
      %s15 = ssub.s32 %s10, 1
      %s16 = ssub.s32 %s10, 2
      %s17 = sadd.s32 %s10, 1
      %s18 = ssub.s32 %s10, %s17
      %p19 = scmp.eq.s32.totalorder %s18, 0
      %s21 = sadd.s32 %s20, 1
      %s22 = scalar_select %p19, %s20, %s21
      %p25 = pneg %p19
      %p26 = scmp.eq.s32.totalorder %s10, 1
      %p27 = por %p25, %p26
      %p28 = scmp.ne.s32.totalorder %s20, %s23
      %p29 = scmp.eq.s32.totalorder %s10, 0
      %p30 = por %p28, %p29
      %p31 = scmp.ne.s32.totalorder %s20, %s23
      %p32 = scmp.eq.s32.totalorder %s15, 1
      %p33 = por %p31, %p32
      %p34 = scmp.ne.s32.totalorder %s23, %s24
      %p35 = scmp.eq.s32.totalorder %s15, 0
      %p36 = por %p34, %p35
      %p37 = scmp.ne.s32.totalorder %s23, %s24
      %p38 = scmp.eq.s32.totalorder %s16, 1
      %p39 = por %p37, %p38
      %p41 = scmp.ne.s32.totalorder %s24, %s40
      %p42 = scmp.eq.s32.totalorder %s16, 0
      %p43 = por %p41, %p42
      %s45 = sadd.s32 %s44, 1
      %p48 = scmp.eq.s32.totalorder %s10, 1
      %p49 = scmp.ne.s32.totalorder %s44, %s46
      %p50 = scmp.eq.s32.totalorder %s10, 0
      %p51 = por %p49, %p50
      %p52 = scmp.ne.s32.totalorder %s44, %s46
      %p53 = scmp.eq.s32.totalorder %s15, 1
      %p54 = por %p52, %p53
      %p55 = scmp.ne.s32.totalorder %s46, %s47
      %p56 = scmp.eq.s32.totalorder %s15, 0
      %p57 = por %p55, %p56
      %p58 = scmp.ne.s32.totalorder %s46, %s47
      %p59 = scmp.eq.s32.totalorder %s16, 1
      %p60 = por %p58, %p59
      %p62 = scmp.ne.s32.totalorder %s47, %s61
      %p63 = scmp.eq.s32.totalorder %s16, 0
      %p64 = por %p62, %p63
      %s66 = sadd.s32 %s65, 1
      %p69 = scmp.eq.s32.totalorder %s10, 1
      %p70 = scmp.ne.s32.totalorder %s65, %s67
      %p71 = scmp.eq.s32.totalorder %s10, 0
      %p72 = por %p70, %p71
      %p73 = scmp.ne.s32.totalorder %s65, %s67
      %p74 = scmp.eq.s32.totalorder %s15, 1
      %p75 = por %p73, %p74
      %p76 = scmp.ne.s32.totalorder %s67, %s68
      %p77 = scmp.eq.s32.totalorder %s15, 0
      %p78 = por %p76, %p77
      %p79 = scmp.ne.s32.totalorder %s67, %s68
      %p80 = scmp.eq.s32.totalorder %s16, 1
      %p81 = por %p79, %p80
      %p83 = scmp.ne.s32.totalorder %s68, %s82
      %p84 = scmp.eq.s32.totalorder %s16, 0
      %p85 = por %p83, %p84
      %s86 = ssub.s32 %s10, %s17
      %p87 = scmp.eq.s32.totalorder %s86, 0
      %s89 = sadd.s32 %s88, 1
      %s90 = scalar_select %p87, %s88, %s89
      %p93 = pneg %p87
      %p94 = scmp.eq.s32.totalorder %s10, 1
      %p95 = por %p93, %p94
      %p96 = scmp.ne.s32.totalorder %s88, %s91
      %p97 = scmp.eq.s32.totalorder %s10, 0
      %p98 = por %p96, %p97
      %p99 = scmp.ne.s32.totalorder %s88, %s91
      %p100 = scmp.eq.s32.totalorder %s15, 1
      %p101 = por %p99, %p100
      %p102 = scmp.ne.s32.totalorder %s91, %s92
      %p103 = scmp.eq.s32.totalorder %s15, 0
      %p104 = por %p102, %p103
      %p105 = scmp.ne.s32.totalorder %s91, %s92
      %p106 = scmp.eq.s32.totalorder %s16, 1
      %p107 = por %p105, %p106
      %p109 = scmp.ne.s32.totalorder %s92, %s108
      %p110 = scmp.eq.s32.totalorder %s16, 0
      %p111 = por %p109, %p110
      %p112 = scmp.le.s32.totalorder 1, %s10
      %p113 = scmp.lt.s32.totalorder %s10, 3
      %p114 = pnand %p112, %p113
      %p115 = pneg %p114
      // Predicated region
      $region9: #{cpm_stage_x_forward.5} parent=5 // pred_check
        _
      $region10: #{cpm_stage_x_forward.5} parent=5 // pred_check_branch
        %117 = sbr.rel (%p114) target = $region12
      $region11: #{cpm_stage_x_forward.5} parent=5 // pred_region
        %s118 = ssub.s32 %s10, 1
        // Predicated region
        $region13: #{cpm_stage_x_forward.5} parent=11 // pred_check
          %p119 = pneg %p57
        $region14: #{cpm_stage_x_forward.5} parent=11 // pred_check_branch
          %121 = sbr.rel (%p119) target = $region16
        $region15: #{cpm_stage_x_forward.5} parent=11 // pred_region
          _
        $region16: #{cpm_stage_x_forward.5} parent=11 // pred_fallthru
          _
        // Predicated region
        $region17: #{cpm_stage_x_forward.5} parent=11 // pred_check
          %p122 = pneg %p78
        $region18: #{cpm_stage_x_forward.5} parent=11 // pred_check_branch
          %124 = sbr.rel (%p122) target = $region20
        $region19: #{cpm_stage_x_forward.5} parent=11 // pred_region
          %s126 = ssub.s32 16, 16
          %127 = vsyncadd [#allocation3], %s126
          %s129 = sshll.u32 [#allocation2], 4
          %s130 = int_to_ptr.vmem [resolvable:$true] %s129
          %132 = dma.hbm_to_vmem [thread:$0]  %s2, 16, %s130, [#allocation3]
        $region20: #{cpm_stage_x_forward.5} parent=11 // pred_fallthru
          _
      $region12: #{cpm_stage_x_forward.5} parent=5 // pred_fallthru
        _
      %p133 = scmp.lt.s32.totalorder %s10, 2
      // Predicated region
      $region21: #{cpm_stage_x_forward.5} parent=5 // pred_check
        %p134 = pneg %p133
      $region22: #{cpm_stage_x_forward.5} parent=5 // pred_check_branch
        %136 = sbr.rel (%p134) target = $region24
      $region23: #{cpm_stage_x_forward.5} parent=5 // pred_region
        // Predicated region
        $region25: #{cpm_stage_x_forward.5} parent=23 // pred_check
          %p137 = pneg %p30
        $region26: #{cpm_stage_x_forward.5} parent=23 // pred_check_branch
          %139 = sbr.rel (%p137) target = $region28
        $region27: #{cpm_stage_x_forward.5} parent=23 // pred_region
          %p140 = scmp.lt.s32.totalorder %s10, 1
          %s141 = scalar_select %p140, %s10, 1
          %s142 = smul.addr %s141, 3
          %s143 = smul.addr %s142, 4
          %s144 = scalar_lea.vmem %s0, %s143
        $region28: #{cpm_stage_x_forward.5} parent=23 // pred_fallthru
          _
      $region24: #{cpm_stage_x_forward.5} parent=5 // pred_fallthru
        _
      %p145 = scmp.le.s32.totalorder 1, %s10
      %p146 = scmp.lt.s32.totalorder %s10, 3
      %p147 = pnand %p145, %p146
      %p148 = pneg %p147
      // Predicated region
      $region29: #{cpm_stage_x_forward.5} parent=5 // pred_check
        _
      $region30: #{cpm_stage_x_forward.5} parent=5 // pred_check_branch
        %150 = sbr.rel (%p147) target = $region32
      $region31: #{cpm_stage_x_forward.5} parent=5 // pred_region
        %s151 = ssub.s32 %s10, 1
        // Predicated region
        $region33: #{cpm_stage_x_forward.5} parent=31 // pred_check
          %p152 = pneg %p78
        $region34: #{cpm_stage_x_forward.5} parent=31 // pred_check_branch
          %154 = sbr.rel (%p152) target = $region36
        $region35: #{cpm_stage_x_forward.5} parent=31 // pred_region
          %155 = dma.done [#allocation3], 16
        $region36: #{cpm_stage_x_forward.5} parent=31 // pred_fallthru
          _
        %p156 = scmp.lt.s32.totalorder %s15, 1
        %s157 = scalar_select %p156, %s15, 1
        %s158 = smul.addr %s157, 3
        %s159 = smul.addr %s158, 4
        %s160 = scalar_lea.vmem %s0, %s159
        %p161 = pneg %p36
        %p162 = pneg %p33
        %p163 = pneg %p57
        %p164 = pneg %p54
        %p165 = pneg %p78
        %p166 = pneg %p75
        %p167 = pneg %p104
        %p168 = pneg %p101
        %p169 = scmp.lt.s32.totalorder %s15, 1
        %s170 = scalar_select %p169, %s15, 1
        %s171 = smul.addr %s170, 2
        %s172 = smul.addr %s171, 4
        %s173 = scalar_lea.vmem %s3, %s172
        %p174 = scmp.lt.s32.totalorder %s15, 1
        %s175 = scalar_select %p174, %s15, 1
        %s176 = smul.addr %s175, 3
        %s177 = smul.addr %s176, 4
        %s178 = scalar_lea.vmem %s0, %s177
        %p179 = scmp.lt.s32.totalorder %s15, 1
        %s180 = scalar_select %p179, %s15, 1
        %s181 = smul.addr %s180, 2
        %s182 = smul.addr %s181, 4
        %s183 = scalar_lea.vmem %s3, %s182
        %v185 = vld [vmem:[%s178] sm:$0xf]
        %v186 = vld [vmem:[%s178 + $0x4] sm:$0xf]
        %v187 = vld [vmem:[%s1] sm:$0xf]
        %v188 = vld [vmem:[%s1 + $0x4] sm:$0xf]
        %v189 = vld [vmem:[%s1 + $0x8] sm:$0xf]
        %v190 = vld [vmem:[%s1 + $0xc] sm:$0xf]
        %v191 = vld [vmem:[%s1 + $0x10] sm:$0xf]
        %v192 = vld [vmem:[%s1 + $0x14] sm:$0xf]
        %v193 = vld [vmem:[%s1 + $0x18] sm:$0xf]
        %v194 = vld [vmem:[%s1 + $0x1c] sm:$0xf]
        %v195 = vld [vmem:[%s1 + $0x20] sm:$0xf]
        %v196 = vld [vmem:[%s1 + $0x24] sm:$0xf]
        %v197 = vld [vmem:[%s1 + $0x28] sm:$0xf]
        %v198 = vld [vmem:[%s1 + $0x2c] sm:$0xf]
        %v199 = vld [vmem:[%s178 + $0x8] sm:$0x1]
        %s200 = scalar_lea.vmem %s1, 48
        %v201 = vld [vmem:[%s200] sm:$0xf]
        %v202 = vld [vmem:[%s200 + $0x4] sm:$0xf]
        %v203 = vld [vmem:[%s200 + $0x8] sm:$0xf]
        %v204 = vld [vmem:[%s200 + $0xc] sm:$0xf]
        %v205 = vld [vmem:[%s200 + $0x10] sm:$0xf]
        %v206 = vld [vmem:[%s200 + $0x14] sm:$0xf]
        %v207 = vld [vmem:[%s200 + $0x18] sm:$0xf]
        %v208 = vld [vmem:[%s200 + $0x1c] sm:$0xf]
        %v209 = vld [vmem:[%s200 + $0x20] sm:$0xf]
        %v210 = vld [vmem:[%s200 + $0x24] sm:$0xf]
        %v211 = vld [vmem:[%s200 + $0x28] sm:$0xf]
        %v212 = vld [vmem:[%s200 + $0x2c] sm:$0xf]
        %v216 = vunpack.c.l.b16 %v185
        %v217 = vunpack.c.l.b16 %v186
        %v218 = vunpack.c.l.b16 %v199
        %v219 = vpack.c.b16 %v217, %v216
        %v220 = vpack.c.b16 %v218, %v218
        %vm221 = vsmask.f32 7424
        %v223 = vshrl.u32 %v219, 16
        %v225 = vshll.u32 %v219, 16
        %v227 = vrot.slane %v225, 1
        %v228 = vor.u32 %v223, %v227
        %v230 = vshll.u32 %v220, 16
        %v232 = vrot.slane %v230, 1
        %v233 = vsel %vm221, %v228, %v232
        %v246 = vunpack.c.l.b16 %v201
        %v247 = vunpack.c.l.b16 %v202
        %v248 = vunpack.c.l.b16 %v203
        %v249 = vunpack.c.l.b16 %v204
        %v250 = vunpack.c.l.b16 %v205
        %v251 = vunpack.c.l.b16 %v206
        %v252 = vunpack.c.l.b16 %v207
        %v253 = vunpack.c.l.b16 %v208
        %v254 = vunpack.c.l.b16 %v209
        %v255 = vunpack.c.l.b16 %v210
        %v256 = vunpack.c.l.b16 %v211
        %v257 = vunpack.c.l.b16 %v212
        %v258 = vpack.c.b16 %v247, %v246
        %v259 = vpack.c.b16 %v249, %v248
        %v260 = vpack.c.b16 %v251, %v250
        %v261 = vpack.c.b16 %v253, %v252
        %v262 = vpack.c.b16 %v255, %v254
        %v263 = vpack.c.b16 %v257, %v256
        %vm270 = vcmask 785408
        %v272 = vsel %vm270, %v233, 0
        %274 = vmatprep.subr.bf16.mxu0 0
        %275 = vmatpush1.bf16.msra.mxu0 0
        %276 = vmatprep.subr.bf16.mxu0 0
        %277 = vmatpush1.bf16.msra.mxu0 0
        %278 = vmatprep.subr.bf16.mxu0 0
        %279 = vmatpush1.bf16.msra.mxu0 %v263
        %280 = vmatprep.subr.bf16.mxu0 0
        %281 = vmatpush1.bf16.msra.mxu0 %v262
        %282 = vmatprep.subr.bf16.mxu0 0
        %283 = vmatpush1.bf16.msra.mxu0 %v261
        %284 = vmatprep.subr.bf16.mxu0 0
        %285 = vmatpush1.bf16.msra.mxu0 %v260
        %286 = vmatprep.subr.bf16.mxu0 0
        %287 = vmatpush1.bf16.msra.mxu0 %v259
        %288 = vmatprep.subr.bf16.mxu0 0
        %289 = vmatpush1.bf16.msra.mxu0 %v258
        %290 = vmatprep.subr.bf16.mxu0 0
        %291 = vmatpush2.bf16.msra.mxu0 0
        %292 = vmatprep.subr.bf16.mxu0 0
        %293 = vmatpush2.bf16.msra.mxu0 0
        %294 = vmatprep.subr.bf16.mxu0 0
        %295 = vmatpush2.bf16.msra.mxu0 0
        %296 = vmatprep.subr.bf16.mxu0 0
        %297 = vmatpush2.bf16.msra.mxu0 0
        %298 = vmatprep.subr.bf16.mxu0 0
        %299 = vmatpush2.bf16.msra.mxu0 0
        %300 = vmatprep.subr.bf16.mxu0 0
        %301 = vmatpush2.bf16.msra.mxu0 0
        %302 = vmatprep.subr.bf16.mxu0 0
        %303 = vmatpush2.bf16.msra.mxu0 0
        %304 = vmatprep.subr.bf16.mxu0 0
        %305 = vmatpush2.bf16.msra.mxu0 0
        %306 = vmatprep.mubr.bf16.mxu0 0
        %307 = vmatmul.mubr.bf16.gmra.mxu0 %v272
        %v308 = vpop.f32.mrf.mxu0
        %v309 = vadd.f32 0.0, %v308
        %v310 = vpop.f32.mrf.mxu0
        %v311 = vpop.f32.mrf.mxu0
        %v312 = vadd.f32 0.0, %v311
        %v313 = vpop.f32.mrf.mxu0
        %314 = vdwg.mxu0
        %v327 = vunpack.c.l.b16 %v187
        %v328 = vunpack.c.l.b16 %v188
        %v329 = vunpack.c.l.b16 %v189
        %v330 = vunpack.c.l.b16 %v190
        %v331 = vunpack.c.l.b16 %v191
        %v332 = vunpack.c.l.b16 %v192
        %v333 = vunpack.c.l.b16 %v193
        %v334 = vunpack.c.l.b16 %v194
        %v335 = vunpack.c.l.b16 %v195
        %v336 = vunpack.c.l.b16 %v196
        %v337 = vunpack.c.l.b16 %v197
        %v338 = vunpack.c.l.b16 %v198
        %v339 = vpack.c.b16 %v328, %v327
        %v340 = vpack.c.b16 %v330, %v329
        %v341 = vpack.c.b16 %v332, %v331
        %v342 = vpack.c.b16 %v334, %v333
        %v343 = vpack.c.b16 %v336, %v335
        %v344 = vpack.c.b16 %v338, %v337
        %v351 = vsel %vm270, %v219, 0
        %353 = vmatprep.subr.bf16.mxu0 0
        %354 = vmatpush1.bf16.msra.mxu0 0
        %355 = vmatprep.subr.bf16.mxu0 0
        %356 = vmatpush1.bf16.msra.mxu0 0
        %357 = vmatprep.subr.bf16.mxu0 0
        %358 = vmatpush1.bf16.msra.mxu0 %v344
        %359 = vmatprep.subr.bf16.mxu0 0
        %360 = vmatpush1.bf16.msra.mxu0 %v343
        %361 = vmatprep.subr.bf16.mxu0 0
        %362 = vmatpush1.bf16.msra.mxu0 %v342
        %363 = vmatprep.subr.bf16.mxu0 0
        %364 = vmatpush1.bf16.msra.mxu0 %v341
        %365 = vmatprep.subr.bf16.mxu0 0
        %366 = vmatpush1.bf16.msra.mxu0 %v340
        %367 = vmatprep.subr.bf16.mxu0 0
        %368 = vmatpush1.bf16.msra.mxu0 %v339
        %369 = vmatprep.subr.bf16.mxu0 0
        %370 = vmatpush2.bf16.msra.mxu0 0
        %371 = vmatprep.subr.bf16.mxu0 0
        %372 = vmatpush2.bf16.msra.mxu0 0
        %373 = vmatprep.subr.bf16.mxu0 0
        %374 = vmatpush2.bf16.msra.mxu0 0
        %375 = vmatprep.subr.bf16.mxu0 0
        %376 = vmatpush2.bf16.msra.mxu0 0
        %377 = vmatprep.subr.bf16.mxu0 0
        %378 = vmatpush2.bf16.msra.mxu0 0
        %379 = vmatprep.subr.bf16.mxu0 0
        %380 = vmatpush2.bf16.msra.mxu0 0
        %381 = vmatprep.subr.bf16.mxu0 0
        %382 = vmatpush2.bf16.msra.mxu0 0
        %383 = vmatprep.subr.bf16.mxu0 0
        %384 = vmatpush2.bf16.msra.mxu0 0
        %385 = vmatprep.mubr.bf16.mxu0 0
        %386 = vmatmul.mubr.bf16.gmra.mxu0 %v351
        %v387 = vpop.f32.mrf.mxu0
        %v388 = vadd.f32 %v309, %v387
        %v389 = vpop.f32.mrf.mxu0
        %v390 = vpop.f32.mrf.mxu0
        %v391 = vadd.f32 %v312, %v390
        %v392 = vpop.f32.mrf.mxu0
        %393 = vdwg.mxu0
        %v394 = vld [vmem:[%s178] sm:$0xe]
        %s395 = scalar_lea.vmem %s1, 96
        %v396 = vld [vmem:[%s395] sm:$0xf]
        %v397 = vld [vmem:[%s395 + $0x4] sm:$0xf]
        %v398 = vld [vmem:[%s395 + $0x8] sm:$0xf]
        %v399 = vld [vmem:[%s395 + $0xc] sm:$0xf]
        %v400 = vld [vmem:[%s395 + $0x10] sm:$0xf]
        %v401 = vld [vmem:[%s395 + $0x14] sm:$0xf]
        %v402 = vld [vmem:[%s395 + $0x18] sm:$0xf]
        %v403 = vld [vmem:[%s395 + $0x1c] sm:$0xf]
        %v404 = vld [vmem:[%s395 + $0x20] sm:$0xf]
        %v405 = vld [vmem:[%s395 + $0x24] sm:$0xf]
        %v406 = vld [vmem:[%s395 + $0x28] sm:$0xf]
        %v407 = vld [vmem:[%s395 + $0x2c] sm:$0xf]
        %v409 = vunpack.c.l.b16 %v394
        %v410 = vpack.c.b16 %v217, %v409
        %vm411 = vcmask 1046528
        %v412 = vrot.slane %v410, 1
        %v413 = vrot.slane %v220, 1
        %v414 = vsel %vm411, %v412, %v413
        %v427 = vunpack.c.l.b16 %v396
        %v428 = vunpack.c.l.b16 %v397
        %v429 = vunpack.c.l.b16 %v398
        %v430 = vunpack.c.l.b16 %v399
        %v431 = vunpack.c.l.b16 %v400
        %v432 = vunpack.c.l.b16 %v401
        %v433 = vunpack.c.l.b16 %v402
        %v434 = vunpack.c.l.b16 %v403
        %v435 = vunpack.c.l.b16 %v404
        %v436 = vunpack.c.l.b16 %v405
        %v437 = vunpack.c.l.b16 %v406
        %v438 = vunpack.c.l.b16 %v407
        %v439 = vpack.c.b16 %v428, %v427
        %v440 = vpack.c.b16 %v430, %v429
        %v441 = vpack.c.b16 %v432, %v431
        %v442 = vpack.c.b16 %v434, %v433
        %v443 = vpack.c.b16 %v436, %v435
        %v444 = vpack.c.b16 %v438, %v437
        %v452 = vsel %vm270, %v414, 0
        %454 = vmatprep.subr.bf16.mxu0 0
        %455 = vmatpush1.bf16.msra.mxu0 0
        %456 = vmatprep.subr.bf16.mxu0 0
        %457 = vmatpush1.bf16.msra.mxu0 0
        %458 = vmatprep.subr.bf16.mxu0 0
        %459 = vmatpush1.bf16.msra.mxu0 %v444
        %460 = vmatprep.subr.bf16.mxu0 0
        %461 = vmatpush1.bf16.msra.mxu0 %v443
        %462 = vmatprep.subr.bf16.mxu0 0
        %463 = vmatpush1.bf16.msra.mxu0 %v442
        %464 = vmatprep.subr.bf16.mxu0 0
        %465 = vmatpush1.bf16.msra.mxu0 %v441
        %466 = vmatprep.subr.bf16.mxu0 0
        %467 = vmatpush1.bf16.msra.mxu0 %v440
        %468 = vmatprep.subr.bf16.mxu0 0
        %469 = vmatpush1.bf16.msra.mxu0 %v439
        %470 = vmatprep.subr.bf16.mxu0 0
        %471 = vmatpush2.bf16.msra.mxu0 0
        %472 = vmatprep.subr.bf16.mxu0 0
        %473 = vmatpush2.bf16.msra.mxu0 0
        %474 = vmatprep.subr.bf16.mxu0 0
        %475 = vmatpush2.bf16.msra.mxu0 0
        %476 = vmatprep.subr.bf16.mxu0 0
        %477 = vmatpush2.bf16.msra.mxu0 0
        %478 = vmatprep.subr.bf16.mxu0 0
        %479 = vmatpush2.bf16.msra.mxu0 0
        %480 = vmatprep.subr.bf16.mxu0 0
        %481 = vmatpush2.bf16.msra.mxu0 0
        %482 = vmatprep.subr.bf16.mxu0 0
        %483 = vmatpush2.bf16.msra.mxu0 0
        %484 = vmatprep.subr.bf16.mxu0 0
        %485 = vmatpush2.bf16.msra.mxu0 0
        %486 = vmatprep.mubr.bf16.mxu0 0
        %487 = vmatmul.mubr.bf16.gmra.mxu0 %v452
        %v488 = vpop.f32.mrf.mxu0
        %v489 = vadd.f32 0.0, %v488
        %v490 = vpop.f32.mrf.mxu0
        %v491 = vpop.f32.mrf.mxu0
        %v492 = vadd.f32 0.0, %v491
        %v493 = vpop.f32.mrf.mxu0
        %494 = vdwg.mxu0
        %v495 = vadd.f32 %v388, %v489
        %v496 = vadd.f32 %v391, %v492
        %v497 = vld [vmem:[%s178 + $0x8] sm:$0x3]
        %s498 = scalar_lea.vmem %s1, 144
        %v499 = vld [vmem:[%s498] sm:$0xf]
        %v500 = vld [vmem:[%s498 + $0x4] sm:$0xf]
        %v501 = vld [vmem:[%s498 + $0x8] sm:$0xf]
        %v502 = vld [vmem:[%s498 + $0xc] sm:$0xf]
        %v503 = vld [vmem:[%s498 + $0x10] sm:$0xf]
        %v504 = vld [vmem:[%s498 + $0x14] sm:$0xf]
        %v505 = vld [vmem:[%s498 + $0x18] sm:$0xf]
        %v506 = vld [vmem:[%s498 + $0x1c] sm:$0xf]
        %v507 = vld [vmem:[%s498 + $0x20] sm:$0xf]
        %v508 = vld [vmem:[%s498 + $0x24] sm:$0xf]
        %v509 = vld [vmem:[%s498 + $0x28] sm:$0xf]
        %v510 = vld [vmem:[%s498 + $0x2c] sm:$0xf]
        %v512 = vunpack.c.l.b16 %v497
        %v513 = vpack.c.b16 %v512, %v512
        %vm514 = vsmask.f32 6400
        %v516 = vshrl.u32 %v410, 16
        %v518 = vrot.slane %v516, 1
        %v519 = vshll.u32 %v410, 16
        %v521 = vrot.slane %v519, 2
        %v522 = vor.u32 %v518, %v521
        %v524 = vshrl.u32 %v513, 16
        %v526 = vrot.slane %v524, 1
        %v527 = vshll.u32 %v513, 16
        %v529 = vrot.slane %v527, 2
        %v530 = vor.u32 %v526, %v529
        %v531 = vsel %vm514, %v522, %v530
        %v544 = vunpack.c.l.b16 %v499
        %v545 = vunpack.c.l.b16 %v500
        %v546 = vunpack.c.l.b16 %v501
        %v547 = vunpack.c.l.b16 %v502
        %v548 = vunpack.c.l.b16 %v503
        %v549 = vunpack.c.l.b16 %v504
        %v550 = vunpack.c.l.b16 %v505
        %v551 = vunpack.c.l.b16 %v506
        %v552 = vunpack.c.l.b16 %v507
        %v553 = vunpack.c.l.b16 %v508
        %v554 = vunpack.c.l.b16 %v509
        %v555 = vunpack.c.l.b16 %v510
        %v556 = vpack.c.b16 %v545, %v544
        %v557 = vpack.c.b16 %v547, %v546
        %v558 = vpack.c.b16 %v549, %v548
        %v559 = vpack.c.b16 %v551, %v550
        %v560 = vpack.c.b16 %v553, %v552
        %v561 = vpack.c.b16 %v555, %v554
        %v569 = vsel %vm270, %v531, 0
        %571 = vmatprep.subr.bf16.mxu0 0
        %572 = vmatpush1.bf16.msra.mxu0 0
        %573 = vmatprep.subr.bf16.mxu0 0
        %574 = vmatpush1.bf16.msra.mxu0 0
        %575 = vmatprep.subr.bf16.mxu0 0
        %576 = vmatpush1.bf16.msra.mxu0 %v561
        %577 = vmatprep.subr.bf16.mxu0 0
        %578 = vmatpush1.bf16.msra.mxu0 %v560
        %579 = vmatprep.subr.bf16.mxu0 0
        %580 = vmatpush1.bf16.msra.mxu0 %v559
        %581 = vmatprep.subr.bf16.mxu0 0
        %582 = vmatpush1.bf16.msra.mxu0 %v558
        %583 = vmatprep.subr.bf16.mxu0 0
        %584 = vmatpush1.bf16.msra.mxu0 %v557
        %585 = vmatprep.subr.bf16.mxu0 0
        %586 = vmatpush1.bf16.msra.mxu0 %v556
        %587 = vmatprep.subr.bf16.mxu0 0
        %588 = vmatpush2.bf16.msra.mxu0 0
        %589 = vmatprep.subr.bf16.mxu0 0
        %590 = vmatpush2.bf16.msra.mxu0 0
        %591 = vmatprep.subr.bf16.mxu0 0
        %592 = vmatpush2.bf16.msra.mxu0 0
        %593 = vmatprep.subr.bf16.mxu0 0
        %594 = vmatpush2.bf16.msra.mxu0 0
        %595 = vmatprep.subr.bf16.mxu0 0
        %596 = vmatpush2.bf16.msra.mxu0 0
        %597 = vmatprep.subr.bf16.mxu0 0
        %598 = vmatpush2.bf16.msra.mxu0 0
        %599 = vmatprep.subr.bf16.mxu0 0
        %600 = vmatpush2.bf16.msra.mxu0 0
        %601 = vmatprep.subr.bf16.mxu0 0
        %602 = vmatpush2.bf16.msra.mxu0 0
        %603 = vmatprep.mubr.bf16.mxu0 0
        %604 = vmatmul.mubr.bf16.gmra.mxu0 %v569
        %v605 = vpop.f32.mrf.mxu0
        %v606 = vadd.f32 0.0, %v605
        %v607 = vpop.f32.mrf.mxu0
        %v608 = vpop.f32.mrf.mxu0
        %v609 = vadd.f32 0.0, %v608
        %v610 = vpop.f32.mrf.mxu0
        %611 = vdwg.mxu0
        %v612 = vadd.f32 %v495, %v606
        %v613 = vadd.f32 %v496, %v609
        %v614 = vld [vmem:[%s178] sm:$0xc]
        %s615 = scalar_lea.vmem %s1, 192
        %v616 = vld [vmem:[%s615] sm:$0xf]
        %v617 = vld [vmem:[%s615 + $0x4] sm:$0xf]
        %v618 = vld [vmem:[%s615 + $0x8] sm:$0xf]
        %v619 = vld [vmem:[%s615 + $0xc] sm:$0xf]
        %v620 = vld [vmem:[%s615 + $0x10] sm:$0xf]
        %v621 = vld [vmem:[%s615 + $0x14] sm:$0xf]
        %v622 = vld [vmem:[%s615 + $0x18] sm:$0xf]
        %v623 = vld [vmem:[%s615 + $0x1c] sm:$0xf]
        %v624 = vld [vmem:[%s615 + $0x20] sm:$0xf]
        %v625 = vld [vmem:[%s615 + $0x24] sm:$0xf]
        %v626 = vld [vmem:[%s615 + $0x28] sm:$0xf]
        %v627 = vld [vmem:[%s615 + $0x2c] sm:$0xf]
        %v629 = vunpack.c.l.b16 %v614
        %v630 = vpack.c.b16 %v217, %v629
        %vm631 = vcmask 1045504
        %v632 = vrot.slane %v630, 2
        %v633 = vrot.slane %v513, 2
        %v634 = vsel %vm631, %v632, %v633
        %v647 = vunpack.c.l.b16 %v616
        %v648 = vunpack.c.l.b16 %v617
        %v649 = vunpack.c.l.b16 %v618
        %v650 = vunpack.c.l.b16 %v619
        %v651 = vunpack.c.l.b16 %v620
        %v652 = vunpack.c.l.b16 %v621
        %v653 = vunpack.c.l.b16 %v622
        %v654 = vunpack.c.l.b16 %v623
        %v655 = vunpack.c.l.b16 %v624
        %v656 = vunpack.c.l.b16 %v625
        %v657 = vunpack.c.l.b16 %v626
        %v658 = vunpack.c.l.b16 %v627
        %v659 = vpack.c.b16 %v648, %v647
        %v660 = vpack.c.b16 %v650, %v649
        %v661 = vpack.c.b16 %v652, %v651
        %v662 = vpack.c.b16 %v654, %v653
        %v663 = vpack.c.b16 %v656, %v655
        %v664 = vpack.c.b16 %v658, %v657
        %v672 = vsel %vm270, %v634, 0
        %674 = vmatprep.subr.bf16.mxu0 0
        %675 = vmatpush1.bf16.msra.mxu0 0
        %676 = vmatprep.subr.bf16.mxu0 0
        %677 = vmatpush1.bf16.msra.mxu0 0
        %678 = vmatprep.subr.bf16.mxu0 0
        %679 = vmatpush1.bf16.msra.mxu0 %v664
        %680 = vmatprep.subr.bf16.mxu0 0
        %681 = vmatpush1.bf16.msra.mxu0 %v663
        %682 = vmatprep.subr.bf16.mxu0 0
        %683 = vmatpush1.bf16.msra.mxu0 %v662
        %684 = vmatprep.subr.bf16.mxu0 0
        %685 = vmatpush1.bf16.msra.mxu0 %v661
        %686 = vmatprep.subr.bf16.mxu0 0
        %687 = vmatpush1.bf16.msra.mxu0 %v660
        %688 = vmatprep.subr.bf16.mxu0 0
        %689 = vmatpush1.bf16.msra.mxu0 %v659
        %690 = vmatprep.subr.bf16.mxu0 0
        %691 = vmatpush2.bf16.msra.mxu0 0
        %692 = vmatprep.subr.bf16.mxu0 0
        %693 = vmatpush2.bf16.msra.mxu0 0
        %694 = vmatprep.subr.bf16.mxu0 0
        %695 = vmatpush2.bf16.msra.mxu0 0
        %696 = vmatprep.subr.bf16.mxu0 0
        %697 = vmatpush2.bf16.msra.mxu0 0
        %698 = vmatprep.subr.bf16.mxu0 0
        %699 = vmatpush2.bf16.msra.mxu0 0
        %700 = vmatprep.subr.bf16.mxu0 0
        %701 = vmatpush2.bf16.msra.mxu0 0
        %702 = vmatprep.subr.bf16.mxu0 0
        %703 = vmatpush2.bf16.msra.mxu0 0
        %704 = vmatprep.subr.bf16.mxu0 0
        %705 = vmatpush2.bf16.msra.mxu0 0
        %706 = vmatprep.mubr.bf16.mxu0 0
        %707 = vmatmul.mubr.bf16.gmra.mxu0 %v672
        %v708 = vpop.f32.mrf.mxu0
        %v709 = vadd.f32 0.0, %v708
        %v710 = vpop.f32.mrf.mxu0
        %v711 = vpop.f32.mrf.mxu0
        %v712 = vadd.f32 0.0, %v711
        %v713 = vpop.f32.mrf.mxu0
        %714 = vdwg.mxu0
        %v715 = vadd.f32 %v612, %v709
        %v716 = vadd.f32 %v613, %v712
        %v717 = vld [vmem:[%s178 + $0x8] sm:$0x7]
        %s718 = scalar_lea.vmem %s1, 240
        %v719 = vld [vmem:[%s718] sm:$0xf]
        %v720 = vld [vmem:[%s718 + $0x4] sm:$0xf]
        %v721 = vld [vmem:[%s718 + $0x8] sm:$0xf]
        %v722 = vld [vmem:[%s718 + $0xc] sm:$0xf]
        %v723 = vld [vmem:[%s718 + $0x10] sm:$0xf]
        %v724 = vld [vmem:[%s718 + $0x14] sm:$0xf]
        %v725 = vld [vmem:[%s718 + $0x18] sm:$0xf]
        %v726 = vld [vmem:[%s718 + $0x1c] sm:$0xf]
        %v727 = vld [vmem:[%s718 + $0x20] sm:$0xf]
        %v728 = vld [vmem:[%s718 + $0x24] sm:$0xf]
        %v729 = vld [vmem:[%s718 + $0x28] sm:$0xf]
        %v730 = vld [vmem:[%s718 + $0x2c] sm:$0xf]
        %v732 = vunpack.c.l.b16 %v717
        %v733 = vpack.c.b16 %v732, %v732
        %vm734 = vsmask.f32 5376
        %v736 = vshrl.u32 %v630, 16
        %v738 = vrot.slane %v736, 2
        %v739 = vshll.u32 %v630, 16
        %v741 = vrot.slane %v739, 3
        %v742 = vor.u32 %v738, %v741
        %v744 = vshrl.u32 %v733, 16
        %v746 = vrot.slane %v744, 2
        %v747 = vshll.u32 %v733, 16
        %v749 = vrot.slane %v747, 3
        %v750 = vor.u32 %v746, %v749
        %v751 = vsel %vm734, %v742, %v750
        %v764 = vunpack.c.l.b16 %v719
        %v765 = vunpack.c.l.b16 %v720
        %v766 = vunpack.c.l.b16 %v721
        %v767 = vunpack.c.l.b16 %v722
        %v768 = vunpack.c.l.b16 %v723
        %v769 = vunpack.c.l.b16 %v724
        %v770 = vunpack.c.l.b16 %v725
        %v771 = vunpack.c.l.b16 %v726
        %v772 = vunpack.c.l.b16 %v727
        %v773 = vunpack.c.l.b16 %v728
        %v774 = vunpack.c.l.b16 %v729
        %v775 = vunpack.c.l.b16 %v730
        %v776 = vpack.c.b16 %v765, %v764
        %v777 = vpack.c.b16 %v767, %v766
        %v778 = vpack.c.b16 %v769, %v768
        %v779 = vpack.c.b16 %v771, %v770
        %v780 = vpack.c.b16 %v773, %v772
        %v781 = vpack.c.b16 %v775, %v774
        %v789 = vsel %vm270, %v751, 0
        %791 = vmatprep.subr.bf16.mxu0 0
        %792 = vmatpush1.bf16.msra.mxu0 0
        %793 = vmatprep.subr.bf16.mxu0 0
        %794 = vmatpush1.bf16.msra.mxu0 0
        %795 = vmatprep.subr.bf16.mxu0 0
        %796 = vmatpush1.bf16.msra.mxu0 %v781
        %797 = vmatprep.subr.bf16.mxu0 0
        %798 = vmatpush1.bf16.msra.mxu0 %v780
        %799 = vmatprep.subr.bf16.mxu0 0
        %800 = vmatpush1.bf16.msra.mxu0 %v779
        %801 = vmatprep.subr.bf16.mxu0 0
        %802 = vmatpush1.bf16.msra.mxu0 %v778
        %803 = vmatprep.subr.bf16.mxu0 0
        %804 = vmatpush1.bf16.msra.mxu0 %v777
        %805 = vmatprep.subr.bf16.mxu0 0
        %806 = vmatpush1.bf16.msra.mxu0 %v776
        %807 = vmatprep.subr.bf16.mxu0 0
        %808 = vmatpush2.bf16.msra.mxu0 0
        %809 = vmatprep.subr.bf16.mxu0 0
        %810 = vmatpush2.bf16.msra.mxu0 0
        %811 = vmatprep.subr.bf16.mxu0 0
        %812 = vmatpush2.bf16.msra.mxu0 0
        %813 = vmatprep.subr.bf16.mxu0 0
        %814 = vmatpush2.bf16.msra.mxu0 0
        %815 = vmatprep.subr.bf16.mxu0 0
        %816 = vmatpush2.bf16.msra.mxu0 0
        %817 = vmatprep.subr.bf16.mxu0 0
        %818 = vmatpush2.bf16.msra.mxu0 0
        %819 = vmatprep.subr.bf16.mxu0 0
        %820 = vmatpush2.bf16.msra.mxu0 0
        %821 = vmatprep.subr.bf16.mxu0 0
        %822 = vmatpush2.bf16.msra.mxu0 0
        %823 = vmatprep.mubr.bf16.mxu0 0
        %824 = vmatmul.mubr.bf16.gmra.mxu0 %v789
        %v825 = vpop.f32.mrf.mxu0
        %v826 = vadd.f32 0.0, %v825
        %v827 = vpop.f32.mrf.mxu0
        %v828 = vpop.f32.mrf.mxu0
        %v829 = vadd.f32 0.0, %v828
        %v830 = vpop.f32.mrf.mxu0
        %831 = vdwg.mxu0
        %v832 = vadd.f32 %v715, %v826
        %v833 = vadd.f32 %v716, %v829
        %v834 = vld [vmem:[%s178] sm:$0x8]
        %s835 = scalar_lea.vmem %s1, 288
        %v836 = vld [vmem:[%s835] sm:$0xf]
        %v837 = vld [vmem:[%s835 + $0x4] sm:$0xf]
        %v838 = vld [vmem:[%s835 + $0x8] sm:$0xf]
        %v839 = vld [vmem:[%s835 + $0xc] sm:$0xf]
        %v840 = vld [vmem:[%s835 + $0x10] sm:$0xf]
        %v841 = vld [vmem:[%s835 + $0x14] sm:$0xf]
        %v842 = vld [vmem:[%s835 + $0x18] sm:$0xf]
        %v843 = vld [vmem:[%s835 + $0x1c] sm:$0xf]
        %v844 = vld [vmem:[%s835 + $0x20] sm:$0xf]
        %v845 = vld [vmem:[%s835 + $0x24] sm:$0xf]
        %v846 = vld [vmem:[%s835 + $0x28] sm:$0xf]
        %v847 = vld [vmem:[%s835 + $0x2c] sm:$0xf]
        %v849 = vunpack.c.l.b16 %v834
        %v850 = vpack.c.b16 %v217, %v849
        %vm851 = vcmask 1044480
        %v852 = vrot.slane %v850, 3
        %v853 = vrot.slane %v733, 3
        %v854 = vsel %vm851, %v852, %v853
        %v867 = vunpack.c.l.b16 %v836
        %v868 = vunpack.c.l.b16 %v837
        %v869 = vunpack.c.l.b16 %v838
        %v870 = vunpack.c.l.b16 %v839
        %v871 = vunpack.c.l.b16 %v840
        %v872 = vunpack.c.l.b16 %v841
        %v873 = vunpack.c.l.b16 %v842
        %v874 = vunpack.c.l.b16 %v843
        %v875 = vunpack.c.l.b16 %v844
        %v876 = vunpack.c.l.b16 %v845
        %v877 = vunpack.c.l.b16 %v846
        %v878 = vunpack.c.l.b16 %v847
        %v879 = vpack.c.b16 %v868, %v867
        %v880 = vpack.c.b16 %v870, %v869
        %v881 = vpack.c.b16 %v872, %v871
        %v882 = vpack.c.b16 %v874, %v873
        %v883 = vpack.c.b16 %v876, %v875
        %v884 = vpack.c.b16 %v878, %v877
        %v892 = vsel %vm270, %v854, 0
        %894 = vmatprep.subr.bf16.mxu0 0
        %895 = vmatpush1.bf16.msra.mxu0 0
        %896 = vmatprep.subr.bf16.mxu0 0
        %897 = vmatpush1.bf16.msra.mxu0 0
        %898 = vmatprep.subr.bf16.mxu0 0
        %899 = vmatpush1.bf16.msra.mxu0 %v884
        %900 = vmatprep.subr.bf16.mxu0 0
        %901 = vmatpush1.bf16.msra.mxu0 %v883
        %902 = vmatprep.subr.bf16.mxu0 0
        %903 = vmatpush1.bf16.msra.mxu0 %v882
        %904 = vmatprep.subr.bf16.mxu0 0
        %905 = vmatpush1.bf16.msra.mxu0 %v881
        %906 = vmatprep.subr.bf16.mxu0 0
        %907 = vmatpush1.bf16.msra.mxu0 %v880
        %908 = vmatprep.subr.bf16.mxu0 0
        %909 = vmatpush1.bf16.msra.mxu0 %v879
        %910 = vmatprep.subr.bf16.mxu0 0
        %911 = vmatpush2.bf16.msra.mxu0 0
        %912 = vmatprep.subr.bf16.mxu0 0
        %913 = vmatpush2.bf16.msra.mxu0 0
        %914 = vmatprep.subr.bf16.mxu0 0
        %915 = vmatpush2.bf16.msra.mxu0 0
        %916 = vmatprep.subr.bf16.mxu0 0
        %917 = vmatpush2.bf16.msra.mxu0 0
        %918 = vmatprep.subr.bf16.mxu0 0
        %919 = vmatpush2.bf16.msra.mxu0 0
        %920 = vmatprep.subr.bf16.mxu0 0
        %921 = vmatpush2.bf16.msra.mxu0 0
        %922 = vmatprep.subr.bf16.mxu0 0
        %923 = vmatpush2.bf16.msra.mxu0 0
        %924 = vmatprep.subr.bf16.mxu0 0
        %925 = vmatpush2.bf16.msra.mxu0 0
        %926 = vmatprep.mubr.bf16.mxu0 0
        %927 = vmatmul.mubr.bf16.gmra.mxu0 %v892
        %v928 = vpop.f32.mrf.mxu0
        %v929 = vadd.f32 0.0, %v928
        %v930 = vpop.f32.mrf.mxu0
        %v931 = vpop.f32.mrf.mxu0
        %v932 = vadd.f32 0.0, %v931
        %v933 = vpop.f32.mrf.mxu0
        %934 = vdwg.mxu0
        %v935 = vadd.f32 %v832, %v929
        %v936 = vadd.f32 %v833, %v932
        %v937 = vld [vmem:[%s178 + $0x8] sm:$0xf]
        %s938 = scalar_lea.vmem %s1, 336
        %v939 = vld [vmem:[%s938] sm:$0xf]
        %v940 = vld [vmem:[%s938 + $0x4] sm:$0xf]
        %v941 = vld [vmem:[%s938 + $0x8] sm:$0xf]
        %v942 = vld [vmem:[%s938 + $0xc] sm:$0xf]
        %v943 = vld [vmem:[%s938 + $0x10] sm:$0xf]
        %v944 = vld [vmem:[%s938 + $0x14] sm:$0xf]
        %v945 = vld [vmem:[%s938 + $0x18] sm:$0xf]
        %v946 = vld [vmem:[%s938 + $0x1c] sm:$0xf]
        %v947 = vld [vmem:[%s938 + $0x20] sm:$0xf]
        %v948 = vld [vmem:[%s938 + $0x24] sm:$0xf]
        %v949 = vld [vmem:[%s938 + $0x28] sm:$0xf]
        %v950 = vld [vmem:[%s938 + $0x2c] sm:$0xf]
        %v952 = vunpack.c.l.b16 %v937
        %v953 = vpack.c.b16 %v952, %v952
        %vm954 = vsmask.f32 4352
        %v956 = vshrl.u32 %v850, 16
        %v958 = vrot.slane %v956, 3
        %v959 = vshll.u32 %v850, 16
        %v961 = vrot.slane %v959, 4
        %v962 = vor.u32 %v958, %v961
        %v964 = vshrl.u32 %v953, 16
        %v966 = vrot.slane %v964, 3
        %v967 = vshll.u32 %v953, 16
        %v969 = vrot.slane %v967, 4
        %v970 = vor.u32 %v966, %v969
        %v971 = vsel %vm954, %v962, %v970
        %v984 = vunpack.c.l.b16 %v939
        %v985 = vunpack.c.l.b16 %v940
        %v986 = vunpack.c.l.b16 %v941
        %v987 = vunpack.c.l.b16 %v942
        %v988 = vunpack.c.l.b16 %v943
        %v989 = vunpack.c.l.b16 %v944
        %v990 = vunpack.c.l.b16 %v945
        %v991 = vunpack.c.l.b16 %v946
        %v992 = vunpack.c.l.b16 %v947
        %v993 = vunpack.c.l.b16 %v948
        %v994 = vunpack.c.l.b16 %v949
        %v995 = vunpack.c.l.b16 %v950
        %v996 = vpack.c.b16 %v985, %v984
        %v997 = vpack.c.b16 %v987, %v986
        %v998 = vpack.c.b16 %v989, %v988
        %v999 = vpack.c.b16 %v991, %v990
        %v1000 = vpack.c.b16 %v993, %v992
        %v1001 = vpack.c.b16 %v995, %v994
        %v1009 = vsel %vm270, %v971, 0
        %1011 = vmatprep.subr.bf16.mxu0 0
        %1012 = vmatpush1.bf16.msra.mxu0 0
        %1013 = vmatprep.subr.bf16.mxu0 0
        %1014 = vmatpush1.bf16.msra.mxu0 0
        %1015 = vmatprep.subr.bf16.mxu0 0
        %1016 = vmatpush1.bf16.msra.mxu0 %v1001
        %1017 = vmatprep.subr.bf16.mxu0 0
        %1018 = vmatpush1.bf16.msra.mxu0 %v1000
        %1019 = vmatprep.subr.bf16.mxu0 0
        %1020 = vmatpush1.bf16.msra.mxu0 %v999
        %1021 = vmatprep.subr.bf16.mxu0 0
        %1022 = vmatpush1.bf16.msra.mxu0 %v998
        %1023 = vmatprep.subr.bf16.mxu0 0
        %1024 = vmatpush1.bf16.msra.mxu0 %v997
        %1025 = vmatprep.subr.bf16.mxu0 0
        %1026 = vmatpush1.bf16.msra.mxu0 %v996
        %1027 = vmatprep.subr.bf16.mxu0 0
        %1028 = vmatpush2.bf16.msra.mxu0 0
        %1029 = vmatprep.subr.bf16.mxu0 0
        %1030 = vmatpush2.bf16.msra.mxu0 0
        %1031 = vmatprep.subr.bf16.mxu0 0
        %1032 = vmatpush2.bf16.msra.mxu0 0
        %1033 = vmatprep.subr.bf16.mxu0 0
        %1034 = vmatpush2.bf16.msra.mxu0 0
        %1035 = vmatprep.subr.bf16.mxu0 0
        %1036 = vmatpush2.bf16.msra.mxu0 0
        %1037 = vmatprep.subr.bf16.mxu0 0
        %1038 = vmatpush2.bf16.msra.mxu0 0
        %1039 = vmatprep.subr.bf16.mxu0 0
        %1040 = vmatpush2.bf16.msra.mxu0 0
        %1041 = vmatprep.subr.bf16.mxu0 0
        %1042 = vmatpush2.bf16.msra.mxu0 0
        %1043 = vmatprep.mubr.bf16.mxu0 0
        %1044 = vmatmul.mubr.bf16.gmra.mxu0 %v1009
        %v1045 = vpop.f32.mrf.mxu0
        %v1046 = vadd.f32 0.0, %v1045
        %v1047 = vpop.f32.mrf.mxu0
        %v1048 = vpop.f32.mrf.mxu0
        %v1049 = vadd.f32 0.0, %v1048
        %v1050 = vpop.f32.mrf.mxu0
        %1051 = vdwg.mxu0
        %v1052 = vadd.f32 %v935, %v1046
        %v1053 = vadd.f32 %v936, %v1049
        %s1054 = scalar_lea.vmem %s1, 384
        %v1055 = vld [vmem:[%s1054] sm:$0xf]
        %v1056 = vld [vmem:[%s1054 + $0x4] sm:$0xf]
        %v1057 = vld [vmem:[%s1054 + $0x8] sm:$0xf]
        %v1058 = vld [vmem:[%s1054 + $0xc] sm:$0xf]
        %v1059 = vld [vmem:[%s1054 + $0x10] sm:$0xf]
        %v1060 = vld [vmem:[%s1054 + $0x14] sm:$0xf]
        %v1061 = vld [vmem:[%s1054 + $0x18] sm:$0xf]
        %v1062 = vld [vmem:[%s1054 + $0x1c] sm:$0xf]
        %v1063 = vld [vmem:[%s1054 + $0x20] sm:$0xf]
        %v1064 = vld [vmem:[%s1054 + $0x24] sm:$0xf]
        %v1065 = vld [vmem:[%s1054 + $0x28] sm:$0xf]
        %v1066 = vld [vmem:[%s1054 + $0x2c] sm:$0xf]
        %v1067 = vpack.c.b16 %v952, %v217
        %v1080 = vunpack.c.l.b16 %v1055
        %v1081 = vunpack.c.l.b16 %v1056
        %v1082 = vunpack.c.l.b16 %v1057
        %v1083 = vunpack.c.l.b16 %v1058
        %v1084 = vunpack.c.l.b16 %v1059
        %v1085 = vunpack.c.l.b16 %v1060
        %v1086 = vunpack.c.l.b16 %v1061
        %v1087 = vunpack.c.l.b16 %v1062
        %v1088 = vunpack.c.l.b16 %v1063
        %v1089 = vunpack.c.l.b16 %v1064
        %v1090 = vunpack.c.l.b16 %v1065
        %v1091 = vunpack.c.l.b16 %v1066
        %v1092 = vpack.c.b16 %v1081, %v1080
        %v1093 = vpack.c.b16 %v1083, %v1082
        %v1094 = vpack.c.b16 %v1085, %v1084
        %v1095 = vpack.c.b16 %v1087, %v1086
        %v1096 = vpack.c.b16 %v1089, %v1088
        %v1097 = vpack.c.b16 %v1091, %v1090
        %v1105 = vsel %vm270, %v1067, 0
        %1107 = vmatprep.subr.bf16.mxu0 0
        %1108 = vmatpush1.bf16.msra.mxu0 0
        %1109 = vmatprep.subr.bf16.mxu0 0
        %1110 = vmatpush1.bf16.msra.mxu0 0
        %1111 = vmatprep.subr.bf16.mxu0 0
        %1112 = vmatpush1.bf16.msra.mxu0 %v1097
        %1113 = vmatprep.subr.bf16.mxu0 0
        %1114 = vmatpush1.bf16.msra.mxu0 %v1096
        %1115 = vmatprep.subr.bf16.mxu0 0
        %1116 = vmatpush1.bf16.msra.mxu0 %v1095
        %1117 = vmatprep.subr.bf16.mxu0 0
        %1118 = vmatpush1.bf16.msra.mxu0 %v1094
        %1119 = vmatprep.subr.bf16.mxu0 0
        %1120 = vmatpush1.bf16.msra.mxu0 %v1093
        %1121 = vmatprep.subr.bf16.mxu0 0
        %1122 = vmatpush1.bf16.msra.mxu0 %v1092
        %1123 = vmatprep.subr.bf16.mxu0 0
        %1124 = vmatpush2.bf16.msra.mxu0 0
        %1125 = vmatprep.subr.bf16.mxu0 0
        %1126 = vmatpush2.bf16.msra.mxu0 0
        %1127 = vmatprep.subr.bf16.mxu0 0
        %1128 = vmatpush2.bf16.msra.mxu0 0
        %1129 = vmatprep.subr.bf16.mxu0 0
        %1130 = vmatpush2.bf16.msra.mxu0 0
        %1131 = vmatprep.subr.bf16.mxu0 0
        %1132 = vmatpush2.bf16.msra.mxu0 0
        %1133 = vmatprep.subr.bf16.mxu0 0
        %1134 = vmatpush2.bf16.msra.mxu0 0
        %1135 = vmatprep.subr.bf16.mxu0 0
        %1136 = vmatpush2.bf16.msra.mxu0 0
        %1137 = vmatprep.subr.bf16.mxu0 0
        %1138 = vmatpush2.bf16.msra.mxu0 0
        %1139 = vmatprep.mubr.bf16.mxu0 0
        %1140 = vmatmul.mubr.bf16.gmra.mxu0 %v1105
        %v1141 = vpop.f32.mrf.mxu0
        %v1142 = vadd.f32 0.0, %v1141
        %v1143 = vpop.f32.mrf.mxu0
        %v1144 = vpop.f32.mrf.mxu0
        %v1145 = vadd.f32 0.0, %v1144
        %v1146 = vpop.f32.mrf.mxu0
        %1147 = vdwg.mxu0
        %v1148 = vadd.f32 %v1052, %v1142
        %v1149 = vadd.f32 %v1053, %v1145
        %v1150 = vld [vmem:[#allocation2] sm:$0x1]
        %v1152 = vlaneseq
        %v1153 = vshrl.u32 %v1152, 7
        %v1154 = vsub.s32 0, %v1153
        %v1155 = vrot.slane %v1150, %v1154
        %v1157 = vadd.f32 %v1148, %v1155
        %v1158 = vadd.f32 %v1149, %v1155
        %v1159 = vmax.f32 %v1157, 0.0
        %v1160 = vmax.f32 %v1158, 0.0
        %v1161 = vpack.c.bf16 %v1160, %v1159
        %v1163 = vunpack.c.l.b16 %v1161
        %v1164 = vunpack.c.h.b16 %v1161
        %v1165 = vpack.c.b16 %v1163, %v1163
        %v1166 = vpack.c.b16 %v1164, %v1164
        %1169 = vst [vmem:[%s183] sm:$0xf] %v1165
        %1170 = vst [vmem:[%s183 + $0x4] sm:$0xf] %v1166
        %p1171 = scmp.lt.s32.totalorder %s15, 1
        %s1172 = scalar_select %p1171, %s15, 1
        %s1173 = smul.addr %s1172, 2
        %s1174 = smul.addr %s1173, 4
        %s1175 = scalar_lea.vmem %s3, %s1174
        // Predicated region
        $region37: #{cpm_stage_x_forward.5} parent=31 // pred_check
          %p1176 = pneg %p101
        $region38: #{cpm_stage_x_forward.5} parent=31 // pred_check_branch
          %1178 = sbr.rel (%p1176) target = $region40
        $region39: #{cpm_stage_x_forward.5} parent=31 // pred_region
          _
        $region40: #{cpm_stage_x_forward.5} parent=31 // pred_fallthru
          _
      $region32: #{cpm_stage_x_forward.5} parent=5 // pred_fallthru
        _
      %p1179 = scmp.le.s32.totalorder 2, %s10
      // Predicated region
      $region41: #{cpm_stage_x_forward.5} parent=5 // pred_check
        %p1180 = pneg %p1179
      $region42: #{cpm_stage_x_forward.5} parent=5 // pred_check_branch
        %1182 = sbr.rel (%p1180) target = $region44
      $region43: #{cpm_stage_x_forward.5} parent=5 // pred_region
        %s1183 = ssub.s32 %s10, 2
        // Predicated region
        $region45: #{cpm_stage_x_forward.5} parent=43 // pred_check
          %p1184 = pneg %p107
        $region46: #{cpm_stage_x_forward.5} parent=43 // pred_check_branch
          %1186 = sbr.rel (%p1184) target = $region48
        $region47: #{cpm_stage_x_forward.5} parent=43 // pred_region
          %p1187 = scmp.lt.s32.totalorder %s16, 1
          %s1188 = scalar_select %p1187, %s16, 1
          %s1189 = smul.addr %s1188, 2
          %s1190 = smul.addr %s1189, 4
          %s1191 = scalar_lea.vmem %s3, %s1190
        $region48: #{cpm_stage_x_forward.5} parent=43 // pred_fallthru
          _
      $region44: #{cpm_stage_x_forward.5} parent=5 // pred_fallthru
        _
    $region6: #{cpm_stage_x_forward.5} parent=1 // loop_footer
      %s14 = sadd.s32 1, %s10
    $region7: #{cpm_stage_x_forward.5} parent=1 // loop_footer_branch
      %9 = sbr.rel target = $region3
    $region8: #{cpm_stage_x_forward.5} parent=1 // loop_exit
      _
    %1192 = vsyncpa [#allocation3], 1
    %s1193 = scalar_lea.sflag [#allocation3], 1
    %1194 = vsyncpa %s1193, 1

// kernel: cpm_stage_x_forward.6
$region0: #{cpm_stage_x_forward.6}
  #allocation0 [shape = 'u32[]', space=smem, size = 0x4, offset = 0x4, fixed_abs, tag = 'smem constant byte address 0x4 - core index']
  #allocation1 [shape = 'u32[144,128]{1,0:T(1,128)}', space=vmem, size = 0x12000, scoped, tag = 'internal scratch']
  %s0 = inlined_call_operand.vmem [shape: bf16[2,24,192], index: 0, kind: input, shape index: {}]
  %s1 = inlined_call_operand.vmem [shape: bf16[9,192,128], index: 1, kind: input, shape index: {}]
  %s2 = inlined_call_operand.vmem [shape: f32[1,128], index: 2, kind: input, shape index: {}]
  %s3 = inlined_call_operand.vmem [shape: bf16[2,16,128], index: 3, kind: output, shape index: {}]
  %s4 = sld [smem:[#allocation0]]
  $region45: #{cpm_stage_x_forward.6} parent=0
    _
  %s6 = ssub.s32 1, %s4
  %s7 = scalar_select 0, %s6, %s4
  loop: start=0, step=1, limit=4
  $region2: #{cpm_stage_x_forward.6} parent=0 // loop_pre_header
    _
  $region3: #{cpm_stage_x_forward.6} parent=0 // loop_header
    %s9 = sphi 0, %s13
    %p10 = scmp.ge.s32.totalorder %s9, 4
    %s19 = sphi 0, %s21
    %s22 = sphi 0, %s19
    %s23 = sphi 0, %s22
    %s39 = sphi 0, %s23
    %s43 = sphi 0, %s43
    %s45 = sphi 0, %s43
    %s46 = sphi 0, %s45
    %s60 = sphi 0, %s46
    %s64 = sphi 0, %s64
    %s66 = sphi 0, %s64
    %s67 = sphi 0, %s66
    %s81 = sphi 0, %s67
    %s87 = sphi 0, %s89
    %s90 = sphi 0, %s87
    %s91 = sphi 0, %s90
    %s107 = sphi 0, %s91
  $region4: #{cpm_stage_x_forward.6} parent=0 // loop_header_branch
    %12 = sbr.rel (%p10) target = $region8
  $region5: #{cpm_stage_x_forward.6} parent=0 // loop_body
    %s14 = ssub.s32 %s9, 1
    %s15 = ssub.s32 %s9, 2
    %s16 = sadd.s32 %s9, 1
    %s17 = ssub.s32 %s9, %s16
    %p18 = scmp.eq.s32.totalorder %s17, 0
    %s20 = sadd.s32 %s19, 1
    %s21 = scalar_select %p18, %s19, %s20
    %p24 = pneg %p18
    %p25 = scmp.eq.s32.totalorder %s9, 1
    %p26 = por %p24, %p25
    %p27 = scmp.ne.s32.totalorder %s19, %s22
    %p28 = scmp.eq.s32.totalorder %s9, 0
    %p29 = por %p27, %p28
    %p30 = scmp.ne.s32.totalorder %s19, %s22
    %p31 = scmp.eq.s32.totalorder %s14, 1
    %p32 = por %p30, %p31
    %p33 = scmp.ne.s32.totalorder %s22, %s23
    %p34 = scmp.eq.s32.totalorder %s14, 0
    %p35 = por %p33, %p34
    %p36 = scmp.ne.s32.totalorder %s22, %s23
    %p37 = scmp.eq.s32.totalorder %s15, 1
    %p38 = por %p36, %p37
    %p40 = scmp.ne.s32.totalorder %s23, %s39
    %p41 = scmp.eq.s32.totalorder %s15, 0
    %p42 = por %p40, %p41
    %s44 = sadd.s32 %s43, 1
    %p47 = scmp.eq.s32.totalorder %s9, 1
    %p48 = scmp.ne.s32.totalorder %s43, %s45
    %p49 = scmp.eq.s32.totalorder %s9, 0
    %p50 = por %p48, %p49
    %p51 = scmp.ne.s32.totalorder %s43, %s45
    %p52 = scmp.eq.s32.totalorder %s14, 1
    %p53 = por %p51, %p52
    %p54 = scmp.ne.s32.totalorder %s45, %s46
    %p55 = scmp.eq.s32.totalorder %s14, 0
    %p56 = por %p54, %p55
    %p57 = scmp.ne.s32.totalorder %s45, %s46
    %p58 = scmp.eq.s32.totalorder %s15, 1
    %p59 = por %p57, %p58
    %p61 = scmp.ne.s32.totalorder %s46, %s60
    %p62 = scmp.eq.s32.totalorder %s15, 0
    %p63 = por %p61, %p62
    %s65 = sadd.s32 %s64, 1
    %p68 = scmp.eq.s32.totalorder %s9, 1
    %p69 = scmp.ne.s32.totalorder %s64, %s66
    %p70 = scmp.eq.s32.totalorder %s9, 0
    %p71 = por %p69, %p70
    %p72 = scmp.ne.s32.totalorder %s64, %s66
    %p73 = scmp.eq.s32.totalorder %s14, 1
    %p74 = por %p72, %p73
    %p75 = scmp.ne.s32.totalorder %s66, %s67
    %p76 = scmp.eq.s32.totalorder %s14, 0
    %p77 = por %p75, %p76
    %p78 = scmp.ne.s32.totalorder %s66, %s67
    %p79 = scmp.eq.s32.totalorder %s15, 1
    %p80 = por %p78, %p79
    %p82 = scmp.ne.s32.totalorder %s67, %s81
    %p83 = scmp.eq.s32.totalorder %s15, 0
    %p84 = por %p82, %p83
    %s85 = ssub.s32 %s9, %s16
    %p86 = scmp.eq.s32.totalorder %s85, 0
    %s88 = sadd.s32 %s87, 1
    %s89 = scalar_select %p86, %s87, %s88
    %p92 = pneg %p86
    %p93 = scmp.eq.s32.totalorder %s9, 1
    %p94 = por %p92, %p93
    %p95 = scmp.ne.s32.totalorder %s87, %s90
    %p96 = scmp.eq.s32.totalorder %s9, 0
    %p97 = por %p95, %p96
    %p98 = scmp.ne.s32.totalorder %s87, %s90
    %p99 = scmp.eq.s32.totalorder %s14, 1
    %p100 = por %p98, %p99
    %p101 = scmp.ne.s32.totalorder %s90, %s91
    %p102 = scmp.eq.s32.totalorder %s14, 0
    %p103 = por %p101, %p102
    %p104 = scmp.ne.s32.totalorder %s90, %s91
    %p105 = scmp.eq.s32.totalorder %s15, 1
    %p106 = por %p104, %p105
    %p108 = scmp.ne.s32.totalorder %s91, %s107
    %p109 = scmp.eq.s32.totalorder %s15, 0
    %p110 = por %p108, %p109
    %p111 = scmp.le.s32.totalorder 1, %s9
    %p112 = scmp.lt.s32.totalorder %s9, 3
    %p113 = pnand %p111, %p112
    %p114 = pneg %p113
    // Predicated region
    $region9: #{cpm_stage_x_forward.6} parent=5 // pred_check
      _
    $region10: #{cpm_stage_x_forward.6} parent=5 // pred_check_branch
      %116 = sbr.rel (%p113) target = $region12
    $region11: #{cpm_stage_x_forward.6} parent=5 // pred_region
      %s117 = ssub.s32 %s9, 1
      // Predicated region
      $region13: #{cpm_stage_x_forward.6} parent=11 // pred_check
        %p118 = pneg %p56
      $region14: #{cpm_stage_x_forward.6} parent=11 // pred_check_branch
        %120 = sbr.rel (%p118) target = $region16
      $region15: #{cpm_stage_x_forward.6} parent=11 // pred_region
        _
      $region16: #{cpm_stage_x_forward.6} parent=11 // pred_fallthru
        _
      // Predicated region
      $region17: #{cpm_stage_x_forward.6} parent=11 // pred_check
        %p121 = pneg %p77
      $region18: #{cpm_stage_x_forward.6} parent=11 // pred_check_branch
        %123 = sbr.rel (%p121) target = $region20
      $region19: #{cpm_stage_x_forward.6} parent=11 // pred_region
        _
      $region20: #{cpm_stage_x_forward.6} parent=11 // pred_fallthru
        _
    $region12: #{cpm_stage_x_forward.6} parent=5 // pred_fallthru
      _
    %p124 = scmp.lt.s32.totalorder %s9, 2
    // Predicated region
    $region21: #{cpm_stage_x_forward.6} parent=5 // pred_check
      %p125 = pneg %p124
    $region22: #{cpm_stage_x_forward.6} parent=5 // pred_check_branch
      %127 = sbr.rel (%p125) target = $region24
    $region23: #{cpm_stage_x_forward.6} parent=5 // pred_region
      // Predicated region
      $region25: #{cpm_stage_x_forward.6} parent=23 // pred_check
        %p128 = pneg %p29
      $region26: #{cpm_stage_x_forward.6} parent=23 // pred_check_branch
        %130 = sbr.rel (%p128) target = $region28
      $region27: #{cpm_stage_x_forward.6} parent=23 // pred_region
        %p131 = scmp.lt.s32.totalorder %s9, 1
        %s132 = scalar_select %p131, %s9, 1
        %s133 = smul.addr %s132, 6
        %s134 = smul.addr %s133, 4
        %s135 = scalar_lea.vmem %s0, %s134
      $region28: #{cpm_stage_x_forward.6} parent=23 // pred_fallthru
        _
    $region24: #{cpm_stage_x_forward.6} parent=5 // pred_fallthru
      _
    %p136 = scmp.le.s32.totalorder 1, %s9
    %p137 = scmp.lt.s32.totalorder %s9, 3
    %p138 = pnand %p136, %p137
    %p139 = pneg %p138
    // Predicated region
    $region29: #{cpm_stage_x_forward.6} parent=5 // pred_check
      _
    $region30: #{cpm_stage_x_forward.6} parent=5 // pred_check_branch
      %141 = sbr.rel (%p138) target = $region32
    $region31: #{cpm_stage_x_forward.6} parent=5 // pred_region
      %s142 = ssub.s32 %s9, 1
      %p143 = scmp.lt.s32.totalorder %s14, 1
      %s144 = scalar_select %p143, %s14, 1
      %s145 = smul.addr %s144, 6
      %s146 = smul.addr %s145, 4
      %s147 = scalar_lea.vmem %s0, %s146
      %p148 = pneg %p35
      %p149 = pneg %p32
      %p150 = pneg %p56
      %p151 = pneg %p53
      %p152 = pneg %p77
      %p153 = pneg %p74
      %p154 = pneg %p103
      %p155 = pneg %p100
      %p156 = scmp.lt.s32.totalorder %s14, 1
      %s157 = scalar_select %p156, %s14, 1
      %s158 = smul.addr %s157, 2
      %s159 = smul.addr %s158, 4
      %s160 = scalar_lea.vmem %s3, %s159
      %p161 = scmp.lt.s32.totalorder %s14, 1
      %s162 = scalar_select %p161, %s14, 1
      %s163 = smul.addr %s162, 6
      %s164 = smul.addr %s163, 4
      %s165 = scalar_lea.vmem %s0, %s164
      %p166 = scmp.lt.s32.totalorder %s14, 1
      %s167 = scalar_select %p166, %s14, 1
      %s168 = smul.addr %s167, 2
      %s169 = smul.addr %s168, 4
      %s170 = scalar_lea.vmem %s3, %s169
      %v172 = vld [vmem:[%s165] sm:$0xff]
      %v173 = vld [vmem:[%s165 + $0x8] sm:$0xff]
      %v174 = vld [vmem:[%s1] sm:$0xf]
      %v175 = vld [vmem:[%s1 + $0x4] sm:$0xf]
      %v176 = vld [vmem:[%s1 + $0x8] sm:$0xf]
      %v177 = vld [vmem:[%s1 + $0xc] sm:$0xf]
      %v178 = vld [vmem:[%s1 + $0x10] sm:$0xf]
      %v179 = vld [vmem:[%s1 + $0x14] sm:$0xf]
      %v180 = vld [vmem:[%s1 + $0x18] sm:$0xf]
      %v181 = vld [vmem:[%s1 + $0x1c] sm:$0xf]
      %v182 = vld [vmem:[%s1 + $0x20] sm:$0xf]
      %v183 = vld [vmem:[%s1 + $0x24] sm:$0xf]
      %v184 = vld [vmem:[%s1 + $0x28] sm:$0xf]
      %v185 = vld [vmem:[%s1 + $0x2c] sm:$0xf]
      %v186 = vld [vmem:[%s1 + $0x30] sm:$0xf]
      %v187 = vld [vmem:[%s1 + $0x34] sm:$0xf]
      %v188 = vld [vmem:[%s1 + $0x38] sm:$0xf]
      %v189 = vld [vmem:[%s1 + $0x3c] sm:$0xf]
      %v190 = vld [vmem:[%s1 + $0x40] sm:$0xf]
      %v191 = vld [vmem:[%s1 + $0x44] sm:$0xf]
      %v192 = vld [vmem:[%s1 + $0x48] sm:$0xf]
      %v193 = vld [vmem:[%s1 + $0x4c] sm:$0xf]
      %v194 = vld [vmem:[%s1 + $0x50] sm:$0xf]
      %v195 = vld [vmem:[%s1 + $0x54] sm:$0xf]
      %v196 = vld [vmem:[%s1 + $0x58] sm:$0xf]
      %v197 = vld [vmem:[%s1 + $0x5c] sm:$0xf]
      %v198 = vld [vmem:[%s165 + $0x10] sm:$0x11]
      %s199 = scalar_lea.vmem %s1, 96
      %v200 = vld [vmem:[%s199] sm:$0xf]
      %v201 = vld [vmem:[%s199 + $0x4] sm:$0xf]
      %v202 = vld [vmem:[%s199 + $0x8] sm:$0xf]
      %v203 = vld [vmem:[%s199 + $0xc] sm:$0xf]
      %v204 = vld [vmem:[%s199 + $0x10] sm:$0xf]
      %v205 = vld [vmem:[%s199 + $0x14] sm:$0xf]
      %v206 = vld [vmem:[%s199 + $0x18] sm:$0xf]
      %v207 = vld [vmem:[%s199 + $0x1c] sm:$0xf]
      %v208 = vld [vmem:[%s199 + $0x20] sm:$0xf]
      %v209 = vld [vmem:[%s199 + $0x24] sm:$0xf]
      %v210 = vld [vmem:[%s199 + $0x28] sm:$0xf]
      %v211 = vld [vmem:[%s199 + $0x2c] sm:$0xf]
      %v212 = vld [vmem:[%s199 + $0x30] sm:$0xf]
      %v213 = vld [vmem:[%s199 + $0x34] sm:$0xf]
      %v214 = vld [vmem:[%s199 + $0x38] sm:$0xf]
      %v215 = vld [vmem:[%s199 + $0x3c] sm:$0xf]
      %v216 = vld [vmem:[%s199 + $0x40] sm:$0xf]
      %v217 = vld [vmem:[%s199 + $0x44] sm:$0xf]
      %v218 = vld [vmem:[%s199 + $0x48] sm:$0xf]
      %v219 = vld [vmem:[%s199 + $0x4c] sm:$0xf]
      %v220 = vld [vmem:[%s199 + $0x50] sm:$0xf]
      %v221 = vld [vmem:[%s199 + $0x54] sm:$0xf]
      %v222 = vld [vmem:[%s199 + $0x58] sm:$0xf]
      %v223 = vld [vmem:[%s199 + $0x5c] sm:$0xf]
      %v227 = vunpack.c.l.b16 %v172
      %v228 = vunpack.c.h.b16 %v172
      %v229 = vunpack.c.l.b16 %v173
      %v230 = vunpack.c.h.b16 %v173
      %v231 = vunpack.c.l.b16 %v198
      %v232 = vunpack.c.h.b16 %v198
      %v233 = vpack.c.b16 %v229, %v227
      %v234 = vpack.c.b16 %v230, %v228
      %v235 = vpack.c.b16 %v231, %v231
      %v236 = vpack.c.b16 %v232, %v232
      %vm237 = vsmask.f32 7424
      %v239 = vshrl.u32 %v233, 16
      %v241 = vshll.u32 %v233, 16
      %v243 = vrot.slane %v241, 1
      %v244 = vor.u32 %v239, %v243
      %v246 = vshll.u32 %v235, 16
      %v248 = vrot.slane %v246, 1
      %v249 = vsel %vm237, %v244, %v248
      %v251 = vshrl.u32 %v234, 16
      %v253 = vshll.u32 %v234, 16
      %v255 = vrot.slane %v253, 1
      %v256 = vor.u32 %v251, %v255
      %v258 = vshll.u32 %v236, 16
      %v260 = vrot.slane %v258, 1
      %v261 = vsel %vm237, %v256, %v260
      %v287 = vunpack.c.l.b16 %v200
      %v288 = vunpack.c.l.b16 %v201
      %v289 = vunpack.c.l.b16 %v202
      %v290 = vunpack.c.l.b16 %v203
      %v291 = vunpack.c.l.b16 %v204
      %v292 = vunpack.c.l.b16 %v205
      %v293 = vunpack.c.l.b16 %v206
      %v294 = vunpack.c.l.b16 %v207
      %v295 = vunpack.c.l.b16 %v208
      %v296 = vunpack.c.l.b16 %v209
      %v297 = vunpack.c.l.b16 %v210
      %v298 = vunpack.c.l.b16 %v211
      %v299 = vunpack.c.l.b16 %v212
      %v300 = vunpack.c.l.b16 %v213
      %v301 = vunpack.c.l.b16 %v214
      %v302 = vunpack.c.l.b16 %v215
      %v303 = vunpack.c.l.b16 %v216
      %v304 = vunpack.c.l.b16 %v217
      %v305 = vunpack.c.l.b16 %v218
      %v306 = vunpack.c.l.b16 %v219
      %v307 = vunpack.c.l.b16 %v220
      %v308 = vunpack.c.l.b16 %v221
      %v309 = vunpack.c.l.b16 %v222
      %v310 = vunpack.c.l.b16 %v223
      %v311 = vpack.c.b16 %v288, %v287
      %v312 = vpack.c.b16 %v290, %v289
      %v313 = vpack.c.b16 %v292, %v291
      %v314 = vpack.c.b16 %v294, %v293
      %v315 = vpack.c.b16 %v296, %v295
      %v316 = vpack.c.b16 %v298, %v297
      %v317 = vpack.c.b16 %v300, %v299
      %v318 = vpack.c.b16 %v302, %v301
      %v319 = vpack.c.b16 %v304, %v303
      %v320 = vpack.c.b16 %v306, %v305
      %v321 = vpack.c.b16 %v308, %v307
      %v322 = vpack.c.b16 %v310, %v309
      %vm335 = vcmask 523264
      %v337 = vsel %vm335, %v261, 0
      %339 = vmatprep.subr.bf16.mxu0 0
      %340 = vmatpush1.bf16.msra.mxu0 %v318
      %341 = vmatprep.subr.bf16.mxu0 0
      %342 = vmatpush1.bf16.msra.mxu0 %v317
      %343 = vmatprep.subr.bf16.mxu0 0
      %344 = vmatpush1.bf16.msra.mxu0 %v316
      %345 = vmatprep.subr.bf16.mxu0 0
      %346 = vmatpush1.bf16.msra.mxu0 %v315
      %347 = vmatprep.subr.bf16.mxu0 0
      %348 = vmatpush1.bf16.msra.mxu0 %v314
      %349 = vmatprep.subr.bf16.mxu0 0
      %350 = vmatpush1.bf16.msra.mxu0 %v313
      %351 = vmatprep.subr.bf16.mxu0 0
      %352 = vmatpush1.bf16.msra.mxu0 %v312
      %353 = vmatprep.subr.bf16.mxu0 0
      %354 = vmatpush1.bf16.msra.mxu0 %v311
      %355 = vmatprep.subr.bf16.mxu0 0
      %356 = vmatpush2.bf16.msra.mxu0 0
      %357 = vmatprep.subr.bf16.mxu0 0
      %358 = vmatpush2.bf16.msra.mxu0 0
      %359 = vmatprep.subr.bf16.mxu0 0
      %360 = vmatpush2.bf16.msra.mxu0 0
      %361 = vmatprep.subr.bf16.mxu0 0
      %362 = vmatpush2.bf16.msra.mxu0 0
      %363 = vmatprep.subr.bf16.mxu0 0
      %364 = vmatpush2.bf16.msra.mxu0 %v322
      %365 = vmatprep.subr.bf16.mxu0 0
      %366 = vmatpush2.bf16.msra.mxu0 %v321
      %367 = vmatprep.subr.bf16.mxu0 0
      %368 = vmatpush2.bf16.msra.mxu0 %v320
      %369 = vmatprep.subr.bf16.mxu0 0
      %370 = vmatpush2.bf16.msra.mxu0 %v319
      %371 = vmatprep.mubr.bf16.mxu0 %v337
      %372 = vmatmul.mubr.bf16.gmra.mxu0 %v249
      %v373 = vpop.f32.mrf.mxu0
      %v374 = vadd.f32 0.0, %v373
      %v375 = vpop.f32.mrf.mxu0
      %v376 = vpop.f32.mrf.mxu0
      %v377 = vadd.f32 0.0, %v376
      %v378 = vpop.f32.mrf.mxu0
      %379 = vdwg.mxu0
      %v405 = vunpack.c.l.b16 %v174
      %v406 = vunpack.c.l.b16 %v175
      %v407 = vunpack.c.l.b16 %v176
      %v408 = vunpack.c.l.b16 %v177
      %v409 = vunpack.c.l.b16 %v178
      %v410 = vunpack.c.l.b16 %v179
      %v411 = vunpack.c.l.b16 %v180
      %v412 = vunpack.c.l.b16 %v181
      %v413 = vunpack.c.l.b16 %v182
      %v414 = vunpack.c.l.b16 %v183
      %v415 = vunpack.c.l.b16 %v184
      %v416 = vunpack.c.l.b16 %v185
      %v417 = vunpack.c.l.b16 %v186
      %v418 = vunpack.c.l.b16 %v187
      %v419 = vunpack.c.l.b16 %v188
      %v420 = vunpack.c.l.b16 %v189
      %v421 = vunpack.c.l.b16 %v190
      %v422 = vunpack.c.l.b16 %v191
      %v423 = vunpack.c.l.b16 %v192
      %v424 = vunpack.c.l.b16 %v193
      %v425 = vunpack.c.l.b16 %v194
      %v426 = vunpack.c.l.b16 %v195
      %v427 = vunpack.c.l.b16 %v196
      %v428 = vunpack.c.l.b16 %v197
      %v429 = vpack.c.b16 %v406, %v405
      %v430 = vpack.c.b16 %v408, %v407
      %v431 = vpack.c.b16 %v410, %v409
      %v432 = vpack.c.b16 %v412, %v411
      %v433 = vpack.c.b16 %v414, %v413
      %v434 = vpack.c.b16 %v416, %v415
      %v435 = vpack.c.b16 %v418, %v417
      %v436 = vpack.c.b16 %v420, %v419
      %v437 = vpack.c.b16 %v422, %v421
      %v438 = vpack.c.b16 %v424, %v423
      %v439 = vpack.c.b16 %v426, %v425
      %v440 = vpack.c.b16 %v428, %v427
      %v453 = vsel %vm335, %v234, 0
      %455 = vmatprep.subr.bf16.mxu0 0
      %456 = vmatpush1.bf16.msra.mxu0 %v436
      %457 = vmatprep.subr.bf16.mxu0 0
      %458 = vmatpush1.bf16.msra.mxu0 %v435
      %459 = vmatprep.subr.bf16.mxu0 0
      %460 = vmatpush1.bf16.msra.mxu0 %v434
      %461 = vmatprep.subr.bf16.mxu0 0
      %462 = vmatpush1.bf16.msra.mxu0 %v433
      %463 = vmatprep.subr.bf16.mxu0 0
      %464 = vmatpush1.bf16.msra.mxu0 %v432
      %465 = vmatprep.subr.bf16.mxu0 0
      %466 = vmatpush1.bf16.msra.mxu0 %v431
      %467 = vmatprep.subr.bf16.mxu0 0
      %468 = vmatpush1.bf16.msra.mxu0 %v430
      %469 = vmatprep.subr.bf16.mxu0 0
      %470 = vmatpush1.bf16.msra.mxu0 %v429
      %471 = vmatprep.subr.bf16.mxu0 0
      %472 = vmatpush2.bf16.msra.mxu0 0
      %473 = vmatprep.subr.bf16.mxu0 0
      %474 = vmatpush2.bf16.msra.mxu0 0
      %475 = vmatprep.subr.bf16.mxu0 0
      %476 = vmatpush2.bf16.msra.mxu0 0
      %477 = vmatprep.subr.bf16.mxu0 0
      %478 = vmatpush2.bf16.msra.mxu0 0
      %479 = vmatprep.subr.bf16.mxu0 0
      %480 = vmatpush2.bf16.msra.mxu0 %v440
      %481 = vmatprep.subr.bf16.mxu0 0
      %482 = vmatpush2.bf16.msra.mxu0 %v439
      %483 = vmatprep.subr.bf16.mxu0 0
      %484 = vmatpush2.bf16.msra.mxu0 %v438
      %485 = vmatprep.subr.bf16.mxu0 0
      %486 = vmatpush2.bf16.msra.mxu0 %v437
      %487 = vmatprep.mubr.bf16.mxu0 %v453
      %488 = vmatmul.mubr.bf16.gmra.mxu0 %v233
      %v489 = vpop.f32.mrf.mxu0
      %v490 = vadd.f32 %v374, %v489
      %v491 = vpop.f32.mrf.mxu0
      %v492 = vpop.f32.mrf.mxu0
      %v493 = vadd.f32 %v377, %v492
      %v494 = vpop.f32.mrf.mxu0
      %495 = vdwg.mxu0
      %v496 = vld [vmem:[%s165] sm:$0xee]
      %s497 = scalar_lea.vmem %s1, 192
      %v498 = vld [vmem:[%s497] sm:$0xf]
      %v499 = vld [vmem:[%s497 + $0x4] sm:$0xf]
      %v500 = vld [vmem:[%s497 + $0x8] sm:$0xf]
      %v501 = vld [vmem:[%s497 + $0xc] sm:$0xf]
      %v502 = vld [vmem:[%s497 + $0x10] sm:$0xf]
      %v503 = vld [vmem:[%s497 + $0x14] sm:$0xf]
      %v504 = vld [vmem:[%s497 + $0x18] sm:$0xf]
      %v505 = vld [vmem:[%s497 + $0x1c] sm:$0xf]
      %v506 = vld [vmem:[%s497 + $0x20] sm:$0xf]
      %v507 = vld [vmem:[%s497 + $0x24] sm:$0xf]
      %v508 = vld [vmem:[%s497 + $0x28] sm:$0xf]
      %v509 = vld [vmem:[%s497 + $0x2c] sm:$0xf]
      %v510 = vld [vmem:[%s497 + $0x30] sm:$0xf]
      %v511 = vld [vmem:[%s497 + $0x34] sm:$0xf]
      %v512 = vld [vmem:[%s497 + $0x38] sm:$0xf]
      %v513 = vld [vmem:[%s497 + $0x3c] sm:$0xf]
      %v514 = vld [vmem:[%s497 + $0x40] sm:$0xf]
      %v515 = vld [vmem:[%s497 + $0x44] sm:$0xf]
      %v516 = vld [vmem:[%s497 + $0x48] sm:$0xf]
      %v517 = vld [vmem:[%s497 + $0x4c] sm:$0xf]
      %v518 = vld [vmem:[%s497 + $0x50] sm:$0xf]
      %v519 = vld [vmem:[%s497 + $0x54] sm:$0xf]
      %v520 = vld [vmem:[%s497 + $0x58] sm:$0xf]
      %v521 = vld [vmem:[%s497 + $0x5c] sm:$0xf]
      %v523 = vunpack.c.l.b16 %v496
      %v524 = vunpack.c.h.b16 %v496
      %v525 = vpack.c.b16 %v229, %v523
      %v526 = vpack.c.b16 %v230, %v524
      %vm527 = vcmask 1046528
      %v528 = vrot.slane %v525, 1
      %v529 = vrot.slane %v235, 1
      %v530 = vsel %vm527, %v528, %v529
      %v531 = vrot.slane %v526, 1
      %v532 = vrot.slane %v236, 1
      %v533 = vsel %vm527, %v531, %v532
      %v559 = vunpack.c.l.b16 %v498
      %v560 = vunpack.c.l.b16 %v499
      %v561 = vunpack.c.l.b16 %v500
      %v562 = vunpack.c.l.b16 %v501
      %v563 = vunpack.c.l.b16 %v502
      %v564 = vunpack.c.l.b16 %v503
      %v565 = vunpack.c.l.b16 %v504
      %v566 = vunpack.c.l.b16 %v505
      %v567 = vunpack.c.l.b16 %v506
      %v568 = vunpack.c.l.b16 %v507
      %v569 = vunpack.c.l.b16 %v508
      %v570 = vunpack.c.l.b16 %v509
      %v571 = vunpack.c.l.b16 %v510
      %v572 = vunpack.c.l.b16 %v511
      %v573 = vunpack.c.l.b16 %v512
      %v574 = vunpack.c.l.b16 %v513
      %v575 = vunpack.c.l.b16 %v514
      %v576 = vunpack.c.l.b16 %v515
      %v577 = vunpack.c.l.b16 %v516
      %v578 = vunpack.c.l.b16 %v517
      %v579 = vunpack.c.l.b16 %v518
      %v580 = vunpack.c.l.b16 %v519
      %v581 = vunpack.c.l.b16 %v520
      %v582 = vunpack.c.l.b16 %v521
      %v583 = vpack.c.b16 %v560, %v559
      %v584 = vpack.c.b16 %v562, %v561
      %v585 = vpack.c.b16 %v564, %v563
      %v586 = vpack.c.b16 %v566, %v565
      %v587 = vpack.c.b16 %v568, %v567
      %v588 = vpack.c.b16 %v570, %v569
      %v589 = vpack.c.b16 %v572, %v571
      %v590 = vpack.c.b16 %v574, %v573
      %v591 = vpack.c.b16 %v576, %v575
      %v592 = vpack.c.b16 %v578, %v577
      %v593 = vpack.c.b16 %v580, %v579
      %v594 = vpack.c.b16 %v582, %v581
      %v608 = vsel %vm335, %v533, 0
      %610 = vmatprep.subr.bf16.mxu0 0
      %611 = vmatpush1.bf16.msra.mxu0 %v590
      %612 = vmatprep.subr.bf16.mxu0 0
      %613 = vmatpush1.bf16.msra.mxu0 %v589
      %614 = vmatprep.subr.bf16.mxu0 0
      %615 = vmatpush1.bf16.msra.mxu0 %v588
      %616 = vmatprep.subr.bf16.mxu0 0
      %617 = vmatpush1.bf16.msra.mxu0 %v587
      %618 = vmatprep.subr.bf16.mxu0 0
      %619 = vmatpush1.bf16.msra.mxu0 %v586
      %620 = vmatprep.subr.bf16.mxu0 0
      %621 = vmatpush1.bf16.msra.mxu0 %v585
      %622 = vmatprep.subr.bf16.mxu0 0
      %623 = vmatpush1.bf16.msra.mxu0 %v584
      %624 = vmatprep.subr.bf16.mxu0 0
      %625 = vmatpush1.bf16.msra.mxu0 %v583
      %626 = vmatprep.subr.bf16.mxu0 0
      %627 = vmatpush2.bf16.msra.mxu0 0
      %628 = vmatprep.subr.bf16.mxu0 0
      %629 = vmatpush2.bf16.msra.mxu0 0
      %630 = vmatprep.subr.bf16.mxu0 0
      %631 = vmatpush2.bf16.msra.mxu0 0
      %632 = vmatprep.subr.bf16.mxu0 0
      %633 = vmatpush2.bf16.msra.mxu0 0
      %634 = vmatprep.subr.bf16.mxu0 0
      %635 = vmatpush2.bf16.msra.mxu0 %v594
      %636 = vmatprep.subr.bf16.mxu0 0
      %637 = vmatpush2.bf16.msra.mxu0 %v593
      %638 = vmatprep.subr.bf16.mxu0 0
      %639 = vmatpush2.bf16.msra.mxu0 %v592
      %640 = vmatprep.subr.bf16.mxu0 0
      %641 = vmatpush2.bf16.msra.mxu0 %v591
      %642 = vmatprep.mubr.bf16.mxu0 %v608
      %643 = vmatmul.mubr.bf16.gmra.mxu0 %v530
      %v644 = vpop.f32.mrf.mxu0
      %v645 = vadd.f32 0.0, %v644
      %v646 = vpop.f32.mrf.mxu0
      %v647 = vpop.f32.mrf.mxu0
      %v648 = vadd.f32 0.0, %v647
      %v649 = vpop.f32.mrf.mxu0
      %650 = vdwg.mxu0
      %v651 = vadd.f32 %v490, %v645
      %v652 = vadd.f32 %v493, %v648
      %v653 = vld [vmem:[%s165 + $0x10] sm:$0x33]
      %s654 = scalar_lea.vmem %s1, 288
      %v655 = vld [vmem:[%s654] sm:$0xf]
      %v656 = vld [vmem:[%s654 + $0x4] sm:$0xf]
      %v657 = vld [vmem:[%s654 + $0x8] sm:$0xf]
      %v658 = vld [vmem:[%s654 + $0xc] sm:$0xf]
      %v659 = vld [vmem:[%s654 + $0x10] sm:$0xf]
      %v660 = vld [vmem:[%s654 + $0x14] sm:$0xf]
      %v661 = vld [vmem:[%s654 + $0x18] sm:$0xf]
      %v662 = vld [vmem:[%s654 + $0x1c] sm:$0xf]
      %v663 = vld [vmem:[%s654 + $0x20] sm:$0xf]
      %v664 = vld [vmem:[%s654 + $0x24] sm:$0xf]
      %v665 = vld [vmem:[%s654 + $0x28] sm:$0xf]
      %v666 = vld [vmem:[%s654 + $0x2c] sm:$0xf]
      %v667 = vld [vmem:[%s654 + $0x30] sm:$0xf]
      %v668 = vld [vmem:[%s654 + $0x34] sm:$0xf]
      %v669 = vld [vmem:[%s654 + $0x38] sm:$0xf]
      %v670 = vld [vmem:[%s654 + $0x3c] sm:$0xf]
      %v671 = vld [vmem:[%s654 + $0x40] sm:$0xf]
      %v672 = vld [vmem:[%s654 + $0x44] sm:$0xf]
      %v673 = vld [vmem:[%s654 + $0x48] sm:$0xf]
      %v674 = vld [vmem:[%s654 + $0x4c] sm:$0xf]
      %v675 = vld [vmem:[%s654 + $0x50] sm:$0xf]
      %v676 = vld [vmem:[%s654 + $0x54] sm:$0xf]
      %v677 = vld [vmem:[%s654 + $0x58] sm:$0xf]
      %v678 = vld [vmem:[%s654 + $0x5c] sm:$0xf]
      %v680 = vunpack.c.l.b16 %v653
      %v681 = vunpack.c.h.b16 %v653
      %v682 = vpack.c.b16 %v680, %v680
      %v683 = vpack.c.b16 %v681, %v681
      %vm684 = vsmask.f32 6400
      %v686 = vshrl.u32 %v525, 16
      %v688 = vrot.slane %v686, 1
      %v689 = vshll.u32 %v525, 16
      %v691 = vrot.slane %v689, 2
      %v692 = vor.u32 %v688, %v691
      %v694 = vshrl.u32 %v682, 16
      %v696 = vrot.slane %v694, 1
      %v697 = vshll.u32 %v682, 16
      %v699 = vrot.slane %v697, 2
      %v700 = vor.u32 %v696, %v699
      %v701 = vsel %vm684, %v692, %v700
      %v703 = vshrl.u32 %v526, 16
      %v705 = vrot.slane %v703, 1
      %v706 = vshll.u32 %v526, 16
      %v708 = vrot.slane %v706, 2
      %v709 = vor.u32 %v705, %v708
      %v711 = vshrl.u32 %v683, 16
      %v713 = vrot.slane %v711, 1
      %v714 = vshll.u32 %v683, 16
      %v716 = vrot.slane %v714, 2
      %v717 = vor.u32 %v713, %v716
      %v718 = vsel %vm684, %v709, %v717
      %v744 = vunpack.c.l.b16 %v655
      %v745 = vunpack.c.l.b16 %v656
      %v746 = vunpack.c.l.b16 %v657
      %v747 = vunpack.c.l.b16 %v658
      %v748 = vunpack.c.l.b16 %v659
      %v749 = vunpack.c.l.b16 %v660
      %v750 = vunpack.c.l.b16 %v661
      %v751 = vunpack.c.l.b16 %v662
      %v752 = vunpack.c.l.b16 %v663
      %v753 = vunpack.c.l.b16 %v664
      %v754 = vunpack.c.l.b16 %v665
      %v755 = vunpack.c.l.b16 %v666
      %v756 = vunpack.c.l.b16 %v667
      %v757 = vunpack.c.l.b16 %v668
      %v758 = vunpack.c.l.b16 %v669
      %v759 = vunpack.c.l.b16 %v670
      %v760 = vunpack.c.l.b16 %v671
      %v761 = vunpack.c.l.b16 %v672
      %v762 = vunpack.c.l.b16 %v673
      %v763 = vunpack.c.l.b16 %v674
      %v764 = vunpack.c.l.b16 %v675
      %v765 = vunpack.c.l.b16 %v676
      %v766 = vunpack.c.l.b16 %v677
      %v767 = vunpack.c.l.b16 %v678
      %v768 = vpack.c.b16 %v745, %v744
      %v769 = vpack.c.b16 %v747, %v746
      %v770 = vpack.c.b16 %v749, %v748
      %v771 = vpack.c.b16 %v751, %v750
      %v772 = vpack.c.b16 %v753, %v752
      %v773 = vpack.c.b16 %v755, %v754
      %v774 = vpack.c.b16 %v757, %v756
      %v775 = vpack.c.b16 %v759, %v758
      %v776 = vpack.c.b16 %v761, %v760
      %v777 = vpack.c.b16 %v763, %v762
      %v778 = vpack.c.b16 %v765, %v764
      %v779 = vpack.c.b16 %v767, %v766
      %v793 = vsel %vm335, %v718, 0
      %795 = vmatprep.subr.bf16.mxu0 0
      %796 = vmatpush1.bf16.msra.mxu0 %v775
      %797 = vmatprep.subr.bf16.mxu0 0
      %798 = vmatpush1.bf16.msra.mxu0 %v774
      %799 = vmatprep.subr.bf16.mxu0 0
      %800 = vmatpush1.bf16.msra.mxu0 %v773
      %801 = vmatprep.subr.bf16.mxu0 0
      %802 = vmatpush1.bf16.msra.mxu0 %v772
      %803 = vmatprep.subr.bf16.mxu0 0
      %804 = vmatpush1.bf16.msra.mxu0 %v771
      %805 = vmatprep.subr.bf16.mxu0 0
      %806 = vmatpush1.bf16.msra.mxu0 %v770
      %807 = vmatprep.subr.bf16.mxu0 0
      %808 = vmatpush1.bf16.msra.mxu0 %v769
      %809 = vmatprep.subr.bf16.mxu0 0
      %810 = vmatpush1.bf16.msra.mxu0 %v768
      %811 = vmatprep.subr.bf16.mxu0 0
      %812 = vmatpush2.bf16.msra.mxu0 0
      %813 = vmatprep.subr.bf16.mxu0 0
      %814 = vmatpush2.bf16.msra.mxu0 0
      %815 = vmatprep.subr.bf16.mxu0 0
      %816 = vmatpush2.bf16.msra.mxu0 0
      %817 = vmatprep.subr.bf16.mxu0 0
      %818 = vmatpush2.bf16.msra.mxu0 0
      %819 = vmatprep.subr.bf16.mxu0 0
      %820 = vmatpush2.bf16.msra.mxu0 %v779
      %821 = vmatprep.subr.bf16.mxu0 0
      %822 = vmatpush2.bf16.msra.mxu0 %v778
      %823 = vmatprep.subr.bf16.mxu0 0
      %824 = vmatpush2.bf16.msra.mxu0 %v777
      %825 = vmatprep.subr.bf16.mxu0 0
      %826 = vmatpush2.bf16.msra.mxu0 %v776
      %827 = vmatprep.mubr.bf16.mxu0 %v793
      %828 = vmatmul.mubr.bf16.gmra.mxu0 %v701
      %v829 = vpop.f32.mrf.mxu0
      %v830 = vadd.f32 0.0, %v829
      %v831 = vpop.f32.mrf.mxu0
      %v832 = vpop.f32.mrf.mxu0
      %v833 = vadd.f32 0.0, %v832
      %v834 = vpop.f32.mrf.mxu0
      %835 = vdwg.mxu0
      %v836 = vadd.f32 %v651, %v830
      %v837 = vadd.f32 %v652, %v833
      %v838 = vld [vmem:[%s165] sm:$0xcc]
      %s839 = scalar_lea.vmem %s1, 384
      %v840 = vld [vmem:[%s839] sm:$0xf]
      %v841 = vld [vmem:[%s839 + $0x4] sm:$0xf]
      %v842 = vld [vmem:[%s839 + $0x8] sm:$0xf]
      %v843 = vld [vmem:[%s839 + $0xc] sm:$0xf]
      %v844 = vld [vmem:[%s839 + $0x10] sm:$0xf]
      %v845 = vld [vmem:[%s839 + $0x14] sm:$0xf]
      %v846 = vld [vmem:[%s839 + $0x18] sm:$0xf]
      %v847 = vld [vmem:[%s839 + $0x1c] sm:$0xf]
      %v848 = vld [vmem:[%s839 + $0x20] sm:$0xf]
      %v849 = vld [vmem:[%s839 + $0x24] sm:$0xf]
      %v850 = vld [vmem:[%s839 + $0x28] sm:$0xf]
      %v851 = vld [vmem:[%s839 + $0x2c] sm:$0xf]
      %v852 = vld [vmem:[%s839 + $0x30] sm:$0xf]
      %v853 = vld [vmem:[%s839 + $0x34] sm:$0xf]
      %v854 = vld [vmem:[%s839 + $0x38] sm:$0xf]
      %v855 = vld [vmem:[%s839 + $0x3c] sm:$0xf]
      %v856 = vld [vmem:[%s839 + $0x40] sm:$0xf]
      %v857 = vld [vmem:[%s839 + $0x44] sm:$0xf]
      %v858 = vld [vmem:[%s839 + $0x48] sm:$0xf]
      %v859 = vld [vmem:[%s839 + $0x4c] sm:$0xf]
      %v860 = vld [vmem:[%s839 + $0x50] sm:$0xf]
      %v861 = vld [vmem:[%s839 + $0x54] sm:$0xf]
      %v862 = vld [vmem:[%s839 + $0x58] sm:$0xf]
      %v863 = vld [vmem:[%s839 + $0x5c] sm:$0xf]
      %v865 = vunpack.c.l.b16 %v838
      %v866 = vunpack.c.h.b16 %v838
      %v867 = vpack.c.b16 %v229, %v865
      %v868 = vpack.c.b16 %v230, %v866
      %vm869 = vcmask 1045504
      %v870 = vrot.slane %v867, 2
      %v871 = vrot.slane %v682, 2
      %v872 = vsel %vm869, %v870, %v871
      %v873 = vrot.slane %v868, 2
      %v874 = vrot.slane %v683, 2
      %v875 = vsel %vm869, %v873, %v874
      %v901 = vunpack.c.l.b16 %v840
      %v902 = vunpack.c.l.b16 %v841
      %v903 = vunpack.c.l.b16 %v842
      %v904 = vunpack.c.l.b16 %v843
      %v905 = vunpack.c.l.b16 %v844
      %v906 = vunpack.c.l.b16 %v845
      %v907 = vunpack.c.l.b16 %v846
      %v908 = vunpack.c.l.b16 %v847
      %v909 = vunpack.c.l.b16 %v848
      %v910 = vunpack.c.l.b16 %v849
      %v911 = vunpack.c.l.b16 %v850
      %v912 = vunpack.c.l.b16 %v851
      %v913 = vunpack.c.l.b16 %v852
      %v914 = vunpack.c.l.b16 %v853
      %v915 = vunpack.c.l.b16 %v854
      %v916 = vunpack.c.l.b16 %v855
      %v917 = vunpack.c.l.b16 %v856
      %v918 = vunpack.c.l.b16 %v857
      %v919 = vunpack.c.l.b16 %v858
      %v920 = vunpack.c.l.b16 %v859
      %v921 = vunpack.c.l.b16 %v860
      %v922 = vunpack.c.l.b16 %v861
      %v923 = vunpack.c.l.b16 %v862
      %v924 = vunpack.c.l.b16 %v863
      %v925 = vpack.c.b16 %v902, %v901
      %v926 = vpack.c.b16 %v904, %v903
      %v927 = vpack.c.b16 %v906, %v905
      %v928 = vpack.c.b16 %v908, %v907
      %v929 = vpack.c.b16 %v910, %v909
      %v930 = vpack.c.b16 %v912, %v911
      %v931 = vpack.c.b16 %v914, %v913
      %v932 = vpack.c.b16 %v916, %v915
      %v933 = vpack.c.b16 %v918, %v917
      %v934 = vpack.c.b16 %v920, %v919
      %v935 = vpack.c.b16 %v922, %v921
      %v936 = vpack.c.b16 %v924, %v923
      %v950 = vsel %vm335, %v875, 0
      %952 = vmatprep.subr.bf16.mxu0 0
      %953 = vmatpush1.bf16.msra.mxu0 %v932
      %954 = vmatprep.subr.bf16.mxu0 0
      %955 = vmatpush1.bf16.msra.mxu0 %v931
      %956 = vmatprep.subr.bf16.mxu0 0
      %957 = vmatpush1.bf16.msra.mxu0 %v930
      %958 = vmatprep.subr.bf16.mxu0 0
      %959 = vmatpush1.bf16.msra.mxu0 %v929
      %960 = vmatprep.subr.bf16.mxu0 0
      %961 = vmatpush1.bf16.msra.mxu0 %v928
      %962 = vmatprep.subr.bf16.mxu0 0
      %963 = vmatpush1.bf16.msra.mxu0 %v927
      %964 = vmatprep.subr.bf16.mxu0 0
      %965 = vmatpush1.bf16.msra.mxu0 %v926
      %966 = vmatprep.subr.bf16.mxu0 0
      %967 = vmatpush1.bf16.msra.mxu0 %v925
      %968 = vmatprep.subr.bf16.mxu0 0
      %969 = vmatpush2.bf16.msra.mxu0 0
      %970 = vmatprep.subr.bf16.mxu0 0
      %971 = vmatpush2.bf16.msra.mxu0 0
      %972 = vmatprep.subr.bf16.mxu0 0
      %973 = vmatpush2.bf16.msra.mxu0 0
      %974 = vmatprep.subr.bf16.mxu0 0
      %975 = vmatpush2.bf16.msra.mxu0 0
      %976 = vmatprep.subr.bf16.mxu0 0
      %977 = vmatpush2.bf16.msra.mxu0 %v936
      %978 = vmatprep.subr.bf16.mxu0 0
      %979 = vmatpush2.bf16.msra.mxu0 %v935
      %980 = vmatprep.subr.bf16.mxu0 0
      %981 = vmatpush2.bf16.msra.mxu0 %v934
      %982 = vmatprep.subr.bf16.mxu0 0
      %983 = vmatpush2.bf16.msra.mxu0 %v933
      %984 = vmatprep.mubr.bf16.mxu0 %v950
      %985 = vmatmul.mubr.bf16.gmra.mxu0 %v872
      %v986 = vpop.f32.mrf.mxu0
      %v987 = vadd.f32 0.0, %v986
      %v988 = vpop.f32.mrf.mxu0
      %v989 = vpop.f32.mrf.mxu0
      %v990 = vadd.f32 0.0, %v989
      %v991 = vpop.f32.mrf.mxu0
      %992 = vdwg.mxu0
      %v993 = vadd.f32 %v836, %v987
      %v994 = vadd.f32 %v837, %v990
      %v995 = vld [vmem:[%s165 + $0x10] sm:$0x77]
      %s996 = scalar_lea.vmem %s1, 480
      %v997 = vld [vmem:[%s996] sm:$0xf]
      %v998 = vld [vmem:[%s996 + $0x4] sm:$0xf]
      %v999 = vld [vmem:[%s996 + $0x8] sm:$0xf]
      %v1000 = vld [vmem:[%s996 + $0xc] sm:$0xf]
      %v1001 = vld [vmem:[%s996 + $0x10] sm:$0xf]
      %v1002 = vld [vmem:[%s996 + $0x14] sm:$0xf]
      %v1003 = vld [vmem:[%s996 + $0x18] sm:$0xf]
      %v1004 = vld [vmem:[%s996 + $0x1c] sm:$0xf]
      %v1005 = vld [vmem:[%s996 + $0x20] sm:$0xf]
      %v1006 = vld [vmem:[%s996 + $0x24] sm:$0xf]
      %v1007 = vld [vmem:[%s996 + $0x28] sm:$0xf]
      %v1008 = vld [vmem:[%s996 + $0x2c] sm:$0xf]
      %v1009 = vld [vmem:[%s996 + $0x30] sm:$0xf]
      %v1010 = vld [vmem:[%s996 + $0x34] sm:$0xf]
      %v1011 = vld [vmem:[%s996 + $0x38] sm:$0xf]
      %v1012 = vld [vmem:[%s996 + $0x3c] sm:$0xf]
      %v1013 = vld [vmem:[%s996 + $0x40] sm:$0xf]
      %v1014 = vld [vmem:[%s996 + $0x44] sm:$0xf]
      %v1015 = vld [vmem:[%s996 + $0x48] sm:$0xf]
      %v1016 = vld [vmem:[%s996 + $0x4c] sm:$0xf]
      %v1017 = vld [vmem:[%s996 + $0x50] sm:$0xf]
      %v1018 = vld [vmem:[%s996 + $0x54] sm:$0xf]
      %v1019 = vld [vmem:[%s996 + $0x58] sm:$0xf]
      %v1020 = vld [vmem:[%s996 + $0x5c] sm:$0xf]
      %v1022 = vunpack.c.l.b16 %v995
      %v1023 = vunpack.c.h.b16 %v995
      %v1024 = vpack.c.b16 %v1022, %v1022
      %v1025 = vpack.c.b16 %v1023, %v1023
      %vm1026 = vsmask.f32 5376
      %v1028 = vshrl.u32 %v867, 16
      %v1030 = vrot.slane %v1028, 2
      %v1031 = vshll.u32 %v867, 16
      %v1033 = vrot.slane %v1031, 3
      %v1034 = vor.u32 %v1030, %v1033
      %v1036 = vshrl.u32 %v1024, 16
      %v1038 = vrot.slane %v1036, 2
      %v1039 = vshll.u32 %v1024, 16
      %v1041 = vrot.slane %v1039, 3
      %v1042 = vor.u32 %v1038, %v1041
      %v1043 = vsel %vm1026, %v1034, %v1042
      %v1045 = vshrl.u32 %v868, 16
      %v1047 = vrot.slane %v1045, 2
      %v1048 = vshll.u32 %v868, 16
      %v1050 = vrot.slane %v1048, 3
      %v1051 = vor.u32 %v1047, %v1050
      %v1053 = vshrl.u32 %v1025, 16
      %v1055 = vrot.slane %v1053, 2
      %v1056 = vshll.u32 %v1025, 16
      %v1058 = vrot.slane %v1056, 3
      %v1059 = vor.u32 %v1055, %v1058
      %v1060 = vsel %vm1026, %v1051, %v1059
      %v1086 = vunpack.c.l.b16 %v997
      %v1087 = vunpack.c.l.b16 %v998
      %v1088 = vunpack.c.l.b16 %v999
      %v1089 = vunpack.c.l.b16 %v1000
      %v1090 = vunpack.c.l.b16 %v1001
      %v1091 = vunpack.c.l.b16 %v1002
      %v1092 = vunpack.c.l.b16 %v1003
      %v1093 = vunpack.c.l.b16 %v1004
      %v1094 = vunpack.c.l.b16 %v1005
      %v1095 = vunpack.c.l.b16 %v1006
      %v1096 = vunpack.c.l.b16 %v1007
      %v1097 = vunpack.c.l.b16 %v1008
      %v1098 = vunpack.c.l.b16 %v1009
      %v1099 = vunpack.c.l.b16 %v1010
      %v1100 = vunpack.c.l.b16 %v1011
      %v1101 = vunpack.c.l.b16 %v1012
      %v1102 = vunpack.c.l.b16 %v1013
      %v1103 = vunpack.c.l.b16 %v1014
      %v1104 = vunpack.c.l.b16 %v1015
      %v1105 = vunpack.c.l.b16 %v1016
      %v1106 = vunpack.c.l.b16 %v1017
      %v1107 = vunpack.c.l.b16 %v1018
      %v1108 = vunpack.c.l.b16 %v1019
      %v1109 = vunpack.c.l.b16 %v1020
      %v1110 = vpack.c.b16 %v1087, %v1086
      %v1111 = vpack.c.b16 %v1089, %v1088
      %v1112 = vpack.c.b16 %v1091, %v1090
      %v1113 = vpack.c.b16 %v1093, %v1092
      %v1114 = vpack.c.b16 %v1095, %v1094
      %v1115 = vpack.c.b16 %v1097, %v1096
      %v1116 = vpack.c.b16 %v1099, %v1098
      %v1117 = vpack.c.b16 %v1101, %v1100
      %v1118 = vpack.c.b16 %v1103, %v1102
      %v1119 = vpack.c.b16 %v1105, %v1104
      %v1120 = vpack.c.b16 %v1107, %v1106
      %v1121 = vpack.c.b16 %v1109, %v1108
      %v1135 = vsel %vm335, %v1060, 0
      %1137 = vmatprep.subr.bf16.mxu0 0
      %1138 = vmatpush1.bf16.msra.mxu0 %v1117
      %1139 = vmatprep.subr.bf16.mxu0 0
      %1140 = vmatpush1.bf16.msra.mxu0 %v1116
      %1141 = vmatprep.subr.bf16.mxu0 0
      %1142 = vmatpush1.bf16.msra.mxu0 %v1115
      %1143 = vmatprep.subr.bf16.mxu0 0
      %1144 = vmatpush1.bf16.msra.mxu0 %v1114
      %1145 = vmatprep.subr.bf16.mxu0 0
      %1146 = vmatpush1.bf16.msra.mxu0 %v1113
      %1147 = vmatprep.subr.bf16.mxu0 0
      %1148 = vmatpush1.bf16.msra.mxu0 %v1112
      %1149 = vmatprep.subr.bf16.mxu0 0
      %1150 = vmatpush1.bf16.msra.mxu0 %v1111
      %1151 = vmatprep.subr.bf16.mxu0 0
      %1152 = vmatpush1.bf16.msra.mxu0 %v1110
      %1153 = vmatprep.subr.bf16.mxu0 0
      %1154 = vmatpush2.bf16.msra.mxu0 0
      %1155 = vmatprep.subr.bf16.mxu0 0
      %1156 = vmatpush2.bf16.msra.mxu0 0
      %1157 = vmatprep.subr.bf16.mxu0 0
      %1158 = vmatpush2.bf16.msra.mxu0 0
      %1159 = vmatprep.subr.bf16.mxu0 0
      %1160 = vmatpush2.bf16.msra.mxu0 0
      %1161 = vmatprep.subr.bf16.mxu0 0
      %1162 = vmatpush2.bf16.msra.mxu0 %v1121
      %1163 = vmatprep.subr.bf16.mxu0 0
      %1164 = vmatpush2.bf16.msra.mxu0 %v1120
      %1165 = vmatprep.subr.bf16.mxu0 0
      %1166 = vmatpush2.bf16.msra.mxu0 %v1119
      %1167 = vmatprep.subr.bf16.mxu0 0
      %1168 = vmatpush2.bf16.msra.mxu0 %v1118
      %1169 = vmatprep.mubr.bf16.mxu0 %v1135
      %1170 = vmatmul.mubr.bf16.gmra.mxu0 %v1043
      %v1171 = vpop.f32.mrf.mxu0
      %v1172 = vadd.f32 0.0, %v1171
      %v1173 = vpop.f32.mrf.mxu0
      %v1174 = vpop.f32.mrf.mxu0
      %v1175 = vadd.f32 0.0, %v1174
      %v1176 = vpop.f32.mrf.mxu0
      %1177 = vdwg.mxu0
      %v1178 = vadd.f32 %v993, %v1172
      %v1179 = vadd.f32 %v994, %v1175
      %v1180 = vld [vmem:[%s165] sm:$0x88]
      %s1181 = scalar_lea.vmem %s1, 576
      %v1182 = vld [vmem:[%s1181] sm:$0xf]
      %v1183 = vld [vmem:[%s1181 + $0x4] sm:$0xf]
      %v1184 = vld [vmem:[%s1181 + $0x8] sm:$0xf]
      %v1185 = vld [vmem:[%s1181 + $0xc] sm:$0xf]
      %v1186 = vld [vmem:[%s1181 + $0x10] sm:$0xf]
      %v1187 = vld [vmem:[%s1181 + $0x14] sm:$0xf]
      %v1188 = vld [vmem:[%s1181 + $0x18] sm:$0xf]
      %v1189 = vld [vmem:[%s1181 + $0x1c] sm:$0xf]
      %v1190 = vld [vmem:[%s1181 + $0x20] sm:$0xf]
      %v1191 = vld [vmem:[%s1181 + $0x24] sm:$0xf]
      %v1192 = vld [vmem:[%s1181 + $0x28] sm:$0xf]
      %v1193 = vld [vmem:[%s1181 + $0x2c] sm:$0xf]
      %v1194 = vld [vmem:[%s1181 + $0x30] sm:$0xf]
      %v1195 = vld [vmem:[%s1181 + $0x34] sm:$0xf]
      %v1196 = vld [vmem:[%s1181 + $0x38] sm:$0xf]
      %v1197 = vld [vmem:[%s1181 + $0x3c] sm:$0xf]
      %v1198 = vld [vmem:[%s1181 + $0x40] sm:$0xf]
      %v1199 = vld [vmem:[%s1181 + $0x44] sm:$0xf]
      %v1200 = vld [vmem:[%s1181 + $0x48] sm:$0xf]
      %v1201 = vld [vmem:[%s1181 + $0x4c] sm:$0xf]
      %v1202 = vld [vmem:[%s1181 + $0x50] sm:$0xf]
      %v1203 = vld [vmem:[%s1181 + $0x54] sm:$0xf]
      %v1204 = vld [vmem:[%s1181 + $0x58] sm:$0xf]
      %v1205 = vld [vmem:[%s1181 + $0x5c] sm:$0xf]
      %v1207 = vunpack.c.l.b16 %v1180
      %v1208 = vunpack.c.h.b16 %v1180
      %v1209 = vpack.c.b16 %v229, %v1207
      %v1210 = vpack.c.b16 %v230, %v1208
      %vm1211 = vcmask 1044480
      %v1212 = vrot.slane %v1209, 3
      %v1213 = vrot.slane %v1024, 3
      %v1214 = vsel %vm1211, %v1212, %v1213
      %v1215 = vrot.slane %v1210, 3
      %v1216 = vrot.slane %v1025, 3
      %v1217 = vsel %vm1211, %v1215, %v1216
      %v1243 = vunpack.c.l.b16 %v1182
      %v1244 = vunpack.c.l.b16 %v1183
      %v1245 = vunpack.c.l.b16 %v1184
      %v1246 = vunpack.c.l.b16 %v1185
      %v1247 = vunpack.c.l.b16 %v1186
      %v1248 = vunpack.c.l.b16 %v1187
      %v1249 = vunpack.c.l.b16 %v1188
      %v1250 = vunpack.c.l.b16 %v1189
      %v1251 = vunpack.c.l.b16 %v1190
      %v1252 = vunpack.c.l.b16 %v1191
      %v1253 = vunpack.c.l.b16 %v1192
      %v1254 = vunpack.c.l.b16 %v1193
      %v1255 = vunpack.c.l.b16 %v1194
      %v1256 = vunpack.c.l.b16 %v1195
      %v1257 = vunpack.c.l.b16 %v1196
      %v1258 = vunpack.c.l.b16 %v1197
      %v1259 = vunpack.c.l.b16 %v1198
      %v1260 = vunpack.c.l.b16 %v1199
      %v1261 = vunpack.c.l.b16 %v1200
      %v1262 = vunpack.c.l.b16 %v1201
      %v1263 = vunpack.c.l.b16 %v1202
      %v1264 = vunpack.c.l.b16 %v1203
      %v1265 = vunpack.c.l.b16 %v1204
      %v1266 = vunpack.c.l.b16 %v1205
      %v1267 = vpack.c.b16 %v1244, %v1243
      %v1268 = vpack.c.b16 %v1246, %v1245
      %v1269 = vpack.c.b16 %v1248, %v1247
      %v1270 = vpack.c.b16 %v1250, %v1249
      %v1271 = vpack.c.b16 %v1252, %v1251
      %v1272 = vpack.c.b16 %v1254, %v1253
      %v1273 = vpack.c.b16 %v1256, %v1255
      %v1274 = vpack.c.b16 %v1258, %v1257
      %v1275 = vpack.c.b16 %v1260, %v1259
      %v1276 = vpack.c.b16 %v1262, %v1261
      %v1277 = vpack.c.b16 %v1264, %v1263
      %v1278 = vpack.c.b16 %v1266, %v1265
      %v1292 = vsel %vm335, %v1217, 0
      %1294 = vmatprep.subr.bf16.mxu0 0
      %1295 = vmatpush1.bf16.msra.mxu0 %v1274
      %1296 = vmatprep.subr.bf16.mxu0 0
      %1297 = vmatpush1.bf16.msra.mxu0 %v1273
      %1298 = vmatprep.subr.bf16.mxu0 0
      %1299 = vmatpush1.bf16.msra.mxu0 %v1272
      %1300 = vmatprep.subr.bf16.mxu0 0
      %1301 = vmatpush1.bf16.msra.mxu0 %v1271
      %1302 = vmatprep.subr.bf16.mxu0 0
      %1303 = vmatpush1.bf16.msra.mxu0 %v1270
      %1304 = vmatprep.subr.bf16.mxu0 0
      %1305 = vmatpush1.bf16.msra.mxu0 %v1269
      %1306 = vmatprep.subr.bf16.mxu0 0
      %1307 = vmatpush1.bf16.msra.mxu0 %v1268
      %1308 = vmatprep.subr.bf16.mxu0 0
      %1309 = vmatpush1.bf16.msra.mxu0 %v1267
      %1310 = vmatprep.subr.bf16.mxu0 0
      %1311 = vmatpush2.bf16.msra.mxu0 0
      %1312 = vmatprep.subr.bf16.mxu0 0
      %1313 = vmatpush2.bf16.msra.mxu0 0
      %1314 = vmatprep.subr.bf16.mxu0 0
      %1315 = vmatpush2.bf16.msra.mxu0 0
      %1316 = vmatprep.subr.bf16.mxu0 0
      %1317 = vmatpush2.bf16.msra.mxu0 0
      %1318 = vmatprep.subr.bf16.mxu0 0
      %1319 = vmatpush2.bf16.msra.mxu0 %v1278
      %1320 = vmatprep.subr.bf16.mxu0 0
      %1321 = vmatpush2.bf16.msra.mxu0 %v1277
      %1322 = vmatprep.subr.bf16.mxu0 0
      %1323 = vmatpush2.bf16.msra.mxu0 %v1276
      %1324 = vmatprep.subr.bf16.mxu0 0
      %1325 = vmatpush2.bf16.msra.mxu0 %v1275
      %1326 = vmatprep.mubr.bf16.mxu0 %v1292
      %1327 = vmatmul.mubr.bf16.gmra.mxu0 %v1214
      %v1328 = vpop.f32.mrf.mxu0
      %v1329 = vadd.f32 0.0, %v1328
      %v1330 = vpop.f32.mrf.mxu0
      %v1331 = vpop.f32.mrf.mxu0
      %v1332 = vadd.f32 0.0, %v1331
      %v1333 = vpop.f32.mrf.mxu0
      %1334 = vdwg.mxu0
      %v1335 = vadd.f32 %v1178, %v1329
      %v1336 = vadd.f32 %v1179, %v1332
      %v1337 = vld [vmem:[%s165 + $0x10] sm:$0xff]
      %s1338 = scalar_lea.vmem %s1, 672
      %v1339 = vld [vmem:[%s1338] sm:$0xf]
      %v1340 = vld [vmem:[%s1338 + $0x4] sm:$0xf]
      %v1341 = vld [vmem:[%s1338 + $0x8] sm:$0xf]
      %v1342 = vld [vmem:[%s1338 + $0xc] sm:$0xf]
      %v1343 = vld [vmem:[%s1338 + $0x10] sm:$0xf]
      %v1344 = vld [vmem:[%s1338 + $0x14] sm:$0xf]
      %v1345 = vld [vmem:[%s1338 + $0x18] sm:$0xf]
      %v1346 = vld [vmem:[%s1338 + $0x1c] sm:$0xf]
      %v1347 = vld [vmem:[%s1338 + $0x20] sm:$0xf]
      %v1348 = vld [vmem:[%s1338 + $0x24] sm:$0xf]
      %v1349 = vld [vmem:[%s1338 + $0x28] sm:$0xf]
      %v1350 = vld [vmem:[%s1338 + $0x2c] sm:$0xf]
      %v1351 = vld [vmem:[%s1338 + $0x30] sm:$0xf]
      %v1352 = vld [vmem:[%s1338 + $0x34] sm:$0xf]
      %v1353 = vld [vmem:[%s1338 + $0x38] sm:$0xf]
      %v1354 = vld [vmem:[%s1338 + $0x3c] sm:$0xf]
      %v1355 = vld [vmem:[%s1338 + $0x40] sm:$0xf]
      %v1356 = vld [vmem:[%s1338 + $0x44] sm:$0xf]
      %v1357 = vld [vmem:[%s1338 + $0x48] sm:$0xf]
      %v1358 = vld [vmem:[%s1338 + $0x4c] sm:$0xf]
      %v1359 = vld [vmem:[%s1338 + $0x50] sm:$0xf]
      %v1360 = vld [vmem:[%s1338 + $0x54] sm:$0xf]
      %v1361 = vld [vmem:[%s1338 + $0x58] sm:$0xf]
      %v1362 = vld [vmem:[%s1338 + $0x5c] sm:$0xf]
      %v1364 = vunpack.c.l.b16 %v1337
      %v1365 = vunpack.c.h.b16 %v1337
      %v1366 = vpack.c.b16 %v1364, %v1364
      %v1367 = vpack.c.b16 %v1365, %v1365
      %vm1368 = vsmask.f32 4352
      %v1370 = vshrl.u32 %v1209, 16
      %v1372 = vrot.slane %v1370, 3
      %v1373 = vshll.u32 %v1209, 16
      %v1375 = vrot.slane %v1373, 4
      %v1376 = vor.u32 %v1372, %v1375
      %v1378 = vshrl.u32 %v1366, 16
      %v1380 = vrot.slane %v1378, 3
      %v1381 = vshll.u32 %v1366, 16
      %v1383 = vrot.slane %v1381, 4
      %v1384 = vor.u32 %v1380, %v1383
      %v1385 = vsel %vm1368, %v1376, %v1384
      %v1387 = vshrl.u32 %v1210, 16
      %v1389 = vrot.slane %v1387, 3
      %v1390 = vshll.u32 %v1210, 16
      %v1392 = vrot.slane %v1390, 4
      %v1393 = vor.u32 %v1389, %v1392
      %v1395 = vshrl.u32 %v1367, 16
      %v1397 = vrot.slane %v1395, 3
      %v1398 = vshll.u32 %v1367, 16
      %v1400 = vrot.slane %v1398, 4
      %v1401 = vor.u32 %v1397, %v1400
      %v1402 = vsel %vm1368, %v1393, %v1401
      %v1428 = vunpack.c.l.b16 %v1339
      %v1429 = vunpack.c.l.b16 %v1340
      %v1430 = vunpack.c.l.b16 %v1341
      %v1431 = vunpack.c.l.b16 %v1342
      %v1432 = vunpack.c.l.b16 %v1343
      %v1433 = vunpack.c.l.b16 %v1344
      %v1434 = vunpack.c.l.b16 %v1345
      %v1435 = vunpack.c.l.b16 %v1346
      %v1436 = vunpack.c.l.b16 %v1347
      %v1437 = vunpack.c.l.b16 %v1348
      %v1438 = vunpack.c.l.b16 %v1349
      %v1439 = vunpack.c.l.b16 %v1350
      %v1440 = vunpack.c.l.b16 %v1351
      %v1441 = vunpack.c.l.b16 %v1352
      %v1442 = vunpack.c.l.b16 %v1353
      %v1443 = vunpack.c.l.b16 %v1354
      %v1444 = vunpack.c.l.b16 %v1355
      %v1445 = vunpack.c.l.b16 %v1356
      %v1446 = vunpack.c.l.b16 %v1357
      %v1447 = vunpack.c.l.b16 %v1358
      %v1448 = vunpack.c.l.b16 %v1359
      %v1449 = vunpack.c.l.b16 %v1360
      %v1450 = vunpack.c.l.b16 %v1361
      %v1451 = vunpack.c.l.b16 %v1362
      %v1452 = vpack.c.b16 %v1429, %v1428
      %v1453 = vpack.c.b16 %v1431, %v1430
      %v1454 = vpack.c.b16 %v1433, %v1432
      %v1455 = vpack.c.b16 %v1435, %v1434
      %v1456 = vpack.c.b16 %v1437, %v1436
      %v1457 = vpack.c.b16 %v1439, %v1438
      %v1458 = vpack.c.b16 %v1441, %v1440
      %v1459 = vpack.c.b16 %v1443, %v1442
      %v1460 = vpack.c.b16 %v1445, %v1444
      %v1461 = vpack.c.b16 %v1447, %v1446
      %v1462 = vpack.c.b16 %v1449, %v1448
      %v1463 = vpack.c.b16 %v1451, %v1450
      %v1477 = vsel %vm335, %v1402, 0
      %1479 = vmatprep.subr.bf16.mxu0 0
      %1480 = vmatpush1.bf16.msra.mxu0 %v1459
      %1481 = vmatprep.subr.bf16.mxu0 0
      %1482 = vmatpush1.bf16.msra.mxu0 %v1458
      %1483 = vmatprep.subr.bf16.mxu0 0
      %1484 = vmatpush1.bf16.msra.mxu0 %v1457
      %1485 = vmatprep.subr.bf16.mxu0 0
      %1486 = vmatpush1.bf16.msra.mxu0 %v1456
      %1487 = vmatprep.subr.bf16.mxu0 0
      %1488 = vmatpush1.bf16.msra.mxu0 %v1455
      %1489 = vmatprep.subr.bf16.mxu0 0
      %1490 = vmatpush1.bf16.msra.mxu0 %v1454
      %1491 = vmatprep.subr.bf16.mxu0 0
      %1492 = vmatpush1.bf16.msra.mxu0 %v1453
      %1493 = vmatprep.subr.bf16.mxu0 0
      %1494 = vmatpush1.bf16.msra.mxu0 %v1452
      %1495 = vmatprep.subr.bf16.mxu0 0
      %1496 = vmatpush2.bf16.msra.mxu0 0
      %1497 = vmatprep.subr.bf16.mxu0 0
      %1498 = vmatpush2.bf16.msra.mxu0 0
      %1499 = vmatprep.subr.bf16.mxu0 0
      %1500 = vmatpush2.bf16.msra.mxu0 0
      %1501 = vmatprep.subr.bf16.mxu0 0
      %1502 = vmatpush2.bf16.msra.mxu0 0
      %1503 = vmatprep.subr.bf16.mxu0 0
      %1504 = vmatpush2.bf16.msra.mxu0 %v1463
      %1505 = vmatprep.subr.bf16.mxu0 0
      %1506 = vmatpush2.bf16.msra.mxu0 %v1462
      %1507 = vmatprep.subr.bf16.mxu0 0
      %1508 = vmatpush2.bf16.msra.mxu0 %v1461
      %1509 = vmatprep.subr.bf16.mxu0 0
      %1510 = vmatpush2.bf16.msra.mxu0 %v1460
      %1511 = vmatprep.mubr.bf16.mxu0 %v1477
      %1512 = vmatmul.mubr.bf16.gmra.mxu0 %v1385
      %v1513 = vpop.f32.mrf.mxu0
      %v1514 = vadd.f32 0.0, %v1513
      %v1515 = vpop.f32.mrf.mxu0
      %v1516 = vpop.f32.mrf.mxu0
      %v1517 = vadd.f32 0.0, %v1516
      %v1518 = vpop.f32.mrf.mxu0
      %1519 = vdwg.mxu0
      %v1520 = vadd.f32 %v1335, %v1514
      %v1521 = vadd.f32 %v1336, %v1517
      %s1522 = scalar_lea.vmem %s1, 768
      %v1523 = vld [vmem:[%s1522] sm:$0xf]
      %v1524 = vld [vmem:[%s1522 + $0x4] sm:$0xf]
      %v1525 = vld [vmem:[%s1522 + $0x8] sm:$0xf]
      %v1526 = vld [vmem:[%s1522 + $0xc] sm:$0xf]
      %v1527 = vld [vmem:[%s1522 + $0x10] sm:$0xf]
      %v1528 = vld [vmem:[%s1522 + $0x14] sm:$0xf]
      %v1529 = vld [vmem:[%s1522 + $0x18] sm:$0xf]
      %v1530 = vld [vmem:[%s1522 + $0x1c] sm:$0xf]
      %v1531 = vld [vmem:[%s1522 + $0x20] sm:$0xf]
      %v1532 = vld [vmem:[%s1522 + $0x24] sm:$0xf]
      %v1533 = vld [vmem:[%s1522 + $0x28] sm:$0xf]
      %v1534 = vld [vmem:[%s1522 + $0x2c] sm:$0xf]
      %v1535 = vld [vmem:[%s1522 + $0x30] sm:$0xf]
      %v1536 = vld [vmem:[%s1522 + $0x34] sm:$0xf]
      %v1537 = vld [vmem:[%s1522 + $0x38] sm:$0xf]
      %v1538 = vld [vmem:[%s1522 + $0x3c] sm:$0xf]
      %v1539 = vld [vmem:[%s1522 + $0x40] sm:$0xf]
      %v1540 = vld [vmem:[%s1522 + $0x44] sm:$0xf]
      %v1541 = vld [vmem:[%s1522 + $0x48] sm:$0xf]
      %v1542 = vld [vmem:[%s1522 + $0x4c] sm:$0xf]
      %v1543 = vld [vmem:[%s1522 + $0x50] sm:$0xf]
      %v1544 = vld [vmem:[%s1522 + $0x54] sm:$0xf]
      %v1545 = vld [vmem:[%s1522 + $0x58] sm:$0xf]
      %v1546 = vld [vmem:[%s1522 + $0x5c] sm:$0xf]
      %v1547 = vpack.c.b16 %v1364, %v229
      %v1548 = vpack.c.b16 %v1365, %v230
      %v1574 = vunpack.c.l.b16 %v1523
      %v1575 = vunpack.c.l.b16 %v1524
      %v1576 = vunpack.c.l.b16 %v1525
      %v1577 = vunpack.c.l.b16 %v1526
      %v1578 = vunpack.c.l.b16 %v1527
      %v1579 = vunpack.c.l.b16 %v1528
      %v1580 = vunpack.c.l.b16 %v1529
      %v1581 = vunpack.c.l.b16 %v1530
      %v1582 = vunpack.c.l.b16 %v1531
      %v1583 = vunpack.c.l.b16 %v1532
      %v1584 = vunpack.c.l.b16 %v1533
      %v1585 = vunpack.c.l.b16 %v1534
      %v1586 = vunpack.c.l.b16 %v1535
      %v1587 = vunpack.c.l.b16 %v1536
      %v1588 = vunpack.c.l.b16 %v1537
      %v1589 = vunpack.c.l.b16 %v1538
      %v1590 = vunpack.c.l.b16 %v1539
      %v1591 = vunpack.c.l.b16 %v1540
      %v1592 = vunpack.c.l.b16 %v1541
      %v1593 = vunpack.c.l.b16 %v1542
      %v1594 = vunpack.c.l.b16 %v1543
      %v1595 = vunpack.c.l.b16 %v1544
      %v1596 = vunpack.c.l.b16 %v1545
      %v1597 = vunpack.c.l.b16 %v1546
      %v1598 = vpack.c.b16 %v1575, %v1574
      %v1599 = vpack.c.b16 %v1577, %v1576
      %v1600 = vpack.c.b16 %v1579, %v1578
      %v1601 = vpack.c.b16 %v1581, %v1580
      %v1602 = vpack.c.b16 %v1583, %v1582
      %v1603 = vpack.c.b16 %v1585, %v1584
      %v1604 = vpack.c.b16 %v1587, %v1586
      %v1605 = vpack.c.b16 %v1589, %v1588
      %v1606 = vpack.c.b16 %v1591, %v1590
      %v1607 = vpack.c.b16 %v1593, %v1592
      %v1608 = vpack.c.b16 %v1595, %v1594
      %v1609 = vpack.c.b16 %v1597, %v1596
      %v1623 = vsel %vm335, %v1548, 0
      %1625 = vmatprep.subr.bf16.mxu0 0
      %1626 = vmatpush1.bf16.msra.mxu0 %v1605
      %1627 = vmatprep.subr.bf16.mxu0 0
      %1628 = vmatpush1.bf16.msra.mxu0 %v1604
      %1629 = vmatprep.subr.bf16.mxu0 0
      %1630 = vmatpush1.bf16.msra.mxu0 %v1603
      %1631 = vmatprep.subr.bf16.mxu0 0
      %1632 = vmatpush1.bf16.msra.mxu0 %v1602
      %1633 = vmatprep.subr.bf16.mxu0 0
      %1634 = vmatpush1.bf16.msra.mxu0 %v1601
      %1635 = vmatprep.subr.bf16.mxu0 0
      %1636 = vmatpush1.bf16.msra.mxu0 %v1600
      %1637 = vmatprep.subr.bf16.mxu0 0
      %1638 = vmatpush1.bf16.msra.mxu0 %v1599
      %1639 = vmatprep.subr.bf16.mxu0 0
      %1640 = vmatpush1.bf16.msra.mxu0 %v1598
      %1641 = vmatprep.subr.bf16.mxu0 0
      %1642 = vmatpush2.bf16.msra.mxu0 0
      %1643 = vmatprep.subr.bf16.mxu0 0
      %1644 = vmatpush2.bf16.msra.mxu0 0
      %1645 = vmatprep.subr.bf16.mxu0 0
      %1646 = vmatpush2.bf16.msra.mxu0 0
      %1647 = vmatprep.subr.bf16.mxu0 0
      %1648 = vmatpush2.bf16.msra.mxu0 0
      %1649 = vmatprep.subr.bf16.mxu0 0
      %1650 = vmatpush2.bf16.msra.mxu0 %v1609
      %1651 = vmatprep.subr.bf16.mxu0 0
      %1652 = vmatpush2.bf16.msra.mxu0 %v1608
      %1653 = vmatprep.subr.bf16.mxu0 0
      %1654 = vmatpush2.bf16.msra.mxu0 %v1607
      %1655 = vmatprep.subr.bf16.mxu0 0
      %1656 = vmatpush2.bf16.msra.mxu0 %v1606
      %1657 = vmatprep.mubr.bf16.mxu0 %v1623
      %1658 = vmatmul.mubr.bf16.gmra.mxu0 %v1547
      %v1659 = vpop.f32.mrf.mxu0
      %v1660 = vadd.f32 0.0, %v1659
      %v1661 = vpop.f32.mrf.mxu0
      %v1662 = vpop.f32.mrf.mxu0
      %v1663 = vadd.f32 0.0, %v1662
      %v1664 = vpop.f32.mrf.mxu0
      %1665 = vdwg.mxu0
      %v1666 = vadd.f32 %v1520, %v1660
      %v1667 = vadd.f32 %v1521, %v1663
      %v1668 = vld [vmem:[%s2] sm:$0x1]
      %v1670 = vlaneseq
      %v1671 = vshrl.u32 %v1670, 7
      %v1672 = vsub.s32 0, %v1671
      %v1673 = vrot.slane %v1668, %v1672
      %v1675 = vadd.f32 %v1666, %v1673
      %v1676 = vadd.f32 %v1667, %v1673
      %v1677 = vmax.f32 %v1675, 0.0
      %v1678 = vmax.f32 %v1676, 0.0
      %v1679 = vpack.c.bf16 %v1678, %v1677
      %v1681 = vunpack.c.l.b16 %v1679
      %v1682 = vunpack.c.h.b16 %v1679
      %v1683 = vpack.c.b16 %v1681, %v1681
      %v1684 = vpack.c.b16 %v1682, %v1682
      %1687 = vst [vmem:[%s170] sm:$0xf] %v1683
      %1688 = vst [vmem:[%s170 + $0x4] sm:$0xf] %v1684
      %p1689 = scmp.lt.s32.totalorder %s14, 1
      %s1690 = scalar_select %p1689, %s14, 1
      %s1691 = smul.addr %s1690, 2
      %s1692 = smul.addr %s1691, 4
      %s1693 = scalar_lea.vmem %s3, %s1692
      // Predicated region
      $region33: #{cpm_stage_x_forward.6} parent=31 // pred_check
        %p1694 = pneg %p100
      $region34: #{cpm_stage_x_forward.6} parent=31 // pred_check_branch
        %1696 = sbr.rel (%p1694) target = $region36
      $region35: #{cpm_stage_x_forward.6} parent=31 // pred_region
        _
      $region36: #{cpm_stage_x_forward.6} parent=31 // pred_fallthru
        _
    $region32: #{cpm_stage_x_forward.6} parent=5 // pred_fallthru
      _
    %p1697 = scmp.le.s32.totalorder 2, %s9
    // Predicated region
    $region37: #{cpm_stage_x_forward.6} parent=5 // pred_check
      %p1698 = pneg %p1697
    $region38: #{cpm_stage_x_forward.6} parent=5 // pred_check_branch
      %1700 = sbr.rel (%p1698) target = $region40
    $region39: #{cpm_stage_x_forward.6} parent=5 // pred_region
      %s1701 = ssub.s32 %s9, 2
      // Predicated region
      $region41: #{cpm_stage_x_forward.6} parent=39 // pred_check
        %p1702 = pneg %p106
      $region42: #{cpm_stage_x_forward.6} parent=39 // pred_check_branch
        %1704 = sbr.rel (%p1702) target = $region44
      $region43: #{cpm_stage_x_forward.6} parent=39 // pred_region
        %p1705 = scmp.lt.s32.totalorder %s15, 1
        %s1706 = scalar_select %p1705, %s15, 1
        %s1707 = smul.addr %s1706, 2
        %s1708 = smul.addr %s1707, 4
        %s1709 = scalar_lea.vmem %s3, %s1708
      $region44: #{cpm_stage_x_forward.6} parent=39 // pred_fallthru
        _
    $region40: #{cpm_stage_x_forward.6} parent=5 // pred_fallthru
      _
  $region6: #{cpm_stage_x_forward.6} parent=0 // loop_footer
    %s13 = sadd.s32 1, %s9
  $region7: #{cpm_stage_x_forward.6} parent=0 // loop_footer_branch
    %8 = sbr.rel target = $region3
  $region8: #{cpm_stage_x_forward.6} parent=0 // loop_exit
    _

// kernel: cpm_stage_x_forward.7
$region0: #{cpm_stage_x_forward.7}
  #allocation0 [shape = 'u32[]', space=smem, size = 0x4, offset = 0x4, fixed_abs, tag = 'smem constant byte address 0x4 - core index']
  #allocation1 [shape = 'u32[144,128]{1,0:T(1,128)}', space=vmem, size = 0x12000, scoped, tag = 'internal scratch']
  %s0 = inlined_call_operand.vmem [shape: bf16[2,2,12,192], index: 0, kind: input, shape index: {}]
  %s1 = inlined_call_operand.vmem [shape: bf16[9,192,128], index: 1, kind: input, shape index: {}]
  %s2 = inlined_call_operand.vmem [shape: f32[1,64], index: 2, kind: input, shape index: {}]
  %s3 = inlined_call_operand.vmem [shape: f32[1,64], index: 3, kind: input, shape index: {}]
  %s4 = inlined_call_operand.vmem [shape: f32[1,64], index: 4, kind: input, shape index: {}]
  %s5 = inlined_call_operand.vmem [shape: bf16[2,8,64], index: 5, kind: output, shape index: {}]
  %s6 = sld [smem:[#allocation0]]
  $region53: #{cpm_stage_x_forward.7} parent=0
    _
  %s8 = ssub.s32 1, %s6
  %s9 = scalar_select 0, %s8, %s6
  loop: start=0, step=1, limit=4
  $region2: #{cpm_stage_x_forward.7} parent=0 // loop_pre_header
    _
  $region3: #{cpm_stage_x_forward.7} parent=0 // loop_header
    %s11 = sphi 0, %s15
    %p12 = scmp.ge.s32.totalorder %s11, 4
    %s21 = sphi 0, %s23
    %s24 = sphi 0, %s21
    %s25 = sphi 0, %s24
    %s41 = sphi 0, %s25
    %s45 = sphi 0, %s45
    %s47 = sphi 0, %s45
    %s48 = sphi 0, %s47
    %s62 = sphi 0, %s48
    %s66 = sphi 0, %s66
    %s68 = sphi 0, %s66
    %s69 = sphi 0, %s68
    %s83 = sphi 0, %s69
    %s87 = sphi 0, %s87
    %s89 = sphi 0, %s87
    %s90 = sphi 0, %s89
    %s104 = sphi 0, %s90
    %s108 = sphi 0, %s108
    %s110 = sphi 0, %s108
    %s111 = sphi 0, %s110
    %s125 = sphi 0, %s111
    %s131 = sphi 0, %s133
    %s134 = sphi 0, %s131
    %s135 = sphi 0, %s134
    %s151 = sphi 0, %s135
  $region4: #{cpm_stage_x_forward.7} parent=0 // loop_header_branch
    %14 = sbr.rel (%p12) target = $region8
  $region5: #{cpm_stage_x_forward.7} parent=0 // loop_body
    %s16 = ssub.s32 %s11, 1
    %s17 = ssub.s32 %s11, 2
    %s18 = sadd.s32 %s11, 1
    %s19 = ssub.s32 %s11, %s18
    %p20 = scmp.eq.s32.totalorder %s19, 0
    %s22 = sadd.s32 %s21, 1
    %s23 = scalar_select %p20, %s21, %s22
    %p26 = pneg %p20
    %p27 = scmp.eq.s32.totalorder %s11, 1
    %p28 = por %p26, %p27
    %p29 = scmp.ne.s32.totalorder %s21, %s24
    %p30 = scmp.eq.s32.totalorder %s11, 0
    %p31 = por %p29, %p30
    %p32 = scmp.ne.s32.totalorder %s21, %s24
    %p33 = scmp.eq.s32.totalorder %s16, 1
    %p34 = por %p32, %p33
    %p35 = scmp.ne.s32.totalorder %s24, %s25
    %p36 = scmp.eq.s32.totalorder %s16, 0
    %p37 = por %p35, %p36
    %p38 = scmp.ne.s32.totalorder %s24, %s25
    %p39 = scmp.eq.s32.totalorder %s17, 1
    %p40 = por %p38, %p39
    %p42 = scmp.ne.s32.totalorder %s25, %s41
    %p43 = scmp.eq.s32.totalorder %s17, 0
    %p44 = por %p42, %p43
    %s46 = sadd.s32 %s45, 1
    %p49 = scmp.eq.s32.totalorder %s11, 1
    %p50 = scmp.ne.s32.totalorder %s45, %s47
    %p51 = scmp.eq.s32.totalorder %s11, 0
    %p52 = por %p50, %p51
    %p53 = scmp.ne.s32.totalorder %s45, %s47
    %p54 = scmp.eq.s32.totalorder %s16, 1
    %p55 = por %p53, %p54
    %p56 = scmp.ne.s32.totalorder %s47, %s48
    %p57 = scmp.eq.s32.totalorder %s16, 0
    %p58 = por %p56, %p57
    %p59 = scmp.ne.s32.totalorder %s47, %s48
    %p60 = scmp.eq.s32.totalorder %s17, 1
    %p61 = por %p59, %p60
    %p63 = scmp.ne.s32.totalorder %s48, %s62
    %p64 = scmp.eq.s32.totalorder %s17, 0
    %p65 = por %p63, %p64
    %s67 = sadd.s32 %s66, 1
    %p70 = scmp.eq.s32.totalorder %s11, 1
    %p71 = scmp.ne.s32.totalorder %s66, %s68
    %p72 = scmp.eq.s32.totalorder %s11, 0
    %p73 = por %p71, %p72
    %p74 = scmp.ne.s32.totalorder %s66, %s68
    %p75 = scmp.eq.s32.totalorder %s16, 1
    %p76 = por %p74, %p75
    %p77 = scmp.ne.s32.totalorder %s68, %s69
    %p78 = scmp.eq.s32.totalorder %s16, 0
    %p79 = por %p77, %p78
    %p80 = scmp.ne.s32.totalorder %s68, %s69
    %p81 = scmp.eq.s32.totalorder %s17, 1
    %p82 = por %p80, %p81
    %p84 = scmp.ne.s32.totalorder %s69, %s83
    %p85 = scmp.eq.s32.totalorder %s17, 0
    %p86 = por %p84, %p85
    %s88 = sadd.s32 %s87, 1
    %p91 = scmp.eq.s32.totalorder %s11, 1
    %p92 = scmp.ne.s32.totalorder %s87, %s89
    %p93 = scmp.eq.s32.totalorder %s11, 0
    %p94 = por %p92, %p93
    %p95 = scmp.ne.s32.totalorder %s87, %s89
    %p96 = scmp.eq.s32.totalorder %s16, 1
    %p97 = por %p95, %p96
    %p98 = scmp.ne.s32.totalorder %s89, %s90
    %p99 = scmp.eq.s32.totalorder %s16, 0
    %p100 = por %p98, %p99
    %p101 = scmp.ne.s32.totalorder %s89, %s90
    %p102 = scmp.eq.s32.totalorder %s17, 1
    %p103 = por %p101, %p102
    %p105 = scmp.ne.s32.totalorder %s90, %s104
    %p106 = scmp.eq.s32.totalorder %s17, 0
    %p107 = por %p105, %p106
    %s109 = sadd.s32 %s108, 1
    %p112 = scmp.eq.s32.totalorder %s11, 1
    %p113 = scmp.ne.s32.totalorder %s108, %s110
    %p114 = scmp.eq.s32.totalorder %s11, 0
    %p115 = por %p113, %p114
    %p116 = scmp.ne.s32.totalorder %s108, %s110
    %p117 = scmp.eq.s32.totalorder %s16, 1
    %p118 = por %p116, %p117
    %p119 = scmp.ne.s32.totalorder %s110, %s111
    %p120 = scmp.eq.s32.totalorder %s16, 0
    %p121 = por %p119, %p120
    %p122 = scmp.ne.s32.totalorder %s110, %s111
    %p123 = scmp.eq.s32.totalorder %s17, 1
    %p124 = por %p122, %p123
    %p126 = scmp.ne.s32.totalorder %s111, %s125
    %p127 = scmp.eq.s32.totalorder %s17, 0
    %p128 = por %p126, %p127
    %s129 = ssub.s32 %s11, %s18
    %p130 = scmp.eq.s32.totalorder %s129, 0
    %s132 = sadd.s32 %s131, 1
    %s133 = scalar_select %p130, %s131, %s132
    %p136 = pneg %p130
    %p137 = scmp.eq.s32.totalorder %s11, 1
    %p138 = por %p136, %p137
    %p139 = scmp.ne.s32.totalorder %s131, %s134
    %p140 = scmp.eq.s32.totalorder %s11, 0
    %p141 = por %p139, %p140
    %p142 = scmp.ne.s32.totalorder %s131, %s134
    %p143 = scmp.eq.s32.totalorder %s16, 1
    %p144 = por %p142, %p143
    %p145 = scmp.ne.s32.totalorder %s134, %s135
    %p146 = scmp.eq.s32.totalorder %s16, 0
    %p147 = por %p145, %p146
    %p148 = scmp.ne.s32.totalorder %s134, %s135
    %p149 = scmp.eq.s32.totalorder %s17, 1
    %p150 = por %p148, %p149
    %p152 = scmp.ne.s32.totalorder %s135, %s151
    %p153 = scmp.eq.s32.totalorder %s17, 0
    %p154 = por %p152, %p153
    %p155 = scmp.le.s32.totalorder 1, %s11
    %p156 = scmp.lt.s32.totalorder %s11, 3
    %p157 = pnand %p155, %p156
    %p158 = pneg %p157
    // Predicated region
    $region9: #{cpm_stage_x_forward.7} parent=5 // pred_check
      _
    $region10: #{cpm_stage_x_forward.7} parent=5 // pred_check_branch
      %160 = sbr.rel (%p157) target = $region12
    $region11: #{cpm_stage_x_forward.7} parent=5 // pred_region
      %s161 = ssub.s32 %s11, 1
      // Predicated region
      $region13: #{cpm_stage_x_forward.7} parent=11 // pred_check
        %p162 = pneg %p58
      $region14: #{cpm_stage_x_forward.7} parent=11 // pred_check_branch
        %164 = sbr.rel (%p162) target = $region16
      $region15: #{cpm_stage_x_forward.7} parent=11 // pred_region
        _
      $region16: #{cpm_stage_x_forward.7} parent=11 // pred_fallthru
        _
      // Predicated region
      $region17: #{cpm_stage_x_forward.7} parent=11 // pred_check
        %p165 = pneg %p79
      $region18: #{cpm_stage_x_forward.7} parent=11 // pred_check_branch
        %167 = sbr.rel (%p165) target = $region20
      $region19: #{cpm_stage_x_forward.7} parent=11 // pred_region
        _
      $region20: #{cpm_stage_x_forward.7} parent=11 // pred_fallthru
        _
      // Predicated region
      $region21: #{cpm_stage_x_forward.7} parent=11 // pred_check
        %p168 = pneg %p100
      $region22: #{cpm_stage_x_forward.7} parent=11 // pred_check_branch
        %170 = sbr.rel (%p168) target = $region24
      $region23: #{cpm_stage_x_forward.7} parent=11 // pred_region
        _
      $region24: #{cpm_stage_x_forward.7} parent=11 // pred_fallthru
        _
      // Predicated region
      $region25: #{cpm_stage_x_forward.7} parent=11 // pred_check
        %p171 = pneg %p121
      $region26: #{cpm_stage_x_forward.7} parent=11 // pred_check_branch
        %173 = sbr.rel (%p171) target = $region28
      $region27: #{cpm_stage_x_forward.7} parent=11 // pred_region
        _
      $region28: #{cpm_stage_x_forward.7} parent=11 // pred_fallthru
        _
    $region12: #{cpm_stage_x_forward.7} parent=5 // pred_fallthru
      _
    %p174 = scmp.lt.s32.totalorder %s11, 2
    // Predicated region
    $region29: #{cpm_stage_x_forward.7} parent=5 // pred_check
      %p175 = pneg %p174
    $region30: #{cpm_stage_x_forward.7} parent=5 // pred_check_branch
      %177 = sbr.rel (%p175) target = $region32
    $region31: #{cpm_stage_x_forward.7} parent=5 // pred_region
      // Predicated region
      $region33: #{cpm_stage_x_forward.7} parent=31 // pred_check
        %p178 = pneg %p31
      $region34: #{cpm_stage_x_forward.7} parent=31 // pred_check_branch
        %180 = sbr.rel (%p178) target = $region36
      $region35: #{cpm_stage_x_forward.7} parent=31 // pred_region
        %p181 = scmp.lt.s32.totalorder %s11, 1
        %s182 = scalar_select %p181, %s11, 1
        %s183 = smul.addr %s182, 8
        %s184 = smul.addr %s183, 4
        %s185 = scalar_lea.vmem %s0, %s184
      $region36: #{cpm_stage_x_forward.7} parent=31 // pred_fallthru
        _
    $region32: #{cpm_stage_x_forward.7} parent=5 // pred_fallthru
      _
    %p186 = scmp.le.s32.totalorder 1, %s11
    %p187 = scmp.lt.s32.totalorder %s11, 3
    %p188 = pnand %p186, %p187
    %p189 = pneg %p188
    // Predicated region
    $region37: #{cpm_stage_x_forward.7} parent=5 // pred_check
      _
    $region38: #{cpm_stage_x_forward.7} parent=5 // pred_check_branch
      %191 = sbr.rel (%p188) target = $region40
    $region39: #{cpm_stage_x_forward.7} parent=5 // pred_region
      %s192 = ssub.s32 %s11, 1
      %p193 = scmp.lt.s32.totalorder %s16, 1
      %s194 = scalar_select %p193, %s16, 1
      %s195 = smul.addr %s194, 8
      %s196 = smul.addr %s195, 4
      %s197 = scalar_lea.vmem %s0, %s196
      %p198 = pneg %p37
      %p199 = pneg %p34
      %p200 = pneg %p58
      %p201 = pneg %p55
      %p202 = pneg %p79
      %p203 = pneg %p76
      %p204 = pneg %p100
      %p205 = pneg %p97
      %p206 = pneg %p121
      %p207 = pneg %p118
      %p208 = pneg %p147
      %p209 = pneg %p144
      %p210 = scmp.lt.s32.totalorder %s16, 1
      %s211 = scalar_select %p210, %s16, 1
      %s212 = smul.addr %s211, 4
      %s213 = scalar_lea.vmem %s5, %s212
      %p214 = scmp.lt.s32.totalorder %s16, 1
      %s215 = scalar_select %p214, %s16, 1
      %s216 = smul.addr %s215, 8
      %s217 = smul.addr %s216, 4
      %s218 = scalar_lea.vmem %s0, %s217
      %p219 = scmp.lt.s32.totalorder %s16, 1
      %s220 = scalar_select %p219, %s16, 1
      %s221 = smul.addr %s220, 4
      %s222 = scalar_lea.vmem %s5, %s221
      %v224 = vld [vmem:[%s218] sm:$0xff]
      %v225 = vld [vmem:[%s1] sm:$0xf]
      %v226 = vld [vmem:[%s1 + $0x4] sm:$0xf]
      %v227 = vld [vmem:[%s1 + $0x8] sm:$0xf]
      %v228 = vld [vmem:[%s1 + $0xc] sm:$0xf]
      %v229 = vld [vmem:[%s1 + $0x10] sm:$0xf]
      %v230 = vld [vmem:[%s1 + $0x14] sm:$0xf]
      %v231 = vld [vmem:[%s1 + $0x18] sm:$0xf]
      %v232 = vld [vmem:[%s1 + $0x1c] sm:$0xf]
      %v233 = vld [vmem:[%s1 + $0x20] sm:$0xf]
      %v234 = vld [vmem:[%s1 + $0x24] sm:$0xf]
      %v235 = vld [vmem:[%s1 + $0x28] sm:$0xf]
      %v236 = vld [vmem:[%s1 + $0x2c] sm:$0xf]
      %v237 = vld [vmem:[%s1 + $0x30] sm:$0xf]
      %v238 = vld [vmem:[%s1 + $0x34] sm:$0xf]
      %v239 = vld [vmem:[%s1 + $0x38] sm:$0xf]
      %v240 = vld [vmem:[%s1 + $0x3c] sm:$0xf]
      %v241 = vld [vmem:[%s1 + $0x40] sm:$0xf]
      %v242 = vld [vmem:[%s1 + $0x44] sm:$0xf]
      %v243 = vld [vmem:[%s1 + $0x48] sm:$0xf]
      %v244 = vld [vmem:[%s1 + $0x4c] sm:$0xf]
      %v245 = vld [vmem:[%s1 + $0x50] sm:$0xf]
      %v246 = vld [vmem:[%s1 + $0x54] sm:$0xf]
      %v247 = vld [vmem:[%s1 + $0x58] sm:$0xf]
      %v248 = vld [vmem:[%s1 + $0x5c] sm:$0xf]
      %s249 = scalar_lea.vmem %s218, 16
      %v250 = vld [vmem:[%s249] sm:$0xff]
      %s251 = scalar_lea.vmem %s1, 96
      %v252 = vld [vmem:[%s251] sm:$0xf]
      %v253 = vld [vmem:[%s251 + $0x4] sm:$0xf]
      %v254 = vld [vmem:[%s251 + $0x8] sm:$0xf]
      %v255 = vld [vmem:[%s251 + $0xc] sm:$0xf]
      %v256 = vld [vmem:[%s251 + $0x10] sm:$0xf]
      %v257 = vld [vmem:[%s251 + $0x14] sm:$0xf]
      %v258 = vld [vmem:[%s251 + $0x18] sm:$0xf]
      %v259 = vld [vmem:[%s251 + $0x1c] sm:$0xf]
      %v260 = vld [vmem:[%s251 + $0x20] sm:$0xf]
      %v261 = vld [vmem:[%s251 + $0x24] sm:$0xf]
      %v262 = vld [vmem:[%s251 + $0x28] sm:$0xf]
      %v263 = vld [vmem:[%s251 + $0x2c] sm:$0xf]
      %v264 = vld [vmem:[%s251 + $0x30] sm:$0xf]
      %v265 = vld [vmem:[%s251 + $0x34] sm:$0xf]
      %v266 = vld [vmem:[%s251 + $0x38] sm:$0xf]
      %v267 = vld [vmem:[%s251 + $0x3c] sm:$0xf]
      %v268 = vld [vmem:[%s251 + $0x40] sm:$0xf]
      %v269 = vld [vmem:[%s251 + $0x44] sm:$0xf]
      %v270 = vld [vmem:[%s251 + $0x48] sm:$0xf]
      %v271 = vld [vmem:[%s251 + $0x4c] sm:$0xf]
      %v272 = vld [vmem:[%s251 + $0x50] sm:$0xf]
      %v273 = vld [vmem:[%s251 + $0x54] sm:$0xf]
      %v274 = vld [vmem:[%s251 + $0x58] sm:$0xf]
      %v275 = vld [vmem:[%s251 + $0x5c] sm:$0xf]
      %v277 = vunpack.c.l.b16 %v250
      %v278 = vunpack.c.h.b16 %v250
      %v279 = vpack.c.b16 %v277, %v277
      %v280 = vpack.c.b16 %v278, %v278
      %v306 = vunpack.c.l.b16 %v252
      %v307 = vunpack.c.l.b16 %v253
      %v308 = vunpack.c.l.b16 %v254
      %v309 = vunpack.c.l.b16 %v255
      %v310 = vunpack.c.l.b16 %v256
      %v311 = vunpack.c.l.b16 %v257
      %v312 = vunpack.c.l.b16 %v258
      %v313 = vunpack.c.l.b16 %v259
      %v314 = vunpack.c.l.b16 %v260
      %v315 = vunpack.c.l.b16 %v261
      %v316 = vunpack.c.l.b16 %v262
      %v317 = vunpack.c.l.b16 %v263
      %v318 = vunpack.c.l.b16 %v264
      %v319 = vunpack.c.l.b16 %v265
      %v320 = vunpack.c.l.b16 %v266
      %v321 = vunpack.c.l.b16 %v267
      %v322 = vunpack.c.l.b16 %v268
      %v323 = vunpack.c.l.b16 %v269
      %v324 = vunpack.c.l.b16 %v270
      %v325 = vunpack.c.l.b16 %v271
      %v326 = vunpack.c.l.b16 %v272
      %v327 = vunpack.c.l.b16 %v273
      %v328 = vunpack.c.l.b16 %v274
      %v329 = vunpack.c.l.b16 %v275
      %v330 = vpack.c.b16 %v307, %v306
      %v331 = vpack.c.b16 %v309, %v308
      %v332 = vpack.c.b16 %v311, %v310
      %v333 = vpack.c.b16 %v313, %v312
      %v334 = vpack.c.b16 %v315, %v314
      %v335 = vpack.c.b16 %v317, %v316
      %v336 = vpack.c.b16 %v319, %v318
      %v337 = vpack.c.b16 %v321, %v320
      %v338 = vpack.c.b16 %v323, %v322
      %v339 = vpack.c.b16 %v325, %v324
      %v340 = vpack.c.b16 %v327, %v326
      %v341 = vpack.c.b16 %v329, %v328
      %vm354 = vcmask 523264
      %v356 = vsel %vm354, %v280, 0
      %358 = vmatprep.subr.bf16.mxu0 0
      %359 = vmatpush1.bf16.msra.mxu0 %v337
      %360 = vmatprep.subr.bf16.mxu0 0
      %361 = vmatpush1.bf16.msra.mxu0 %v336
      %362 = vmatprep.subr.bf16.mxu0 0
      %363 = vmatpush1.bf16.msra.mxu0 %v335
      %364 = vmatprep.subr.bf16.mxu0 0
      %365 = vmatpush1.bf16.msra.mxu0 %v334
      %366 = vmatprep.subr.bf16.mxu0 0
      %367 = vmatpush1.bf16.msra.mxu0 %v333
      %368 = vmatprep.subr.bf16.mxu0 0
      %369 = vmatpush1.bf16.msra.mxu0 %v332
      %370 = vmatprep.subr.bf16.mxu0 0
      %371 = vmatpush1.bf16.msra.mxu0 %v331
      %372 = vmatprep.subr.bf16.mxu0 0
      %373 = vmatpush1.bf16.msra.mxu0 %v330
      %374 = vmatprep.subr.bf16.mxu0 0
      %375 = vmatpush2.bf16.msra.mxu0 0
      %376 = vmatprep.subr.bf16.mxu0 0
      %377 = vmatpush2.bf16.msra.mxu0 0
      %378 = vmatprep.subr.bf16.mxu0 0
      %379 = vmatpush2.bf16.msra.mxu0 0
      %380 = vmatprep.subr.bf16.mxu0 0
      %381 = vmatpush2.bf16.msra.mxu0 0
      %382 = vmatprep.subr.bf16.mxu0 0
      %383 = vmatpush2.bf16.msra.mxu0 %v341
      %384 = vmatprep.subr.bf16.mxu0 0
      %385 = vmatpush2.bf16.msra.mxu0 %v340
      %386 = vmatprep.subr.bf16.mxu0 0
      %387 = vmatpush2.bf16.msra.mxu0 %v339
      %388 = vmatprep.subr.bf16.mxu0 0
      %389 = vmatpush2.bf16.msra.mxu0 %v338
      %390 = vmatprep.mubr.bf16.mxu0 %v356
      %391 = vmatmul.mubr.bf16.gmra.mxu0 %v279
      %v392 = vpop.f32.mrf.mxu0
      %v393 = vadd.f32 0.0, %v392
      %v394 = vpop.f32.mrf.mxu0
      %v395 = vpop.f32.mrf.mxu0
      %v396 = vpop.f32.mrf.mxu0
      %397 = vdwg.mxu0
      %v399 = vunpack.c.l.b16 %v224
      %v400 = vunpack.c.h.b16 %v224
      %v401 = vpack.c.b16 %v399, %v399
      %v402 = vpack.c.b16 %v400, %v400
      %v428 = vunpack.c.l.b16 %v225
      %v429 = vunpack.c.l.b16 %v226
      %v430 = vunpack.c.l.b16 %v227
      %v431 = vunpack.c.l.b16 %v228
      %v432 = vunpack.c.l.b16 %v229
      %v433 = vunpack.c.l.b16 %v230
      %v434 = vunpack.c.l.b16 %v231
      %v435 = vunpack.c.l.b16 %v232
      %v436 = vunpack.c.l.b16 %v233
      %v437 = vunpack.c.l.b16 %v234
      %v438 = vunpack.c.l.b16 %v235
      %v439 = vunpack.c.l.b16 %v236
      %v440 = vunpack.c.l.b16 %v237
      %v441 = vunpack.c.l.b16 %v238
      %v442 = vunpack.c.l.b16 %v239
      %v443 = vunpack.c.l.b16 %v240
      %v444 = vunpack.c.l.b16 %v241
      %v445 = vunpack.c.l.b16 %v242
      %v446 = vunpack.c.l.b16 %v243
      %v447 = vunpack.c.l.b16 %v244
      %v448 = vunpack.c.l.b16 %v245
      %v449 = vunpack.c.l.b16 %v246
      %v450 = vunpack.c.l.b16 %v247
      %v451 = vunpack.c.l.b16 %v248
      %v452 = vpack.c.b16 %v429, %v428
      %v453 = vpack.c.b16 %v431, %v430
      %v454 = vpack.c.b16 %v433, %v432
      %v455 = vpack.c.b16 %v435, %v434
      %v456 = vpack.c.b16 %v437, %v436
      %v457 = vpack.c.b16 %v439, %v438
      %v458 = vpack.c.b16 %v441, %v440
      %v459 = vpack.c.b16 %v443, %v442
      %v460 = vpack.c.b16 %v445, %v444
      %v461 = vpack.c.b16 %v447, %v446
      %v462 = vpack.c.b16 %v449, %v448
      %v463 = vpack.c.b16 %v451, %v450
      %v477 = vsel %vm354, %v402, 0
      %479 = vmatprep.subr.bf16.mxu0 0
      %480 = vmatpush1.bf16.msra.mxu0 %v459
      %481 = vmatprep.subr.bf16.mxu0 0
      %482 = vmatpush1.bf16.msra.mxu0 %v458
      %483 = vmatprep.subr.bf16.mxu0 0
      %484 = vmatpush1.bf16.msra.mxu0 %v457
      %485 = vmatprep.subr.bf16.mxu0 0
      %486 = vmatpush1.bf16.msra.mxu0 %v456
      %487 = vmatprep.subr.bf16.mxu0 0
      %488 = vmatpush1.bf16.msra.mxu0 %v455
      %489 = vmatprep.subr.bf16.mxu0 0
      %490 = vmatpush1.bf16.msra.mxu0 %v454
      %491 = vmatprep.subr.bf16.mxu0 0
      %492 = vmatpush1.bf16.msra.mxu0 %v453
      %493 = vmatprep.subr.bf16.mxu0 0
      %494 = vmatpush1.bf16.msra.mxu0 %v452
      %495 = vmatprep.subr.bf16.mxu0 0
      %496 = vmatpush2.bf16.msra.mxu0 0
      %497 = vmatprep.subr.bf16.mxu0 0
      %498 = vmatpush2.bf16.msra.mxu0 0
      %499 = vmatprep.subr.bf16.mxu0 0
      %500 = vmatpush2.bf16.msra.mxu0 0
      %501 = vmatprep.subr.bf16.mxu0 0
      %502 = vmatpush2.bf16.msra.mxu0 0
      %503 = vmatprep.subr.bf16.mxu0 0
      %504 = vmatpush2.bf16.msra.mxu0 %v463
      %505 = vmatprep.subr.bf16.mxu0 0
      %506 = vmatpush2.bf16.msra.mxu0 %v462
      %507 = vmatprep.subr.bf16.mxu0 0
      %508 = vmatpush2.bf16.msra.mxu0 %v461
      %509 = vmatprep.subr.bf16.mxu0 0
      %510 = vmatpush2.bf16.msra.mxu0 %v460
      %511 = vmatprep.mubr.bf16.mxu0 %v477
      %512 = vmatmul.mubr.bf16.gmra.mxu0 %v401
      %v513 = vpop.f32.mrf.mxu0
      %v514 = vadd.f32 %v393, %v513
      %v515 = vpop.f32.mrf.mxu0
      %v516 = vpop.f32.mrf.mxu0
      %v517 = vpop.f32.mrf.mxu0
      %518 = vdwg.mxu0
      %v519 = vld [vmem:[%s218] sm:$0xff]
      %v520 = vld [vmem:[%s218 + $0x8] sm:$0x11]
      %s521 = scalar_lea.vmem %s1, 192
      %v522 = vld [vmem:[%s521] sm:$0xf]
      %v523 = vld [vmem:[%s521 + $0x4] sm:$0xf]
      %v524 = vld [vmem:[%s521 + $0x8] sm:$0xf]
      %v525 = vld [vmem:[%s521 + $0xc] sm:$0xf]
      %v526 = vld [vmem:[%s521 + $0x10] sm:$0xf]
      %v527 = vld [vmem:[%s521 + $0x14] sm:$0xf]
      %v528 = vld [vmem:[%s521 + $0x18] sm:$0xf]
      %v529 = vld [vmem:[%s521 + $0x1c] sm:$0xf]
      %v530 = vld [vmem:[%s521 + $0x20] sm:$0xf]
      %v531 = vld [vmem:[%s521 + $0x24] sm:$0xf]
      %v532 = vld [vmem:[%s521 + $0x28] sm:$0xf]
      %v533 = vld [vmem:[%s521 + $0x2c] sm:$0xf]
      %v534 = vld [vmem:[%s521 + $0x30] sm:$0xf]
      %v535 = vld [vmem:[%s521 + $0x34] sm:$0xf]
      %v536 = vld [vmem:[%s521 + $0x38] sm:$0xf]
      %v537 = vld [vmem:[%s521 + $0x3c] sm:$0xf]
      %v538 = vld [vmem:[%s521 + $0x40] sm:$0xf]
      %v539 = vld [vmem:[%s521 + $0x44] sm:$0xf]
      %v540 = vld [vmem:[%s521 + $0x48] sm:$0xf]
      %v541 = vld [vmem:[%s521 + $0x4c] sm:$0xf]
      %v542 = vld [vmem:[%s521 + $0x50] sm:$0xf]
      %v543 = vld [vmem:[%s521 + $0x54] sm:$0xf]
      %v544 = vld [vmem:[%s521 + $0x58] sm:$0xf]
      %v545 = vld [vmem:[%s521 + $0x5c] sm:$0xf]
      %v548 = vunpack.c.l.b16 %v519
      %v549 = vunpack.c.h.b16 %v519
      %v550 = vunpack.c.l.b16 %v520
      %v551 = vunpack.c.h.b16 %v520
      %v552 = vpack.c.b16 %v550, %v548
      %v553 = vpack.c.b16 %v551, %v549
      %v555 = vshrl.u32 %v552, 16
      %v557 = vshll.u32 %v552, 16
      %v559 = vrot.slane %v557, 1
      %v560 = vor.u32 %v555, %v559
      %v562 = vshrl.u32 %v553, 16
      %v564 = vshll.u32 %v553, 16
      %v566 = vrot.slane %v564, 1
      %v567 = vor.u32 %v562, %v566
      %v593 = vunpack.c.l.b16 %v522
      %v594 = vunpack.c.l.b16 %v523
      %v595 = vunpack.c.l.b16 %v524
      %v596 = vunpack.c.l.b16 %v525
      %v597 = vunpack.c.l.b16 %v526
      %v598 = vunpack.c.l.b16 %v527
      %v599 = vunpack.c.l.b16 %v528
      %v600 = vunpack.c.l.b16 %v529
      %v601 = vunpack.c.l.b16 %v530
      %v602 = vunpack.c.l.b16 %v531
      %v603 = vunpack.c.l.b16 %v532
      %v604 = vunpack.c.l.b16 %v533
      %v605 = vunpack.c.l.b16 %v534
      %v606 = vunpack.c.l.b16 %v535
      %v607 = vunpack.c.l.b16 %v536
      %v608 = vunpack.c.l.b16 %v537
      %v609 = vunpack.c.l.b16 %v538
      %v610 = vunpack.c.l.b16 %v539
      %v611 = vunpack.c.l.b16 %v540
      %v612 = vunpack.c.l.b16 %v541
      %v613 = vunpack.c.l.b16 %v542
      %v614 = vunpack.c.l.b16 %v543
      %v615 = vunpack.c.l.b16 %v544
      %v616 = vunpack.c.l.b16 %v545
      %v617 = vpack.c.b16 %v594, %v593
      %v618 = vpack.c.b16 %v596, %v595
      %v619 = vpack.c.b16 %v598, %v597
      %v620 = vpack.c.b16 %v600, %v599
      %v621 = vpack.c.b16 %v602, %v601
      %v622 = vpack.c.b16 %v604, %v603
      %v623 = vpack.c.b16 %v606, %v605
      %v624 = vpack.c.b16 %v608, %v607
      %v625 = vpack.c.b16 %v610, %v609
      %v626 = vpack.c.b16 %v612, %v611
      %v627 = vpack.c.b16 %v614, %v613
      %v628 = vpack.c.b16 %v616, %v615
      %v642 = vsel %vm354, %v567, 0
      %644 = vmatprep.subr.bf16.mxu0 0
      %645 = vmatpush1.bf16.msra.mxu0 %v624
      %646 = vmatprep.subr.bf16.mxu0 0
      %647 = vmatpush1.bf16.msra.mxu0 %v623
      %648 = vmatprep.subr.bf16.mxu0 0
      %649 = vmatpush1.bf16.msra.mxu0 %v622
      %650 = vmatprep.subr.bf16.mxu0 0
      %651 = vmatpush1.bf16.msra.mxu0 %v621
      %652 = vmatprep.subr.bf16.mxu0 0
      %653 = vmatpush1.bf16.msra.mxu0 %v620
      %654 = vmatprep.subr.bf16.mxu0 0
      %655 = vmatpush1.bf16.msra.mxu0 %v619
      %656 = vmatprep.subr.bf16.mxu0 0
      %657 = vmatpush1.bf16.msra.mxu0 %v618
      %658 = vmatprep.subr.bf16.mxu0 0
      %659 = vmatpush1.bf16.msra.mxu0 %v617
      %660 = vmatprep.subr.bf16.mxu0 0
      %661 = vmatpush2.bf16.msra.mxu0 0
      %662 = vmatprep.subr.bf16.mxu0 0
      %663 = vmatpush2.bf16.msra.mxu0 0
      %664 = vmatprep.subr.bf16.mxu0 0
      %665 = vmatpush2.bf16.msra.mxu0 0
      %666 = vmatprep.subr.bf16.mxu0 0
      %667 = vmatpush2.bf16.msra.mxu0 0
      %668 = vmatprep.subr.bf16.mxu0 0
      %669 = vmatpush2.bf16.msra.mxu0 %v628
      %670 = vmatprep.subr.bf16.mxu0 0
      %671 = vmatpush2.bf16.msra.mxu0 %v627
      %672 = vmatprep.subr.bf16.mxu0 0
      %673 = vmatpush2.bf16.msra.mxu0 %v626
      %674 = vmatprep.subr.bf16.mxu0 0
      %675 = vmatpush2.bf16.msra.mxu0 %v625
      %676 = vmatprep.mubr.bf16.mxu0 %v642
      %677 = vmatmul.mubr.bf16.gmra.mxu0 %v560
      %v678 = vpop.f32.mrf.mxu0
      %v679 = vadd.f32 0.0, %v678
      %v680 = vpop.f32.mrf.mxu0
      %v681 = vpop.f32.mrf.mxu0
      %v682 = vpop.f32.mrf.mxu0
      %683 = vdwg.mxu0
      %v684 = vadd.f32 %v514, %v679
      %v685 = vld [vmem:[%s249] sm:$0xff]
      %v686 = vld [vmem:[%s249 + $0x8] sm:$0x11]
      %s687 = scalar_lea.vmem %s1, 288
      %v688 = vld [vmem:[%s687] sm:$0xf]
      %v689 = vld [vmem:[%s687 + $0x4] sm:$0xf]
      %v690 = vld [vmem:[%s687 + $0x8] sm:$0xf]
      %v691 = vld [vmem:[%s687 + $0xc] sm:$0xf]
      %v692 = vld [vmem:[%s687 + $0x10] sm:$0xf]
      %v693 = vld [vmem:[%s687 + $0x14] sm:$0xf]
      %v694 = vld [vmem:[%s687 + $0x18] sm:$0xf]
      %v695 = vld [vmem:[%s687 + $0x1c] sm:$0xf]
      %v696 = vld [vmem:[%s687 + $0x20] sm:$0xf]
      %v697 = vld [vmem:[%s687 + $0x24] sm:$0xf]
      %v698 = vld [vmem:[%s687 + $0x28] sm:$0xf]
      %v699 = vld [vmem:[%s687 + $0x2c] sm:$0xf]
      %v700 = vld [vmem:[%s687 + $0x30] sm:$0xf]
      %v701 = vld [vmem:[%s687 + $0x34] sm:$0xf]
      %v702 = vld [vmem:[%s687 + $0x38] sm:$0xf]
      %v703 = vld [vmem:[%s687 + $0x3c] sm:$0xf]
      %v704 = vld [vmem:[%s687 + $0x40] sm:$0xf]
      %v705 = vld [vmem:[%s687 + $0x44] sm:$0xf]
      %v706 = vld [vmem:[%s687 + $0x48] sm:$0xf]
      %v707 = vld [vmem:[%s687 + $0x4c] sm:$0xf]
      %v708 = vld [vmem:[%s687 + $0x50] sm:$0xf]
      %v709 = vld [vmem:[%s687 + $0x54] sm:$0xf]
      %v710 = vld [vmem:[%s687 + $0x58] sm:$0xf]
      %v711 = vld [vmem:[%s687 + $0x5c] sm:$0xf]
      %v714 = vunpack.c.l.b16 %v685
      %v715 = vunpack.c.h.b16 %v685
      %v716 = vunpack.c.l.b16 %v686
      %v717 = vunpack.c.h.b16 %v686
      %v718 = vpack.c.b16 %v716, %v714
      %v719 = vpack.c.b16 %v717, %v715
      %v721 = vshrl.u32 %v718, 16
      %v723 = vshll.u32 %v718, 16
      %v725 = vrot.slane %v723, 1
      %v726 = vor.u32 %v721, %v725
      %v728 = vshrl.u32 %v719, 16
      %v730 = vshll.u32 %v719, 16
      %v732 = vrot.slane %v730, 1
      %v733 = vor.u32 %v728, %v732
      %v759 = vunpack.c.l.b16 %v688
      %v760 = vunpack.c.l.b16 %v689
      %v761 = vunpack.c.l.b16 %v690
      %v762 = vunpack.c.l.b16 %v691
      %v763 = vunpack.c.l.b16 %v692
      %v764 = vunpack.c.l.b16 %v693
      %v765 = vunpack.c.l.b16 %v694
      %v766 = vunpack.c.l.b16 %v695
      %v767 = vunpack.c.l.b16 %v696
      %v768 = vunpack.c.l.b16 %v697
      %v769 = vunpack.c.l.b16 %v698
      %v770 = vunpack.c.l.b16 %v699
      %v771 = vunpack.c.l.b16 %v700
      %v772 = vunpack.c.l.b16 %v701
      %v773 = vunpack.c.l.b16 %v702
      %v774 = vunpack.c.l.b16 %v703
      %v775 = vunpack.c.l.b16 %v704
      %v776 = vunpack.c.l.b16 %v705
      %v777 = vunpack.c.l.b16 %v706
      %v778 = vunpack.c.l.b16 %v707
      %v779 = vunpack.c.l.b16 %v708
      %v780 = vunpack.c.l.b16 %v709
      %v781 = vunpack.c.l.b16 %v710
      %v782 = vunpack.c.l.b16 %v711
      %v783 = vpack.c.b16 %v760, %v759
      %v784 = vpack.c.b16 %v762, %v761
      %v785 = vpack.c.b16 %v764, %v763
      %v786 = vpack.c.b16 %v766, %v765
      %v787 = vpack.c.b16 %v768, %v767
      %v788 = vpack.c.b16 %v770, %v769
      %v789 = vpack.c.b16 %v772, %v771
      %v790 = vpack.c.b16 %v774, %v773
      %v791 = vpack.c.b16 %v776, %v775
      %v792 = vpack.c.b16 %v778, %v777
      %v793 = vpack.c.b16 %v780, %v779
      %v794 = vpack.c.b16 %v782, %v781
      %v808 = vsel %vm354, %v733, 0
      %810 = vmatprep.subr.bf16.mxu0 0
      %811 = vmatpush1.bf16.msra.mxu0 %v790
      %812 = vmatprep.subr.bf16.mxu0 0
      %813 = vmatpush1.bf16.msra.mxu0 %v789
      %814 = vmatprep.subr.bf16.mxu0 0
      %815 = vmatpush1.bf16.msra.mxu0 %v788
      %816 = vmatprep.subr.bf16.mxu0 0
      %817 = vmatpush1.bf16.msra.mxu0 %v787
      %818 = vmatprep.subr.bf16.mxu0 0
      %819 = vmatpush1.bf16.msra.mxu0 %v786
      %820 = vmatprep.subr.bf16.mxu0 0
      %821 = vmatpush1.bf16.msra.mxu0 %v785
      %822 = vmatprep.subr.bf16.mxu0 0
      %823 = vmatpush1.bf16.msra.mxu0 %v784
      %824 = vmatprep.subr.bf16.mxu0 0
      %825 = vmatpush1.bf16.msra.mxu0 %v783
      %826 = vmatprep.subr.bf16.mxu0 0
      %827 = vmatpush2.bf16.msra.mxu0 0
      %828 = vmatprep.subr.bf16.mxu0 0
      %829 = vmatpush2.bf16.msra.mxu0 0
      %830 = vmatprep.subr.bf16.mxu0 0
      %831 = vmatpush2.bf16.msra.mxu0 0
      %832 = vmatprep.subr.bf16.mxu0 0
      %833 = vmatpush2.bf16.msra.mxu0 0
      %834 = vmatprep.subr.bf16.mxu0 0
      %835 = vmatpush2.bf16.msra.mxu0 %v794
      %836 = vmatprep.subr.bf16.mxu0 0
      %837 = vmatpush2.bf16.msra.mxu0 %v793
      %838 = vmatprep.subr.bf16.mxu0 0
      %839 = vmatpush2.bf16.msra.mxu0 %v792
      %840 = vmatprep.subr.bf16.mxu0 0
      %841 = vmatpush2.bf16.msra.mxu0 %v791
      %842 = vmatprep.mubr.bf16.mxu0 %v808
      %843 = vmatmul.mubr.bf16.gmra.mxu0 %v726
      %v844 = vpop.f32.mrf.mxu0
      %v845 = vadd.f32 0.0, %v844
      %v846 = vpop.f32.mrf.mxu0
      %v847 = vpop.f32.mrf.mxu0
      %v848 = vpop.f32.mrf.mxu0
      %849 = vdwg.mxu0
      %v850 = vadd.f32 %v684, %v845
      %v851 = vld [vmem:[%s218] sm:$0xee]
      %s852 = scalar_lea.vmem %s1, 384
      %v853 = vld [vmem:[%s852] sm:$0xf]
      %v854 = vld [vmem:[%s852 + $0x4] sm:$0xf]
      %v855 = vld [vmem:[%s852 + $0x8] sm:$0xf]
      %v856 = vld [vmem:[%s852 + $0xc] sm:$0xf]
      %v857 = vld [vmem:[%s852 + $0x10] sm:$0xf]
      %v858 = vld [vmem:[%s852 + $0x14] sm:$0xf]
      %v859 = vld [vmem:[%s852 + $0x18] sm:$0xf]
      %v860 = vld [vmem:[%s852 + $0x1c] sm:$0xf]
      %v861 = vld [vmem:[%s852 + $0x20] sm:$0xf]
      %v862 = vld [vmem:[%s852 + $0x24] sm:$0xf]
      %v863 = vld [vmem:[%s852 + $0x28] sm:$0xf]
      %v864 = vld [vmem:[%s852 + $0x2c] sm:$0xf]
      %v865 = vld [vmem:[%s852 + $0x30] sm:$0xf]
      %v866 = vld [vmem:[%s852 + $0x34] sm:$0xf]
      %v867 = vld [vmem:[%s852 + $0x38] sm:$0xf]
      %v868 = vld [vmem:[%s852 + $0x3c] sm:$0xf]
      %v869 = vld [vmem:[%s852 + $0x40] sm:$0xf]
      %v870 = vld [vmem:[%s852 + $0x44] sm:$0xf]
      %v871 = vld [vmem:[%s852 + $0x48] sm:$0xf]
      %v872 = vld [vmem:[%s852 + $0x4c] sm:$0xf]
      %v873 = vld [vmem:[%s852 + $0x50] sm:$0xf]
      %v874 = vld [vmem:[%s852 + $0x54] sm:$0xf]
      %v875 = vld [vmem:[%s852 + $0x58] sm:$0xf]
      %v876 = vld [vmem:[%s852 + $0x5c] sm:$0xf]
      %v878 = vunpack.c.l.b16 %v851
      %v879 = vunpack.c.h.b16 %v851
      %v880 = vpack.c.b16 %v550, %v878
      %v881 = vpack.c.b16 %v551, %v879
      %v882 = vrot.slane %v880, 1
      %v883 = vrot.slane %v881, 1
      %v909 = vunpack.c.l.b16 %v853
      %v910 = vunpack.c.l.b16 %v854
      %v911 = vunpack.c.l.b16 %v855
      %v912 = vunpack.c.l.b16 %v856
      %v913 = vunpack.c.l.b16 %v857
      %v914 = vunpack.c.l.b16 %v858
      %v915 = vunpack.c.l.b16 %v859
      %v916 = vunpack.c.l.b16 %v860
      %v917 = vunpack.c.l.b16 %v861
      %v918 = vunpack.c.l.b16 %v862
      %v919 = vunpack.c.l.b16 %v863
      %v920 = vunpack.c.l.b16 %v864
      %v921 = vunpack.c.l.b16 %v865
      %v922 = vunpack.c.l.b16 %v866
      %v923 = vunpack.c.l.b16 %v867
      %v924 = vunpack.c.l.b16 %v868
      %v925 = vunpack.c.l.b16 %v869
      %v926 = vunpack.c.l.b16 %v870
      %v927 = vunpack.c.l.b16 %v871
      %v928 = vunpack.c.l.b16 %v872
      %v929 = vunpack.c.l.b16 %v873
      %v930 = vunpack.c.l.b16 %v874
      %v931 = vunpack.c.l.b16 %v875
      %v932 = vunpack.c.l.b16 %v876
      %v933 = vpack.c.b16 %v910, %v909
      %v934 = vpack.c.b16 %v912, %v911
      %v935 = vpack.c.b16 %v914, %v913
      %v936 = vpack.c.b16 %v916, %v915
      %v937 = vpack.c.b16 %v918, %v917
      %v938 = vpack.c.b16 %v920, %v919
      %v939 = vpack.c.b16 %v922, %v921
      %v940 = vpack.c.b16 %v924, %v923
      %v941 = vpack.c.b16 %v926, %v925
      %v942 = vpack.c.b16 %v928, %v927
      %v943 = vpack.c.b16 %v930, %v929
      %v944 = vpack.c.b16 %v932, %v931
      %v958 = vsel %vm354, %v883, 0
      %960 = vmatprep.subr.bf16.mxu0 0
      %961 = vmatpush1.bf16.msra.mxu0 %v940
      %962 = vmatprep.subr.bf16.mxu0 0
      %963 = vmatpush1.bf16.msra.mxu0 %v939
      %964 = vmatprep.subr.bf16.mxu0 0
      %965 = vmatpush1.bf16.msra.mxu0 %v938
      %966 = vmatprep.subr.bf16.mxu0 0
      %967 = vmatpush1.bf16.msra.mxu0 %v937
      %968 = vmatprep.subr.bf16.mxu0 0
      %969 = vmatpush1.bf16.msra.mxu0 %v936
      %970 = vmatprep.subr.bf16.mxu0 0
      %971 = vmatpush1.bf16.msra.mxu0 %v935
      %972 = vmatprep.subr.bf16.mxu0 0
      %973 = vmatpush1.bf16.msra.mxu0 %v934
      %974 = vmatprep.subr.bf16.mxu0 0
      %975 = vmatpush1.bf16.msra.mxu0 %v933
      %976 = vmatprep.subr.bf16.mxu0 0
      %977 = vmatpush2.bf16.msra.mxu0 0
      %978 = vmatprep.subr.bf16.mxu0 0
      %979 = vmatpush2.bf16.msra.mxu0 0
      %980 = vmatprep.subr.bf16.mxu0 0
      %981 = vmatpush2.bf16.msra.mxu0 0
      %982 = vmatprep.subr.bf16.mxu0 0
      %983 = vmatpush2.bf16.msra.mxu0 0
      %984 = vmatprep.subr.bf16.mxu0 0
      %985 = vmatpush2.bf16.msra.mxu0 %v944
      %986 = vmatprep.subr.bf16.mxu0 0
      %987 = vmatpush2.bf16.msra.mxu0 %v943
      %988 = vmatprep.subr.bf16.mxu0 0
      %989 = vmatpush2.bf16.msra.mxu0 %v942
      %990 = vmatprep.subr.bf16.mxu0 0
      %991 = vmatpush2.bf16.msra.mxu0 %v941
      %992 = vmatprep.mubr.bf16.mxu0 %v958
      %993 = vmatmul.mubr.bf16.gmra.mxu0 %v882
      %v994 = vpop.f32.mrf.mxu0
      %v995 = vadd.f32 0.0, %v994
      %v996 = vpop.f32.mrf.mxu0
      %v997 = vpop.f32.mrf.mxu0
      %v998 = vpop.f32.mrf.mxu0
      %999 = vdwg.mxu0
      %v1000 = vadd.f32 %v850, %v995
      %v1001 = vld [vmem:[%s249] sm:$0xee]
      %s1002 = scalar_lea.vmem %s1, 480
      %v1003 = vld [vmem:[%s1002] sm:$0xf]
      %v1004 = vld [vmem:[%s1002 + $0x4] sm:$0xf]
      %v1005 = vld [vmem:[%s1002 + $0x8] sm:$0xf]
      %v1006 = vld [vmem:[%s1002 + $0xc] sm:$0xf]
      %v1007 = vld [vmem:[%s1002 + $0x10] sm:$0xf]
      %v1008 = vld [vmem:[%s1002 + $0x14] sm:$0xf]
      %v1009 = vld [vmem:[%s1002 + $0x18] sm:$0xf]
      %v1010 = vld [vmem:[%s1002 + $0x1c] sm:$0xf]
      %v1011 = vld [vmem:[%s1002 + $0x20] sm:$0xf]
      %v1012 = vld [vmem:[%s1002 + $0x24] sm:$0xf]
      %v1013 = vld [vmem:[%s1002 + $0x28] sm:$0xf]
      %v1014 = vld [vmem:[%s1002 + $0x2c] sm:$0xf]
      %v1015 = vld [vmem:[%s1002 + $0x30] sm:$0xf]
      %v1016 = vld [vmem:[%s1002 + $0x34] sm:$0xf]
      %v1017 = vld [vmem:[%s1002 + $0x38] sm:$0xf]
      %v1018 = vld [vmem:[%s1002 + $0x3c] sm:$0xf]
      %v1019 = vld [vmem:[%s1002 + $0x40] sm:$0xf]
      %v1020 = vld [vmem:[%s1002 + $0x44] sm:$0xf]
      %v1021 = vld [vmem:[%s1002 + $0x48] sm:$0xf]
      %v1022 = vld [vmem:[%s1002 + $0x4c] sm:$0xf]
      %v1023 = vld [vmem:[%s1002 + $0x50] sm:$0xf]
      %v1024 = vld [vmem:[%s1002 + $0x54] sm:$0xf]
      %v1025 = vld [vmem:[%s1002 + $0x58] sm:$0xf]
      %v1026 = vld [vmem:[%s1002 + $0x5c] sm:$0xf]
      %v1028 = vunpack.c.l.b16 %v1001
      %v1029 = vunpack.c.h.b16 %v1001
      %v1030 = vpack.c.b16 %v716, %v1028
      %v1031 = vpack.c.b16 %v717, %v1029
      %v1032 = vrot.slane %v1030, 1
      %v1033 = vrot.slane %v1031, 1
      %v1059 = vunpack.c.l.b16 %v1003
      %v1060 = vunpack.c.l.b16 %v1004
      %v1061 = vunpack.c.l.b16 %v1005
      %v1062 = vunpack.c.l.b16 %v1006
      %v1063 = vunpack.c.l.b16 %v1007
      %v1064 = vunpack.c.l.b16 %v1008
      %v1065 = vunpack.c.l.b16 %v1009
      %v1066 = vunpack.c.l.b16 %v1010
      %v1067 = vunpack.c.l.b16 %v1011
      %v1068 = vunpack.c.l.b16 %v1012
      %v1069 = vunpack.c.l.b16 %v1013
      %v1070 = vunpack.c.l.b16 %v1014
      %v1071 = vunpack.c.l.b16 %v1015
      %v1072 = vunpack.c.l.b16 %v1016
      %v1073 = vunpack.c.l.b16 %v1017
      %v1074 = vunpack.c.l.b16 %v1018
      %v1075 = vunpack.c.l.b16 %v1019
      %v1076 = vunpack.c.l.b16 %v1020
      %v1077 = vunpack.c.l.b16 %v1021
      %v1078 = vunpack.c.l.b16 %v1022
      %v1079 = vunpack.c.l.b16 %v1023
      %v1080 = vunpack.c.l.b16 %v1024
      %v1081 = vunpack.c.l.b16 %v1025
      %v1082 = vunpack.c.l.b16 %v1026
      %v1083 = vpack.c.b16 %v1060, %v1059
      %v1084 = vpack.c.b16 %v1062, %v1061
      %v1085 = vpack.c.b16 %v1064, %v1063
      %v1086 = vpack.c.b16 %v1066, %v1065
      %v1087 = vpack.c.b16 %v1068, %v1067
      %v1088 = vpack.c.b16 %v1070, %v1069
      %v1089 = vpack.c.b16 %v1072, %v1071
      %v1090 = vpack.c.b16 %v1074, %v1073
      %v1091 = vpack.c.b16 %v1076, %v1075
      %v1092 = vpack.c.b16 %v1078, %v1077
      %v1093 = vpack.c.b16 %v1080, %v1079
      %v1094 = vpack.c.b16 %v1082, %v1081
      %v1108 = vsel %vm354, %v1033, 0
      %1110 = vmatprep.subr.bf16.mxu0 0
      %1111 = vmatpush1.bf16.msra.mxu0 %v1090
      %1112 = vmatprep.subr.bf16.mxu0 0
      %1113 = vmatpush1.bf16.msra.mxu0 %v1089
      %1114 = vmatprep.subr.bf16.mxu0 0
      %1115 = vmatpush1.bf16.msra.mxu0 %v1088
      %1116 = vmatprep.subr.bf16.mxu0 0
      %1117 = vmatpush1.bf16.msra.mxu0 %v1087
      %1118 = vmatprep.subr.bf16.mxu0 0
      %1119 = vmatpush1.bf16.msra.mxu0 %v1086
      %1120 = vmatprep.subr.bf16.mxu0 0
      %1121 = vmatpush1.bf16.msra.mxu0 %v1085
      %1122 = vmatprep.subr.bf16.mxu0 0
      %1123 = vmatpush1.bf16.msra.mxu0 %v1084
      %1124 = vmatprep.subr.bf16.mxu0 0
      %1125 = vmatpush1.bf16.msra.mxu0 %v1083
      %1126 = vmatprep.subr.bf16.mxu0 0
      %1127 = vmatpush2.bf16.msra.mxu0 0
      %1128 = vmatprep.subr.bf16.mxu0 0
      %1129 = vmatpush2.bf16.msra.mxu0 0
      %1130 = vmatprep.subr.bf16.mxu0 0
      %1131 = vmatpush2.bf16.msra.mxu0 0
      %1132 = vmatprep.subr.bf16.mxu0 0
      %1133 = vmatpush2.bf16.msra.mxu0 0
      %1134 = vmatprep.subr.bf16.mxu0 0
      %1135 = vmatpush2.bf16.msra.mxu0 %v1094
      %1136 = vmatprep.subr.bf16.mxu0 0
      %1137 = vmatpush2.bf16.msra.mxu0 %v1093
      %1138 = vmatprep.subr.bf16.mxu0 0
      %1139 = vmatpush2.bf16.msra.mxu0 %v1092
      %1140 = vmatprep.subr.bf16.mxu0 0
      %1141 = vmatpush2.bf16.msra.mxu0 %v1091
      %1142 = vmatprep.mubr.bf16.mxu0 %v1108
      %1143 = vmatmul.mubr.bf16.gmra.mxu0 %v1032
      %v1144 = vpop.f32.mrf.mxu0
      %v1145 = vadd.f32 0.0, %v1144
      %v1146 = vpop.f32.mrf.mxu0
      %v1147 = vpop.f32.mrf.mxu0
      %v1148 = vpop.f32.mrf.mxu0
      %1149 = vdwg.mxu0
      %v1150 = vadd.f32 %v1000, %v1145
      %v1151 = vld [vmem:[%s218 + $0x8] sm:$0x33]
      %s1152 = scalar_lea.vmem %s1, 576
      %v1153 = vld [vmem:[%s1152] sm:$0xf]
      %v1154 = vld [vmem:[%s1152 + $0x4] sm:$0xf]
      %v1155 = vld [vmem:[%s1152 + $0x8] sm:$0xf]
      %v1156 = vld [vmem:[%s1152 + $0xc] sm:$0xf]
      %v1157 = vld [vmem:[%s1152 + $0x10] sm:$0xf]
      %v1158 = vld [vmem:[%s1152 + $0x14] sm:$0xf]
      %v1159 = vld [vmem:[%s1152 + $0x18] sm:$0xf]
      %v1160 = vld [vmem:[%s1152 + $0x1c] sm:$0xf]
      %v1161 = vld [vmem:[%s1152 + $0x20] sm:$0xf]
      %v1162 = vld [vmem:[%s1152 + $0x24] sm:$0xf]
      %v1163 = vld [vmem:[%s1152 + $0x28] sm:$0xf]
      %v1164 = vld [vmem:[%s1152 + $0x2c] sm:$0xf]
      %v1165 = vld [vmem:[%s1152 + $0x30] sm:$0xf]
      %v1166 = vld [vmem:[%s1152 + $0x34] sm:$0xf]
      %v1167 = vld [vmem:[%s1152 + $0x38] sm:$0xf]
      %v1168 = vld [vmem:[%s1152 + $0x3c] sm:$0xf]
      %v1169 = vld [vmem:[%s1152 + $0x40] sm:$0xf]
      %v1170 = vld [vmem:[%s1152 + $0x44] sm:$0xf]
      %v1171 = vld [vmem:[%s1152 + $0x48] sm:$0xf]
      %v1172 = vld [vmem:[%s1152 + $0x4c] sm:$0xf]
      %v1173 = vld [vmem:[%s1152 + $0x50] sm:$0xf]
      %v1174 = vld [vmem:[%s1152 + $0x54] sm:$0xf]
      %v1175 = vld [vmem:[%s1152 + $0x58] sm:$0xf]
      %v1176 = vld [vmem:[%s1152 + $0x5c] sm:$0xf]
      %v1178 = vunpack.c.l.b16 %v1151
      %v1179 = vunpack.c.h.b16 %v1151
      %v1180 = vpack.c.b16 %v1178, %v878
      %v1181 = vpack.c.b16 %v1179, %v879
      %v1183 = vshrl.u32 %v1180, 16
      %v1185 = vrot.slane %v1183, 1
      %v1186 = vshll.u32 %v1180, 16
      %v1188 = vrot.slane %v1186, 2
      %v1189 = vor.u32 %v1185, %v1188
      %v1191 = vshrl.u32 %v1181, 16
      %v1193 = vrot.slane %v1191, 1
      %v1194 = vshll.u32 %v1181, 16
      %v1196 = vrot.slane %v1194, 2
      %v1197 = vor.u32 %v1193, %v1196
      %v1223 = vunpack.c.l.b16 %v1153
      %v1224 = vunpack.c.l.b16 %v1154
      %v1225 = vunpack.c.l.b16 %v1155
      %v1226 = vunpack.c.l.b16 %v1156
      %v1227 = vunpack.c.l.b16 %v1157
      %v1228 = vunpack.c.l.b16 %v1158
      %v1229 = vunpack.c.l.b16 %v1159
      %v1230 = vunpack.c.l.b16 %v1160
      %v1231 = vunpack.c.l.b16 %v1161
      %v1232 = vunpack.c.l.b16 %v1162
      %v1233 = vunpack.c.l.b16 %v1163
      %v1234 = vunpack.c.l.b16 %v1164
      %v1235 = vunpack.c.l.b16 %v1165
      %v1236 = vunpack.c.l.b16 %v1166
      %v1237 = vunpack.c.l.b16 %v1167
      %v1238 = vunpack.c.l.b16 %v1168
      %v1239 = vunpack.c.l.b16 %v1169
      %v1240 = vunpack.c.l.b16 %v1170
      %v1241 = vunpack.c.l.b16 %v1171
      %v1242 = vunpack.c.l.b16 %v1172
      %v1243 = vunpack.c.l.b16 %v1173
      %v1244 = vunpack.c.l.b16 %v1174
      %v1245 = vunpack.c.l.b16 %v1175
      %v1246 = vunpack.c.l.b16 %v1176
      %v1247 = vpack.c.b16 %v1224, %v1223
      %v1248 = vpack.c.b16 %v1226, %v1225
      %v1249 = vpack.c.b16 %v1228, %v1227
      %v1250 = vpack.c.b16 %v1230, %v1229
      %v1251 = vpack.c.b16 %v1232, %v1231
      %v1252 = vpack.c.b16 %v1234, %v1233
      %v1253 = vpack.c.b16 %v1236, %v1235
      %v1254 = vpack.c.b16 %v1238, %v1237
      %v1255 = vpack.c.b16 %v1240, %v1239
      %v1256 = vpack.c.b16 %v1242, %v1241
      %v1257 = vpack.c.b16 %v1244, %v1243
      %v1258 = vpack.c.b16 %v1246, %v1245
      %v1272 = vsel %vm354, %v1197, 0
      %1274 = vmatprep.subr.bf16.mxu0 0
      %1275 = vmatpush1.bf16.msra.mxu0 %v1254
      %1276 = vmatprep.subr.bf16.mxu0 0
      %1277 = vmatpush1.bf16.msra.mxu0 %v1253
      %1278 = vmatprep.subr.bf16.mxu0 0
      %1279 = vmatpush1.bf16.msra.mxu0 %v1252
      %1280 = vmatprep.subr.bf16.mxu0 0
      %1281 = vmatpush1.bf16.msra.mxu0 %v1251
      %1282 = vmatprep.subr.bf16.mxu0 0
      %1283 = vmatpush1.bf16.msra.mxu0 %v1250
      %1284 = vmatprep.subr.bf16.mxu0 0
      %1285 = vmatpush1.bf16.msra.mxu0 %v1249
      %1286 = vmatprep.subr.bf16.mxu0 0
      %1287 = vmatpush1.bf16.msra.mxu0 %v1248
      %1288 = vmatprep.subr.bf16.mxu0 0
      %1289 = vmatpush1.bf16.msra.mxu0 %v1247
      %1290 = vmatprep.subr.bf16.mxu0 0
      %1291 = vmatpush2.bf16.msra.mxu0 0
      %1292 = vmatprep.subr.bf16.mxu0 0
      %1293 = vmatpush2.bf16.msra.mxu0 0
      %1294 = vmatprep.subr.bf16.mxu0 0
      %1295 = vmatpush2.bf16.msra.mxu0 0
      %1296 = vmatprep.subr.bf16.mxu0 0
      %1297 = vmatpush2.bf16.msra.mxu0 0
      %1298 = vmatprep.subr.bf16.mxu0 0
      %1299 = vmatpush2.bf16.msra.mxu0 %v1258
      %1300 = vmatprep.subr.bf16.mxu0 0
      %1301 = vmatpush2.bf16.msra.mxu0 %v1257
      %1302 = vmatprep.subr.bf16.mxu0 0
      %1303 = vmatpush2.bf16.msra.mxu0 %v1256
      %1304 = vmatprep.subr.bf16.mxu0 0
      %1305 = vmatpush2.bf16.msra.mxu0 %v1255
      %1306 = vmatprep.mubr.bf16.mxu0 %v1272
      %1307 = vmatmul.mubr.bf16.gmra.mxu0 %v1189
      %v1308 = vpop.f32.mrf.mxu0
      %v1309 = vadd.f32 0.0, %v1308
      %v1310 = vpop.f32.mrf.mxu0
      %v1311 = vpop.f32.mrf.mxu0
      %v1312 = vpop.f32.mrf.mxu0
      %1313 = vdwg.mxu0
      %v1314 = vadd.f32 %v1150, %v1309
      %v1315 = vld [vmem:[%s249 + $0x8] sm:$0x33]
      %s1316 = scalar_lea.vmem %s1, 672
      %v1317 = vld [vmem:[%s1316] sm:$0xf]
      %v1318 = vld [vmem:[%s1316 + $0x4] sm:$0xf]
      %v1319 = vld [vmem:[%s1316 + $0x8] sm:$0xf]
      %v1320 = vld [vmem:[%s1316 + $0xc] sm:$0xf]
      %v1321 = vld [vmem:[%s1316 + $0x10] sm:$0xf]
      %v1322 = vld [vmem:[%s1316 + $0x14] sm:$0xf]
      %v1323 = vld [vmem:[%s1316 + $0x18] sm:$0xf]
      %v1324 = vld [vmem:[%s1316 + $0x1c] sm:$0xf]
      %v1325 = vld [vmem:[%s1316 + $0x20] sm:$0xf]
      %v1326 = vld [vmem:[%s1316 + $0x24] sm:$0xf]
      %v1327 = vld [vmem:[%s1316 + $0x28] sm:$0xf]
      %v1328 = vld [vmem:[%s1316 + $0x2c] sm:$0xf]
      %v1329 = vld [vmem:[%s1316 + $0x30] sm:$0xf]
      %v1330 = vld [vmem:[%s1316 + $0x34] sm:$0xf]
      %v1331 = vld [vmem:[%s1316 + $0x38] sm:$0xf]
      %v1332 = vld [vmem:[%s1316 + $0x3c] sm:$0xf]
      %v1333 = vld [vmem:[%s1316 + $0x40] sm:$0xf]
      %v1334 = vld [vmem:[%s1316 + $0x44] sm:$0xf]
      %v1335 = vld [vmem:[%s1316 + $0x48] sm:$0xf]
      %v1336 = vld [vmem:[%s1316 + $0x4c] sm:$0xf]
      %v1337 = vld [vmem:[%s1316 + $0x50] sm:$0xf]
      %v1338 = vld [vmem:[%s1316 + $0x54] sm:$0xf]
      %v1339 = vld [vmem:[%s1316 + $0x58] sm:$0xf]
      %v1340 = vld [vmem:[%s1316 + $0x5c] sm:$0xf]
      %v1342 = vunpack.c.l.b16 %v1315
      %v1343 = vunpack.c.h.b16 %v1315
      %v1344 = vpack.c.b16 %v1342, %v1028
      %v1345 = vpack.c.b16 %v1343, %v1029
      %v1347 = vshrl.u32 %v1344, 16
      %v1349 = vrot.slane %v1347, 1
      %v1350 = vshll.u32 %v1344, 16
      %v1352 = vrot.slane %v1350, 2
      %v1353 = vor.u32 %v1349, %v1352
      %v1355 = vshrl.u32 %v1345, 16
      %v1357 = vrot.slane %v1355, 1
      %v1358 = vshll.u32 %v1345, 16
      %v1360 = vrot.slane %v1358, 2
      %v1361 = vor.u32 %v1357, %v1360
      %v1387 = vunpack.c.l.b16 %v1317
      %v1388 = vunpack.c.l.b16 %v1318
      %v1389 = vunpack.c.l.b16 %v1319
      %v1390 = vunpack.c.l.b16 %v1320
      %v1391 = vunpack.c.l.b16 %v1321
      %v1392 = vunpack.c.l.b16 %v1322
      %v1393 = vunpack.c.l.b16 %v1323
      %v1394 = vunpack.c.l.b16 %v1324
      %v1395 = vunpack.c.l.b16 %v1325
      %v1396 = vunpack.c.l.b16 %v1326
      %v1397 = vunpack.c.l.b16 %v1327
      %v1398 = vunpack.c.l.b16 %v1328
      %v1399 = vunpack.c.l.b16 %v1329
      %v1400 = vunpack.c.l.b16 %v1330
      %v1401 = vunpack.c.l.b16 %v1331
      %v1402 = vunpack.c.l.b16 %v1332
      %v1403 = vunpack.c.l.b16 %v1333
      %v1404 = vunpack.c.l.b16 %v1334
      %v1405 = vunpack.c.l.b16 %v1335
      %v1406 = vunpack.c.l.b16 %v1336
      %v1407 = vunpack.c.l.b16 %v1337
      %v1408 = vunpack.c.l.b16 %v1338
      %v1409 = vunpack.c.l.b16 %v1339
      %v1410 = vunpack.c.l.b16 %v1340
      %v1411 = vpack.c.b16 %v1388, %v1387
      %v1412 = vpack.c.b16 %v1390, %v1389
      %v1413 = vpack.c.b16 %v1392, %v1391
      %v1414 = vpack.c.b16 %v1394, %v1393
      %v1415 = vpack.c.b16 %v1396, %v1395
      %v1416 = vpack.c.b16 %v1398, %v1397
      %v1417 = vpack.c.b16 %v1400, %v1399
      %v1418 = vpack.c.b16 %v1402, %v1401
      %v1419 = vpack.c.b16 %v1404, %v1403
      %v1420 = vpack.c.b16 %v1406, %v1405
      %v1421 = vpack.c.b16 %v1408, %v1407
      %v1422 = vpack.c.b16 %v1410, %v1409
      %v1436 = vsel %vm354, %v1361, 0
      %1438 = vmatprep.subr.bf16.mxu0 0
      %1439 = vmatpush1.bf16.msra.mxu0 %v1418
      %1440 = vmatprep.subr.bf16.mxu0 0
      %1441 = vmatpush1.bf16.msra.mxu0 %v1417
      %1442 = vmatprep.subr.bf16.mxu0 0
      %1443 = vmatpush1.bf16.msra.mxu0 %v1416
      %1444 = vmatprep.subr.bf16.mxu0 0
      %1445 = vmatpush1.bf16.msra.mxu0 %v1415
      %1446 = vmatprep.subr.bf16.mxu0 0
      %1447 = vmatpush1.bf16.msra.mxu0 %v1414
      %1448 = vmatprep.subr.bf16.mxu0 0
      %1449 = vmatpush1.bf16.msra.mxu0 %v1413
      %1450 = vmatprep.subr.bf16.mxu0 0
      %1451 = vmatpush1.bf16.msra.mxu0 %v1412
      %1452 = vmatprep.subr.bf16.mxu0 0
      %1453 = vmatpush1.bf16.msra.mxu0 %v1411
      %1454 = vmatprep.subr.bf16.mxu0 0
      %1455 = vmatpush2.bf16.msra.mxu0 0
      %1456 = vmatprep.subr.bf16.mxu0 0
      %1457 = vmatpush2.bf16.msra.mxu0 0
      %1458 = vmatprep.subr.bf16.mxu0 0
      %1459 = vmatpush2.bf16.msra.mxu0 0
      %1460 = vmatprep.subr.bf16.mxu0 0
      %1461 = vmatpush2.bf16.msra.mxu0 0
      %1462 = vmatprep.subr.bf16.mxu0 0
      %1463 = vmatpush2.bf16.msra.mxu0 %v1422
      %1464 = vmatprep.subr.bf16.mxu0 0
      %1465 = vmatpush2.bf16.msra.mxu0 %v1421
      %1466 = vmatprep.subr.bf16.mxu0 0
      %1467 = vmatpush2.bf16.msra.mxu0 %v1420
      %1468 = vmatprep.subr.bf16.mxu0 0
      %1469 = vmatpush2.bf16.msra.mxu0 %v1419
      %1470 = vmatprep.mubr.bf16.mxu0 %v1436
      %1471 = vmatmul.mubr.bf16.gmra.mxu0 %v1353
      %v1472 = vpop.f32.mrf.mxu0
      %v1473 = vadd.f32 0.0, %v1472
      %v1474 = vpop.f32.mrf.mxu0
      %v1475 = vpop.f32.mrf.mxu0
      %v1476 = vpop.f32.mrf.mxu0
      %1477 = vdwg.mxu0
      %v1478 = vadd.f32 %v1314, %v1473
      %v1479 = vld [vmem:[%s218] sm:$0xcc]
      %s1480 = scalar_lea.vmem %s1, 768
      %v1481 = vld [vmem:[%s1480] sm:$0xf]
      %v1482 = vld [vmem:[%s1480 + $0x4] sm:$0xf]
      %v1483 = vld [vmem:[%s1480 + $0x8] sm:$0xf]
      %v1484 = vld [vmem:[%s1480 + $0xc] sm:$0xf]
      %v1485 = vld [vmem:[%s1480 + $0x10] sm:$0xf]
      %v1486 = vld [vmem:[%s1480 + $0x14] sm:$0xf]
      %v1487 = vld [vmem:[%s1480 + $0x18] sm:$0xf]
      %v1488 = vld [vmem:[%s1480 + $0x1c] sm:$0xf]
      %v1489 = vld [vmem:[%s1480 + $0x20] sm:$0xf]
      %v1490 = vld [vmem:[%s1480 + $0x24] sm:$0xf]
      %v1491 = vld [vmem:[%s1480 + $0x28] sm:$0xf]
      %v1492 = vld [vmem:[%s1480 + $0x2c] sm:$0xf]
      %v1493 = vld [vmem:[%s1480 + $0x30] sm:$0xf]
      %v1494 = vld [vmem:[%s1480 + $0x34] sm:$0xf]
      %v1495 = vld [vmem:[%s1480 + $0x38] sm:$0xf]
      %v1496 = vld [vmem:[%s1480 + $0x3c] sm:$0xf]
      %v1497 = vld [vmem:[%s1480 + $0x40] sm:$0xf]
      %v1498 = vld [vmem:[%s1480 + $0x44] sm:$0xf]
      %v1499 = vld [vmem:[%s1480 + $0x48] sm:$0xf]
      %v1500 = vld [vmem:[%s1480 + $0x4c] sm:$0xf]
      %v1501 = vld [vmem:[%s1480 + $0x50] sm:$0xf]
      %v1502 = vld [vmem:[%s1480 + $0x54] sm:$0xf]
      %v1503 = vld [vmem:[%s1480 + $0x58] sm:$0xf]
      %v1504 = vld [vmem:[%s1480 + $0x5c] sm:$0xf]
      %v1506 = vunpack.c.l.b16 %v1479
      %v1507 = vunpack.c.h.b16 %v1479
      %v1508 = vpack.c.b16 %v1178, %v1506
      %v1509 = vpack.c.b16 %v1179, %v1507
      %v1510 = vrot.slane %v1508, 2
      %v1511 = vrot.slane %v1509, 2
      %v1537 = vunpack.c.l.b16 %v1481
      %v1538 = vunpack.c.l.b16 %v1482
      %v1539 = vunpack.c.l.b16 %v1483
      %v1540 = vunpack.c.l.b16 %v1484
      %v1541 = vunpack.c.l.b16 %v1485
      %v1542 = vunpack.c.l.b16 %v1486
      %v1543 = vunpack.c.l.b16 %v1487
      %v1544 = vunpack.c.l.b16 %v1488
      %v1545 = vunpack.c.l.b16 %v1489
      %v1546 = vunpack.c.l.b16 %v1490
      %v1547 = vunpack.c.l.b16 %v1491
      %v1548 = vunpack.c.l.b16 %v1492
      %v1549 = vunpack.c.l.b16 %v1493
      %v1550 = vunpack.c.l.b16 %v1494
      %v1551 = vunpack.c.l.b16 %v1495
      %v1552 = vunpack.c.l.b16 %v1496
      %v1553 = vunpack.c.l.b16 %v1497
      %v1554 = vunpack.c.l.b16 %v1498
      %v1555 = vunpack.c.l.b16 %v1499
      %v1556 = vunpack.c.l.b16 %v1500
      %v1557 = vunpack.c.l.b16 %v1501
      %v1558 = vunpack.c.l.b16 %v1502
      %v1559 = vunpack.c.l.b16 %v1503
      %v1560 = vunpack.c.l.b16 %v1504
      %v1561 = vpack.c.b16 %v1538, %v1537
      %v1562 = vpack.c.b16 %v1540, %v1539
      %v1563 = vpack.c.b16 %v1542, %v1541
      %v1564 = vpack.c.b16 %v1544, %v1543
      %v1565 = vpack.c.b16 %v1546, %v1545
      %v1566 = vpack.c.b16 %v1548, %v1547
      %v1567 = vpack.c.b16 %v1550, %v1549
      %v1568 = vpack.c.b16 %v1552, %v1551
      %v1569 = vpack.c.b16 %v1554, %v1553
      %v1570 = vpack.c.b16 %v1556, %v1555
      %v1571 = vpack.c.b16 %v1558, %v1557
      %v1572 = vpack.c.b16 %v1560, %v1559
      %v1586 = vsel %vm354, %v1511, 0
      %1588 = vmatprep.subr.bf16.mxu0 0
      %1589 = vmatpush1.bf16.msra.mxu0 %v1568
      %1590 = vmatprep.subr.bf16.mxu0 0
      %1591 = vmatpush1.bf16.msra.mxu0 %v1567
      %1592 = vmatprep.subr.bf16.mxu0 0
      %1593 = vmatpush1.bf16.msra.mxu0 %v1566
      %1594 = vmatprep.subr.bf16.mxu0 0
      %1595 = vmatpush1.bf16.msra.mxu0 %v1565
      %1596 = vmatprep.subr.bf16.mxu0 0
      %1597 = vmatpush1.bf16.msra.mxu0 %v1564
      %1598 = vmatprep.subr.bf16.mxu0 0
      %1599 = vmatpush1.bf16.msra.mxu0 %v1563
      %1600 = vmatprep.subr.bf16.mxu0 0
      %1601 = vmatpush1.bf16.msra.mxu0 %v1562
      %1602 = vmatprep.subr.bf16.mxu0 0
      %1603 = vmatpush1.bf16.msra.mxu0 %v1561
      %1604 = vmatprep.subr.bf16.mxu0 0
      %1605 = vmatpush2.bf16.msra.mxu0 0
      %1606 = vmatprep.subr.bf16.mxu0 0
      %1607 = vmatpush2.bf16.msra.mxu0 0
      %1608 = vmatprep.subr.bf16.mxu0 0
      %1609 = vmatpush2.bf16.msra.mxu0 0
      %1610 = vmatprep.subr.bf16.mxu0 0
      %1611 = vmatpush2.bf16.msra.mxu0 0
      %1612 = vmatprep.subr.bf16.mxu0 0
      %1613 = vmatpush2.bf16.msra.mxu0 %v1572
      %1614 = vmatprep.subr.bf16.mxu0 0
      %1615 = vmatpush2.bf16.msra.mxu0 %v1571
      %1616 = vmatprep.subr.bf16.mxu0 0
      %1617 = vmatpush2.bf16.msra.mxu0 %v1570
      %1618 = vmatprep.subr.bf16.mxu0 0
      %1619 = vmatpush2.bf16.msra.mxu0 %v1569
      %1620 = vmatprep.mubr.bf16.mxu0 %v1586
      %1621 = vmatmul.mubr.bf16.gmra.mxu0 %v1510
      %v1622 = vpop.f32.mrf.mxu0
      %v1623 = vadd.f32 0.0, %v1622
      %v1624 = vpop.f32.mrf.mxu0
      %v1625 = vpop.f32.mrf.mxu0
      %v1626 = vpop.f32.mrf.mxu0
      %1627 = vdwg.mxu0
      %v1628 = vadd.f32 %v1478, %v1623
      %1629 = vmatprep.subr.bf16.mxu0 0
      %1630 = vmatpush1.bf16.msra.mxu0 %v337
      %1631 = vmatprep.subr.bf16.mxu0 0
      %1632 = vmatpush1.bf16.msra.mxu0 %v336
      %1633 = vmatprep.subr.bf16.mxu0 0
      %1634 = vmatpush1.bf16.msra.mxu0 %v335
      %1635 = vmatprep.subr.bf16.mxu0 0
      %1636 = vmatpush1.bf16.msra.mxu0 %v334
      %1637 = vmatprep.subr.bf16.mxu0 0
      %1638 = vmatpush1.bf16.msra.mxu0 %v333
      %1639 = vmatprep.subr.bf16.mxu0 0
      %1640 = vmatpush1.bf16.msra.mxu0 %v332
      %1641 = vmatprep.subr.bf16.mxu0 0
      %1642 = vmatpush1.bf16.msra.mxu0 %v331
      %1643 = vmatprep.subr.bf16.mxu0 0
      %1644 = vmatpush1.bf16.msra.mxu0 %v330
      %1645 = vmatprep.subr.bf16.mxu0 0
      %1646 = vmatpush2.bf16.msra.mxu0 0
      %1647 = vmatprep.subr.bf16.mxu0 0
      %1648 = vmatpush2.bf16.msra.mxu0 0
      %1649 = vmatprep.subr.bf16.mxu0 0
      %1650 = vmatpush2.bf16.msra.mxu0 0
      %1651 = vmatprep.subr.bf16.mxu0 0
      %1652 = vmatpush2.bf16.msra.mxu0 0
      %1653 = vmatprep.subr.bf16.mxu0 0
      %1654 = vmatpush2.bf16.msra.mxu0 %v341
      %1655 = vmatprep.subr.bf16.mxu0 0
      %1656 = vmatpush2.bf16.msra.mxu0 %v340
      %1657 = vmatprep.subr.bf16.mxu0 0
      %1658 = vmatpush2.bf16.msra.mxu0 %v339
      %1659 = vmatprep.subr.bf16.mxu0 0
      %1660 = vmatpush2.bf16.msra.mxu0 %v338
      %1661 = vmatprep.mubr.bf16.mxu0 %v642
      %1662 = vmatmul.mubr.bf16.gmra.mxu0 %v560
      %v1663 = vpop.f32.mrf.mxu0
      %v1664 = vadd.f32 0.0, %v1663
      %v1665 = vpop.f32.mrf.mxu0
      %v1666 = vpop.f32.mrf.mxu0
      %v1667 = vpop.f32.mrf.mxu0
      %1668 = vdwg.mxu0
      %1669 = vmatprep.subr.bf16.mxu0 0
      %1670 = vmatpush1.bf16.msra.mxu0 %v459
      %1671 = vmatprep.subr.bf16.mxu0 0
      %1672 = vmatpush1.bf16.msra.mxu0 %v458
      %1673 = vmatprep.subr.bf16.mxu0 0
      %1674 = vmatpush1.bf16.msra.mxu0 %v457
      %1675 = vmatprep.subr.bf16.mxu0 0
      %1676 = vmatpush1.bf16.msra.mxu0 %v456
      %1677 = vmatprep.subr.bf16.mxu0 0
      %1678 = vmatpush1.bf16.msra.mxu0 %v455
      %1679 = vmatprep.subr.bf16.mxu0 0
      %1680 = vmatpush1.bf16.msra.mxu0 %v454
      %1681 = vmatprep.subr.bf16.mxu0 0
      %1682 = vmatpush1.bf16.msra.mxu0 %v453
      %1683 = vmatprep.subr.bf16.mxu0 0
      %1684 = vmatpush1.bf16.msra.mxu0 %v452
      %1685 = vmatprep.subr.bf16.mxu0 0
      %1686 = vmatpush2.bf16.msra.mxu0 0
      %1687 = vmatprep.subr.bf16.mxu0 0
      %1688 = vmatpush2.bf16.msra.mxu0 0
      %1689 = vmatprep.subr.bf16.mxu0 0
      %1690 = vmatpush2.bf16.msra.mxu0 0
      %1691 = vmatprep.subr.bf16.mxu0 0
      %1692 = vmatpush2.bf16.msra.mxu0 0
      %1693 = vmatprep.subr.bf16.mxu0 0
      %1694 = vmatpush2.bf16.msra.mxu0 %v463
      %1695 = vmatprep.subr.bf16.mxu0 0
      %1696 = vmatpush2.bf16.msra.mxu0 %v462
      %1697 = vmatprep.subr.bf16.mxu0 0
      %1698 = vmatpush2.bf16.msra.mxu0 %v461
      %1699 = vmatprep.subr.bf16.mxu0 0
      %1700 = vmatpush2.bf16.msra.mxu0 %v460
      %1701 = vmatprep.mubr.bf16.mxu0 %v356
      %1702 = vmatmul.mubr.bf16.gmra.mxu0 %v279
      %v1703 = vpop.f32.mrf.mxu0
      %v1704 = vadd.f32 %v1664, %v1703
      %v1705 = vpop.f32.mrf.mxu0
      %v1706 = vpop.f32.mrf.mxu0
      %v1707 = vpop.f32.mrf.mxu0
      %1708 = vdwg.mxu0
      %1709 = vmatprep.subr.bf16.mxu0 0
      %1710 = vmatpush1.bf16.msra.mxu0 %v624
      %1711 = vmatprep.subr.bf16.mxu0 0
      %1712 = vmatpush1.bf16.msra.mxu0 %v623
      %1713 = vmatprep.subr.bf16.mxu0 0
      %1714 = vmatpush1.bf16.msra.mxu0 %v622
      %1715 = vmatprep.subr.bf16.mxu0 0
      %1716 = vmatpush1.bf16.msra.mxu0 %v621
      %1717 = vmatprep.subr.bf16.mxu0 0
      %1718 = vmatpush1.bf16.msra.mxu0 %v620
      %1719 = vmatprep.subr.bf16.mxu0 0
      %1720 = vmatpush1.bf16.msra.mxu0 %v619
      %1721 = vmatprep.subr.bf16.mxu0 0
      %1722 = vmatpush1.bf16.msra.mxu0 %v618
      %1723 = vmatprep.subr.bf16.mxu0 0
      %1724 = vmatpush1.bf16.msra.mxu0 %v617
      %1725 = vmatprep.subr.bf16.mxu0 0
      %1726 = vmatpush2.bf16.msra.mxu0 0
      %1727 = vmatprep.subr.bf16.mxu0 0
      %1728 = vmatpush2.bf16.msra.mxu0 0
      %1729 = vmatprep.subr.bf16.mxu0 0
      %1730 = vmatpush2.bf16.msra.mxu0 0
      %1731 = vmatprep.subr.bf16.mxu0 0
      %1732 = vmatpush2.bf16.msra.mxu0 0
      %1733 = vmatprep.subr.bf16.mxu0 0
      %1734 = vmatpush2.bf16.msra.mxu0 %v628
      %1735 = vmatprep.subr.bf16.mxu0 0
      %1736 = vmatpush2.bf16.msra.mxu0 %v627
      %1737 = vmatprep.subr.bf16.mxu0 0
      %1738 = vmatpush2.bf16.msra.mxu0 %v626
      %1739 = vmatprep.subr.bf16.mxu0 0
      %1740 = vmatpush2.bf16.msra.mxu0 %v625
      %1741 = vmatprep.mubr.bf16.mxu0 %v808
      %1742 = vmatmul.mubr.bf16.gmra.mxu0 %v726
      %v1743 = vpop.f32.mrf.mxu0
      %v1744 = vadd.f32 0.0, %v1743
      %v1745 = vpop.f32.mrf.mxu0
      %v1746 = vpop.f32.mrf.mxu0
      %v1747 = vpop.f32.mrf.mxu0
      %1748 = vdwg.mxu0
      %v1749 = vadd.f32 %v1704, %v1744
      %1750 = vmatprep.subr.bf16.mxu0 0
      %1751 = vmatpush1.bf16.msra.mxu0 %v790
      %1752 = vmatprep.subr.bf16.mxu0 0
      %1753 = vmatpush1.bf16.msra.mxu0 %v789
      %1754 = vmatprep.subr.bf16.mxu0 0
      %1755 = vmatpush1.bf16.msra.mxu0 %v788
      %1756 = vmatprep.subr.bf16.mxu0 0
      %1757 = vmatpush1.bf16.msra.mxu0 %v787
      %1758 = vmatprep.subr.bf16.mxu0 0
      %1759 = vmatpush1.bf16.msra.mxu0 %v786
      %1760 = vmatprep.subr.bf16.mxu0 0
      %1761 = vmatpush1.bf16.msra.mxu0 %v785
      %1762 = vmatprep.subr.bf16.mxu0 0
      %1763 = vmatpush1.bf16.msra.mxu0 %v784
      %1764 = vmatprep.subr.bf16.mxu0 0
      %1765 = vmatpush1.bf16.msra.mxu0 %v783
      %1766 = vmatprep.subr.bf16.mxu0 0
      %1767 = vmatpush2.bf16.msra.mxu0 0
      %1768 = vmatprep.subr.bf16.mxu0 0
      %1769 = vmatpush2.bf16.msra.mxu0 0
      %1770 = vmatprep.subr.bf16.mxu0 0
      %1771 = vmatpush2.bf16.msra.mxu0 0
      %1772 = vmatprep.subr.bf16.mxu0 0
      %1773 = vmatpush2.bf16.msra.mxu0 0
      %1774 = vmatprep.subr.bf16.mxu0 0
      %1775 = vmatpush2.bf16.msra.mxu0 %v794
      %1776 = vmatprep.subr.bf16.mxu0 0
      %1777 = vmatpush2.bf16.msra.mxu0 %v793
      %1778 = vmatprep.subr.bf16.mxu0 0
      %1779 = vmatpush2.bf16.msra.mxu0 %v792
      %1780 = vmatprep.subr.bf16.mxu0 0
      %1781 = vmatpush2.bf16.msra.mxu0 %v791
      %1782 = vmatprep.mubr.bf16.mxu0 %v958
      %1783 = vmatmul.mubr.bf16.gmra.mxu0 %v882
      %v1784 = vpop.f32.mrf.mxu0
      %v1785 = vadd.f32 0.0, %v1784
      %v1786 = vpop.f32.mrf.mxu0
      %v1787 = vpop.f32.mrf.mxu0
      %v1788 = vpop.f32.mrf.mxu0
      %1789 = vdwg.mxu0
      %v1790 = vadd.f32 %v1749, %v1785
      %1791 = vmatprep.subr.bf16.mxu0 0
      %1792 = vmatpush1.bf16.msra.mxu0 %v940
      %1793 = vmatprep.subr.bf16.mxu0 0
      %1794 = vmatpush1.bf16.msra.mxu0 %v939
      %1795 = vmatprep.subr.bf16.mxu0 0
      %1796 = vmatpush1.bf16.msra.mxu0 %v938
      %1797 = vmatprep.subr.bf16.mxu0 0
      %1798 = vmatpush1.bf16.msra.mxu0 %v937
      %1799 = vmatprep.subr.bf16.mxu0 0
      %1800 = vmatpush1.bf16.msra.mxu0 %v936
      %1801 = vmatprep.subr.bf16.mxu0 0
      %1802 = vmatpush1.bf16.msra.mxu0 %v935
      %1803 = vmatprep.subr.bf16.mxu0 0
      %1804 = vmatpush1.bf16.msra.mxu0 %v934
      %1805 = vmatprep.subr.bf16.mxu0 0
      %1806 = vmatpush1.bf16.msra.mxu0 %v933
      %1807 = vmatprep.subr.bf16.mxu0 0
      %1808 = vmatpush2.bf16.msra.mxu0 0
      %1809 = vmatprep.subr.bf16.mxu0 0
      %1810 = vmatpush2.bf16.msra.mxu0 0
      %1811 = vmatprep.subr.bf16.mxu0 0
      %1812 = vmatpush2.bf16.msra.mxu0 0
      %1813 = vmatprep.subr.bf16.mxu0 0
      %1814 = vmatpush2.bf16.msra.mxu0 0
      %1815 = vmatprep.subr.bf16.mxu0 0
      %1816 = vmatpush2.bf16.msra.mxu0 %v944
      %1817 = vmatprep.subr.bf16.mxu0 0
      %1818 = vmatpush2.bf16.msra.mxu0 %v943
      %1819 = vmatprep.subr.bf16.mxu0 0
      %1820 = vmatpush2.bf16.msra.mxu0 %v942
      %1821 = vmatprep.subr.bf16.mxu0 0
      %1822 = vmatpush2.bf16.msra.mxu0 %v941
      %1823 = vmatprep.mubr.bf16.mxu0 %v1108
      %1824 = vmatmul.mubr.bf16.gmra.mxu0 %v1032
      %v1825 = vpop.f32.mrf.mxu0
      %v1826 = vadd.f32 0.0, %v1825
      %v1827 = vpop.f32.mrf.mxu0
      %v1828 = vpop.f32.mrf.mxu0
      %v1829 = vpop.f32.mrf.mxu0
      %1830 = vdwg.mxu0
      %v1831 = vadd.f32 %v1790, %v1826
      %1832 = vmatprep.subr.bf16.mxu0 0
      %1833 = vmatpush1.bf16.msra.mxu0 %v1090
      %1834 = vmatprep.subr.bf16.mxu0 0
      %1835 = vmatpush1.bf16.msra.mxu0 %v1089
      %1836 = vmatprep.subr.bf16.mxu0 0
      %1837 = vmatpush1.bf16.msra.mxu0 %v1088
      %1838 = vmatprep.subr.bf16.mxu0 0
      %1839 = vmatpush1.bf16.msra.mxu0 %v1087
      %1840 = vmatprep.subr.bf16.mxu0 0
      %1841 = vmatpush1.bf16.msra.mxu0 %v1086
      %1842 = vmatprep.subr.bf16.mxu0 0
      %1843 = vmatpush1.bf16.msra.mxu0 %v1085
      %1844 = vmatprep.subr.bf16.mxu0 0
      %1845 = vmatpush1.bf16.msra.mxu0 %v1084
      %1846 = vmatprep.subr.bf16.mxu0 0
      %1847 = vmatpush1.bf16.msra.mxu0 %v1083
      %1848 = vmatprep.subr.bf16.mxu0 0
      %1849 = vmatpush2.bf16.msra.mxu0 0
      %1850 = vmatprep.subr.bf16.mxu0 0
      %1851 = vmatpush2.bf16.msra.mxu0 0
      %1852 = vmatprep.subr.bf16.mxu0 0
      %1853 = vmatpush2.bf16.msra.mxu0 0
      %1854 = vmatprep.subr.bf16.mxu0 0
      %1855 = vmatpush2.bf16.msra.mxu0 0
      %1856 = vmatprep.subr.bf16.mxu0 0
      %1857 = vmatpush2.bf16.msra.mxu0 %v1094
      %1858 = vmatprep.subr.bf16.mxu0 0
      %1859 = vmatpush2.bf16.msra.mxu0 %v1093
      %1860 = vmatprep.subr.bf16.mxu0 0
      %1861 = vmatpush2.bf16.msra.mxu0 %v1092
      %1862 = vmatprep.subr.bf16.mxu0 0
      %1863 = vmatpush2.bf16.msra.mxu0 %v1091
      %1864 = vmatprep.mubr.bf16.mxu0 %v1272
      %1865 = vmatmul.mubr.bf16.gmra.mxu0 %v1189
      %v1866 = vpop.f32.mrf.mxu0
      %v1867 = vadd.f32 0.0, %v1866
      %v1868 = vpop.f32.mrf.mxu0
      %v1869 = vpop.f32.mrf.mxu0
      %v1870 = vpop.f32.mrf.mxu0
      %1871 = vdwg.mxu0
      %v1872 = vadd.f32 %v1831, %v1867
      %1873 = vmatprep.subr.bf16.mxu0 0
      %1874 = vmatpush1.bf16.msra.mxu0 %v1254
      %1875 = vmatprep.subr.bf16.mxu0 0
      %1876 = vmatpush1.bf16.msra.mxu0 %v1253
      %1877 = vmatprep.subr.bf16.mxu0 0
      %1878 = vmatpush1.bf16.msra.mxu0 %v1252
      %1879 = vmatprep.subr.bf16.mxu0 0
      %1880 = vmatpush1.bf16.msra.mxu0 %v1251
      %1881 = vmatprep.subr.bf16.mxu0 0
      %1882 = vmatpush1.bf16.msra.mxu0 %v1250
      %1883 = vmatprep.subr.bf16.mxu0 0
      %1884 = vmatpush1.bf16.msra.mxu0 %v1249
      %1885 = vmatprep.subr.bf16.mxu0 0
      %1886 = vmatpush1.bf16.msra.mxu0 %v1248
      %1887 = vmatprep.subr.bf16.mxu0 0
      %1888 = vmatpush1.bf16.msra.mxu0 %v1247
      %1889 = vmatprep.subr.bf16.mxu0 0
      %1890 = vmatpush2.bf16.msra.mxu0 0
      %1891 = vmatprep.subr.bf16.mxu0 0
      %1892 = vmatpush2.bf16.msra.mxu0 0
      %1893 = vmatprep.subr.bf16.mxu0 0
      %1894 = vmatpush2.bf16.msra.mxu0 0
      %1895 = vmatprep.subr.bf16.mxu0 0
      %1896 = vmatpush2.bf16.msra.mxu0 0
      %1897 = vmatprep.subr.bf16.mxu0 0
      %1898 = vmatpush2.bf16.msra.mxu0 %v1258
      %1899 = vmatprep.subr.bf16.mxu0 0
      %1900 = vmatpush2.bf16.msra.mxu0 %v1257
      %1901 = vmatprep.subr.bf16.mxu0 0
      %1902 = vmatpush2.bf16.msra.mxu0 %v1256
      %1903 = vmatprep.subr.bf16.mxu0 0
      %1904 = vmatpush2.bf16.msra.mxu0 %v1255
      %1905 = vmatprep.mubr.bf16.mxu0 %v1436
      %1906 = vmatmul.mubr.bf16.gmra.mxu0 %v1353
      %v1907 = vpop.f32.mrf.mxu0
      %v1908 = vadd.f32 0.0, %v1907
      %v1909 = vpop.f32.mrf.mxu0
      %v1910 = vpop.f32.mrf.mxu0
      %v1911 = vpop.f32.mrf.mxu0
      %1912 = vdwg.mxu0
      %v1913 = vadd.f32 %v1872, %v1908
      %1914 = vmatprep.subr.bf16.mxu0 0
      %1915 = vmatpush1.bf16.msra.mxu0 %v1418
      %1916 = vmatprep.subr.bf16.mxu0 0
      %1917 = vmatpush1.bf16.msra.mxu0 %v1417
      %1918 = vmatprep.subr.bf16.mxu0 0
      %1919 = vmatpush1.bf16.msra.mxu0 %v1416
      %1920 = vmatprep.subr.bf16.mxu0 0
      %1921 = vmatpush1.bf16.msra.mxu0 %v1415
      %1922 = vmatprep.subr.bf16.mxu0 0
      %1923 = vmatpush1.bf16.msra.mxu0 %v1414
      %1924 = vmatprep.subr.bf16.mxu0 0
      %1925 = vmatpush1.bf16.msra.mxu0 %v1413
      %1926 = vmatprep.subr.bf16.mxu0 0
      %1927 = vmatpush1.bf16.msra.mxu0 %v1412
      %1928 = vmatprep.subr.bf16.mxu0 0
      %1929 = vmatpush1.bf16.msra.mxu0 %v1411
      %1930 = vmatprep.subr.bf16.mxu0 0
      %1931 = vmatpush2.bf16.msra.mxu0 0
      %1932 = vmatprep.subr.bf16.mxu0 0
      %1933 = vmatpush2.bf16.msra.mxu0 0
      %1934 = vmatprep.subr.bf16.mxu0 0
      %1935 = vmatpush2.bf16.msra.mxu0 0
      %1936 = vmatprep.subr.bf16.mxu0 0
      %1937 = vmatpush2.bf16.msra.mxu0 0
      %1938 = vmatprep.subr.bf16.mxu0 0
      %1939 = vmatpush2.bf16.msra.mxu0 %v1422
      %1940 = vmatprep.subr.bf16.mxu0 0
      %1941 = vmatpush2.bf16.msra.mxu0 %v1421
      %1942 = vmatprep.subr.bf16.mxu0 0
      %1943 = vmatpush2.bf16.msra.mxu0 %v1420
      %1944 = vmatprep.subr.bf16.mxu0 0
      %1945 = vmatpush2.bf16.msra.mxu0 %v1419
      %1946 = vmatprep.mubr.bf16.mxu0 %v1586
      %1947 = vmatmul.mubr.bf16.gmra.mxu0 %v1510
      %v1948 = vpop.f32.mrf.mxu0
      %v1949 = vadd.f32 0.0, %v1948
      %v1950 = vpop.f32.mrf.mxu0
      %v1951 = vpop.f32.mrf.mxu0
      %v1952 = vpop.f32.mrf.mxu0
      %1953 = vdwg.mxu0
      %v1954 = vadd.f32 %v1913, %v1949
      %v1955 = vld [vmem:[%s249] sm:$0xcc]
      %v1957 = vunpack.c.l.b16 %v1955
      %v1958 = vunpack.c.h.b16 %v1955
      %v1959 = vpack.c.b16 %v1342, %v1957
      %v1960 = vpack.c.b16 %v1343, %v1958
      %v1961 = vrot.slane %v1959, 2
      %v1962 = vrot.slane %v1960, 2
      %v1965 = vsel %vm354, %v1962, 0
      %1967 = vmatprep.subr.bf16.mxu0 0
      %1968 = vmatpush1.bf16.msra.mxu0 %v1568
      %1969 = vmatprep.subr.bf16.mxu0 0
      %1970 = vmatpush1.bf16.msra.mxu0 %v1567
      %1971 = vmatprep.subr.bf16.mxu0 0
      %1972 = vmatpush1.bf16.msra.mxu0 %v1566
      %1973 = vmatprep.subr.bf16.mxu0 0
      %1974 = vmatpush1.bf16.msra.mxu0 %v1565
      %1975 = vmatprep.subr.bf16.mxu0 0
      %1976 = vmatpush1.bf16.msra.mxu0 %v1564
      %1977 = vmatprep.subr.bf16.mxu0 0
      %1978 = vmatpush1.bf16.msra.mxu0 %v1563
      %1979 = vmatprep.subr.bf16.mxu0 0
      %1980 = vmatpush1.bf16.msra.mxu0 %v1562
      %1981 = vmatprep.subr.bf16.mxu0 0
      %1982 = vmatpush1.bf16.msra.mxu0 %v1561
      %1983 = vmatprep.subr.bf16.mxu0 0
      %1984 = vmatpush2.bf16.msra.mxu0 0
      %1985 = vmatprep.subr.bf16.mxu0 0
      %1986 = vmatpush2.bf16.msra.mxu0 0
      %1987 = vmatprep.subr.bf16.mxu0 0
      %1988 = vmatpush2.bf16.msra.mxu0 0
      %1989 = vmatprep.subr.bf16.mxu0 0
      %1990 = vmatpush2.bf16.msra.mxu0 0
      %1991 = vmatprep.subr.bf16.mxu0 0
      %1992 = vmatpush2.bf16.msra.mxu0 %v1572
      %1993 = vmatprep.subr.bf16.mxu0 0
      %1994 = vmatpush2.bf16.msra.mxu0 %v1571
      %1995 = vmatprep.subr.bf16.mxu0 0
      %1996 = vmatpush2.bf16.msra.mxu0 %v1570
      %1997 = vmatprep.subr.bf16.mxu0 0
      %1998 = vmatpush2.bf16.msra.mxu0 %v1569
      %1999 = vmatprep.mubr.bf16.mxu0 %v1965
      %2000 = vmatmul.mubr.bf16.gmra.mxu0 %v1961
      %v2001 = vpop.f32.mrf.mxu0
      %v2002 = vadd.f32 0.0, %v2001
      %v2003 = vpop.f32.mrf.mxu0
      %v2004 = vpop.f32.mrf.mxu0
      %v2005 = vpop.f32.mrf.mxu0
      %2006 = vdwg.mxu0
      %v2007 = vadd.f32 %v1954, %v2002
      %v2008 = vmax.f32 %v1628, %v2007
      %2010 = vrot.lane.b32.xlu0 %v2008, 64
      %v2011 = vpop.permute.xlu0 %2010
      %v2013 = vmax.f32 %v2008, %v2011
      %v2014 = vld [vmem:[%s2] sm:$0x1]
      %v2016 = vlaneseq
      %v2017 = vshrl.u32 %v2016, 7
      %v2018 = vsub.s32 0, %v2017
      %v2019 = vrot.slane %v2014, %v2018
      %v2021 = vadd.f32 %v2013, %v2019
      %v2022 = vld [vmem:[%s3] sm:$0x1]
      %v2024 = vlaneseq
      %v2025 = vshrl.u32 %v2024, 7
      %v2026 = vsub.s32 0, %v2025
      %v2027 = vrot.slane %v2022, %v2026
      %v2029 = vmul.f32 %v2021, %v2027
      %v2030 = vld [vmem:[%s4] sm:$0x1]
      %v2032 = vlaneseq
      %v2033 = vshrl.u32 %v2032, 7
      %v2034 = vsub.s32 0, %v2033
      %v2035 = vrot.slane %v2030, %v2034
      %v2037 = vadd.f32 %v2029, %v2035
      %v2038 = vmax.f32 %v2037, 0.0
      %v2039 = vpack.c.bf16 %v2038, %v2038
      %vm2040 = vcmask 519168
      %2041 = vst.msk [vmem:[%s222] sm:$0xf] %vm2040, %v2039
      %p2042 = scmp.lt.s32.totalorder %s16, 1
      %s2043 = scalar_select %p2042, %s16, 1
      %s2044 = smul.addr %s2043, 4
      %s2045 = scalar_lea.vmem %s5, %s2044
      // Predicated region
      $region41: #{cpm_stage_x_forward.7} parent=39 // pred_check
        %p2046 = pneg %p144
      $region42: #{cpm_stage_x_forward.7} parent=39 // pred_check_branch
        %2048 = sbr.rel (%p2046) target = $region44
      $region43: #{cpm_stage_x_forward.7} parent=39 // pred_region
        _
      $region44: #{cpm_stage_x_forward.7} parent=39 // pred_fallthru
        _
    $region40: #{cpm_stage_x_forward.7} parent=5 // pred_fallthru
      _
    %p2049 = scmp.le.s32.totalorder 2, %s11
    // Predicated region
    $region45: #{cpm_stage_x_forward.7} parent=5 // pred_check
      %p2050 = pneg %p2049
    $region46: #{cpm_stage_x_forward.7} parent=5 // pred_check_branch
      %2052 = sbr.rel (%p2050) target = $region48
    $region47: #{cpm_stage_x_forward.7} parent=5 // pred_region
      %s2053 = ssub.s32 %s11, 2
      // Predicated region
      $region49: #{cpm_stage_x_forward.7} parent=47 // pred_check
        %p2054 = pneg %p150
      $region50: #{cpm_stage_x_forward.7} parent=47 // pred_check_branch
        %2056 = sbr.rel (%p2054) target = $region52
      $region51: #{cpm_stage_x_forward.7} parent=47 // pred_region
        %p2057 = scmp.lt.s32.totalorder %s17, 1
        %s2058 = scalar_select %p2057, %s17, 1
        %s2059 = smul.addr %s2058, 4
        %s2060 = scalar_lea.vmem %s5, %s2059
      $region52: #{cpm_stage_x_forward.7} parent=47 // pred_fallthru
        _
    $region48: #{cpm_stage_x_forward.7} parent=5 // pred_fallthru
      _
  $region6: #{cpm_stage_x_forward.7} parent=0 // loop_footer
    %s15 = sadd.s32 1, %s11
  $region7: #{cpm_stage_x_forward.7} parent=0 // loop_footer_branch
    %10 = sbr.rel target = $region3
  $region8: #{cpm_stage_x_forward.7} parent=0 // loop_exit
    _

// kernel: cpm_stage_x_forward.8
$region0: #{cpm_stage_x_forward.8}
  #allocation0 [shape = 'u32[]', space=smem, size = 0x4, offset = 0x4, fixed_abs, tag = 'smem constant byte address 0x4 - core index']
  #allocation1 [shape = 'u32[144,128]{1,0:T(1,128)}', space=vmem, size = 0x12000, scoped, tag = 'internal scratch']
  %s0 = inlined_call_operand.vmem [shape: bf16[2,16,128], index: 0, kind: input, shape index: {}]
  %s1 = inlined_call_operand.vmem [shape: bf16[9,128,128], index: 1, kind: input, shape index: {}]
  %s2 = inlined_call_operand.vmem [shape: f32[1,128], index: 2, kind: input, shape index: {}]
  %s3 = inlined_call_operand.vmem [shape: bf16[2,8,128], index: 3, kind: output, shape index: {}]
  %s4 = sld [smem:[#allocation0]]
  $region45: #{cpm_stage_x_forward.8} parent=0
    _
  %s6 = ssub.s32 1, %s4
  %s7 = scalar_select 0, %s6, %s4
  loop: start=0, step=1, limit=4
  $region2: #{cpm_stage_x_forward.8} parent=0 // loop_pre_header
    _
  $region3: #{cpm_stage_x_forward.8} parent=0 // loop_header
    %s9 = sphi 0, %s13
    %p10 = scmp.ge.s32.totalorder %s9, 4
    %s19 = sphi 0, %s21
    %s22 = sphi 0, %s19
    %s23 = sphi 0, %s22
    %s39 = sphi 0, %s23
    %s43 = sphi 0, %s43
    %s45 = sphi 0, %s43
    %s46 = sphi 0, %s45
    %s60 = sphi 0, %s46
    %s64 = sphi 0, %s64
    %s66 = sphi 0, %s64
    %s67 = sphi 0, %s66
    %s81 = sphi 0, %s67
    %s87 = sphi 0, %s89
    %s90 = sphi 0, %s87
    %s91 = sphi 0, %s90
    %s107 = sphi 0, %s91
  $region4: #{cpm_stage_x_forward.8} parent=0 // loop_header_branch
    %12 = sbr.rel (%p10) target = $region8
  $region5: #{cpm_stage_x_forward.8} parent=0 // loop_body
    %s14 = ssub.s32 %s9, 1
    %s15 = ssub.s32 %s9, 2
    %s16 = sadd.s32 %s9, 1
    %s17 = ssub.s32 %s9, %s16
    %p18 = scmp.eq.s32.totalorder %s17, 0
    %s20 = sadd.s32 %s19, 1
    %s21 = scalar_select %p18, %s19, %s20
    %p24 = pneg %p18
    %p25 = scmp.eq.s32.totalorder %s9, 1
    %p26 = por %p24, %p25
    %p27 = scmp.ne.s32.totalorder %s19, %s22
    %p28 = scmp.eq.s32.totalorder %s9, 0
    %p29 = por %p27, %p28
    %p30 = scmp.ne.s32.totalorder %s19, %s22
    %p31 = scmp.eq.s32.totalorder %s14, 1
    %p32 = por %p30, %p31
    %p33 = scmp.ne.s32.totalorder %s22, %s23
    %p34 = scmp.eq.s32.totalorder %s14, 0
    %p35 = por %p33, %p34
    %p36 = scmp.ne.s32.totalorder %s22, %s23
    %p37 = scmp.eq.s32.totalorder %s15, 1
    %p38 = por %p36, %p37
    %p40 = scmp.ne.s32.totalorder %s23, %s39
    %p41 = scmp.eq.s32.totalorder %s15, 0
    %p42 = por %p40, %p41
    %s44 = sadd.s32 %s43, 1
    %p47 = scmp.eq.s32.totalorder %s9, 1
    %p48 = scmp.ne.s32.totalorder %s43, %s45
    %p49 = scmp.eq.s32.totalorder %s9, 0
    %p50 = por %p48, %p49
    %p51 = scmp.ne.s32.totalorder %s43, %s45
    %p52 = scmp.eq.s32.totalorder %s14, 1
    %p53 = por %p51, %p52
    %p54 = scmp.ne.s32.totalorder %s45, %s46
    %p55 = scmp.eq.s32.totalorder %s14, 0
    %p56 = por %p54, %p55
    %p57 = scmp.ne.s32.totalorder %s45, %s46
    %p58 = scmp.eq.s32.totalorder %s15, 1
    %p59 = por %p57, %p58
    %p61 = scmp.ne.s32.totalorder %s46, %s60
    %p62 = scmp.eq.s32.totalorder %s15, 0
    %p63 = por %p61, %p62
    %s65 = sadd.s32 %s64, 1
    %p68 = scmp.eq.s32.totalorder %s9, 1
    %p69 = scmp.ne.s32.totalorder %s64, %s66
    %p70 = scmp.eq.s32.totalorder %s9, 0
    %p71 = por %p69, %p70
    %p72 = scmp.ne.s32.totalorder %s64, %s66
    %p73 = scmp.eq.s32.totalorder %s14, 1
    %p74 = por %p72, %p73
    %p75 = scmp.ne.s32.totalorder %s66, %s67
    %p76 = scmp.eq.s32.totalorder %s14, 0
    %p77 = por %p75, %p76
    %p78 = scmp.ne.s32.totalorder %s66, %s67
    %p79 = scmp.eq.s32.totalorder %s15, 1
    %p80 = por %p78, %p79
    %p82 = scmp.ne.s32.totalorder %s67, %s81
    %p83 = scmp.eq.s32.totalorder %s15, 0
    %p84 = por %p82, %p83
    %s85 = ssub.s32 %s9, %s16
    %p86 = scmp.eq.s32.totalorder %s85, 0
    %s88 = sadd.s32 %s87, 1
    %s89 = scalar_select %p86, %s87, %s88
    %p92 = pneg %p86
    %p93 = scmp.eq.s32.totalorder %s9, 1
    %p94 = por %p92, %p93
    %p95 = scmp.ne.s32.totalorder %s87, %s90
    %p96 = scmp.eq.s32.totalorder %s9, 0
    %p97 = por %p95, %p96
    %p98 = scmp.ne.s32.totalorder %s87, %s90
    %p99 = scmp.eq.s32.totalorder %s14, 1
    %p100 = por %p98, %p99
    %p101 = scmp.ne.s32.totalorder %s90, %s91
    %p102 = scmp.eq.s32.totalorder %s14, 0
    %p103 = por %p101, %p102
    %p104 = scmp.ne.s32.totalorder %s90, %s91
    %p105 = scmp.eq.s32.totalorder %s15, 1
    %p106 = por %p104, %p105
    %p108 = scmp.ne.s32.totalorder %s91, %s107
    %p109 = scmp.eq.s32.totalorder %s15, 0
    %p110 = por %p108, %p109
    %p111 = scmp.le.s32.totalorder 1, %s9
    %p112 = scmp.lt.s32.totalorder %s9, 3
    %p113 = pnand %p111, %p112
    %p114 = pneg %p113
    // Predicated region
    $region9: #{cpm_stage_x_forward.8} parent=5 // pred_check
      _
    $region10: #{cpm_stage_x_forward.8} parent=5 // pred_check_branch
      %116 = sbr.rel (%p113) target = $region12
    $region11: #{cpm_stage_x_forward.8} parent=5 // pred_region
      %s117 = ssub.s32 %s9, 1
      // Predicated region
      $region13: #{cpm_stage_x_forward.8} parent=11 // pred_check
        %p118 = pneg %p56
      $region14: #{cpm_stage_x_forward.8} parent=11 // pred_check_branch
        %120 = sbr.rel (%p118) target = $region16
      $region15: #{cpm_stage_x_forward.8} parent=11 // pred_region
        _
      $region16: #{cpm_stage_x_forward.8} parent=11 // pred_fallthru
        _
      // Predicated region
      $region17: #{cpm_stage_x_forward.8} parent=11 // pred_check
        %p121 = pneg %p77
      $region18: #{cpm_stage_x_forward.8} parent=11 // pred_check_branch
        %123 = sbr.rel (%p121) target = $region20
      $region19: #{cpm_stage_x_forward.8} parent=11 // pred_region
        _
      $region20: #{cpm_stage_x_forward.8} parent=11 // pred_fallthru
        _
    $region12: #{cpm_stage_x_forward.8} parent=5 // pred_fallthru
      _
    %p124 = scmp.lt.s32.totalorder %s9, 2
    // Predicated region
    $region21: #{cpm_stage_x_forward.8} parent=5 // pred_check
      %p125 = pneg %p124
    $region22: #{cpm_stage_x_forward.8} parent=5 // pred_check_branch
      %127 = sbr.rel (%p125) target = $region24
    $region23: #{cpm_stage_x_forward.8} parent=5 // pred_region
      // Predicated region
      $region25: #{cpm_stage_x_forward.8} parent=23 // pred_check
        %p128 = pneg %p29
      $region26: #{cpm_stage_x_forward.8} parent=23 // pred_check_branch
        %130 = sbr.rel (%p128) target = $region28
      $region27: #{cpm_stage_x_forward.8} parent=23 // pred_region
        %p131 = scmp.lt.s32.totalorder %s9, 1
        %s132 = scalar_select %p131, %s9, 1
        %s133 = smul.addr %s132, 2
        %s134 = smul.addr %s133, 4
        %s135 = scalar_lea.vmem %s0, %s134
      $region28: #{cpm_stage_x_forward.8} parent=23 // pred_fallthru
        _
    $region24: #{cpm_stage_x_forward.8} parent=5 // pred_fallthru
      _
    %p136 = scmp.le.s32.totalorder 1, %s9
    %p137 = scmp.lt.s32.totalorder %s9, 3
    %p138 = pnand %p136, %p137
    %p139 = pneg %p138
    // Predicated region
    $region29: #{cpm_stage_x_forward.8} parent=5 // pred_check
      _
    $region30: #{cpm_stage_x_forward.8} parent=5 // pred_check_branch
      %141 = sbr.rel (%p138) target = $region32
    $region31: #{cpm_stage_x_forward.8} parent=5 // pred_region
      %s142 = ssub.s32 %s9, 1
      %p143 = scmp.lt.s32.totalorder %s14, 1
      %s144 = scalar_select %p143, %s14, 1
      %s145 = smul.addr %s144, 2
      %s146 = smul.addr %s145, 4
      %s147 = scalar_lea.vmem %s0, %s146
      %p148 = pneg %p35
      %p149 = pneg %p32
      %p150 = pneg %p56
      %p151 = pneg %p53
      %p152 = pneg %p77
      %p153 = pneg %p74
      %p154 = pneg %p103
      %p155 = pneg %p100
      %p156 = scmp.lt.s32.totalorder %s14, 1
      %s157 = scalar_select %p156, %s14, 1
      %s158 = smul.addr %s157, 4
      %s159 = scalar_lea.vmem %s3, %s158
      %p160 = scmp.lt.s32.totalorder %s14, 1
      %s161 = scalar_select %p160, %s14, 1
      %s162 = smul.addr %s161, 2
      %s163 = smul.addr %s162, 4
      %s164 = scalar_lea.vmem %s0, %s163
      %p165 = scmp.lt.s32.totalorder %s14, 1
      %s166 = scalar_select %p165, %s14, 1
      %s167 = smul.addr %s166, 4
      %s168 = scalar_lea.vmem %s3, %s167
      %v170 = vld [vmem:[%s164] sm:$0xf]
      %v171 = vld [vmem:[%s1] sm:$0xf]
      %v172 = vld [vmem:[%s1 + $0x4] sm:$0xf]
      %v173 = vld [vmem:[%s1 + $0x8] sm:$0xf]
      %v174 = vld [vmem:[%s1 + $0xc] sm:$0xf]
      %v175 = vld [vmem:[%s1 + $0x10] sm:$0xf]
      %v176 = vld [vmem:[%s1 + $0x14] sm:$0xf]
      %v177 = vld [vmem:[%s1 + $0x18] sm:$0xf]
      %v178 = vld [vmem:[%s1 + $0x1c] sm:$0xf]
      %v179 = vld [vmem:[%s1 + $0x20] sm:$0xf]
      %v180 = vld [vmem:[%s1 + $0x24] sm:$0xf]
      %v181 = vld [vmem:[%s1 + $0x28] sm:$0xf]
      %v182 = vld [vmem:[%s1 + $0x2c] sm:$0xf]
      %v183 = vld [vmem:[%s1 + $0x30] sm:$0xf]
      %v184 = vld [vmem:[%s1 + $0x34] sm:$0xf]
      %v185 = vld [vmem:[%s1 + $0x38] sm:$0xf]
      %v186 = vld [vmem:[%s1 + $0x3c] sm:$0xf]
      %v187 = vld [vmem:[%s164] sm:$0xf]
      %v188 = vld [vmem:[%s164 + $0x4] sm:$0x1]
      %s189 = scalar_lea.vmem %s1, 64
      %v190 = vld [vmem:[%s189] sm:$0xf]
      %v191 = vld [vmem:[%s189 + $0x4] sm:$0xf]
      %v192 = vld [vmem:[%s189 + $0x8] sm:$0xf]
      %v193 = vld [vmem:[%s189 + $0xc] sm:$0xf]
      %v194 = vld [vmem:[%s189 + $0x10] sm:$0xf]
      %v195 = vld [vmem:[%s189 + $0x14] sm:$0xf]
      %v196 = vld [vmem:[%s189 + $0x18] sm:$0xf]
      %v197 = vld [vmem:[%s189 + $0x1c] sm:$0xf]
      %v198 = vld [vmem:[%s189 + $0x20] sm:$0xf]
      %v199 = vld [vmem:[%s189 + $0x24] sm:$0xf]
      %v200 = vld [vmem:[%s189 + $0x28] sm:$0xf]
      %v201 = vld [vmem:[%s189 + $0x2c] sm:$0xf]
      %v202 = vld [vmem:[%s189 + $0x30] sm:$0xf]
      %v203 = vld [vmem:[%s189 + $0x34] sm:$0xf]
      %v204 = vld [vmem:[%s189 + $0x38] sm:$0xf]
      %v205 = vld [vmem:[%s189 + $0x3c] sm:$0xf]
      %v208 = vunpack.c.l.b16 %v187
      %v209 = vunpack.c.l.b16 %v188
      %v210 = vpack.c.b16 %v209, %v208
      %v212 = vshrl.u32 %v210, 16
      %v214 = vshll.u32 %v210, 16
      %v216 = vrot.slane %v214, 1
      %v217 = vor.u32 %v212, %v216
      %v235 = vunpack.c.l.b16 %v190
      %v236 = vunpack.c.l.b16 %v191
      %v237 = vunpack.c.l.b16 %v192
      %v238 = vunpack.c.l.b16 %v193
      %v239 = vunpack.c.l.b16 %v194
      %v240 = vunpack.c.l.b16 %v195
      %v241 = vunpack.c.l.b16 %v196
      %v242 = vunpack.c.l.b16 %v197
      %v243 = vunpack.c.l.b16 %v198
      %v244 = vunpack.c.l.b16 %v199
      %v245 = vunpack.c.l.b16 %v200
      %v246 = vunpack.c.l.b16 %v201
      %v247 = vunpack.c.l.b16 %v202
      %v248 = vunpack.c.l.b16 %v203
      %v249 = vunpack.c.l.b16 %v204
      %v250 = vunpack.c.l.b16 %v205
      %v251 = vpack.c.b16 %v236, %v235
      %v252 = vpack.c.b16 %v238, %v237
      %v253 = vpack.c.b16 %v240, %v239
      %v254 = vpack.c.b16 %v242, %v241
      %v255 = vpack.c.b16 %v244, %v243
      %v256 = vpack.c.b16 %v246, %v245
      %v257 = vpack.c.b16 %v248, %v247
      %v258 = vpack.c.b16 %v250, %v249
      %267 = vmatprep.subr.bf16.mxu0 0
      %268 = vmatpush1.bf16.msra.mxu0 %v258
      %269 = vmatprep.subr.bf16.mxu0 0
      %270 = vmatpush1.bf16.msra.mxu0 %v257
      %271 = vmatprep.subr.bf16.mxu0 0
      %272 = vmatpush1.bf16.msra.mxu0 %v256
      %273 = vmatprep.subr.bf16.mxu0 0
      %274 = vmatpush1.bf16.msra.mxu0 %v255
      %275 = vmatprep.subr.bf16.mxu0 0
      %276 = vmatpush1.bf16.msra.mxu0 %v254
      %277 = vmatprep.subr.bf16.mxu0 0
      %278 = vmatpush1.bf16.msra.mxu0 %v253
      %279 = vmatprep.subr.bf16.mxu0 0
      %280 = vmatpush1.bf16.msra.mxu0 %v252
      %281 = vmatprep.subr.bf16.mxu0 0
      %282 = vmatpush1.bf16.msra.mxu0 %v251
      %283 = vmatprep.subr.bf16.mxu0 0
      %284 = vmatpush2.bf16.msra.mxu0 0
      %285 = vmatprep.subr.bf16.mxu0 0
      %286 = vmatpush2.bf16.msra.mxu0 0
      %287 = vmatprep.subr.bf16.mxu0 0
      %288 = vmatpush2.bf16.msra.mxu0 0
      %289 = vmatprep.subr.bf16.mxu0 0
      %290 = vmatpush2.bf16.msra.mxu0 0
      %291 = vmatprep.subr.bf16.mxu0 0
      %292 = vmatpush2.bf16.msra.mxu0 0
      %293 = vmatprep.subr.bf16.mxu0 0
      %294 = vmatpush2.bf16.msra.mxu0 0
      %295 = vmatprep.subr.bf16.mxu0 0
      %296 = vmatpush2.bf16.msra.mxu0 0
      %297 = vmatprep.subr.bf16.mxu0 0
      %298 = vmatpush2.bf16.msra.mxu0 0
      %299 = vmatprep.mubr.bf16.mxu0 0
      %300 = vmatmul.mubr.bf16.gmra.mxu0 %v217
      %v301 = vpop.f32.mrf.mxu0
      %v302 = vadd.f32 0.0, %v301
      %v303 = vpop.f32.mrf.mxu0
      %v304 = vpop.f32.mrf.mxu0
      %v305 = vpop.f32.mrf.mxu0
      %306 = vdwg.mxu0
      %v323 = vunpack.c.l.b16 %v171
      %v324 = vunpack.c.l.b16 %v172
      %v325 = vunpack.c.l.b16 %v173
      %v326 = vunpack.c.l.b16 %v174
      %v327 = vunpack.c.l.b16 %v175
      %v328 = vunpack.c.l.b16 %v176
      %v329 = vunpack.c.l.b16 %v177
      %v330 = vunpack.c.l.b16 %v178
      %v331 = vunpack.c.l.b16 %v179
      %v332 = vunpack.c.l.b16 %v180
      %v333 = vunpack.c.l.b16 %v181
      %v334 = vunpack.c.l.b16 %v182
      %v335 = vunpack.c.l.b16 %v183
      %v336 = vunpack.c.l.b16 %v184
      %v337 = vunpack.c.l.b16 %v185
      %v338 = vunpack.c.l.b16 %v186
      %v339 = vpack.c.b16 %v324, %v323
      %v340 = vpack.c.b16 %v326, %v325
      %v341 = vpack.c.b16 %v328, %v327
      %v342 = vpack.c.b16 %v330, %v329
      %v343 = vpack.c.b16 %v332, %v331
      %v344 = vpack.c.b16 %v334, %v333
      %v345 = vpack.c.b16 %v336, %v335
      %v346 = vpack.c.b16 %v338, %v337
      %355 = vmatprep.subr.bf16.mxu0 0
      %356 = vmatpush1.bf16.msra.mxu0 %v346
      %357 = vmatprep.subr.bf16.mxu0 0
      %358 = vmatpush1.bf16.msra.mxu0 %v345
      %359 = vmatprep.subr.bf16.mxu0 0
      %360 = vmatpush1.bf16.msra.mxu0 %v344
      %361 = vmatprep.subr.bf16.mxu0 0
      %362 = vmatpush1.bf16.msra.mxu0 %v343
      %363 = vmatprep.subr.bf16.mxu0 0
      %364 = vmatpush1.bf16.msra.mxu0 %v342
      %365 = vmatprep.subr.bf16.mxu0 0
      %366 = vmatpush1.bf16.msra.mxu0 %v341
      %367 = vmatprep.subr.bf16.mxu0 0
      %368 = vmatpush1.bf16.msra.mxu0 %v340
      %369 = vmatprep.subr.bf16.mxu0 0
      %370 = vmatpush1.bf16.msra.mxu0 %v339
      %371 = vmatprep.subr.bf16.mxu0 0
      %372 = vmatpush2.bf16.msra.mxu0 0
      %373 = vmatprep.subr.bf16.mxu0 0
      %374 = vmatpush2.bf16.msra.mxu0 0
      %375 = vmatprep.subr.bf16.mxu0 0
      %376 = vmatpush2.bf16.msra.mxu0 0
      %377 = vmatprep.subr.bf16.mxu0 0
      %378 = vmatpush2.bf16.msra.mxu0 0
      %379 = vmatprep.subr.bf16.mxu0 0
      %380 = vmatpush2.bf16.msra.mxu0 0
      %381 = vmatprep.subr.bf16.mxu0 0
      %382 = vmatpush2.bf16.msra.mxu0 0
      %383 = vmatprep.subr.bf16.mxu0 0
      %384 = vmatpush2.bf16.msra.mxu0 0
      %385 = vmatprep.subr.bf16.mxu0 0
      %386 = vmatpush2.bf16.msra.mxu0 0
      %387 = vmatprep.mubr.bf16.mxu0 0
      %388 = vmatmul.mubr.bf16.gmra.mxu0 %v170
      %v389 = vpop.f32.mrf.mxu0
      %v390 = vadd.f32 %v302, %v389
      %v391 = vpop.f32.mrf.mxu0
      %v392 = vpop.f32.mrf.mxu0
      %v393 = vpop.f32.mrf.mxu0
      %394 = vdwg.mxu0
      %v395 = vld [vmem:[%s164] sm:$0xe]
      %s396 = scalar_lea.vmem %s1, 128
      %v397 = vld [vmem:[%s396] sm:$0xf]
      %v398 = vld [vmem:[%s396 + $0x4] sm:$0xf]
      %v399 = vld [vmem:[%s396 + $0x8] sm:$0xf]
      %v400 = vld [vmem:[%s396 + $0xc] sm:$0xf]
      %v401 = vld [vmem:[%s396 + $0x10] sm:$0xf]
      %v402 = vld [vmem:[%s396 + $0x14] sm:$0xf]
      %v403 = vld [vmem:[%s396 + $0x18] sm:$0xf]
      %v404 = vld [vmem:[%s396 + $0x1c] sm:$0xf]
      %v405 = vld [vmem:[%s396 + $0x20] sm:$0xf]
      %v406 = vld [vmem:[%s396 + $0x24] sm:$0xf]
      %v407 = vld [vmem:[%s396 + $0x28] sm:$0xf]
      %v408 = vld [vmem:[%s396 + $0x2c] sm:$0xf]
      %v409 = vld [vmem:[%s396 + $0x30] sm:$0xf]
      %v410 = vld [vmem:[%s396 + $0x34] sm:$0xf]
      %v411 = vld [vmem:[%s396 + $0x38] sm:$0xf]
      %v412 = vld [vmem:[%s396 + $0x3c] sm:$0xf]
      %v414 = vunpack.c.l.b16 %v395
      %v415 = vpack.c.b16 %v209, %v414
      %v416 = vrot.slane %v415, 1
      %v434 = vunpack.c.l.b16 %v397
      %v435 = vunpack.c.l.b16 %v398
      %v436 = vunpack.c.l.b16 %v399
      %v437 = vunpack.c.l.b16 %v400
      %v438 = vunpack.c.l.b16 %v401
      %v439 = vunpack.c.l.b16 %v402
      %v440 = vunpack.c.l.b16 %v403
      %v441 = vunpack.c.l.b16 %v404
      %v442 = vunpack.c.l.b16 %v405
      %v443 = vunpack.c.l.b16 %v406
      %v444 = vunpack.c.l.b16 %v407
      %v445 = vunpack.c.l.b16 %v408
      %v446 = vunpack.c.l.b16 %v409
      %v447 = vunpack.c.l.b16 %v410
      %v448 = vunpack.c.l.b16 %v411
      %v449 = vunpack.c.l.b16 %v412
      %v450 = vpack.c.b16 %v435, %v434
      %v451 = vpack.c.b16 %v437, %v436
      %v452 = vpack.c.b16 %v439, %v438
      %v453 = vpack.c.b16 %v441, %v440
      %v454 = vpack.c.b16 %v443, %v442
      %v455 = vpack.c.b16 %v445, %v444
      %v456 = vpack.c.b16 %v447, %v446
      %v457 = vpack.c.b16 %v449, %v448
      %466 = vmatprep.subr.bf16.mxu0 0
      %467 = vmatpush1.bf16.msra.mxu0 %v457
      %468 = vmatprep.subr.bf16.mxu0 0
      %469 = vmatpush1.bf16.msra.mxu0 %v456
      %470 = vmatprep.subr.bf16.mxu0 0
      %471 = vmatpush1.bf16.msra.mxu0 %v455
      %472 = vmatprep.subr.bf16.mxu0 0
      %473 = vmatpush1.bf16.msra.mxu0 %v454
      %474 = vmatprep.subr.bf16.mxu0 0
      %475 = vmatpush1.bf16.msra.mxu0 %v453
      %476 = vmatprep.subr.bf16.mxu0 0
      %477 = vmatpush1.bf16.msra.mxu0 %v452
      %478 = vmatprep.subr.bf16.mxu0 0
      %479 = vmatpush1.bf16.msra.mxu0 %v451
      %480 = vmatprep.subr.bf16.mxu0 0
      %481 = vmatpush1.bf16.msra.mxu0 %v450
      %482 = vmatprep.subr.bf16.mxu0 0
      %483 = vmatpush2.bf16.msra.mxu0 0
      %484 = vmatprep.subr.bf16.mxu0 0
      %485 = vmatpush2.bf16.msra.mxu0 0
      %486 = vmatprep.subr.bf16.mxu0 0
      %487 = vmatpush2.bf16.msra.mxu0 0
      %488 = vmatprep.subr.bf16.mxu0 0
      %489 = vmatpush2.bf16.msra.mxu0 0
      %490 = vmatprep.subr.bf16.mxu0 0
      %491 = vmatpush2.bf16.msra.mxu0 0
      %492 = vmatprep.subr.bf16.mxu0 0
      %493 = vmatpush2.bf16.msra.mxu0 0
      %494 = vmatprep.subr.bf16.mxu0 0
      %495 = vmatpush2.bf16.msra.mxu0 0
      %496 = vmatprep.subr.bf16.mxu0 0
      %497 = vmatpush2.bf16.msra.mxu0 0
      %498 = vmatprep.mubr.bf16.mxu0 0
      %499 = vmatmul.mubr.bf16.gmra.mxu0 %v416
      %v500 = vpop.f32.mrf.mxu0
      %v501 = vadd.f32 0.0, %v500
      %v502 = vpop.f32.mrf.mxu0
      %v503 = vpop.f32.mrf.mxu0
      %v504 = vpop.f32.mrf.mxu0
      %505 = vdwg.mxu0
      %v506 = vadd.f32 %v390, %v501
      %v507 = vld [vmem:[%s164 + $0x4] sm:$0x3]
      %s508 = scalar_lea.vmem %s1, 192
      %v509 = vld [vmem:[%s508] sm:$0xf]
      %v510 = vld [vmem:[%s508 + $0x4] sm:$0xf]
      %v511 = vld [vmem:[%s508 + $0x8] sm:$0xf]
      %v512 = vld [vmem:[%s508 + $0xc] sm:$0xf]
      %v513 = vld [vmem:[%s508 + $0x10] sm:$0xf]
      %v514 = vld [vmem:[%s508 + $0x14] sm:$0xf]
      %v515 = vld [vmem:[%s508 + $0x18] sm:$0xf]
      %v516 = vld [vmem:[%s508 + $0x1c] sm:$0xf]
      %v517 = vld [vmem:[%s508 + $0x20] sm:$0xf]
      %v518 = vld [vmem:[%s508 + $0x24] sm:$0xf]
      %v519 = vld [vmem:[%s508 + $0x28] sm:$0xf]
      %v520 = vld [vmem:[%s508 + $0x2c] sm:$0xf]
      %v521 = vld [vmem:[%s508 + $0x30] sm:$0xf]
      %v522 = vld [vmem:[%s508 + $0x34] sm:$0xf]
      %v523 = vld [vmem:[%s508 + $0x38] sm:$0xf]
      %v524 = vld [vmem:[%s508 + $0x3c] sm:$0xf]
      %v526 = vunpack.c.l.b16 %v507
      %v527 = vpack.c.b16 %v526, %v414
      %v529 = vshrl.u32 %v527, 16
      %v531 = vrot.slane %v529, 1
      %v532 = vshll.u32 %v527, 16
      %v534 = vrot.slane %v532, 2
      %v535 = vor.u32 %v531, %v534
      %v553 = vunpack.c.l.b16 %v509
      %v554 = vunpack.c.l.b16 %v510
      %v555 = vunpack.c.l.b16 %v511
      %v556 = vunpack.c.l.b16 %v512
      %v557 = vunpack.c.l.b16 %v513
      %v558 = vunpack.c.l.b16 %v514
      %v559 = vunpack.c.l.b16 %v515
      %v560 = vunpack.c.l.b16 %v516
      %v561 = vunpack.c.l.b16 %v517
      %v562 = vunpack.c.l.b16 %v518
      %v563 = vunpack.c.l.b16 %v519
      %v564 = vunpack.c.l.b16 %v520
      %v565 = vunpack.c.l.b16 %v521
      %v566 = vunpack.c.l.b16 %v522
      %v567 = vunpack.c.l.b16 %v523
      %v568 = vunpack.c.l.b16 %v524
      %v569 = vpack.c.b16 %v554, %v553
      %v570 = vpack.c.b16 %v556, %v555
      %v571 = vpack.c.b16 %v558, %v557
      %v572 = vpack.c.b16 %v560, %v559
      %v573 = vpack.c.b16 %v562, %v561
      %v574 = vpack.c.b16 %v564, %v563
      %v575 = vpack.c.b16 %v566, %v565
      %v576 = vpack.c.b16 %v568, %v567
      %585 = vmatprep.subr.bf16.mxu0 0
      %586 = vmatpush1.bf16.msra.mxu0 %v576
      %587 = vmatprep.subr.bf16.mxu0 0
      %588 = vmatpush1.bf16.msra.mxu0 %v575
      %589 = vmatprep.subr.bf16.mxu0 0
      %590 = vmatpush1.bf16.msra.mxu0 %v574
      %591 = vmatprep.subr.bf16.mxu0 0
      %592 = vmatpush1.bf16.msra.mxu0 %v573
      %593 = vmatprep.subr.bf16.mxu0 0
      %594 = vmatpush1.bf16.msra.mxu0 %v572
      %595 = vmatprep.subr.bf16.mxu0 0
      %596 = vmatpush1.bf16.msra.mxu0 %v571
      %597 = vmatprep.subr.bf16.mxu0 0
      %598 = vmatpush1.bf16.msra.mxu0 %v570
      %599 = vmatprep.subr.bf16.mxu0 0
      %600 = vmatpush1.bf16.msra.mxu0 %v569
      %601 = vmatprep.subr.bf16.mxu0 0
      %602 = vmatpush2.bf16.msra.mxu0 0
      %603 = vmatprep.subr.bf16.mxu0 0
      %604 = vmatpush2.bf16.msra.mxu0 0
      %605 = vmatprep.subr.bf16.mxu0 0
      %606 = vmatpush2.bf16.msra.mxu0 0
      %607 = vmatprep.subr.bf16.mxu0 0
      %608 = vmatpush2.bf16.msra.mxu0 0
      %609 = vmatprep.subr.bf16.mxu0 0
      %610 = vmatpush2.bf16.msra.mxu0 0
      %611 = vmatprep.subr.bf16.mxu0 0
      %612 = vmatpush2.bf16.msra.mxu0 0
      %613 = vmatprep.subr.bf16.mxu0 0
      %614 = vmatpush2.bf16.msra.mxu0 0
      %615 = vmatprep.subr.bf16.mxu0 0
      %616 = vmatpush2.bf16.msra.mxu0 0
      %617 = vmatprep.mubr.bf16.mxu0 0
      %618 = vmatmul.mubr.bf16.gmra.mxu0 %v535
      %v619 = vpop.f32.mrf.mxu0
      %v620 = vadd.f32 0.0, %v619
      %v621 = vpop.f32.mrf.mxu0
      %v622 = vpop.f32.mrf.mxu0
      %v623 = vpop.f32.mrf.mxu0
      %624 = vdwg.mxu0
      %v625 = vadd.f32 %v506, %v620
      %v626 = vld [vmem:[%s164] sm:$0xc]
      %s627 = scalar_lea.vmem %s1, 256
      %v628 = vld [vmem:[%s627] sm:$0xf]
      %v629 = vld [vmem:[%s627 + $0x4] sm:$0xf]
      %v630 = vld [vmem:[%s627 + $0x8] sm:$0xf]
      %v631 = vld [vmem:[%s627 + $0xc] sm:$0xf]
      %v632 = vld [vmem:[%s627 + $0x10] sm:$0xf]
      %v633 = vld [vmem:[%s627 + $0x14] sm:$0xf]
      %v634 = vld [vmem:[%s627 + $0x18] sm:$0xf]
      %v635 = vld [vmem:[%s627 + $0x1c] sm:$0xf]
      %v636 = vld [vmem:[%s627 + $0x20] sm:$0xf]
      %v637 = vld [vmem:[%s627 + $0x24] sm:$0xf]
      %v638 = vld [vmem:[%s627 + $0x28] sm:$0xf]
      %v639 = vld [vmem:[%s627 + $0x2c] sm:$0xf]
      %v640 = vld [vmem:[%s627 + $0x30] sm:$0xf]
      %v641 = vld [vmem:[%s627 + $0x34] sm:$0xf]
      %v642 = vld [vmem:[%s627 + $0x38] sm:$0xf]
      %v643 = vld [vmem:[%s627 + $0x3c] sm:$0xf]
      %v645 = vunpack.c.l.b16 %v626
      %v646 = vpack.c.b16 %v526, %v645
      %v647 = vrot.slane %v646, 2
      %v665 = vunpack.c.l.b16 %v628
      %v666 = vunpack.c.l.b16 %v629
      %v667 = vunpack.c.l.b16 %v630
      %v668 = vunpack.c.l.b16 %v631
      %v669 = vunpack.c.l.b16 %v632
      %v670 = vunpack.c.l.b16 %v633
      %v671 = vunpack.c.l.b16 %v634
      %v672 = vunpack.c.l.b16 %v635
      %v673 = vunpack.c.l.b16 %v636
      %v674 = vunpack.c.l.b16 %v637
      %v675 = vunpack.c.l.b16 %v638
      %v676 = vunpack.c.l.b16 %v639
      %v677 = vunpack.c.l.b16 %v640
      %v678 = vunpack.c.l.b16 %v641
      %v679 = vunpack.c.l.b16 %v642
      %v680 = vunpack.c.l.b16 %v643
      %v681 = vpack.c.b16 %v666, %v665
      %v682 = vpack.c.b16 %v668, %v667
      %v683 = vpack.c.b16 %v670, %v669
      %v684 = vpack.c.b16 %v672, %v671
      %v685 = vpack.c.b16 %v674, %v673
      %v686 = vpack.c.b16 %v676, %v675
      %v687 = vpack.c.b16 %v678, %v677
      %v688 = vpack.c.b16 %v680, %v679
      %697 = vmatprep.subr.bf16.mxu0 0
      %698 = vmatpush1.bf16.msra.mxu0 %v688
      %699 = vmatprep.subr.bf16.mxu0 0
      %700 = vmatpush1.bf16.msra.mxu0 %v687
      %701 = vmatprep.subr.bf16.mxu0 0
      %702 = vmatpush1.bf16.msra.mxu0 %v686
      %703 = vmatprep.subr.bf16.mxu0 0
      %704 = vmatpush1.bf16.msra.mxu0 %v685
      %705 = vmatprep.subr.bf16.mxu0 0
      %706 = vmatpush1.bf16.msra.mxu0 %v684
      %707 = vmatprep.subr.bf16.mxu0 0
      %708 = vmatpush1.bf16.msra.mxu0 %v683
      %709 = vmatprep.subr.bf16.mxu0 0
      %710 = vmatpush1.bf16.msra.mxu0 %v682
      %711 = vmatprep.subr.bf16.mxu0 0
      %712 = vmatpush1.bf16.msra.mxu0 %v681
      %713 = vmatprep.subr.bf16.mxu0 0
      %714 = vmatpush2.bf16.msra.mxu0 0
      %715 = vmatprep.subr.bf16.mxu0 0
      %716 = vmatpush2.bf16.msra.mxu0 0
      %717 = vmatprep.subr.bf16.mxu0 0
      %718 = vmatpush2.bf16.msra.mxu0 0
      %719 = vmatprep.subr.bf16.mxu0 0
      %720 = vmatpush2.bf16.msra.mxu0 0
      %721 = vmatprep.subr.bf16.mxu0 0
      %722 = vmatpush2.bf16.msra.mxu0 0
      %723 = vmatprep.subr.bf16.mxu0 0
      %724 = vmatpush2.bf16.msra.mxu0 0
      %725 = vmatprep.subr.bf16.mxu0 0
      %726 = vmatpush2.bf16.msra.mxu0 0
      %727 = vmatprep.subr.bf16.mxu0 0
      %728 = vmatpush2.bf16.msra.mxu0 0
      %729 = vmatprep.mubr.bf16.mxu0 0
      %730 = vmatmul.mubr.bf16.gmra.mxu0 %v647
      %v731 = vpop.f32.mrf.mxu0
      %v732 = vadd.f32 0.0, %v731
      %v733 = vpop.f32.mrf.mxu0
      %v734 = vpop.f32.mrf.mxu0
      %v735 = vpop.f32.mrf.mxu0
      %736 = vdwg.mxu0
      %v737 = vadd.f32 %v625, %v732
      %v738 = vld [vmem:[%s164 + $0x4] sm:$0x7]
      %s739 = scalar_lea.vmem %s1, 320
      %v740 = vld [vmem:[%s739] sm:$0xf]
      %v741 = vld [vmem:[%s739 + $0x4] sm:$0xf]
      %v742 = vld [vmem:[%s739 + $0x8] sm:$0xf]
      %v743 = vld [vmem:[%s739 + $0xc] sm:$0xf]
      %v744 = vld [vmem:[%s739 + $0x10] sm:$0xf]
      %v745 = vld [vmem:[%s739 + $0x14] sm:$0xf]
      %v746 = vld [vmem:[%s739 + $0x18] sm:$0xf]
      %v747 = vld [vmem:[%s739 + $0x1c] sm:$0xf]
      %v748 = vld [vmem:[%s739 + $0x20] sm:$0xf]
      %v749 = vld [vmem:[%s739 + $0x24] sm:$0xf]
      %v750 = vld [vmem:[%s739 + $0x28] sm:$0xf]
      %v751 = vld [vmem:[%s739 + $0x2c] sm:$0xf]
      %v752 = vld [vmem:[%s739 + $0x30] sm:$0xf]
      %v753 = vld [vmem:[%s739 + $0x34] sm:$0xf]
      %v754 = vld [vmem:[%s739 + $0x38] sm:$0xf]
      %v755 = vld [vmem:[%s739 + $0x3c] sm:$0xf]
      %v757 = vunpack.c.l.b16 %v738
      %v758 = vpack.c.b16 %v757, %v645
      %v760 = vshrl.u32 %v758, 16
      %v762 = vrot.slane %v760, 2
      %v763 = vshll.u32 %v758, 16
      %v765 = vrot.slane %v763, 3
      %v766 = vor.u32 %v762, %v765
      %v784 = vunpack.c.l.b16 %v740
      %v785 = vunpack.c.l.b16 %v741
      %v786 = vunpack.c.l.b16 %v742
      %v787 = vunpack.c.l.b16 %v743
      %v788 = vunpack.c.l.b16 %v744
      %v789 = vunpack.c.l.b16 %v745
      %v790 = vunpack.c.l.b16 %v746
      %v791 = vunpack.c.l.b16 %v747
      %v792 = vunpack.c.l.b16 %v748
      %v793 = vunpack.c.l.b16 %v749
      %v794 = vunpack.c.l.b16 %v750
      %v795 = vunpack.c.l.b16 %v751
      %v796 = vunpack.c.l.b16 %v752
      %v797 = vunpack.c.l.b16 %v753
      %v798 = vunpack.c.l.b16 %v754
      %v799 = vunpack.c.l.b16 %v755
      %v800 = vpack.c.b16 %v785, %v784
      %v801 = vpack.c.b16 %v787, %v786
      %v802 = vpack.c.b16 %v789, %v788
      %v803 = vpack.c.b16 %v791, %v790
      %v804 = vpack.c.b16 %v793, %v792
      %v805 = vpack.c.b16 %v795, %v794
      %v806 = vpack.c.b16 %v797, %v796
      %v807 = vpack.c.b16 %v799, %v798
      %816 = vmatprep.subr.bf16.mxu0 0
      %817 = vmatpush1.bf16.msra.mxu0 %v807
      %818 = vmatprep.subr.bf16.mxu0 0
      %819 = vmatpush1.bf16.msra.mxu0 %v806
      %820 = vmatprep.subr.bf16.mxu0 0
      %821 = vmatpush1.bf16.msra.mxu0 %v805
      %822 = vmatprep.subr.bf16.mxu0 0
      %823 = vmatpush1.bf16.msra.mxu0 %v804
      %824 = vmatprep.subr.bf16.mxu0 0
      %825 = vmatpush1.bf16.msra.mxu0 %v803
      %826 = vmatprep.subr.bf16.mxu0 0
      %827 = vmatpush1.bf16.msra.mxu0 %v802
      %828 = vmatprep.subr.bf16.mxu0 0
      %829 = vmatpush1.bf16.msra.mxu0 %v801
      %830 = vmatprep.subr.bf16.mxu0 0
      %831 = vmatpush1.bf16.msra.mxu0 %v800
      %832 = vmatprep.subr.bf16.mxu0 0
      %833 = vmatpush2.bf16.msra.mxu0 0
      %834 = vmatprep.subr.bf16.mxu0 0
      %835 = vmatpush2.bf16.msra.mxu0 0
      %836 = vmatprep.subr.bf16.mxu0 0
      %837 = vmatpush2.bf16.msra.mxu0 0
      %838 = vmatprep.subr.bf16.mxu0 0
      %839 = vmatpush2.bf16.msra.mxu0 0
      %840 = vmatprep.subr.bf16.mxu0 0
      %841 = vmatpush2.bf16.msra.mxu0 0
      %842 = vmatprep.subr.bf16.mxu0 0
      %843 = vmatpush2.bf16.msra.mxu0 0
      %844 = vmatprep.subr.bf16.mxu0 0
      %845 = vmatpush2.bf16.msra.mxu0 0
      %846 = vmatprep.subr.bf16.mxu0 0
      %847 = vmatpush2.bf16.msra.mxu0 0
      %848 = vmatprep.mubr.bf16.mxu0 0
      %849 = vmatmul.mubr.bf16.gmra.mxu0 %v766
      %v850 = vpop.f32.mrf.mxu0
      %v851 = vadd.f32 0.0, %v850
      %v852 = vpop.f32.mrf.mxu0
      %v853 = vpop.f32.mrf.mxu0
      %v854 = vpop.f32.mrf.mxu0
      %855 = vdwg.mxu0
      %v856 = vadd.f32 %v737, %v851
      %v857 = vld [vmem:[%s164] sm:$0x8]
      %s858 = scalar_lea.vmem %s1, 384
      %v859 = vld [vmem:[%s858] sm:$0xf]
      %v860 = vld [vmem:[%s858 + $0x4] sm:$0xf]
      %v861 = vld [vmem:[%s858 + $0x8] sm:$0xf]
      %v862 = vld [vmem:[%s858 + $0xc] sm:$0xf]
      %v863 = vld [vmem:[%s858 + $0x10] sm:$0xf]
      %v864 = vld [vmem:[%s858 + $0x14] sm:$0xf]
      %v865 = vld [vmem:[%s858 + $0x18] sm:$0xf]
      %v866 = vld [vmem:[%s858 + $0x1c] sm:$0xf]
      %v867 = vld [vmem:[%s858 + $0x20] sm:$0xf]
      %v868 = vld [vmem:[%s858 + $0x24] sm:$0xf]
      %v869 = vld [vmem:[%s858 + $0x28] sm:$0xf]
      %v870 = vld [vmem:[%s858 + $0x2c] sm:$0xf]
      %v871 = vld [vmem:[%s858 + $0x30] sm:$0xf]
      %v872 = vld [vmem:[%s858 + $0x34] sm:$0xf]
      %v873 = vld [vmem:[%s858 + $0x38] sm:$0xf]
      %v874 = vld [vmem:[%s858 + $0x3c] sm:$0xf]
      %v876 = vunpack.c.l.b16 %v857
      %v877 = vpack.c.b16 %v757, %v876
      %v878 = vrot.slane %v877, 3
      %v896 = vunpack.c.l.b16 %v859
      %v897 = vunpack.c.l.b16 %v860
      %v898 = vunpack.c.l.b16 %v861
      %v899 = vunpack.c.l.b16 %v862
      %v900 = vunpack.c.l.b16 %v863
      %v901 = vunpack.c.l.b16 %v864
      %v902 = vunpack.c.l.b16 %v865
      %v903 = vunpack.c.l.b16 %v866
      %v904 = vunpack.c.l.b16 %v867
      %v905 = vunpack.c.l.b16 %v868
      %v906 = vunpack.c.l.b16 %v869
      %v907 = vunpack.c.l.b16 %v870
      %v908 = vunpack.c.l.b16 %v871
      %v909 = vunpack.c.l.b16 %v872
      %v910 = vunpack.c.l.b16 %v873
      %v911 = vunpack.c.l.b16 %v874
      %v912 = vpack.c.b16 %v897, %v896
      %v913 = vpack.c.b16 %v899, %v898
      %v914 = vpack.c.b16 %v901, %v900
      %v915 = vpack.c.b16 %v903, %v902
      %v916 = vpack.c.b16 %v905, %v904
      %v917 = vpack.c.b16 %v907, %v906
      %v918 = vpack.c.b16 %v909, %v908
      %v919 = vpack.c.b16 %v911, %v910
      %928 = vmatprep.subr.bf16.mxu0 0
      %929 = vmatpush1.bf16.msra.mxu0 %v919
      %930 = vmatprep.subr.bf16.mxu0 0
      %931 = vmatpush1.bf16.msra.mxu0 %v918
      %932 = vmatprep.subr.bf16.mxu0 0
      %933 = vmatpush1.bf16.msra.mxu0 %v917
      %934 = vmatprep.subr.bf16.mxu0 0
      %935 = vmatpush1.bf16.msra.mxu0 %v916
      %936 = vmatprep.subr.bf16.mxu0 0
      %937 = vmatpush1.bf16.msra.mxu0 %v915
      %938 = vmatprep.subr.bf16.mxu0 0
      %939 = vmatpush1.bf16.msra.mxu0 %v914
      %940 = vmatprep.subr.bf16.mxu0 0
      %941 = vmatpush1.bf16.msra.mxu0 %v913
      %942 = vmatprep.subr.bf16.mxu0 0
      %943 = vmatpush1.bf16.msra.mxu0 %v912
      %944 = vmatprep.subr.bf16.mxu0 0
      %945 = vmatpush2.bf16.msra.mxu0 0
      %946 = vmatprep.subr.bf16.mxu0 0
      %947 = vmatpush2.bf16.msra.mxu0 0
      %948 = vmatprep.subr.bf16.mxu0 0
      %949 = vmatpush2.bf16.msra.mxu0 0
      %950 = vmatprep.subr.bf16.mxu0 0
      %951 = vmatpush2.bf16.msra.mxu0 0
      %952 = vmatprep.subr.bf16.mxu0 0
      %953 = vmatpush2.bf16.msra.mxu0 0
      %954 = vmatprep.subr.bf16.mxu0 0
      %955 = vmatpush2.bf16.msra.mxu0 0
      %956 = vmatprep.subr.bf16.mxu0 0
      %957 = vmatpush2.bf16.msra.mxu0 0
      %958 = vmatprep.subr.bf16.mxu0 0
      %959 = vmatpush2.bf16.msra.mxu0 0
      %960 = vmatprep.mubr.bf16.mxu0 0
      %961 = vmatmul.mubr.bf16.gmra.mxu0 %v878
      %v962 = vpop.f32.mrf.mxu0
      %v963 = vadd.f32 0.0, %v962
      %v964 = vpop.f32.mrf.mxu0
      %v965 = vpop.f32.mrf.mxu0
      %v966 = vpop.f32.mrf.mxu0
      %967 = vdwg.mxu0
      %v968 = vadd.f32 %v856, %v963
      %v969 = vld [vmem:[%s164 + $0x4] sm:$0xf]
      %s970 = scalar_lea.vmem %s1, 448
      %v971 = vld [vmem:[%s970] sm:$0xf]
      %v972 = vld [vmem:[%s970 + $0x4] sm:$0xf]
      %v973 = vld [vmem:[%s970 + $0x8] sm:$0xf]
      %v974 = vld [vmem:[%s970 + $0xc] sm:$0xf]
      %v975 = vld [vmem:[%s970 + $0x10] sm:$0xf]
      %v976 = vld [vmem:[%s970 + $0x14] sm:$0xf]
      %v977 = vld [vmem:[%s970 + $0x18] sm:$0xf]
      %v978 = vld [vmem:[%s970 + $0x1c] sm:$0xf]
      %v979 = vld [vmem:[%s970 + $0x20] sm:$0xf]
      %v980 = vld [vmem:[%s970 + $0x24] sm:$0xf]
      %v981 = vld [vmem:[%s970 + $0x28] sm:$0xf]
      %v982 = vld [vmem:[%s970 + $0x2c] sm:$0xf]
      %v983 = vld [vmem:[%s970 + $0x30] sm:$0xf]
      %v984 = vld [vmem:[%s970 + $0x34] sm:$0xf]
      %v985 = vld [vmem:[%s970 + $0x38] sm:$0xf]
      %v986 = vld [vmem:[%s970 + $0x3c] sm:$0xf]
      %v988 = vunpack.c.l.b16 %v969
      %v989 = vpack.c.b16 %v988, %v876
      %v991 = vshrl.u32 %v989, 16
      %v993 = vrot.slane %v991, 3
      %v994 = vshll.u32 %v989, 16
      %v996 = vrot.slane %v994, 4
      %v997 = vor.u32 %v993, %v996
      %v1015 = vunpack.c.l.b16 %v971
      %v1016 = vunpack.c.l.b16 %v972
      %v1017 = vunpack.c.l.b16 %v973
      %v1018 = vunpack.c.l.b16 %v974
      %v1019 = vunpack.c.l.b16 %v975
      %v1020 = vunpack.c.l.b16 %v976
      %v1021 = vunpack.c.l.b16 %v977
      %v1022 = vunpack.c.l.b16 %v978
      %v1023 = vunpack.c.l.b16 %v979
      %v1024 = vunpack.c.l.b16 %v980
      %v1025 = vunpack.c.l.b16 %v981
      %v1026 = vunpack.c.l.b16 %v982
      %v1027 = vunpack.c.l.b16 %v983
      %v1028 = vunpack.c.l.b16 %v984
      %v1029 = vunpack.c.l.b16 %v985
      %v1030 = vunpack.c.l.b16 %v986
      %v1031 = vpack.c.b16 %v1016, %v1015
      %v1032 = vpack.c.b16 %v1018, %v1017
      %v1033 = vpack.c.b16 %v1020, %v1019
      %v1034 = vpack.c.b16 %v1022, %v1021
      %v1035 = vpack.c.b16 %v1024, %v1023
      %v1036 = vpack.c.b16 %v1026, %v1025
      %v1037 = vpack.c.b16 %v1028, %v1027
      %v1038 = vpack.c.b16 %v1030, %v1029
      %1047 = vmatprep.subr.bf16.mxu0 0
      %1048 = vmatpush1.bf16.msra.mxu0 %v1038
      %1049 = vmatprep.subr.bf16.mxu0 0
      %1050 = vmatpush1.bf16.msra.mxu0 %v1037
      %1051 = vmatprep.subr.bf16.mxu0 0
      %1052 = vmatpush1.bf16.msra.mxu0 %v1036
      %1053 = vmatprep.subr.bf16.mxu0 0
      %1054 = vmatpush1.bf16.msra.mxu0 %v1035
      %1055 = vmatprep.subr.bf16.mxu0 0
      %1056 = vmatpush1.bf16.msra.mxu0 %v1034
      %1057 = vmatprep.subr.bf16.mxu0 0
      %1058 = vmatpush1.bf16.msra.mxu0 %v1033
      %1059 = vmatprep.subr.bf16.mxu0 0
      %1060 = vmatpush1.bf16.msra.mxu0 %v1032
      %1061 = vmatprep.subr.bf16.mxu0 0
      %1062 = vmatpush1.bf16.msra.mxu0 %v1031
      %1063 = vmatprep.subr.bf16.mxu0 0
      %1064 = vmatpush2.bf16.msra.mxu0 0
      %1065 = vmatprep.subr.bf16.mxu0 0
      %1066 = vmatpush2.bf16.msra.mxu0 0
      %1067 = vmatprep.subr.bf16.mxu0 0
      %1068 = vmatpush2.bf16.msra.mxu0 0
      %1069 = vmatprep.subr.bf16.mxu0 0
      %1070 = vmatpush2.bf16.msra.mxu0 0
      %1071 = vmatprep.subr.bf16.mxu0 0
      %1072 = vmatpush2.bf16.msra.mxu0 0
      %1073 = vmatprep.subr.bf16.mxu0 0
      %1074 = vmatpush2.bf16.msra.mxu0 0
      %1075 = vmatprep.subr.bf16.mxu0 0
      %1076 = vmatpush2.bf16.msra.mxu0 0
      %1077 = vmatprep.subr.bf16.mxu0 0
      %1078 = vmatpush2.bf16.msra.mxu0 0
      %1079 = vmatprep.mubr.bf16.mxu0 0
      %1080 = vmatmul.mubr.bf16.gmra.mxu0 %v997
      %v1081 = vpop.f32.mrf.mxu0
      %v1082 = vadd.f32 0.0, %v1081
      %v1083 = vpop.f32.mrf.mxu0
      %v1084 = vpop.f32.mrf.mxu0
      %v1085 = vpop.f32.mrf.mxu0
      %1086 = vdwg.mxu0
      %v1087 = vadd.f32 %v968, %v1082
      %s1088 = scalar_lea.vmem %s1, 512
      %v1089 = vld [vmem:[%s1088] sm:$0xf]
      %v1090 = vld [vmem:[%s1088 + $0x4] sm:$0xf]
      %v1091 = vld [vmem:[%s1088 + $0x8] sm:$0xf]
      %v1092 = vld [vmem:[%s1088 + $0xc] sm:$0xf]
      %v1093 = vld [vmem:[%s1088 + $0x10] sm:$0xf]
      %v1094 = vld [vmem:[%s1088 + $0x14] sm:$0xf]
      %v1095 = vld [vmem:[%s1088 + $0x18] sm:$0xf]
      %v1096 = vld [vmem:[%s1088 + $0x1c] sm:$0xf]
      %v1097 = vld [vmem:[%s1088 + $0x20] sm:$0xf]
      %v1098 = vld [vmem:[%s1088 + $0x24] sm:$0xf]
      %v1099 = vld [vmem:[%s1088 + $0x28] sm:$0xf]
      %v1100 = vld [vmem:[%s1088 + $0x2c] sm:$0xf]
      %v1101 = vld [vmem:[%s1088 + $0x30] sm:$0xf]
      %v1102 = vld [vmem:[%s1088 + $0x34] sm:$0xf]
      %v1103 = vld [vmem:[%s1088 + $0x38] sm:$0xf]
      %v1104 = vld [vmem:[%s1088 + $0x3c] sm:$0xf]
      %v1121 = vunpack.c.l.b16 %v1089
      %v1122 = vunpack.c.l.b16 %v1090
      %v1123 = vunpack.c.l.b16 %v1091
      %v1124 = vunpack.c.l.b16 %v1092
      %v1125 = vunpack.c.l.b16 %v1093
      %v1126 = vunpack.c.l.b16 %v1094
      %v1127 = vunpack.c.l.b16 %v1095
      %v1128 = vunpack.c.l.b16 %v1096
      %v1129 = vunpack.c.l.b16 %v1097
      %v1130 = vunpack.c.l.b16 %v1098
      %v1131 = vunpack.c.l.b16 %v1099
      %v1132 = vunpack.c.l.b16 %v1100
      %v1133 = vunpack.c.l.b16 %v1101
      %v1134 = vunpack.c.l.b16 %v1102
      %v1135 = vunpack.c.l.b16 %v1103
      %v1136 = vunpack.c.l.b16 %v1104
      %v1137 = vpack.c.b16 %v1122, %v1121
      %v1138 = vpack.c.b16 %v1124, %v1123
      %v1139 = vpack.c.b16 %v1126, %v1125
      %v1140 = vpack.c.b16 %v1128, %v1127
      %v1141 = vpack.c.b16 %v1130, %v1129
      %v1142 = vpack.c.b16 %v1132, %v1131
      %v1143 = vpack.c.b16 %v1134, %v1133
      %v1144 = vpack.c.b16 %v1136, %v1135
      %1153 = vmatprep.subr.bf16.mxu0 0
      %1154 = vmatpush1.bf16.msra.mxu0 %v1144
      %1155 = vmatprep.subr.bf16.mxu0 0
      %1156 = vmatpush1.bf16.msra.mxu0 %v1143
      %1157 = vmatprep.subr.bf16.mxu0 0
      %1158 = vmatpush1.bf16.msra.mxu0 %v1142
      %1159 = vmatprep.subr.bf16.mxu0 0
      %1160 = vmatpush1.bf16.msra.mxu0 %v1141
      %1161 = vmatprep.subr.bf16.mxu0 0
      %1162 = vmatpush1.bf16.msra.mxu0 %v1140
      %1163 = vmatprep.subr.bf16.mxu0 0
      %1164 = vmatpush1.bf16.msra.mxu0 %v1139
      %1165 = vmatprep.subr.bf16.mxu0 0
      %1166 = vmatpush1.bf16.msra.mxu0 %v1138
      %1167 = vmatprep.subr.bf16.mxu0 0
      %1168 = vmatpush1.bf16.msra.mxu0 %v1137
      %1169 = vmatprep.subr.bf16.mxu0 0
      %1170 = vmatpush2.bf16.msra.mxu0 0
      %1171 = vmatprep.subr.bf16.mxu0 0
      %1172 = vmatpush2.bf16.msra.mxu0 0
      %1173 = vmatprep.subr.bf16.mxu0 0
      %1174 = vmatpush2.bf16.msra.mxu0 0
      %1175 = vmatprep.subr.bf16.mxu0 0
      %1176 = vmatpush2.bf16.msra.mxu0 0
      %1177 = vmatprep.subr.bf16.mxu0 0
      %1178 = vmatpush2.bf16.msra.mxu0 0
      %1179 = vmatprep.subr.bf16.mxu0 0
      %1180 = vmatpush2.bf16.msra.mxu0 0
      %1181 = vmatprep.subr.bf16.mxu0 0
      %1182 = vmatpush2.bf16.msra.mxu0 0
      %1183 = vmatprep.subr.bf16.mxu0 0
      %1184 = vmatpush2.bf16.msra.mxu0 0
      %1185 = vmatprep.mubr.bf16.mxu0 0
      %1186 = vmatmul.mubr.bf16.gmra.mxu0 %v969
      %v1187 = vpop.f32.mrf.mxu0
      %v1188 = vadd.f32 0.0, %v1187
      %v1189 = vpop.f32.mrf.mxu0
      %v1190 = vpop.f32.mrf.mxu0
      %v1191 = vpop.f32.mrf.mxu0
      %1192 = vdwg.mxu0
      %v1193 = vadd.f32 %v1087, %v1188
      %v1194 = vld [vmem:[%s2] sm:$0x1]
      %v1196 = vlaneseq
      %v1197 = vshrl.u32 %v1196, 7
      %v1198 = vsub.s32 0, %v1197
      %v1199 = vrot.slane %v1194, %v1198
      %v1201 = vadd.f32 %v1193, %v1199
      %v1202 = vmax.f32 %v1201, 0.0
      %v1203 = vpack.c.bf16 %v1202, %v1202
      %1204 = vst [vmem:[%s168] sm:$0xf] %v1203
      %p1205 = scmp.lt.s32.totalorder %s14, 1
      %s1206 = scalar_select %p1205, %s14, 1
      %s1207 = smul.addr %s1206, 4
      %s1208 = scalar_lea.vmem %s3, %s1207
      // Predicated region
      $region33: #{cpm_stage_x_forward.8} parent=31 // pred_check
        %p1209 = pneg %p100
      $region34: #{cpm_stage_x_forward.8} parent=31 // pred_check_branch
        %1211 = sbr.rel (%p1209) target = $region36
      $region35: #{cpm_stage_x_forward.8} parent=31 // pred_region
        _
      $region36: #{cpm_stage_x_forward.8} parent=31 // pred_fallthru
        _
    $region32: #{cpm_stage_x_forward.8} parent=5 // pred_fallthru
      _
    %p1212 = scmp.le.s32.totalorder 2, %s9
    // Predicated region
    $region37: #{cpm_stage_x_forward.8} parent=5 // pred_check
      %p1213 = pneg %p1212
    $region38: #{cpm_stage_x_forward.8} parent=5 // pred_check_branch
      %1215 = sbr.rel (%p1213) target = $region40
    $region39: #{cpm_stage_x_forward.8} parent=5 // pred_region
      %s1216 = ssub.s32 %s9, 2
      // Predicated region
      $region41: #{cpm_stage_x_forward.8} parent=39 // pred_check
        %p1217 = pneg %p106
      $region42: #{cpm_stage_x_forward.8} parent=39 // pred_check_branch
        %1219 = sbr.rel (%p1217) target = $region44
      $region43: #{cpm_stage_x_forward.8} parent=39 // pred_region
        %p1220 = scmp.lt.s32.totalorder %s15, 1
        %s1221 = scalar_select %p1220, %s15, 1
        %s1222 = smul.addr %s1221, 4
        %s1223 = scalar_lea.vmem %s3, %s1222
      $region44: #{cpm_stage_x_forward.8} parent=39 // pred_fallthru
        _
    $region40: #{cpm_stage_x_forward.8} parent=5 // pred_fallthru
      _
  $region6: #{cpm_stage_x_forward.8} parent=0 // loop_footer
    %s13 = sadd.s32 1, %s9
  $region7: #{cpm_stage_x_forward.8} parent=0 // loop_footer_branch
    %8 = sbr.rel target = $region3
  $region8: #{cpm_stage_x_forward.8} parent=0 // loop_exit
    _

// kernel: cpm_stage_x_forward.9
$region0: #{cpm_stage_x_forward.9}
  #allocation0 [shape = 'u32[]', space=smem, size = 0x4, offset = 0x4, fixed_abs, tag = 'smem constant byte address 0x4 - core index']
  #allocation1 [shape = 'u32[144,128]{1,0:T(1,128)}', space=vmem, size = 0x12000, scoped, tag = 'internal scratch']
  %s0 = inlined_call_operand.vmem [shape: bf16[2,12,192], index: 0, kind: input, shape index: {}]
  %s1 = inlined_call_operand.vmem [shape: bf16[5,192,64], index: 1, kind: input, shape index: {}]
  %s2 = inlined_call_operand.vmem [shape: f32[1,64], index: 2, kind: input, shape index: {}]
  %s3 = inlined_call_operand.vmem [shape: bf16[2,8,64], index: 3, kind: output, shape index: {}]
  %s4 = sld [smem:[#allocation0]]
  $region45: #{cpm_stage_x_forward.9} parent=0
    _
  %s6 = ssub.s32 1, %s4
  %s7 = scalar_select 0, %s6, %s4
  loop: start=0, step=1, limit=4
  $region2: #{cpm_stage_x_forward.9} parent=0 // loop_pre_header
    _
  $region3: #{cpm_stage_x_forward.9} parent=0 // loop_header
    %s9 = sphi 0, %s13
    %p10 = scmp.ge.s32.totalorder %s9, 4
    %s19 = sphi 0, %s21
    %s22 = sphi 0, %s19
    %s23 = sphi 0, %s22
    %s39 = sphi 0, %s23
    %s43 = sphi 0, %s43
    %s45 = sphi 0, %s43
    %s46 = sphi 0, %s45
    %s60 = sphi 0, %s46
    %s64 = sphi 0, %s64
    %s66 = sphi 0, %s64
    %s67 = sphi 0, %s66
    %s81 = sphi 0, %s67
    %s87 = sphi 0, %s89
    %s90 = sphi 0, %s87
    %s91 = sphi 0, %s90
    %s107 = sphi 0, %s91
  $region4: #{cpm_stage_x_forward.9} parent=0 // loop_header_branch
    %12 = sbr.rel (%p10) target = $region8
  $region5: #{cpm_stage_x_forward.9} parent=0 // loop_body
    %s14 = ssub.s32 %s9, 1
    %s15 = ssub.s32 %s9, 2
    %s16 = sadd.s32 %s9, 1
    %s17 = ssub.s32 %s9, %s16
    %p18 = scmp.eq.s32.totalorder %s17, 0
    %s20 = sadd.s32 %s19, 1
    %s21 = scalar_select %p18, %s19, %s20
    %p24 = pneg %p18
    %p25 = scmp.eq.s32.totalorder %s9, 1
    %p26 = por %p24, %p25
    %p27 = scmp.ne.s32.totalorder %s19, %s22
    %p28 = scmp.eq.s32.totalorder %s9, 0
    %p29 = por %p27, %p28
    %p30 = scmp.ne.s32.totalorder %s19, %s22
    %p31 = scmp.eq.s32.totalorder %s14, 1
    %p32 = por %p30, %p31
    %p33 = scmp.ne.s32.totalorder %s22, %s23
    %p34 = scmp.eq.s32.totalorder %s14, 0
    %p35 = por %p33, %p34
    %p36 = scmp.ne.s32.totalorder %s22, %s23
    %p37 = scmp.eq.s32.totalorder %s15, 1
    %p38 = por %p36, %p37
    %p40 = scmp.ne.s32.totalorder %s23, %s39
    %p41 = scmp.eq.s32.totalorder %s15, 0
    %p42 = por %p40, %p41
    %s44 = sadd.s32 %s43, 1
    %p47 = scmp.eq.s32.totalorder %s9, 1
    %p48 = scmp.ne.s32.totalorder %s43, %s45
    %p49 = scmp.eq.s32.totalorder %s9, 0
    %p50 = por %p48, %p49
    %p51 = scmp.ne.s32.totalorder %s43, %s45
    %p52 = scmp.eq.s32.totalorder %s14, 1
    %p53 = por %p51, %p52
    %p54 = scmp.ne.s32.totalorder %s45, %s46
    %p55 = scmp.eq.s32.totalorder %s14, 0
    %p56 = por %p54, %p55
    %p57 = scmp.ne.s32.totalorder %s45, %s46
    %p58 = scmp.eq.s32.totalorder %s15, 1
    %p59 = por %p57, %p58
    %p61 = scmp.ne.s32.totalorder %s46, %s60
    %p62 = scmp.eq.s32.totalorder %s15, 0
    %p63 = por %p61, %p62
    %s65 = sadd.s32 %s64, 1
    %p68 = scmp.eq.s32.totalorder %s9, 1
    %p69 = scmp.ne.s32.totalorder %s64, %s66
    %p70 = scmp.eq.s32.totalorder %s9, 0
    %p71 = por %p69, %p70
    %p72 = scmp.ne.s32.totalorder %s64, %s66
    %p73 = scmp.eq.s32.totalorder %s14, 1
    %p74 = por %p72, %p73
    %p75 = scmp.ne.s32.totalorder %s66, %s67
    %p76 = scmp.eq.s32.totalorder %s14, 0
    %p77 = por %p75, %p76
    %p78 = scmp.ne.s32.totalorder %s66, %s67
    %p79 = scmp.eq.s32.totalorder %s15, 1
    %p80 = por %p78, %p79
    %p82 = scmp.ne.s32.totalorder %s67, %s81
    %p83 = scmp.eq.s32.totalorder %s15, 0
    %p84 = por %p82, %p83
    %s85 = ssub.s32 %s9, %s16
    %p86 = scmp.eq.s32.totalorder %s85, 0
    %s88 = sadd.s32 %s87, 1
    %s89 = scalar_select %p86, %s87, %s88
    %p92 = pneg %p86
    %p93 = scmp.eq.s32.totalorder %s9, 1
    %p94 = por %p92, %p93
    %p95 = scmp.ne.s32.totalorder %s87, %s90
    %p96 = scmp.eq.s32.totalorder %s9, 0
    %p97 = por %p95, %p96
    %p98 = scmp.ne.s32.totalorder %s87, %s90
    %p99 = scmp.eq.s32.totalorder %s14, 1
    %p100 = por %p98, %p99
    %p101 = scmp.ne.s32.totalorder %s90, %s91
    %p102 = scmp.eq.s32.totalorder %s14, 0
    %p103 = por %p101, %p102
    %p104 = scmp.ne.s32.totalorder %s90, %s91
    %p105 = scmp.eq.s32.totalorder %s15, 1
    %p106 = por %p104, %p105
    %p108 = scmp.ne.s32.totalorder %s91, %s107
    %p109 = scmp.eq.s32.totalorder %s15, 0
    %p110 = por %p108, %p109
    %p111 = scmp.le.s32.totalorder 1, %s9
    %p112 = scmp.lt.s32.totalorder %s9, 3
    %p113 = pnand %p111, %p112
    %p114 = pneg %p113
    // Predicated region
    $region9: #{cpm_stage_x_forward.9} parent=5 // pred_check
      _
    $region10: #{cpm_stage_x_forward.9} parent=5 // pred_check_branch
      %116 = sbr.rel (%p113) target = $region12
    $region11: #{cpm_stage_x_forward.9} parent=5 // pred_region
      %s117 = ssub.s32 %s9, 1
      // Predicated region
      $region13: #{cpm_stage_x_forward.9} parent=11 // pred_check
        %p118 = pneg %p56
      $region14: #{cpm_stage_x_forward.9} parent=11 // pred_check_branch
        %120 = sbr.rel (%p118) target = $region16
      $region15: #{cpm_stage_x_forward.9} parent=11 // pred_region
        _
      $region16: #{cpm_stage_x_forward.9} parent=11 // pred_fallthru
        _
      // Predicated region
      $region17: #{cpm_stage_x_forward.9} parent=11 // pred_check
        %p121 = pneg %p77
      $region18: #{cpm_stage_x_forward.9} parent=11 // pred_check_branch
        %123 = sbr.rel (%p121) target = $region20
      $region19: #{cpm_stage_x_forward.9} parent=11 // pred_region
        _
      $region20: #{cpm_stage_x_forward.9} parent=11 // pred_fallthru
        _
    $region12: #{cpm_stage_x_forward.9} parent=5 // pred_fallthru
      _
    %p124 = scmp.lt.s32.totalorder %s9, 2
    // Predicated region
    $region21: #{cpm_stage_x_forward.9} parent=5 // pred_check
      %p125 = pneg %p124
    $region22: #{cpm_stage_x_forward.9} parent=5 // pred_check_branch
      %127 = sbr.rel (%p125) target = $region24
    $region23: #{cpm_stage_x_forward.9} parent=5 // pred_region
      // Predicated region
      $region25: #{cpm_stage_x_forward.9} parent=23 // pred_check
        %p128 = pneg %p29
      $region26: #{cpm_stage_x_forward.9} parent=23 // pred_check_branch
        %130 = sbr.rel (%p128) target = $region28
      $region27: #{cpm_stage_x_forward.9} parent=23 // pred_region
        %p131 = scmp.lt.s32.totalorder %s9, 1
        %s132 = scalar_select %p131, %s9, 1
        %s133 = smul.addr %s132, 4
        %s134 = smul.addr %s133, 4
        %s135 = scalar_lea.vmem %s0, %s134
      $region28: #{cpm_stage_x_forward.9} parent=23 // pred_fallthru
        _
    $region24: #{cpm_stage_x_forward.9} parent=5 // pred_fallthru
      _
    %p136 = scmp.le.s32.totalorder 1, %s9
    %p137 = scmp.lt.s32.totalorder %s9, 3
    %p138 = pnand %p136, %p137
    %p139 = pneg %p138
    // Predicated region
    $region29: #{cpm_stage_x_forward.9} parent=5 // pred_check
      _
    $region30: #{cpm_stage_x_forward.9} parent=5 // pred_check_branch
      %141 = sbr.rel (%p138) target = $region32
    $region31: #{cpm_stage_x_forward.9} parent=5 // pred_region
      %s142 = ssub.s32 %s9, 1
      %p143 = scmp.lt.s32.totalorder %s14, 1
      %s144 = scalar_select %p143, %s14, 1
      %s145 = smul.addr %s144, 4
      %s146 = smul.addr %s145, 4
      %s147 = scalar_lea.vmem %s0, %s146
      %p148 = pneg %p35
      %p149 = pneg %p32
      %p150 = pneg %p56
      %p151 = pneg %p53
      %p152 = pneg %p77
      %p153 = pneg %p74
      %p154 = pneg %p103
      %p155 = pneg %p100
      %p156 = scmp.lt.s32.totalorder %s14, 1
      %s157 = scalar_select %p156, %s14, 1
      %s158 = smul.addr %s157, 4
      %s159 = scalar_lea.vmem %s3, %s158
      %p160 = scmp.lt.s32.totalorder %s14, 1
      %s161 = scalar_select %p160, %s14, 1
      %s162 = smul.addr %s161, 4
      %s163 = smul.addr %s162, 4
      %s164 = scalar_lea.vmem %s0, %s163
      %p165 = scmp.lt.s32.totalorder %s14, 1
      %s166 = scalar_select %p165, %s14, 1
      %s167 = smul.addr %s166, 4
      %s168 = scalar_lea.vmem %s3, %s167
      %v170 = vld [vmem:[%s164] sm:$0xff]
      %v171 = vld [vmem:[%s1] sm:$0xf]
      %v172 = vld [vmem:[%s1 + $0x4] sm:$0xf]
      %v173 = vld [vmem:[%s1 + $0x8] sm:$0xf]
      %v174 = vld [vmem:[%s1 + $0xc] sm:$0xf]
      %v175 = vld [vmem:[%s1 + $0x10] sm:$0xf]
      %v176 = vld [vmem:[%s1 + $0x14] sm:$0xf]
      %v177 = vld [vmem:[%s1 + $0x18] sm:$0xf]
      %v178 = vld [vmem:[%s1 + $0x1c] sm:$0xf]
      %v179 = vld [vmem:[%s1 + $0x20] sm:$0xf]
      %v180 = vld [vmem:[%s1 + $0x24] sm:$0xf]
      %v181 = vld [vmem:[%s1 + $0x28] sm:$0xf]
      %v182 = vld [vmem:[%s1 + $0x2c] sm:$0xf]
      %v183 = vld [vmem:[%s1 + $0x30] sm:$0xf]
      %v184 = vld [vmem:[%s1 + $0x34] sm:$0xf]
      %v185 = vld [vmem:[%s1 + $0x38] sm:$0xf]
      %v186 = vld [vmem:[%s1 + $0x3c] sm:$0xf]
      %v187 = vld [vmem:[%s1 + $0x40] sm:$0xf]
      %v188 = vld [vmem:[%s1 + $0x44] sm:$0xf]
      %v189 = vld [vmem:[%s1 + $0x48] sm:$0xf]
      %v190 = vld [vmem:[%s1 + $0x4c] sm:$0xf]
      %v191 = vld [vmem:[%s1 + $0x50] sm:$0xf]
      %v192 = vld [vmem:[%s1 + $0x54] sm:$0xf]
      %v193 = vld [vmem:[%s1 + $0x58] sm:$0xf]
      %v194 = vld [vmem:[%s1 + $0x5c] sm:$0xf]
      %v195 = vld [vmem:[%s164 + $0x8] sm:$0x11]
      %s196 = scalar_lea.vmem %s1, 96
      %v197 = vld [vmem:[%s196] sm:$0xf]
      %v198 = vld [vmem:[%s196 + $0x4] sm:$0xf]
      %v199 = vld [vmem:[%s196 + $0x8] sm:$0xf]
      %v200 = vld [vmem:[%s196 + $0xc] sm:$0xf]
      %v201 = vld [vmem:[%s196 + $0x10] sm:$0xf]
      %v202 = vld [vmem:[%s196 + $0x14] sm:$0xf]
      %v203 = vld [vmem:[%s196 + $0x18] sm:$0xf]
      %v204 = vld [vmem:[%s196 + $0x1c] sm:$0xf]
      %v205 = vld [vmem:[%s196 + $0x20] sm:$0xf]
      %v206 = vld [vmem:[%s196 + $0x24] sm:$0xf]
      %v207 = vld [vmem:[%s196 + $0x28] sm:$0xf]
      %v208 = vld [vmem:[%s196 + $0x2c] sm:$0xf]
      %v209 = vld [vmem:[%s196 + $0x30] sm:$0xf]
      %v210 = vld [vmem:[%s196 + $0x34] sm:$0xf]
      %v211 = vld [vmem:[%s196 + $0x38] sm:$0xf]
      %v212 = vld [vmem:[%s196 + $0x3c] sm:$0xf]
      %v213 = vld [vmem:[%s196 + $0x40] sm:$0xf]
      %v214 = vld [vmem:[%s196 + $0x44] sm:$0xf]
      %v215 = vld [vmem:[%s196 + $0x48] sm:$0xf]
      %v216 = vld [vmem:[%s196 + $0x4c] sm:$0xf]
      %v217 = vld [vmem:[%s196 + $0x50] sm:$0xf]
      %v218 = vld [vmem:[%s196 + $0x54] sm:$0xf]
      %v219 = vld [vmem:[%s196 + $0x58] sm:$0xf]
      %v220 = vld [vmem:[%s196 + $0x5c] sm:$0xf]
      %v223 = vunpack.c.l.b16 %v170
      %v224 = vunpack.c.h.b16 %v170
      %v225 = vunpack.c.l.b16 %v195
      %v226 = vunpack.c.h.b16 %v195
      %v227 = vpack.c.b16 %v225, %v223
      %v228 = vpack.c.b16 %v226, %v224
      %v230 = vshrl.u32 %v227, 16
      %v232 = vshll.u32 %v227, 16
      %v234 = vrot.slane %v232, 1
      %v235 = vor.u32 %v230, %v234
      %v237 = vshrl.u32 %v228, 16
      %v239 = vshll.u32 %v228, 16
      %v241 = vrot.slane %v239, 1
      %v242 = vor.u32 %v237, %v241
      %v268 = vunpack.c.l.b16 %v197
      %v269 = vunpack.c.l.b16 %v198
      %v270 = vunpack.c.l.b16 %v199
      %v271 = vunpack.c.l.b16 %v200
      %v272 = vunpack.c.l.b16 %v201
      %v273 = vunpack.c.l.b16 %v202
      %v274 = vunpack.c.l.b16 %v203
      %v275 = vunpack.c.l.b16 %v204
      %v276 = vunpack.c.l.b16 %v205
      %v277 = vunpack.c.l.b16 %v206
      %v278 = vunpack.c.l.b16 %v207
      %v279 = vunpack.c.l.b16 %v208
      %v280 = vunpack.c.l.b16 %v209
      %v281 = vunpack.c.l.b16 %v210
      %v282 = vunpack.c.l.b16 %v211
      %v283 = vunpack.c.l.b16 %v212
      %v284 = vunpack.c.l.b16 %v213
      %v285 = vunpack.c.l.b16 %v214
      %v286 = vunpack.c.l.b16 %v215
      %v287 = vunpack.c.l.b16 %v216
      %v288 = vunpack.c.l.b16 %v217
      %v289 = vunpack.c.l.b16 %v218
      %v290 = vunpack.c.l.b16 %v219
      %v291 = vunpack.c.l.b16 %v220
      %v292 = vpack.c.b16 %v269, %v268
      %v293 = vpack.c.b16 %v271, %v270
      %v294 = vpack.c.b16 %v273, %v272
      %v295 = vpack.c.b16 %v275, %v274
      %v296 = vpack.c.b16 %v277, %v276
      %v297 = vpack.c.b16 %v279, %v278
      %v298 = vpack.c.b16 %v281, %v280
      %v299 = vpack.c.b16 %v283, %v282
      %v300 = vpack.c.b16 %v285, %v284
      %v301 = vpack.c.b16 %v287, %v286
      %v302 = vpack.c.b16 %v289, %v288
      %v303 = vpack.c.b16 %v291, %v290
      %vm316 = vcmask 523264
      %v318 = vsel %vm316, %v242, 0
      %320 = vmatprep.subr.bf16.mxu0 0
      %321 = vmatpush1.bf16.msra.mxu0 %v299
      %322 = vmatprep.subr.bf16.mxu0 0
      %323 = vmatpush1.bf16.msra.mxu0 %v298
      %324 = vmatprep.subr.bf16.mxu0 0
      %325 = vmatpush1.bf16.msra.mxu0 %v297
      %326 = vmatprep.subr.bf16.mxu0 0
      %327 = vmatpush1.bf16.msra.mxu0 %v296
      %328 = vmatprep.subr.bf16.mxu0 0
      %329 = vmatpush1.bf16.msra.mxu0 %v295
      %330 = vmatprep.subr.bf16.mxu0 0
      %331 = vmatpush1.bf16.msra.mxu0 %v294
      %332 = vmatprep.subr.bf16.mxu0 0
      %333 = vmatpush1.bf16.msra.mxu0 %v293
      %334 = vmatprep.subr.bf16.mxu0 0
      %335 = vmatpush1.bf16.msra.mxu0 %v292
      %336 = vmatprep.subr.bf16.mxu0 0
      %337 = vmatpush2.bf16.msra.mxu0 0
      %338 = vmatprep.subr.bf16.mxu0 0
      %339 = vmatpush2.bf16.msra.mxu0 0
      %340 = vmatprep.subr.bf16.mxu0 0
      %341 = vmatpush2.bf16.msra.mxu0 0
      %342 = vmatprep.subr.bf16.mxu0 0
      %343 = vmatpush2.bf16.msra.mxu0 0
      %344 = vmatprep.subr.bf16.mxu0 0
      %345 = vmatpush2.bf16.msra.mxu0 %v303
      %346 = vmatprep.subr.bf16.mxu0 0
      %347 = vmatpush2.bf16.msra.mxu0 %v302
      %348 = vmatprep.subr.bf16.mxu0 0
      %349 = vmatpush2.bf16.msra.mxu0 %v301
      %350 = vmatprep.subr.bf16.mxu0 0
      %351 = vmatpush2.bf16.msra.mxu0 %v300
      %352 = vmatprep.mubr.bf16.mxu0 %v318
      %353 = vmatmul.mubr.bf16.gmra.mxu0 %v235
      %v354 = vpop.f32.mrf.mxu0
      %v355 = vadd.f32 0.0, %v354
      %v356 = vpop.f32.mrf.mxu0
      %v357 = vpop.f32.mrf.mxu0
      %v358 = vpop.f32.mrf.mxu0
      %359 = vdwg.mxu0
      %v360 = vpack.c.b16 %v223, %v223
      %v361 = vpack.c.b16 %v224, %v224
      %v387 = vunpack.c.l.b16 %v171
      %v388 = vunpack.c.l.b16 %v172
      %v389 = vunpack.c.l.b16 %v173
      %v390 = vunpack.c.l.b16 %v174
      %v391 = vunpack.c.l.b16 %v175
      %v392 = vunpack.c.l.b16 %v176
      %v393 = vunpack.c.l.b16 %v177
      %v394 = vunpack.c.l.b16 %v178
      %v395 = vunpack.c.l.b16 %v179
      %v396 = vunpack.c.l.b16 %v180
      %v397 = vunpack.c.l.b16 %v181
      %v398 = vunpack.c.l.b16 %v182
      %v399 = vunpack.c.l.b16 %v183
      %v400 = vunpack.c.l.b16 %v184
      %v401 = vunpack.c.l.b16 %v185
      %v402 = vunpack.c.l.b16 %v186
      %v403 = vunpack.c.l.b16 %v187
      %v404 = vunpack.c.l.b16 %v188
      %v405 = vunpack.c.l.b16 %v189
      %v406 = vunpack.c.l.b16 %v190
      %v407 = vunpack.c.l.b16 %v191
      %v408 = vunpack.c.l.b16 %v192
      %v409 = vunpack.c.l.b16 %v193
      %v410 = vunpack.c.l.b16 %v194
      %v411 = vpack.c.b16 %v388, %v387
      %v412 = vpack.c.b16 %v390, %v389
      %v413 = vpack.c.b16 %v392, %v391
      %v414 = vpack.c.b16 %v394, %v393
      %v415 = vpack.c.b16 %v396, %v395
      %v416 = vpack.c.b16 %v398, %v397
      %v417 = vpack.c.b16 %v400, %v399
      %v418 = vpack.c.b16 %v402, %v401
      %v419 = vpack.c.b16 %v404, %v403
      %v420 = vpack.c.b16 %v406, %v405
      %v421 = vpack.c.b16 %v408, %v407
      %v422 = vpack.c.b16 %v410, %v409
      %v436 = vsel %vm316, %v361, 0
      %438 = vmatprep.subr.bf16.mxu0 0
      %439 = vmatpush1.bf16.msra.mxu0 %v418
      %440 = vmatprep.subr.bf16.mxu0 0
      %441 = vmatpush1.bf16.msra.mxu0 %v417
      %442 = vmatprep.subr.bf16.mxu0 0
      %443 = vmatpush1.bf16.msra.mxu0 %v416
      %444 = vmatprep.subr.bf16.mxu0 0
      %445 = vmatpush1.bf16.msra.mxu0 %v415
      %446 = vmatprep.subr.bf16.mxu0 0
      %447 = vmatpush1.bf16.msra.mxu0 %v414
      %448 = vmatprep.subr.bf16.mxu0 0
      %449 = vmatpush1.bf16.msra.mxu0 %v413
      %450 = vmatprep.subr.bf16.mxu0 0
      %451 = vmatpush1.bf16.msra.mxu0 %v412
      %452 = vmatprep.subr.bf16.mxu0 0
      %453 = vmatpush1.bf16.msra.mxu0 %v411
      %454 = vmatprep.subr.bf16.mxu0 0
      %455 = vmatpush2.bf16.msra.mxu0 0
      %456 = vmatprep.subr.bf16.mxu0 0
      %457 = vmatpush2.bf16.msra.mxu0 0
      %458 = vmatprep.subr.bf16.mxu0 0
      %459 = vmatpush2.bf16.msra.mxu0 0
      %460 = vmatprep.subr.bf16.mxu0 0
      %461 = vmatpush2.bf16.msra.mxu0 0
      %462 = vmatprep.subr.bf16.mxu0 0
      %463 = vmatpush2.bf16.msra.mxu0 %v422
      %464 = vmatprep.subr.bf16.mxu0 0
      %465 = vmatpush2.bf16.msra.mxu0 %v421
      %466 = vmatprep.subr.bf16.mxu0 0
      %467 = vmatpush2.bf16.msra.mxu0 %v420
      %468 = vmatprep.subr.bf16.mxu0 0
      %469 = vmatpush2.bf16.msra.mxu0 %v419
      %470 = vmatprep.mubr.bf16.mxu0 %v436
      %471 = vmatmul.mubr.bf16.gmra.mxu0 %v360
      %v472 = vpop.f32.mrf.mxu0
      %v473 = vadd.f32 %v355, %v472
      %v474 = vpop.f32.mrf.mxu0
      %v475 = vpop.f32.mrf.mxu0
      %v476 = vpop.f32.mrf.mxu0
      %477 = vdwg.mxu0
      %v478 = vld [vmem:[%s164] sm:$0xee]
      %s479 = scalar_lea.vmem %s1, 192
      %v480 = vld [vmem:[%s479] sm:$0xf]
      %v481 = vld [vmem:[%s479 + $0x4] sm:$0xf]
      %v482 = vld [vmem:[%s479 + $0x8] sm:$0xf]
      %v483 = vld [vmem:[%s479 + $0xc] sm:$0xf]
      %v484 = vld [vmem:[%s479 + $0x10] sm:$0xf]
      %v485 = vld [vmem:[%s479 + $0x14] sm:$0xf]
      %v486 = vld [vmem:[%s479 + $0x18] sm:$0xf]
      %v487 = vld [vmem:[%s479 + $0x1c] sm:$0xf]
      %v488 = vld [vmem:[%s479 + $0x20] sm:$0xf]
      %v489 = vld [vmem:[%s479 + $0x24] sm:$0xf]
      %v490 = vld [vmem:[%s479 + $0x28] sm:$0xf]
      %v491 = vld [vmem:[%s479 + $0x2c] sm:$0xf]
      %v492 = vld [vmem:[%s479 + $0x30] sm:$0xf]
      %v493 = vld [vmem:[%s479 + $0x34] sm:$0xf]
      %v494 = vld [vmem:[%s479 + $0x38] sm:$0xf]
      %v495 = vld [vmem:[%s479 + $0x3c] sm:$0xf]
      %v496 = vld [vmem:[%s479 + $0x40] sm:$0xf]
      %v497 = vld [vmem:[%s479 + $0x44] sm:$0xf]
      %v498 = vld [vmem:[%s479 + $0x48] sm:$0xf]
      %v499 = vld [vmem:[%s479 + $0x4c] sm:$0xf]
      %v500 = vld [vmem:[%s479 + $0x50] sm:$0xf]
      %v501 = vld [vmem:[%s479 + $0x54] sm:$0xf]
      %v502 = vld [vmem:[%s479 + $0x58] sm:$0xf]
      %v503 = vld [vmem:[%s479 + $0x5c] sm:$0xf]
      %v505 = vunpack.c.l.b16 %v478
      %v506 = vunpack.c.h.b16 %v478
      %v507 = vpack.c.b16 %v225, %v505
      %v508 = vpack.c.b16 %v226, %v506
      %v509 = vrot.slane %v507, 1
      %v510 = vrot.slane %v508, 1
      %v536 = vunpack.c.l.b16 %v480
      %v537 = vunpack.c.l.b16 %v481
      %v538 = vunpack.c.l.b16 %v482
      %v539 = vunpack.c.l.b16 %v483
      %v540 = vunpack.c.l.b16 %v484
      %v541 = vunpack.c.l.b16 %v485
      %v542 = vunpack.c.l.b16 %v486
      %v543 = vunpack.c.l.b16 %v487
      %v544 = vunpack.c.l.b16 %v488
      %v545 = vunpack.c.l.b16 %v489
      %v546 = vunpack.c.l.b16 %v490
      %v547 = vunpack.c.l.b16 %v491
      %v548 = vunpack.c.l.b16 %v492
      %v549 = vunpack.c.l.b16 %v493
      %v550 = vunpack.c.l.b16 %v494
      %v551 = vunpack.c.l.b16 %v495
      %v552 = vunpack.c.l.b16 %v496
      %v553 = vunpack.c.l.b16 %v497
      %v554 = vunpack.c.l.b16 %v498
      %v555 = vunpack.c.l.b16 %v499
      %v556 = vunpack.c.l.b16 %v500
      %v557 = vunpack.c.l.b16 %v501
      %v558 = vunpack.c.l.b16 %v502
      %v559 = vunpack.c.l.b16 %v503
      %v560 = vpack.c.b16 %v537, %v536
      %v561 = vpack.c.b16 %v539, %v538
      %v562 = vpack.c.b16 %v541, %v540
      %v563 = vpack.c.b16 %v543, %v542
      %v564 = vpack.c.b16 %v545, %v544
      %v565 = vpack.c.b16 %v547, %v546
      %v566 = vpack.c.b16 %v549, %v548
      %v567 = vpack.c.b16 %v551, %v550
      %v568 = vpack.c.b16 %v553, %v552
      %v569 = vpack.c.b16 %v555, %v554
      %v570 = vpack.c.b16 %v557, %v556
      %v571 = vpack.c.b16 %v559, %v558
      %v585 = vsel %vm316, %v510, 0
      %587 = vmatprep.subr.bf16.mxu0 0
      %588 = vmatpush1.bf16.msra.mxu0 %v567
      %589 = vmatprep.subr.bf16.mxu0 0
      %590 = vmatpush1.bf16.msra.mxu0 %v566
      %591 = vmatprep.subr.bf16.mxu0 0
      %592 = vmatpush1.bf16.msra.mxu0 %v565
      %593 = vmatprep.subr.bf16.mxu0 0
      %594 = vmatpush1.bf16.msra.mxu0 %v564
      %595 = vmatprep.subr.bf16.mxu0 0
      %596 = vmatpush1.bf16.msra.mxu0 %v563
      %597 = vmatprep.subr.bf16.mxu0 0
      %598 = vmatpush1.bf16.msra.mxu0 %v562
      %599 = vmatprep.subr.bf16.mxu0 0
      %600 = vmatpush1.bf16.msra.mxu0 %v561
      %601 = vmatprep.subr.bf16.mxu0 0
      %602 = vmatpush1.bf16.msra.mxu0 %v560
      %603 = vmatprep.subr.bf16.mxu0 0
      %604 = vmatpush2.bf16.msra.mxu0 0
      %605 = vmatprep.subr.bf16.mxu0 0
      %606 = vmatpush2.bf16.msra.mxu0 0
      %607 = vmatprep.subr.bf16.mxu0 0
      %608 = vmatpush2.bf16.msra.mxu0 0
      %609 = vmatprep.subr.bf16.mxu0 0
      %610 = vmatpush2.bf16.msra.mxu0 0
      %611 = vmatprep.subr.bf16.mxu0 0
      %612 = vmatpush2.bf16.msra.mxu0 %v571
      %613 = vmatprep.subr.bf16.mxu0 0
      %614 = vmatpush2.bf16.msra.mxu0 %v570
      %615 = vmatprep.subr.bf16.mxu0 0
      %616 = vmatpush2.bf16.msra.mxu0 %v569
      %617 = vmatprep.subr.bf16.mxu0 0
      %618 = vmatpush2.bf16.msra.mxu0 %v568
      %619 = vmatprep.mubr.bf16.mxu0 %v585
      %620 = vmatmul.mubr.bf16.gmra.mxu0 %v509
      %v621 = vpop.f32.mrf.mxu0
      %v622 = vadd.f32 0.0, %v621
      %v623 = vpop.f32.mrf.mxu0
      %v624 = vpop.f32.mrf.mxu0
      %v625 = vpop.f32.mrf.mxu0
      %626 = vdwg.mxu0
      %v627 = vadd.f32 %v473, %v622
      %v628 = vld [vmem:[%s164 + $0x8] sm:$0x33]
      %s629 = scalar_lea.vmem %s1, 288
      %v630 = vld [vmem:[%s629] sm:$0xf]
      %v631 = vld [vmem:[%s629 + $0x4] sm:$0xf]
      %v632 = vld [vmem:[%s629 + $0x8] sm:$0xf]
      %v633 = vld [vmem:[%s629 + $0xc] sm:$0xf]
      %v634 = vld [vmem:[%s629 + $0x10] sm:$0xf]
      %v635 = vld [vmem:[%s629 + $0x14] sm:$0xf]
      %v636 = vld [vmem:[%s629 + $0x18] sm:$0xf]
      %v637 = vld [vmem:[%s629 + $0x1c] sm:$0xf]
      %v638 = vld [vmem:[%s629 + $0x20] sm:$0xf]
      %v639 = vld [vmem:[%s629 + $0x24] sm:$0xf]
      %v640 = vld [vmem:[%s629 + $0x28] sm:$0xf]
      %v641 = vld [vmem:[%s629 + $0x2c] sm:$0xf]
      %v642 = vld [vmem:[%s629 + $0x30] sm:$0xf]
      %v643 = vld [vmem:[%s629 + $0x34] sm:$0xf]
      %v644 = vld [vmem:[%s629 + $0x38] sm:$0xf]
      %v645 = vld [vmem:[%s629 + $0x3c] sm:$0xf]
      %v646 = vld [vmem:[%s629 + $0x40] sm:$0xf]
      %v647 = vld [vmem:[%s629 + $0x44] sm:$0xf]
      %v648 = vld [vmem:[%s629 + $0x48] sm:$0xf]
      %v649 = vld [vmem:[%s629 + $0x4c] sm:$0xf]
      %v650 = vld [vmem:[%s629 + $0x50] sm:$0xf]
      %v651 = vld [vmem:[%s629 + $0x54] sm:$0xf]
      %v652 = vld [vmem:[%s629 + $0x58] sm:$0xf]
      %v653 = vld [vmem:[%s629 + $0x5c] sm:$0xf]
      %v655 = vunpack.c.l.b16 %v628
      %v656 = vunpack.c.h.b16 %v628
      %v657 = vpack.c.b16 %v655, %v505
      %v658 = vpack.c.b16 %v656, %v506
      %v660 = vshrl.u32 %v657, 16
      %v662 = vrot.slane %v660, 1
      %v663 = vshll.u32 %v657, 16
      %v665 = vrot.slane %v663, 2
      %v666 = vor.u32 %v662, %v665
      %v668 = vshrl.u32 %v658, 16
      %v670 = vrot.slane %v668, 1
      %v671 = vshll.u32 %v658, 16
      %v673 = vrot.slane %v671, 2
      %v674 = vor.u32 %v670, %v673
      %v700 = vunpack.c.l.b16 %v630
      %v701 = vunpack.c.l.b16 %v631
      %v702 = vunpack.c.l.b16 %v632
      %v703 = vunpack.c.l.b16 %v633
      %v704 = vunpack.c.l.b16 %v634
      %v705 = vunpack.c.l.b16 %v635
      %v706 = vunpack.c.l.b16 %v636
      %v707 = vunpack.c.l.b16 %v637
      %v708 = vunpack.c.l.b16 %v638
      %v709 = vunpack.c.l.b16 %v639
      %v710 = vunpack.c.l.b16 %v640
      %v711 = vunpack.c.l.b16 %v641
      %v712 = vunpack.c.l.b16 %v642
      %v713 = vunpack.c.l.b16 %v643
      %v714 = vunpack.c.l.b16 %v644
      %v715 = vunpack.c.l.b16 %v645
      %v716 = vunpack.c.l.b16 %v646
      %v717 = vunpack.c.l.b16 %v647
      %v718 = vunpack.c.l.b16 %v648
      %v719 = vunpack.c.l.b16 %v649
      %v720 = vunpack.c.l.b16 %v650
      %v721 = vunpack.c.l.b16 %v651
      %v722 = vunpack.c.l.b16 %v652
      %v723 = vunpack.c.l.b16 %v653
      %v724 = vpack.c.b16 %v701, %v700
      %v725 = vpack.c.b16 %v703, %v702
      %v726 = vpack.c.b16 %v705, %v704
      %v727 = vpack.c.b16 %v707, %v706
      %v728 = vpack.c.b16 %v709, %v708
      %v729 = vpack.c.b16 %v711, %v710
      %v730 = vpack.c.b16 %v713, %v712
      %v731 = vpack.c.b16 %v715, %v714
      %v732 = vpack.c.b16 %v717, %v716
      %v733 = vpack.c.b16 %v719, %v718
      %v734 = vpack.c.b16 %v721, %v720
      %v735 = vpack.c.b16 %v723, %v722
      %v749 = vsel %vm316, %v674, 0
      %751 = vmatprep.subr.bf16.mxu0 0
      %752 = vmatpush1.bf16.msra.mxu0 %v731
      %753 = vmatprep.subr.bf16.mxu0 0
      %754 = vmatpush1.bf16.msra.mxu0 %v730
      %755 = vmatprep.subr.bf16.mxu0 0
      %756 = vmatpush1.bf16.msra.mxu0 %v729
      %757 = vmatprep.subr.bf16.mxu0 0
      %758 = vmatpush1.bf16.msra.mxu0 %v728
      %759 = vmatprep.subr.bf16.mxu0 0
      %760 = vmatpush1.bf16.msra.mxu0 %v727
      %761 = vmatprep.subr.bf16.mxu0 0
      %762 = vmatpush1.bf16.msra.mxu0 %v726
      %763 = vmatprep.subr.bf16.mxu0 0
      %764 = vmatpush1.bf16.msra.mxu0 %v725
      %765 = vmatprep.subr.bf16.mxu0 0
      %766 = vmatpush1.bf16.msra.mxu0 %v724
      %767 = vmatprep.subr.bf16.mxu0 0
      %768 = vmatpush2.bf16.msra.mxu0 0
      %769 = vmatprep.subr.bf16.mxu0 0
      %770 = vmatpush2.bf16.msra.mxu0 0
      %771 = vmatprep.subr.bf16.mxu0 0
      %772 = vmatpush2.bf16.msra.mxu0 0
      %773 = vmatprep.subr.bf16.mxu0 0
      %774 = vmatpush2.bf16.msra.mxu0 0
      %775 = vmatprep.subr.bf16.mxu0 0
      %776 = vmatpush2.bf16.msra.mxu0 %v735
      %777 = vmatprep.subr.bf16.mxu0 0
      %778 = vmatpush2.bf16.msra.mxu0 %v734
      %779 = vmatprep.subr.bf16.mxu0 0
      %780 = vmatpush2.bf16.msra.mxu0 %v733
      %781 = vmatprep.subr.bf16.mxu0 0
      %782 = vmatpush2.bf16.msra.mxu0 %v732
      %783 = vmatprep.mubr.bf16.mxu0 %v749
      %784 = vmatmul.mubr.bf16.gmra.mxu0 %v666
      %v785 = vpop.f32.mrf.mxu0
      %v786 = vadd.f32 0.0, %v785
      %v787 = vpop.f32.mrf.mxu0
      %v788 = vpop.f32.mrf.mxu0
      %v789 = vpop.f32.mrf.mxu0
      %790 = vdwg.mxu0
      %v791 = vadd.f32 %v627, %v786
      %v792 = vld [vmem:[%s164] sm:$0xcc]
      %s793 = scalar_lea.vmem %s1, 384
      %v794 = vld [vmem:[%s793] sm:$0xf]
      %v795 = vld [vmem:[%s793 + $0x4] sm:$0xf]
      %v796 = vld [vmem:[%s793 + $0x8] sm:$0xf]
      %v797 = vld [vmem:[%s793 + $0xc] sm:$0xf]
      %v798 = vld [vmem:[%s793 + $0x10] sm:$0xf]
      %v799 = vld [vmem:[%s793 + $0x14] sm:$0xf]
      %v800 = vld [vmem:[%s793 + $0x18] sm:$0xf]
      %v801 = vld [vmem:[%s793 + $0x1c] sm:$0xf]
      %v802 = vld [vmem:[%s793 + $0x20] sm:$0xf]
      %v803 = vld [vmem:[%s793 + $0x24] sm:$0xf]
      %v804 = vld [vmem:[%s793 + $0x28] sm:$0xf]
      %v805 = vld [vmem:[%s793 + $0x2c] sm:$0xf]
      %v806 = vld [vmem:[%s793 + $0x30] sm:$0xf]
      %v807 = vld [vmem:[%s793 + $0x34] sm:$0xf]
      %v808 = vld [vmem:[%s793 + $0x38] sm:$0xf]
      %v809 = vld [vmem:[%s793 + $0x3c] sm:$0xf]
      %v810 = vld [vmem:[%s793 + $0x40] sm:$0xf]
      %v811 = vld [vmem:[%s793 + $0x44] sm:$0xf]
      %v812 = vld [vmem:[%s793 + $0x48] sm:$0xf]
      %v813 = vld [vmem:[%s793 + $0x4c] sm:$0xf]
      %v814 = vld [vmem:[%s793 + $0x50] sm:$0xf]
      %v815 = vld [vmem:[%s793 + $0x54] sm:$0xf]
      %v816 = vld [vmem:[%s793 + $0x58] sm:$0xf]
      %v817 = vld [vmem:[%s793 + $0x5c] sm:$0xf]
      %v819 = vunpack.c.l.b16 %v792
      %v820 = vunpack.c.h.b16 %v792
      %v821 = vpack.c.b16 %v655, %v819
      %v822 = vpack.c.b16 %v656, %v820
      %v823 = vrot.slane %v821, 2
      %v824 = vrot.slane %v822, 2
      %v850 = vunpack.c.l.b16 %v794
      %v851 = vunpack.c.l.b16 %v795
      %v852 = vunpack.c.l.b16 %v796
      %v853 = vunpack.c.l.b16 %v797
      %v854 = vunpack.c.l.b16 %v798
      %v855 = vunpack.c.l.b16 %v799
      %v856 = vunpack.c.l.b16 %v800
      %v857 = vunpack.c.l.b16 %v801
      %v858 = vunpack.c.l.b16 %v802
      %v859 = vunpack.c.l.b16 %v803
      %v860 = vunpack.c.l.b16 %v804
      %v861 = vunpack.c.l.b16 %v805
      %v862 = vunpack.c.l.b16 %v806
      %v863 = vunpack.c.l.b16 %v807
      %v864 = vunpack.c.l.b16 %v808
      %v865 = vunpack.c.l.b16 %v809
      %v866 = vunpack.c.l.b16 %v810
      %v867 = vunpack.c.l.b16 %v811
      %v868 = vunpack.c.l.b16 %v812
      %v869 = vunpack.c.l.b16 %v813
      %v870 = vunpack.c.l.b16 %v814
      %v871 = vunpack.c.l.b16 %v815
      %v872 = vunpack.c.l.b16 %v816
      %v873 = vunpack.c.l.b16 %v817
      %v874 = vpack.c.b16 %v851, %v850
      %v875 = vpack.c.b16 %v853, %v852
      %v876 = vpack.c.b16 %v855, %v854
      %v877 = vpack.c.b16 %v857, %v856
      %v878 = vpack.c.b16 %v859, %v858
      %v879 = vpack.c.b16 %v861, %v860
      %v880 = vpack.c.b16 %v863, %v862
      %v881 = vpack.c.b16 %v865, %v864
      %v882 = vpack.c.b16 %v867, %v866
      %v883 = vpack.c.b16 %v869, %v868
      %v884 = vpack.c.b16 %v871, %v870
      %v885 = vpack.c.b16 %v873, %v872
      %v899 = vsel %vm316, %v824, 0
      %901 = vmatprep.subr.bf16.mxu0 0
      %902 = vmatpush1.bf16.msra.mxu0 %v881
      %903 = vmatprep.subr.bf16.mxu0 0
      %904 = vmatpush1.bf16.msra.mxu0 %v880
      %905 = vmatprep.subr.bf16.mxu0 0
      %906 = vmatpush1.bf16.msra.mxu0 %v879
      %907 = vmatprep.subr.bf16.mxu0 0
      %908 = vmatpush1.bf16.msra.mxu0 %v878
      %909 = vmatprep.subr.bf16.mxu0 0
      %910 = vmatpush1.bf16.msra.mxu0 %v877
      %911 = vmatprep.subr.bf16.mxu0 0
      %912 = vmatpush1.bf16.msra.mxu0 %v876
      %913 = vmatprep.subr.bf16.mxu0 0
      %914 = vmatpush1.bf16.msra.mxu0 %v875
      %915 = vmatprep.subr.bf16.mxu0 0
      %916 = vmatpush1.bf16.msra.mxu0 %v874
      %917 = vmatprep.subr.bf16.mxu0 0
      %918 = vmatpush2.bf16.msra.mxu0 0
      %919 = vmatprep.subr.bf16.mxu0 0
      %920 = vmatpush2.bf16.msra.mxu0 0
      %921 = vmatprep.subr.bf16.mxu0 0
      %922 = vmatpush2.bf16.msra.mxu0 0
      %923 = vmatprep.subr.bf16.mxu0 0
      %924 = vmatpush2.bf16.msra.mxu0 0
      %925 = vmatprep.subr.bf16.mxu0 0
      %926 = vmatpush2.bf16.msra.mxu0 %v885
      %927 = vmatprep.subr.bf16.mxu0 0
      %928 = vmatpush2.bf16.msra.mxu0 %v884
      %929 = vmatprep.subr.bf16.mxu0 0
      %930 = vmatpush2.bf16.msra.mxu0 %v883
      %931 = vmatprep.subr.bf16.mxu0 0
      %932 = vmatpush2.bf16.msra.mxu0 %v882
      %933 = vmatprep.mubr.bf16.mxu0 %v899
      %934 = vmatmul.mubr.bf16.gmra.mxu0 %v823
      %v935 = vpop.f32.mrf.mxu0
      %v936 = vadd.f32 0.0, %v935
      %v937 = vpop.f32.mrf.mxu0
      %v938 = vpop.f32.mrf.mxu0
      %v939 = vpop.f32.mrf.mxu0
      %940 = vdwg.mxu0
      %v941 = vadd.f32 %v791, %v936
      %v942 = vld [vmem:[%s2] sm:$0x1]
      %v944 = vlaneseq
      %v945 = vshrl.u32 %v944, 7
      %v946 = vsub.s32 0, %v945
      %v947 = vrot.slane %v942, %v946
      %v949 = vadd.f32 %v941, %v947
      %v950 = vmax.f32 %v949, 0.0
      %v951 = vpack.c.bf16 %v950, %v950
      %vm952 = vcmask 519168
      %953 = vst.msk [vmem:[%s168] sm:$0xf] %vm952, %v951
      %p954 = scmp.lt.s32.totalorder %s14, 1
      %s955 = scalar_select %p954, %s14, 1
      %s956 = smul.addr %s955, 4
      %s957 = scalar_lea.vmem %s3, %s956
      // Predicated region
      $region33: #{cpm_stage_x_forward.9} parent=31 // pred_check
        %p958 = pneg %p100
      $region34: #{cpm_stage_x_forward.9} parent=31 // pred_check_branch
        %960 = sbr.rel (%p958) target = $region36
      $region35: #{cpm_stage_x_forward.9} parent=31 // pred_region
        _
      $region36: #{cpm_stage_x_forward.9} parent=31 // pred_fallthru
        _
    $region32: #{cpm_stage_x_forward.9} parent=5 // pred_fallthru
      _
    %p961 = scmp.le.s32.totalorder 2, %s9
    // Predicated region
    $region37: #{cpm_stage_x_forward.9} parent=5 // pred_check
      %p962 = pneg %p961
    $region38: #{cpm_stage_x_forward.9} parent=5 // pred_check_branch
      %964 = sbr.rel (%p962) target = $region40
    $region39: #{cpm_stage_x_forward.9} parent=5 // pred_region
      %s965 = ssub.s32 %s9, 2
      // Predicated region
      $region41: #{cpm_stage_x_forward.9} parent=39 // pred_check
        %p966 = pneg %p106
      $region42: #{cpm_stage_x_forward.9} parent=39 // pred_check_branch
        %968 = sbr.rel (%p966) target = $region44
      $region43: #{cpm_stage_x_forward.9} parent=39 // pred_region
        %p969 = scmp.lt.s32.totalorder %s15, 1
        %s970 = scalar_select %p969, %s15, 1
        %s971 = smul.addr %s970, 4
        %s972 = scalar_lea.vmem %s3, %s971
      $region44: #{cpm_stage_x_forward.9} parent=39 // pred_fallthru
        _
    $region40: #{cpm_stage_x_forward.9} parent=5 // pred_fallthru
      _
  $region6: #{cpm_stage_x_forward.9} parent=0 // loop_footer
    %s13 = sadd.s32 1, %s9
  $region7: #{cpm_stage_x_forward.9} parent=0 // loop_footer_branch
    %8 = sbr.rel target = $region3
  $region8: #{cpm_stage_x_forward.9} parent=0 // loop_exit
    _

</llo_original>
